<compile_context>
chip_gen: v7x
topology: tpu7x:2x2x1
jax: 0.10.0
libtpu: 0.0.40
codegen_flags: <defaults>
</compile_context>

<pallas_src>
import functools

import jax
import jax.numpy as jnp
from jax.experimental import pallas as pl
from jax.experimental.pallas import tpu as pltpu


def _round_up(x, m):
    return ((x + m - 1) // m) * m


# ----------------------------------------------------------------------------
# Kernel 1: out = [relu](A @ W + bias).  Grid over M tiles only; W and bias
# use constant index_maps so they are fetched into VMEM once and stay resident.
# ----------------------------------------------------------------------------
def _mm_bias_act_kernel(a_ref, w_ref, bias_ref, o_ref, *, apply_relu):
    acc = jnp.dot(a_ref[...], w_ref[...], preferred_element_type=jnp.float32)
    acc = acc + bias_ref[...]
    if apply_relu:
        acc = jnp.maximum(acc, 0.0)
    o_ref[...] = acc.astype(o_ref.dtype)


def matmul_bias_act(a, w, bias2d, *, relu, out_dtype=jnp.bfloat16, block_m=256):
    """a: (M, K) bf16, w: (K, N) bf16 (pre-laid-out), bias2d: (1, N) f32."""
    M, K = a.shape
    Kw, N = w.shape
    assert K == Kw, (K, Kw)
    bm = block_m if M > block_m else M          # no M zero-padding; masked tail
    grid = (pl.cdiv(M, bm),)
    return pl.pallas_call(
        functools.partial(_mm_bias_act_kernel, apply_relu=relu),
        out_shape=jax.ShapeDtypeStruct((M, N), out_dtype),
        grid_spec=pltpu.PrefetchScalarGridSpec(
            num_scalar_prefetch=0,
            grid=grid,
            in_specs=[
                pl.BlockSpec((bm, K), lambda i: (i, 0)),
                pl.BlockSpec((K, N), lambda i: (0, 0)),
                pl.BlockSpec((1, N), lambda i: (0, 0)),
            ],
            out_specs=pl.BlockSpec((bm, N), lambda i: (i, 0)),
        ),
        compiler_params=pltpu.CompilerParams(
            dimension_semantics=("parallel",)),
    )(a, w, bias2d)


# ----------------------------------------------------------------------------
# Kernel 2: both q-heads fused.  grid = (head, K-tile).  The 9216-K matmul is
# K-tiled into an f32 VMEM accumulator; the tiny 128->64->1 tail layers run in
# the epilogue of the last K step.  Head axis is "parallel" (v7x: one head per
# TensorCore).
# ----------------------------------------------------------------------------
def _qheads_kernel(x_ref, w1_ref, b1_ref, w2_ref, b2_ref, wv_ref, bv_ref,
                   q_ref, acc_ref):
    k = pl.program_id(1)

    @pl.when(k == 0)
    def _():
        acc_ref[...] = jnp.zeros_like(acc_ref)

    acc_ref[...] += jnp.dot(x_ref[...], w1_ref[0],
                            preferred_element_type=jnp.float32)

    @pl.when(k == pl.num_programs(1) - 1)
    def _():
        h1 = jnp.maximum(acc_ref[...] + b1_ref[0], 0.0)            # (B,128)
        h2 = jnp.dot(h1, w2_ref[0], preferred_element_type=jnp.float32)
        h2 = jnp.maximum(h2 + b2_ref[0], 0.0)                      # (B,128) pad
        q = jnp.dot(h2, wv_ref[0], preferred_element_type=jnp.float32)
        q_ref[0] = q + bv_ref[0]                                   # (B,1)


def qheads_fused(x, w1s, b1s, w2s, b2s, wvs, bvs, *, tk=2304):
    """x: (B, 9216) bf16.  w1s: (2, 9216, 128) bf16.  Tails pre-padded to 128."""
    B, K = x.shape
    assert K % tk == 0
    nk = K // tk
    q = pl.pallas_call(
        _qheads_kernel,
        out_shape=jax.ShapeDtypeStruct((2, B, 1), jnp.float32),
        grid_spec=pltpu.PrefetchScalarGridSpec(
            num_scalar_prefetch=0,
            grid=(2, nk),
            in_specs=[
                pl.BlockSpec((B, tk), lambda h, k: (0, k)),
                pl.BlockSpec((1, tk, 128), lambda h, k: (h, k, 0)),
                pl.BlockSpec((1, 1, 128), lambda h, k: (h, 0, 0)),
                pl.BlockSpec((1, 128, 128), lambda h, k: (h, 0, 0)),
                pl.BlockSpec((1, 1, 128), lambda h, k: (h, 0, 0)),
                pl.BlockSpec((1, 128, 1), lambda h, k: (h, 0, 0)),
                pl.BlockSpec((1, 1, 1), lambda h, k: (h, 0, 0)),
            ],
            out_specs=pl.BlockSpec((1, B, 1), lambda h, k: (h, 0, 0)),
            scratch_shapes=[pltpu.VMEM((B, 128), jnp.float32)],
        ),
        compiler_params=pltpu.CompilerParams(
            dimension_semantics=("parallel", "arbitrary")),
    )(x, w1s, b1s, w2s, b2s, wvs, bvs)
    return q[0], q[1]


# ----------------------------------------------------------------------------
# Conv2d (valid, no padding) via NHWC im2col + Pallas matmul.
# ----------------------------------------------------------------------------
def _im2col_nhwc(x, kh, kw, stride, k_pad):
    """Patch order (KH, KW, Cin); K is zero-padded to k_pad inside the concat."""
    B, H, W, C = x.shape
    OH = (H - kh) // stride + 1
    OW = (W - kw) // stride + 1
    slabs = []
    for i in range(kh):
        for j in range(kw):
            slabs.append(x[:, i:i + stride * OH:stride,
                           j:j + stride * OW:stride, :])
    pad = k_pad - kh * kw * C
    if pad > 0:
        slabs.append(jnp.zeros((B, OH, OW, pad), x.dtype))
    p = jnp.concatenate(slabs, axis=-1)                 # (B, OH, OW, k_pad)
    return p.reshape(B * OH * OW, k_pad), OH, OW


def conv2d_nhwc(x, w_mat, bias2d, *, kh, kw, stride=1, relu=True):
    """x: (B,H,W,Cin) bf16; w_mat: (k_pad, Cout) bf16 pre-flattened at init."""
    B = x.shape[0]
    patches, OH, OW = _im2col_nhwc(x, kh, kw, stride, w_mat.shape[0])
    out = matmul_bias_act(patches, w_mat, bias2d, relu=relu)
    return out.reshape(B, OH, OW, w_mat.shape[1])


# ----------------------------------------------------------------------------
# Parameters: PyTorch-layout synthetic init + one-time TPU layout conversion.
# ----------------------------------------------------------------------------
def init_qnet_params(key, state_size=5):
    """Synthetic params in PyTorch layout.  Weights and biases are listed in
    separate dicts (no fragile name heuristics)."""
    weight_shapes = {
        # ImgStack (assumed, see TODO above)
        "is_w1": (16, 1, 8, 8),
        "is_w2": (32, 16, 4, 4),
        # StateStack (assumed)
        "ss_w": (28 * 28, state_size),
        # QNet body
        "c1_w": (32, 33, 3, 3),
        "c2_w": (16, 32, 3, 3),
        "q1_w1": (128, 16 * 24 * 24), "q1_w2": (64, 128), "q1_wv": (1, 64),
        "q2_w1": (128, 16 * 24 * 24), "q2_w2": (64, 128), "q2_wv": (1, 64),
    }
    bias_shapes = {
        "is_b1": (16,), "is_b2": (32,), "ss_b": (28 * 28,),
        "c1_b": (32,), "c2_b": (16,),
        "q1_b1": (128,), "q1_b2": (64,), "q1_bv": (1,),
        "q2_b1": (128,), "q2_b2": (64,), "q2_bv": (1,),
    }
    params = {}
    names = sorted(weight_shapes)
    for k_rng, name in zip(jax.random.split(key, len(names)), names):
        params[name] = 0.05 * jax.random.normal(
            k_rng, weight_shapes[name], jnp.float32)
    for name, shp in bias_shapes.items():
        params[name] = jnp.zeros(shp, jnp.float32)
    return params


def prepare_params(p):
    """One-time layout conversion: transpose / flatten / zero-pad / bf16-cast
    every weight so the per-step forward pass never relayouts weights in HBM."""

    def conv_w(w):                               # (Cout,Cin,KH,KW) -> (Kpad,Cout)
        cout, cin, kh, kw = w.shape
        k = kh * kw * cin
        wm = jnp.transpose(w, (2, 3, 1, 0)).reshape(k, cout)   # (KH,KW,Cin) rows
        wm = jnp.pad(wm, ((0, _round_up(k, 128) - k), (0, 0)))
        return wm.astype(jnp.bfloat16)

    def b2d(b):
        return b.reshape(1, -1).astype(jnp.float32)

    def head_w1(w):
        # PyTorch x.view(B,-1) on NCHW (16,24,24) flattens as (c,h,w); our
        # activations flatten NHWC as (h,w,c): permute the weight rows once.
        w4 = w.reshape(128, 16, 24, 24)           # (out, c, h, w)
        w4 = jnp.transpose(w4, (2, 3, 1, 0))      # (h, w, c, out)
        return w4.reshape(24 * 24 * 16, 128)

    t = {}
    t["is_w1"], t["is_b1"] = conv_w(p["is_w1"]), b2d(p["is_b1"])
    t["is_w2"], t["is_b2"] = conv_w(p["is_w2"]), b2d(p["is_b2"])
    t["c1_w"], t["c1_b"] = conv_w(p["c1_w"]), b2d(p["c1_b"])
    t["c2_w"], t["c2_b"] = conv_w(p["c2_w"]), b2d(p["c2_b"])

    ss_k = p["ss_w"].shape[1]
    ss_w = jnp.pad(p["ss_w"].T, ((0, _round_up(ss_k, 128) - ss_k), (0, 0)))
    t["ss_w"], t["ss_b"] = ss_w.astype(jnp.bfloat16), b2d(p["ss_b"])

    # Fused q-heads: stack the two heads on a leading axis; zero-pad the tiny
    # tails 64 -> 128 so every in-kernel contraction is 128-aligned (exact:
    # zero rows/cols and relu(0)=0 contribute nothing).
    t["q_w1"] = jnp.stack([head_w1(p["q1_w1"]),
                           head_w1(p["q2_w1"])]).astype(jnp.bfloat16)
    t["q_b1"] = jnp.stack([p["q1_b1"].reshape(1, 128),
                           p["q2_b1"].reshape(1, 128)]).astype(jnp.float32)
    t["q_w2"] = jnp.stack(
        [jnp.pad(p["q1_w2"].T, ((0, 0), (0, 64))),
         jnp.pad(p["q2_w2"].T, ((0, 0), (0, 64)))]).astype(jnp.float32)
    t["q_b2"] = jnp.stack(
        [jnp.pad(p["q1_b2"], (0, 64)).reshape(1, 128),
         jnp.pad(p["q2_b2"], (0, 64)).reshape(1, 128)]).astype(jnp.float32)
    t["q_wv"] = jnp.stack(
        [jnp.pad(p["q1_wv"].T, ((0, 64), (0, 0))),
         jnp.pad(p["q2_wv"].T, ((0, 64), (0, 0)))]).astype(jnp.float32)
    t["q_bv"] = jnp.stack([p["q1_bv"].reshape(1, 1),
                           p["q2_bv"].reshape(1, 1)]).astype(jnp.float32)
    return t


# ----------------------------------------------------------------------------
# Forward pass (semantics of QNet.forward; NHWC internally).
# ----------------------------------------------------------------------------
def qnet_forward(tp, img, state):
    B = img.shape[0]
    x = jnp.transpose(img, (0, 2, 3, 1)).astype(jnp.bfloat16)     # NCHW -> NHWC

    # ImgStack (assumed, see TODO): Conv(1->16,k8,s4)+ReLU, Conv(16->32,k4,s1)+ReLU
    x = conv2d_nhwc(x, tp["is_w1"], tp["is_b1"], kh=8, kw=8, stride=4)
    x = conv2d_nhwc(x, tp["is_w2"], tp["is_b2"], kh=4, kw=4, stride=1)  # (B,28,28,32)

    # StateStack (assumed): Linear(5->784)+ReLU -> (B,28,28,1)
    ss_k = tp["ss_w"].shape[0]
    s_in = jnp.pad(state, ((0, 0), (0, ss_k - state.shape[1])))
    s = matmul_bias_act(s_in.astype(jnp.bfloat16), tp["ss_w"], tp["ss_b"],
                        relu=True)
    s = s.reshape(B, 28, 28, 1)

    # torch.cat((img, state), dim=1)  == channel concat in NHWC
    x = jnp.concatenate([x, s], axis=-1)                          # (B,28,28,33)
    x = conv2d_nhwc(x, tp["c1_w"], tp["c1_b"], kh=3, kw=3)        # (B,26,26,32)
    x = conv2d_nhwc(x, tp["c2_w"], tp["c2_b"], kh=3, kw=3)        # (B,24,24,16)

    # x.view(B, -1): NHWC flatten; q-head weights were re-permuted at init so
    # this matches PyTorch's NCHW flatten exactly.
    x = x.reshape(B, 24 * 24 * 16)                                # (B, 9216)

    # All six q-head linears (both heads) in one fused Pallas kernel.
    q1, q2 = qheads_fused(x, tp["q_w1"], tp["q_b1"], tp["q_w2"], tp["q_b2"],
                          tp["q_wv"], tp["q_bv"])
    return q1, q2


if __name__ == "__main__":
    key = jax.random.PRNGKey(0)
    k_p, k_img, k_state = jax.random.split(key, 3)

    batch = 2
    img = jax.random.normal(k_img, (batch, 1, 128, 128), jnp.float32)   # NCHW
    state = jax.random.normal(k_state, (batch, 5), jnp.float32)

    params = init_qnet_params(k_p, state_size=5)
    tparams = prepare_params(params)        # one-time weight layout / pad / cast

    fwd = jax.jit(qnet_forward)
    q1, q2 = fwd(tparams, img, state)
    q1 = jax.block_until_ready(q1)
    q2 = jax.block_until_ready(q2)

    assert q1.shape == (batch, 1) and q2.shape == (batch, 1)
    assert jnp.all(jnp.isfinite(q1)) and jnp.all(jnp.isfinite(q2))
    print("KERNEL_OK")
</pallas_src>

<mosaic_0001>
module attributes {stable_mosaic.version = 11 : i64} {
  func.func @_mm_bias_act_kernel(%arg0: i32, %arg1: memref<256x128xbf16, #tpu.memory_space<vmem>>, %arg2: memref<128x16xbf16, #tpu.memory_space<vmem>>, %arg3: memref<1x16xf32, #tpu.memory_space<vmem>>, %arg4: memref<256x16xbf16, #tpu.memory_space<vmem>>) attributes {dimension_semantics = [#tpu.dimension_semantics<parallel>], iteration_bounds = array<i64: 8>, scalar_prefetch = 0 : i64, scratch_operands = 0 : i64, tpu.core_type = #tpu.core_type<tc>, window_params = [{transform_indices = @transform_0, window_bounds = array<i64: 256, 128>}, {pipeline_mode = #tpu.pipeline_mode<synchronous>, transform_indices = @transform_1, window_bounds = array<i64: 128, 16>}, {pipeline_mode = #tpu.pipeline_mode<synchronous>, transform_indices = @transform_2, window_bounds = array<i64: 1, 16>}, {transform_indices = @transform_3, window_bounds = array<i64: 256, 16>}]} {
    %c0 = arith.constant 0 : index
    %c0_0 = arith.constant 0 : index
    %0 = vector.load %arg1[%c0, %c0_0] : memref<256x128xbf16, #tpu.memory_space<vmem>>, vector<256x128xbf16>
    %c0_1 = arith.constant 0 : index
    %c0_2 = arith.constant 0 : index
    %1 = vector.load %arg2[%c0_1, %c0_2] : memref<128x16xbf16, #tpu.memory_space<vmem>>, vector<128x16xbf16>
    %cst = arith.constant dense<0.000000e+00> : vector<256x16xf32>
    %2 = tpu.matmul %0, %1, %cst {dimension_numbers = #tpu.dot_dimension_numbers<[1], [0], [0], [1], [0, 0, 1, 1], [], []>} : vector<256x128xbf16>, vector<128x16xbf16>, vector<256x16xf32> -> vector<256x16xf32>
    %c0_3 = arith.constant 0 : index
    %c0_4 = arith.constant 0 : index
    %3 = vector.load %arg3[%c0_3, %c0_4] : memref<1x16xf32, #tpu.memory_space<vmem>>, vector<1x16xf32>
    %4 = vector.broadcast %3 : vector<1x16xf32> to vector<256x16xf32>
    %5 = arith.addf %2, %4 : vector<256x16xf32>
    %cst_5 = arith.constant 0.000000e+00 : f32
    %6 = vector.broadcast %cst_5 : f32 to vector<256x16xf32>
    %7 = arith.maximumf %5, %6 : vector<256x16xf32>
    %8 = arith.truncf %7 : vector<256x16xf32> to vector<256x16xbf16>
    %c0_6 = arith.constant 0 : index
    %c0_7 = arith.constant 0 : index
    %9 = vector.load %arg4[%c0_6, %c0_7] : memref<256x16xbf16, #tpu.memory_space<vmem>>, vector<256x16xbf16>
    tpu.vector_store %arg4[%c0_6, %c0_7], %8 {strides = array<i32>} : memref<256x16xbf16, #tpu.memory_space<vmem>>, vector<256x16xbf16>,
    return
  }
  func.func @transform_0(%arg0: i32) -> (i32, i32) {
    %c0_i32 = arith.constant 0 : i32
    %c0_i32_0 = arith.constant 0 : i32
    return %arg0, %c0_i32 : i32, i32
  }
  func.func @transform_1(%arg0: i32) -> (i32, i32) {
    %c0_i32 = arith.constant 0 : i32
    %c0_i32_0 = arith.constant 0 : i32
    %c0_i32_1 = arith.constant 0 : i32
    return %c0_i32, %c0_i32_0 : i32, i32
  }
  func.func @transform_2(%arg0: i32) -> (i32, i32) {
    %c0_i32 = arith.constant 0 : i32
    %c0_i32_0 = arith.constant 0 : i32
    %c0_i32_1 = arith.constant 0 : i32
    return %c0_i32, %c0_i32_0 : i32, i32
  }
  func.func @transform_3(%arg0: i32) -> (i32, i32) {
    %c0_i32 = arith.constant 0 : i32
    %c0_i32_0 = arith.constant 0 : i32
    return %arg0, %c0_i32 : i32, i32
  }
}

module attributes {stable_mosaic.version = 11 : i64} {
  func.func @_mm_bias_act_kernel(%arg0: i32, %arg1: memref<256x256xbf16, #tpu.memory_space<vmem>>, %arg2: memref<256x32xbf16, #tpu.memory_space<vmem>>, %arg3: memref<1x32xf32, #tpu.memory_space<vmem>>, %arg4: memref<256x32xbf16, #tpu.memory_space<vmem>>) attributes {dimension_semantics = [#tpu.dimension_semantics<parallel>], iteration_bounds = array<i64: 7>, scalar_prefetch = 0 : i64, scratch_operands = 0 : i64, tpu.core_type = #tpu.core_type<tc>, window_params = [{transform_indices = @transform_0, window_bounds = array<i64: 256, 256>}, {pipeline_mode = #tpu.pipeline_mode<synchronous>, transform_indices = @transform_1, window_bounds = array<i64: 256, 32>}, {pipeline_mode = #tpu.pipeline_mode<synchronous>, transform_indices = @transform_2, window_bounds = array<i64: 1, 32>}, {transform_indices = @transform_3, window_bounds = array<i64: 256, 32>}]} {
    %c0 = arith.constant 0 : index
    %c0_0 = arith.constant 0 : index
    %0 = vector.load %arg1[%c0, %c0_0] : memref<256x256xbf16, #tpu.memory_space<vmem>>, vector<256x256xbf16>
    %c0_1 = arith.constant 0 : index
    %c0_2 = arith.constant 0 : index
    %1 = vector.load %arg2[%c0_1, %c0_2] : memref<256x32xbf16, #tpu.memory_space<vmem>>, vector<256x32xbf16>
    %cst = arith.constant dense<0.000000e+00> : vector<256x32xf32>
    %2 = tpu.matmul %0, %1, %cst {dimension_numbers = #tpu.dot_dimension_numbers<[1], [0], [0], [1], [0, 0, 1, 1], [], []>} : vector<256x256xbf16>, vector<256x32xbf16>, vector<256x32xf32> -> vector<256x32xf32>
    %c0_3 = arith.constant 0 : index
    %c0_4 = arith.constant 0 : index
    %3 = vector.load %arg3[%c0_3, %c0_4] : memref<1x32xf32, #tpu.memory_space<vmem>>, vector<1x32xf32>
    %4 = vector.broadcast %3 : vector<1x32xf32> to vector<256x32xf32>
    %5 = arith.addf %2, %4 : vector<256x32xf32>
    %cst_5 = arith.constant 0.000000e+00 : f32
    %6 = vector.broadcast %cst_5 : f32 to vector<256x32xf32>
    %7 = arith.maximumf %5, %6 : vector<256x32xf32>
    %8 = arith.truncf %7 : vector<256x32xf32> to vector<256x32xbf16>
    %c0_6 = arith.constant 0 : index
    %c0_7 = arith.constant 0 : index
    %9 = vector.load %arg4[%c0_6, %c0_7] : memref<256x32xbf16, #tpu.memory_space<vmem>>, vector<256x32xbf16>
    tpu.vector_store %arg4[%c0_6, %c0_7], %8 {strides = array<i32>} : memref<256x32xbf16, #tpu.memory_space<vmem>>, vector<256x32xbf16>,
    return
  }
  func.func @transform_0(%arg0: i32) -> (i32, i32) {
    %c0_i32 = arith.constant 0 : i32
    %c0_i32_0 = arith.constant 0 : i32
    return %arg0, %c0_i32 : i32, i32
  }
  func.func @transform_1(%arg0: i32) -> (i32, i32) {
    %c0_i32 = arith.constant 0 : i32
    %c0_i32_0 = arith.constant 0 : i32
    %c0_i32_1 = arith.constant 0 : i32
    return %c0_i32, %c0_i32_0 : i32, i32
  }
  func.func @transform_2(%arg0: i32) -> (i32, i32) {
    %c0_i32 = arith.constant 0 : i32
    %c0_i32_0 = arith.constant 0 : i32
    %c0_i32_1 = arith.constant 0 : i32
    return %c0_i32, %c0_i32_0 : i32, i32
  }
  func.func @transform_3(%arg0: i32) -> (i32, i32) {
    %c0_i32 = arith.constant 0 : i32
    %c0_i32_0 = arith.constant 0 : i32
    return %arg0, %c0_i32 : i32, i32
  }
}

module attributes {stable_mosaic.version = 11 : i64} {
  func.func @_mm_bias_act_kernel(%arg0: i32, %arg1: memref<2x128xbf16, #tpu.memory_space<vmem>>, %arg2: memref<128x784xbf16, #tpu.memory_space<vmem>>, %arg3: memref<1x784xf32, #tpu.memory_space<vmem>>, %arg4: memref<2x784xbf16, #tpu.memory_space<vmem>>) attributes {dimension_semantics = [#tpu.dimension_semantics<parallel>], iteration_bounds = array<i64: 1>, scalar_prefetch = 0 : i64, scratch_operands = 0 : i64, tpu.core_type = #tpu.core_type<tc>, window_params = [{transform_indices = @transform_0, window_bounds = array<i64: 2, 128>}, {pipeline_mode = #tpu.pipeline_mode<synchronous>, transform_indices = @transform_1, window_bounds = array<i64: 128, 784>}, {pipeline_mode = #tpu.pipeline_mode<synchronous>, transform_indices = @transform_2, window_bounds = array<i64: 1, 784>}, {transform_indices = @transform_3, window_bounds = array<i64: 2, 784>}]} {
    %c0 = arith.constant 0 : index
    %c0_0 = arith.constant 0 : index
    %0 = vector.load %arg1[%c0, %c0_0] : memref<2x128xbf16, #tpu.memory_space<vmem>>, vector<2x128xbf16>
    %c0_1 = arith.constant 0 : index
    %c0_2 = arith.constant 0 : index
    %1 = vector.load %arg2[%c0_1, %c0_2] : memref<128x784xbf16, #tpu.memory_space<vmem>>, vector<128x784xbf16>
    %cst = arith.constant dense<0.000000e+00> : vector<2x784xf32>
    %2 = tpu.matmul %0, %1, %cst {dimension_numbers = #tpu.dot_dimension_numbers<[1], [0], [0], [1], [0, 0, 1, 1], [], []>} : vector<2x128xbf16>, vector<128x784xbf16>, vector<2x784xf32> -> vector<2x784xf32>
    %c0_3 = arith.constant 0 : index
    %c0_4 = arith.constant 0 : index
    %3 = vector.load %arg3[%c0_3, %c0_4] : memref<1x784xf32, #tpu.memory_space<vmem>>, vector<1x784xf32>
    %4 = vector.broadcast %3 : vector<1x784xf32> to vector<2x784xf32>
    %5 = arith.addf %2, %4 : vector<2x784xf32>
    %cst_5 = arith.constant 0.000000e+00 : f32
    %6 = vector.broadcast %cst_5 : f32 to vector<2x784xf32>
    %7 = arith.maximumf %5, %6 : vector<2x784xf32>
    %8 = arith.truncf %7 : vector<2x784xf32> to vector<2x784xbf16>
    %c0_6 = arith.constant 0 : index
    %c0_7 = arith.constant 0 : index
    %9 = vector.load %arg4[%c0_6, %c0_7] : memref<2x784xbf16, #tpu.memory_space<vmem>>, vector<2x784xbf16>
    tpu.vector_store %arg4[%c0_6, %c0_7], %8 {strides = array<i32>} : memref<2x784xbf16, #tpu.memory_space<vmem>>, vector<2x784xbf16>,
    return
  }
  func.func @transform_0(%arg0: i32) -> (i32, i32) {
    %c0_i32 = arith.constant 0 : i32
    %c0_i32_0 = arith.constant 0 : i32
    return %arg0, %c0_i32 : i32, i32
  }
  func.func @transform_1(%arg0: i32) -> (i32, i32) {
    %c0_i32 = arith.constant 0 : i32
    %c0_i32_0 = arith.constant 0 : i32
    %c0_i32_1 = arith.constant 0 : i32
    return %c0_i32, %c0_i32_0 : i32, i32
  }
  func.func @transform_2(%arg0: i32) -> (i32, i32) {
    %c0_i32 = arith.constant 0 : i32
    %c0_i32_0 = arith.constant 0 : i32
    %c0_i32_1 = arith.constant 0 : i32
    return %c0_i32, %c0_i32_0 : i32, i32
  }
  func.func @transform_3(%arg0: i32) -> (i32, i32) {
    %c0_i32 = arith.constant 0 : i32
    %c0_i32_0 = arith.constant 0 : i32
    return %arg0, %c0_i32 : i32, i32
  }
}

module attributes {stable_mosaic.version = 11 : i64} {
  func.func @_mm_bias_act_kernel(%arg0: i32, %arg1: memref<256x384xbf16, #tpu.memory_space<vmem>>, %arg2: memref<384x32xbf16, #tpu.memory_space<vmem>>, %arg3: memref<1x32xf32, #tpu.memory_space<vmem>>, %arg4: memref<256x32xbf16, #tpu.memory_space<vmem>>) attributes {dimension_semantics = [#tpu.dimension_semantics<parallel>], iteration_bounds = array<i64: 6>, scalar_prefetch = 0 : i64, scratch_operands = 0 : i64, tpu.core_type = #tpu.core_type<tc>, window_params = [{transform_indices = @transform_0, window_bounds = array<i64: 256, 384>}, {pipeline_mode = #tpu.pipeline_mode<synchronous>, transform_indices = @transform_1, window_bounds = array<i64: 384, 32>}, {pipeline_mode = #tpu.pipeline_mode<synchronous>, transform_indices = @transform_2, window_bounds = array<i64: 1, 32>}, {transform_indices = @transform_3, window_bounds = array<i64: 256, 32>}]} {
    %c0 = arith.constant 0 : index
    %c0_0 = arith.constant 0 : index
    %0 = vector.load %arg1[%c0, %c0_0] : memref<256x384xbf16, #tpu.memory_space<vmem>>, vector<256x384xbf16>
    %c0_1 = arith.constant 0 : index
    %c0_2 = arith.constant 0 : index
    %1 = vector.load %arg2[%c0_1, %c0_2] : memref<384x32xbf16, #tpu.memory_space<vmem>>, vector<384x32xbf16>
    %cst = arith.constant dense<0.000000e+00> : vector<256x32xf32>
    %2 = tpu.matmul %0, %1, %cst {dimension_numbers = #tpu.dot_dimension_numbers<[1], [0], [0], [1], [0, 0, 1, 1], [], []>} : vector<256x384xbf16>, vector<384x32xbf16>, vector<256x32xf32> -> vector<256x32xf32>
    %c0_3 = arith.constant 0 : index
    %c0_4 = arith.constant 0 : index
    %3 = vector.load %arg3[%c0_3, %c0_4] : memref<1x32xf32, #tpu.memory_space<vmem>>, vector<1x32xf32>
    %4 = vector.broadcast %3 : vector<1x32xf32> to vector<256x32xf32>
    %5 = arith.addf %2, %4 : vector<256x32xf32>
    %cst_5 = arith.constant 0.000000e+00 : f32
    %6 = vector.broadcast %cst_5 : f32 to vector<256x32xf32>
    %7 = arith.maximumf %5, %6 : vector<256x32xf32>
    %8 = arith.truncf %7 : vector<256x32xf32> to vector<256x32xbf16>
    %c0_6 = arith.constant 0 : index
    %c0_7 = arith.constant 0 : index
    %9 = vector.load %arg4[%c0_6, %c0_7] : memref<256x32xbf16, #tpu.memory_space<vmem>>, vector<256x32xbf16>
    tpu.vector_store %arg4[%c0_6, %c0_7], %8 {strides = array<i32>} : memref<256x32xbf16, #tpu.memory_space<vmem>>, vector<256x32xbf16>,
    return
  }
  func.func @transform_0(%arg0: i32) -> (i32, i32) {
    %c0_i32 = arith.constant 0 : i32
    %c0_i32_0 = arith.constant 0 : i32
    return %arg0, %c0_i32 : i32, i32
  }
  func.func @transform_1(%arg0: i32) -> (i32, i32) {
    %c0_i32 = arith.constant 0 : i32
    %c0_i32_0 = arith.constant 0 : i32
    %c0_i32_1 = arith.constant 0 : i32
    return %c0_i32, %c0_i32_0 : i32, i32
  }
  func.func @transform_2(%arg0: i32) -> (i32, i32) {
    %c0_i32 = arith.constant 0 : i32
    %c0_i32_0 = arith.constant 0 : i32
    %c0_i32_1 = arith.constant 0 : i32
    return %c0_i32, %c0_i32_0 : i32, i32
  }
  func.func @transform_3(%arg0: i32) -> (i32, i32) {
    %c0_i32 = arith.constant 0 : i32
    %c0_i32_0 = arith.constant 0 : i32
    return %arg0, %c0_i32 : i32, i32
  }
}

module attributes {stable_mosaic.version = 11 : i64} {
  func.func @_mm_bias_act_kernel(%arg0: i32, %arg1: memref<256x384xbf16, #tpu.memory_space<vmem>>, %arg2: memref<384x16xbf16, #tpu.memory_space<vmem>>, %arg3: memref<1x16xf32, #tpu.memory_space<vmem>>, %arg4: memref<256x16xbf16, #tpu.memory_space<vmem>>) attributes {dimension_semantics = [#tpu.dimension_semantics<parallel>], iteration_bounds = array<i64: 5>, scalar_prefetch = 0 : i64, scratch_operands = 0 : i64, tpu.core_type = #tpu.core_type<tc>, window_params = [{transform_indices = @transform_0, window_bounds = array<i64: 256, 384>}, {pipeline_mode = #tpu.pipeline_mode<synchronous>, transform_indices = @transform_1, window_bounds = array<i64: 384, 16>}, {pipeline_mode = #tpu.pipeline_mode<synchronous>, transform_indices = @transform_2, window_bounds = array<i64: 1, 16>}, {transform_indices = @transform_3, window_bounds = array<i64: 256, 16>}]} {
    %c0 = arith.constant 0 : index
    %c0_0 = arith.constant 0 : index
    %0 = vector.load %arg1[%c0, %c0_0] : memref<256x384xbf16, #tpu.memory_space<vmem>>, vector<256x384xbf16>
    %c0_1 = arith.constant 0 : index
    %c0_2 = arith.constant 0 : index
    %1 = vector.load %arg2[%c0_1, %c0_2] : memref<384x16xbf16, #tpu.memory_space<vmem>>, vector<384x16xbf16>
    %cst = arith.constant dense<0.000000e+00> : vector<256x16xf32>
    %2 = tpu.matmul %0, %1, %cst {dimension_numbers = #tpu.dot_dimension_numbers<[1], [0], [0], [1], [0, 0, 1, 1], [], []>} : vector<256x384xbf16>, vector<384x16xbf16>, vector<256x16xf32> -> vector<256x16xf32>
    %c0_3 = arith.constant 0 : index
    %c0_4 = arith.constant 0 : index
    %3 = vector.load %arg3[%c0_3, %c0_4] : memref<1x16xf32, #tpu.memory_space<vmem>>, vector<1x16xf32>
    %4 = vector.broadcast %3 : vector<1x16xf32> to vector<256x16xf32>
    %5 = arith.addf %2, %4 : vector<256x16xf32>
    %cst_5 = arith.constant 0.000000e+00 : f32
    %6 = vector.broadcast %cst_5 : f32 to vector<256x16xf32>
    %7 = arith.maximumf %5, %6 : vector<256x16xf32>
    %8 = arith.truncf %7 : vector<256x16xf32> to vector<256x16xbf16>
    %c0_6 = arith.constant 0 : index
    %c0_7 = arith.constant 0 : index
    %9 = vector.load %arg4[%c0_6, %c0_7] : memref<256x16xbf16, #tpu.memory_space<vmem>>, vector<256x16xbf16>
    tpu.vector_store %arg4[%c0_6, %c0_7], %8 {strides = array<i32>} : memref<256x16xbf16, #tpu.memory_space<vmem>>, vector<256x16xbf16>,
    return
  }
  func.func @transform_0(%arg0: i32) -> (i32, i32) {
    %c0_i32 = arith.constant 0 : i32
    %c0_i32_0 = arith.constant 0 : i32
    return %arg0, %c0_i32 : i32, i32
  }
  func.func @transform_1(%arg0: i32) -> (i32, i32) {
    %c0_i32 = arith.constant 0 : i32
    %c0_i32_0 = arith.constant 0 : i32
    %c0_i32_1 = arith.constant 0 : i32
    return %c0_i32, %c0_i32_0 : i32, i32
  }
  func.func @transform_2(%arg0: i32) -> (i32, i32) {
    %c0_i32 = arith.constant 0 : i32
    %c0_i32_0 = arith.constant 0 : i32
    %c0_i32_1 = arith.constant 0 : i32
    return %c0_i32, %c0_i32_0 : i32, i32
  }
  func.func @transform_3(%arg0: i32) -> (i32, i32) {
    %c0_i32 = arith.constant 0 : i32
    %c0_i32_0 = arith.constant 0 : i32
    return %arg0, %c0_i32 : i32, i32
  }
}

module attributes {stable_mosaic.version = 11 : i64} {
  func.func @_qheads_kernel(%arg0: i32, %arg1: i32, %arg2: memref<2x2304xbf16, #tpu.memory_space<vmem>>, %arg3: memref<1x2304x128xbf16, #tpu.memory_space<vmem>>, %arg4: memref<1x1x128xf32, #tpu.memory_space<vmem>>, %arg5: memref<1x128x128xf32, #tpu.memory_space<vmem>>, %arg6: memref<1x1x128xf32, #tpu.memory_space<vmem>>, %arg7: memref<1x128x1xf32, #tpu.memory_space<vmem>>, %arg8: memref<1x1x1xf32, #tpu.memory_space<vmem>>, %arg9: memref<1x2x1xf32, #tpu.memory_space<vmem>>, %arg10: memref<2x128xf32, #tpu.memory_space<vmem>>) attributes {dimension_semantics = [#tpu.dimension_semantics<parallel>, #tpu.dimension_semantics<arbitrary>], iteration_bounds = array<i64: 2, 4>, scalar_prefetch = 0 : i64, scratch_operands = 1 : i64, tpu.core_type = #tpu.core_type<tc>, window_params = [{transform_indices = @transform_0, window_bounds = array<i64: 2, 2304>}, {transform_indices = @transform_1, window_bounds = array<i64: 1, 2304, 128>}, {transform_indices = @transform_2, window_bounds = array<i64: 1, 1, 128>}, {transform_indices = @transform_3, window_bounds = array<i64: 1, 128, 128>}, {transform_indices = @transform_4, window_bounds = array<i64: 1, 1, 128>}, {transform_indices = @transform_5, window_bounds = array<i64: 1, 128, 1>}, {transform_indices = @transform_6, window_bounds = array<i64: 1, 1, 1>}, {transform_indices = @transform_7, window_bounds = array<i64: 1, 2, 1>}]} {
    %c0_i32 = arith.constant 0 : i32
    %0 = arith.cmpi eq, %arg1, %c0_i32 : i32
    %1 = arith.extui %0 : i1 to i32
    %c0_i32_0 = arith.constant 0 : i32
    %2 = arith.cmpi ne, %1, %c0_i32_0 : i32
    scf.if %2 {
      %cst_10 = arith.constant 0.000000e+00 : f32
      %13 = vector.broadcast %cst_10 : f32 to vector<2x128xf32>
      %c0_11 = arith.constant 0 : index
      %c0_12 = arith.constant 0 : index
      %14 = vector.load %arg10[%c0_11, %c0_12] : memref<2x128xf32, #tpu.memory_space<vmem>>, vector<2x128xf32>
      tpu.vector_store %arg10[%c0_11, %c0_12], %13 {strides = array<i32>} : memref<2x128xf32, #tpu.memory_space<vmem>>, vector<2x128xf32>,
    } else {
    }
    %c0 = arith.constant 0 : index
    %c0_1 = arith.constant 0 : index
    %3 = vector.load %arg10[%c0, %c0_1] : memref<2x128xf32, #tpu.memory_space<vmem>>, vector<2x128xf32>
    %c0_2 = arith.constant 0 : index
    %c0_3 = arith.constant 0 : index
    %4 = vector.load %arg2[%c0_2, %c0_3] : memref<2x2304xbf16, #tpu.memory_space<vmem>>, vector<2x2304xbf16>
    %c0_4 = arith.constant 0 : index
    %c0_5 = arith.constant 0 : index
    %c0_6 = arith.constant 0 : index
    %5 = vector.load %arg3[%c0_4, %c0_5, %c0_6] : memref<1x2304x128xbf16, #tpu.memory_space<vmem>>, vector<1x2304x128xbf16>
    %6 = vector.shape_cast %5 : vector<1x2304x128xbf16> to vector<2304x128xbf16>
    %cst = arith.constant dense<0.000000e+00> : vector<2x128xf32>
    %7 = tpu.matmul %4, %6, %cst {dimension_numbers = #tpu.dot_dimension_numbers<[1], [0], [0], [1], [0, 0, 1, 1], [], []>} : vector<2x2304xbf16>, vector<2304x128xbf16>, vector<2x128xf32> -> vector<2x128xf32>
    %8 = arith.addf %3, %7 : vector<2x128xf32>
    %c0_7 = arith.constant 0 : index
    %c0_8 = arith.constant 0 : index
    %9 = vector.load %arg10[%c0_7, %c0_8] : memref<2x128xf32, #tpu.memory_space<vmem>>, vector<2x128xf32>
    tpu.vector_store %arg10[%c0_7, %c0_8], %8 {strides = array<i32>} : memref<2x128xf32, #tpu.memory_space<vmem>>, vector<2x128xf32>,
    %c3_i32 = arith.constant 3 : i32
    %10 = arith.cmpi eq, %arg1, %c3_i32 : i32
    %11 = arith.extui %10 : i1 to i32
    %c0_i32_9 = arith.constant 0 : i32
    %12 = arith.cmpi ne, %11, %c0_i32_9 : i32
    scf.if %12 {
      %c0_10 = arith.constant 0 : index
      %c0_11 = arith.constant 0 : index
      %13 = vector.load %arg10[%c0_10, %c0_11] : memref<2x128xf32, #tpu.memory_space<vmem>>, vector<2x128xf32>
      %c0_12 = arith.constant 0 : index
      %c0_13 = arith.constant 0 : index
      %c0_14 = arith.constant 0 : index
      %14 = vector.load %arg4[%c0_12, %c0_13, %c0_14] : memref<1x1x128xf32, #tpu.memory_space<vmem>>, vector<1x1x128xf32>
      %15 = vector.shape_cast %14 : vector<1x1x128xf32> to vector<1x128xf32>
      %16 = vector.broadcast %15 : vector<1x128xf32> to vector<2x128xf32>
      %17 = arith.addf %13, %16 : vector<2x128xf32>
      %cst_15 = arith.constant 0.000000e+00 : f32
      %18 = vector.broadcast %cst_15 : f32 to vector<2x128xf32>
      %19 = arith.maximumf %17, %18 : vector<2x128xf32>
      %c0_16 = arith.constant 0 : index
      %c0_17 = arith.constant 0 : index
      %c0_18 = arith.constant 0 : index
      %20 = vector.load %arg5[%c0_16, %c0_17, %c0_18] : memref<1x128x128xf32, #tpu.memory_space<vmem>>, vector<1x128x128xf32>
      %21 = vector.shape_cast %20 : vector<1x128x128xf32> to vector<128x128xf32>
      %cst_19 = arith.constant dense<0.000000e+00> : vector<2x128xf32>
      %22 = tpu.matmul %19, %21, %cst_19 {dimension_numbers = #tpu.dot_dimension_numbers<[1], [0], [0], [1], [0, 0, 1, 1], [], []>} : vector<2x128xf32>, vector<128x128xf32>, vector<2x128xf32> -> vector<2x128xf32>
      %c0_20 = arith.constant 0 : index
      %c0_21 = arith.constant 0 : index
      %c0_22 = arith.constant 0 : index
      %23 = vector.load %arg6[%c0_20, %c0_21, %c0_22] : memref<1x1x128xf32, #tpu.memory_space<vmem>>, vector<1x1x128xf32>
      %24 = vector.shape_cast %23 : vector<1x1x128xf32> to vector<1x128xf32>
      %25 = vector.broadcast %24 : vector<1x128xf32> to vector<2x128xf32>
      %26 = arith.addf %22, %25 : vector<2x128xf32>
      %cst_23 = arith.constant 0.000000e+00 : f32
      %27 = vector.broadcast %cst_23 : f32 to vector<2x128xf32>
      %28 = arith.maximumf %26, %27 : vector<2x128xf32>
      %c0_24 = arith.constant 0 : index
      %c0_25 = arith.constant 0 : index
      %c0_26 = arith.constant 0 : index
      %29 = vector.load %arg7[%c0_24, %c0_25, %c0_26] : memref<1x128x1xf32, #tpu.memory_space<vmem>>, vector<1x128x1xf32>
      %30 = vector.shape_cast %29 : vector<1x128x1xf32> to vector<128x1xf32>
      %cst_27 = arith.constant dense<0.000000e+00> : vector<2x1xf32>
      %31 = tpu.matmul %28, %30, %cst_27 {dimension_numbers = #tpu.dot_dimension_numbers<[1], [0], [0], [1], [0, 0, 1, 1], [], []>} : vector<2x128xf32>, vector<128x1xf32>, vector<2x1xf32> -> vector<2x1xf32>
      %c0_28 = arith.constant 0 : index
      %c0_29 = arith.constant 0 : index
      %c0_30 = arith.constant 0 : index
      %32 = vector.load %arg8[%c0_28, %c0_29, %c0_30] : memref<1x1x1xf32, #tpu.memory_space<vmem>>, vector<1x1x1xf32>
      %33 = vector.shape_cast %32 : vector<1x1x1xf32> to vector<1x1xf32>
      %34 = vector.broadcast %33 : vector<1x1xf32> to vector<2x1xf32>
      %35 = arith.addf %31, %34 : vector<2x1xf32>
      %c0_31 = arith.constant 0 : index
      %c0_32 = arith.constant 0 : index
      %c0_33 = arith.constant 0 : index
      %36 = vector.load %arg9[%c0_31, %c0_32, %c0_33] : memref<1x2x1xf32, #tpu.memory_space<vmem>>, vector<1x2x1xf32>
      %37 = vector.shape_cast %36 : vector<1x2x1xf32> to vector<2x1xf32>
      %38 = vector.shape_cast %35 : vector<2x1xf32> to vector<1x2x1xf32>
      tpu.vector_store %arg9[%c0_31, %c0_32, %c0_33], %38 {strides = array<i32>} : memref<1x2x1xf32, #tpu.memory_space<vmem>>, vector<1x2x1xf32>,
    } else {
    }
    return
  }
  func.func @transform_0(%arg0: i32, %arg1: i32) -> (i32, i32) {
    %c0_i32 = arith.constant 0 : i32
    %c0_i32_0 = arith.constant 0 : i32
    return %c0_i32, %arg1 : i32, i32
  }
  func.func @transform_1(%arg0: i32, %arg1: i32) -> (i32, i32, i32) {
    %c0_i32 = arith.constant 0 : i32
    %c0_i32_0 = arith.constant 0 : i32
    return %arg0, %arg1, %c0_i32 : i32, i32, i32
  }
  func.func @transform_2(%arg0: i32, %arg1: i32) -> (i32, i32, i32) {
    %c0_i32 = arith.constant 0 : i32
    %c0_i32_0 = arith.constant 0 : i32
    %c0_i32_1 = arith.constant 0 : i32
    return %arg0, %c0_i32, %c0_i32_0 : i32, i32, i32
  }
  func.func @transform_3(%arg0: i32, %arg1: i32) -> (i32, i32, i32) {
    %c0_i32 = arith.constant 0 : i32
    %c0_i32_0 = arith.constant 0 : i32
    %c0_i32_1 = arith.constant 0 : i32
    return %arg0, %c0_i32, %c0_i32_0 : i32, i32, i32
  }
  func.func @transform_4(%arg0: i32, %arg1: i32) -> (i32, i32, i32) {
    %c0_i32 = arith.constant 0 : i32
    %c0_i32_0 = arith.constant 0 : i32
    %c0_i32_1 = arith.constant 0 : i32
    return %arg0, %c0_i32, %c0_i32_0 : i32, i32, i32
  }
  func.func @transform_5(%arg0: i32, %arg1: i32) -> (i32, i32, i32) {
    %c0_i32 = arith.constant 0 : i32
    %c0_i32_0 = arith.constant 0 : i32
    %c0_i32_1 = arith.constant 0 : i32
    return %arg0, %c0_i32, %c0_i32_0 : i32, i32, i32
  }
  func.func @transform_6(%arg0: i32, %arg1: i32) -> (i32, i32, i32) {
    %c0_i32 = arith.constant 0 : i32
    %c0_i32_0 = arith.constant 0 : i32
    %c0_i32_1 = arith.constant 0 : i32
    return %arg0, %c0_i32, %c0_i32_0 : i32, i32, i32
  }
  func.func @transform_7(%arg0: i32, %arg1: i32) -> (i32, i32, i32) {
    %c0_i32 = arith.constant 0 : i32
    %c0_i32_0 = arith.constant 0 : i32
    %c0_i32_1 = arith.constant 0 : i32
    return %arg0, %c0_i32, %c0_i32_0 : i32, i32, i32
  }
}

</mosaic_0001>

<llo_original>
// kernel: qnet_forward.6
$region0: #{qnet_forward.6}
  #allocation0 [shape = 'u32[]', space=smem, size = 0x4, offset = 0x4, fixed_abs, tag = 'smem constant byte address 0x4 - core index']
  #allocation1 [shape = 'u32[144,128]{1,0:T(1,128)}', space=vmem, size = 0x12000, scoped, tag = 'internal scratch']
  %s0 = inlined_call_operand.vmem [shape: bf16[1922,128], index: 0, kind: input, shape index: {}]
  %s1 = inlined_call_operand.vmem [shape: bf16[128,16], index: 1, kind: input, shape index: {}]
  %s2 = inlined_call_operand.vmem [shape: f32[1,16], index: 2, kind: input, shape index: {}]
  %s3 = inlined_call_operand.vmem [shape: bf16[1922,16], index: 3, kind: output, shape index: {}]
  %s4 = sld [smem:[#allocation0]]
  $region89: #{qnet_forward.6} parent=0
    _
  %s6 = ssub.s32 1, %s4
  %s7 = scalar_select 0, %s6, %s4
  $region1: #{qnet_forward.6} parent=0
    #allocation2 [shape = 'u8[131072]{0}', space=vmem, size = 0x20000, scoped, tag = 'output window, operand 0']
    loop: start=0, step=1, limit=10
    $region2: #{qnet_forward.6} parent=1 // loop_pre_header
      _
    $region3: #{qnet_forward.6} parent=1 // loop_header
      %s9 = sphi 0, %s13
      %p10 = scmp.ge.s32.totalorder %s9, 10
      %s19 = sphi 0, %s21
      %s22 = sphi 0, %s19
      %s23 = sphi 0, %s22
      %s39 = sphi 0, %s23
      %s43 = sphi 0, %s43
      %s45 = sphi 0, %s43
      %s46 = sphi 0, %s45
      %s60 = sphi 0, %s46
      %s64 = sphi 0, %s64
      %s66 = sphi 0, %s64
      %s67 = sphi 0, %s66
      %s81 = sphi 0, %s67
      %s87 = sphi 0, %s89
      %s90 = sphi 0, %s87
      %s91 = sphi 0, %s90
      %s107 = sphi 0, %s91
    $region4: #{qnet_forward.6} parent=1 // loop_header_branch
      %12 = sbr.rel (%p10) target = $region8
    $region5: #{qnet_forward.6} parent=1 // loop_body
      %s14 = ssub.s32 %s9, 1
      %s15 = ssub.s32 %s9, 2
      %s16 = sadd.s32 %s9, 1
      %s17 = ssub.s32 %s9, %s16
      %p18 = scmp.eq.s32.totalorder %s17, 0
      %s20 = sadd.s32 %s19, 1
      %s21 = scalar_select %p18, %s19, %s20
      %p24 = pneg %p18
      %p25 = scmp.eq.s32.totalorder %s9, 7
      %p26 = por %p24, %p25
      %p27 = scmp.ne.s32.totalorder %s19, %s22
      %p28 = scmp.eq.s32.totalorder %s9, 0
      %p29 = por %p27, %p28
      %p30 = scmp.ne.s32.totalorder %s19, %s22
      %p31 = scmp.eq.s32.totalorder %s14, 7
      %p32 = por %p30, %p31
      %p33 = scmp.ne.s32.totalorder %s22, %s23
      %p34 = scmp.eq.s32.totalorder %s14, 0
      %p35 = por %p33, %p34
      %p36 = scmp.ne.s32.totalorder %s22, %s23
      %p37 = scmp.eq.s32.totalorder %s15, 7
      %p38 = por %p36, %p37
      %p40 = scmp.ne.s32.totalorder %s23, %s39
      %p41 = scmp.eq.s32.totalorder %s15, 0
      %p42 = por %p40, %p41
      %s44 = sadd.s32 %s43, 1
      %p47 = scmp.eq.s32.totalorder %s9, 7
      %p48 = scmp.ne.s32.totalorder %s43, %s45
      %p49 = scmp.eq.s32.totalorder %s9, 0
      %p50 = por %p48, %p49
      %p51 = scmp.ne.s32.totalorder %s43, %s45
      %p52 = scmp.eq.s32.totalorder %s14, 7
      %p53 = por %p51, %p52
      %p54 = scmp.ne.s32.totalorder %s45, %s46
      %p55 = scmp.eq.s32.totalorder %s14, 0
      %p56 = por %p54, %p55
      %p57 = scmp.ne.s32.totalorder %s45, %s46
      %p58 = scmp.eq.s32.totalorder %s15, 7
      %p59 = por %p57, %p58
      %p61 = scmp.ne.s32.totalorder %s46, %s60
      %p62 = scmp.eq.s32.totalorder %s15, 0
      %p63 = por %p61, %p62
      %s65 = sadd.s32 %s64, 1
      %p68 = scmp.eq.s32.totalorder %s9, 7
      %p69 = scmp.ne.s32.totalorder %s64, %s66
      %p70 = scmp.eq.s32.totalorder %s9, 0
      %p71 = por %p69, %p70
      %p72 = scmp.ne.s32.totalorder %s64, %s66
      %p73 = scmp.eq.s32.totalorder %s14, 7
      %p74 = por %p72, %p73
      %p75 = scmp.ne.s32.totalorder %s66, %s67
      %p76 = scmp.eq.s32.totalorder %s14, 0
      %p77 = por %p75, %p76
      %p78 = scmp.ne.s32.totalorder %s66, %s67
      %p79 = scmp.eq.s32.totalorder %s15, 7
      %p80 = por %p78, %p79
      %p82 = scmp.ne.s32.totalorder %s67, %s81
      %p83 = scmp.eq.s32.totalorder %s15, 0
      %p84 = por %p82, %p83
      %s85 = ssub.s32 %s9, %s16
      %p86 = scmp.eq.s32.totalorder %s85, 0
      %s88 = sadd.s32 %s87, 1
      %s89 = scalar_select %p86, %s87, %s88
      %p92 = pneg %p86
      %p93 = scmp.eq.s32.totalorder %s9, 7
      %p94 = por %p92, %p93
      %p95 = scmp.ne.s32.totalorder %s87, %s90
      %p96 = scmp.eq.s32.totalorder %s9, 0
      %p97 = por %p95, %p96
      %p98 = scmp.ne.s32.totalorder %s87, %s90
      %p99 = scmp.eq.s32.totalorder %s14, 7
      %p100 = por %p98, %p99
      %p101 = scmp.ne.s32.totalorder %s90, %s91
      %p102 = scmp.eq.s32.totalorder %s14, 0
      %p103 = por %p101, %p102
      %p104 = scmp.ne.s32.totalorder %s90, %s91
      %p105 = scmp.eq.s32.totalorder %s15, 7
      %p106 = por %p104, %p105
      %p108 = scmp.ne.s32.totalorder %s91, %s107
      %p109 = scmp.eq.s32.totalorder %s15, 0
      %p110 = por %p108, %p109
      %p111 = scmp.le.s32.totalorder 1, %s9
      %p112 = scmp.lt.s32.totalorder %s9, 9
      %p113 = pnand %p111, %p112
      %p114 = pneg %p113
      // Predicated region
      $region9: #{qnet_forward.6} parent=5 // pred_check
        _
      $region10: #{qnet_forward.6} parent=5 // pred_check_branch
        %116 = sbr.rel (%p113) target = $region12
      $region11: #{qnet_forward.6} parent=5 // pred_region
        %s117 = ssub.s32 %s9, 1
        // Predicated region
        $region13: #{qnet_forward.6} parent=11 // pred_check
          %p118 = pneg %p56
        $region14: #{qnet_forward.6} parent=11 // pred_check_branch
          %120 = sbr.rel (%p118) target = $region16
        $region15: #{qnet_forward.6} parent=11 // pred_region
          _
        $region16: #{qnet_forward.6} parent=11 // pred_fallthru
          _
        // Predicated region
        $region17: #{qnet_forward.6} parent=11 // pred_check
          %p121 = pneg %p77
        $region18: #{qnet_forward.6} parent=11 // pred_check_branch
          %123 = sbr.rel (%p121) target = $region20
        $region19: #{qnet_forward.6} parent=11 // pred_region
          _
        $region20: #{qnet_forward.6} parent=11 // pred_fallthru
          _
      $region12: #{qnet_forward.6} parent=5 // pred_fallthru
        _
      %p124 = scmp.lt.s32.totalorder %s9, 8
      // Predicated region
      $region21: #{qnet_forward.6} parent=5 // pred_check
        %p125 = pneg %p124
      $region22: #{qnet_forward.6} parent=5 // pred_check_branch
        %127 = sbr.rel (%p125) target = $region24
      $region23: #{qnet_forward.6} parent=5 // pred_region
        // Predicated region
        $region25: #{qnet_forward.6} parent=23 // pred_check
          %p128 = pneg %p29
        $region26: #{qnet_forward.6} parent=23 // pred_check_branch
          %130 = sbr.rel (%p128) target = $region28
        $region27: #{qnet_forward.6} parent=23 // pred_region
          %s131 = smul.u32 32, %s9
          %s132 = ssub.s32 241, %s131
          %p133 = scmp.lt.s32.totalorder %s132, 32
          %s134 = scalar_select %p133, %s132, 32
          %s135 = smul.u32 64, %s134
          %p136 = scmp.lt.s32.totalorder %s131, 240
          %s137 = scalar_select %p136, %s131, 240
          %s138 = smul.addr %s137, 4
          %s139 = scalar_lea.vmem %s0, %s138
          %s140 = smul.u32 32, %s9
          %s141 = ssub.s32 241, %s140
          %p142 = scmp.lt.s32.totalorder %s141, 32
          %s143 = scalar_select %p142, %s141, 32
          %s144 = smul.u32 64, %s143
        $region28: #{qnet_forward.6} parent=23 // pred_fallthru
          _
      $region24: #{qnet_forward.6} parent=5 // pred_fallthru
        _
      %p145 = scmp.le.s32.totalorder 1, %s9
      %p146 = scmp.lt.s32.totalorder %s9, 9
      %p147 = pnand %p145, %p146
      %p148 = pneg %p147
      // Predicated region
      $region29: #{qnet_forward.6} parent=5 // pred_check
        _
      $region30: #{qnet_forward.6} parent=5 // pred_check_branch
        %150 = sbr.rel (%p147) target = $region32
      $region31: #{qnet_forward.6} parent=5 // pred_region
        %s151 = ssub.s32 %s9, 1
        %s152 = smul.u32 32, %s14
        %s153 = ssub.s32 241, %s152
        %p154 = scmp.lt.s32.totalorder %s153, 32
        %s155 = scalar_select %p154, %s153, 32
        %s156 = smul.u32 64, %s155
        %p157 = scmp.lt.s32.totalorder %s152, 240
        %s158 = scalar_select %p157, %s152, 240
        %s159 = smul.addr %s158, 4
        %s160 = scalar_lea.vmem %s0, %s159
        %p161 = pneg %p35
        %p162 = pneg %p32
        %p163 = pneg %p56
        %p164 = pneg %p53
        %p165 = pneg %p77
        %p166 = pneg %p74
        %p167 = pneg %p103
        %p168 = pneg %p100
        %s169 = sand.u32 %s90, 1
        %s170 = sand.u32 %s90, 1
        %s171 = smul.addr %s170, 128
        %s172 = scalar_lea.vmem [#allocation2], %s171
        %s173 = smul.u32 32, %s14
        %s174 = ssub.s32 241, %s173
        %p175 = scmp.lt.s32.totalorder %s174, 32
        %s176 = scalar_select %p175, %s174, 32
        %s177 = smul.u32 64, %s176
        %p178 = scmp.lt.s32.totalorder %s173, 240
        %s179 = scalar_select %p178, %s173, 240
        %s180 = smul.addr %s179, 4
        %s181 = scalar_lea.vmem %s0, %s180
        %s182 = smul.u32 32, %s14
        %s183 = ssub.s32 241, %s182
        %p184 = scmp.lt.s32.totalorder %s183, 32
        %s185 = scalar_select %p184, %s183, 32
        %s186 = smul.u32 64, %s185
        %s187 = smul.u32 32, %s14
        %s188 = ssub.s32 241, %s187
        %p189 = scmp.lt.s32.totalorder %s188, 32
        %s190 = scalar_select %p189, %s188, 32
        %s191 = smul.u32 64, %s190
        %v193 = vld [vmem:[%s181] sm:$0xf]
        %v194 = vld [vmem:[%s181 + $0x4] sm:$0xf]
        %v195 = vld [vmem:[%s181 + $0x8] sm:$0xf]
        %v196 = vld [vmem:[%s181 + $0xc] sm:$0xf]
        %v197 = vld [vmem:[%s181 + $0x10] sm:$0xf]
        %v198 = vld [vmem:[%s181 + $0x14] sm:$0xf]
        %v199 = vld [vmem:[%s181 + $0x18] sm:$0xf]
        %v200 = vld [vmem:[%s181 + $0x1c] sm:$0xf]
        %v201 = vld [vmem:[%s181 + $0x20] sm:$0xf]
        %v202 = vld [vmem:[%s181 + $0x24] sm:$0xf]
        %v203 = vld [vmem:[%s181 + $0x28] sm:$0xf]
        %v204 = vld [vmem:[%s181 + $0x2c] sm:$0xf]
        %v205 = vld [vmem:[%s181 + $0x30] sm:$0xf]
        %v206 = vld [vmem:[%s181 + $0x34] sm:$0xf]
        %v207 = vld [vmem:[%s181 + $0x38] sm:$0xf]
        %v208 = vld [vmem:[%s181 + $0x3c] sm:$0xf]
        %v209 = vld [vmem:[%s181 + $0x40] sm:$0xf]
        %v210 = vld [vmem:[%s181 + $0x44] sm:$0xf]
        %v211 = vld [vmem:[%s181 + $0x48] sm:$0xf]
        %v212 = vld [vmem:[%s181 + $0x4c] sm:$0xf]
        %v213 = vld [vmem:[%s181 + $0x50] sm:$0xf]
        %v214 = vld [vmem:[%s181 + $0x54] sm:$0xf]
        %v215 = vld [vmem:[%s181 + $0x58] sm:$0xf]
        %v216 = vld [vmem:[%s181 + $0x5c] sm:$0xf]
        %v217 = vld [vmem:[%s181 + $0x60] sm:$0xf]
        %v218 = vld [vmem:[%s181 + $0x64] sm:$0xf]
        %v219 = vld [vmem:[%s181 + $0x68] sm:$0xf]
        %v220 = vld [vmem:[%s181 + $0x6c] sm:$0xf]
        %v221 = vld [vmem:[%s181 + $0x70] sm:$0xf]
        %v222 = vld [vmem:[%s181 + $0x74] sm:$0xf]
        %v223 = vld [vmem:[%s181 + $0x78] sm:$0xf]
        %v224 = vld [vmem:[%s181 + $0x7c] sm:$0xf]
        %v225 = vld [vmem:[%s1] sm:$0xf]
        %v226 = vld [vmem:[%s1 + $0x4] sm:$0xf]
        %v227 = vld [vmem:[%s1 + $0x8] sm:$0xf]
        %v228 = vld [vmem:[%s1 + $0xc] sm:$0xf]
        %v229 = vld [vmem:[%s1 + $0x10] sm:$0xf]
        %v230 = vld [vmem:[%s1 + $0x14] sm:$0xf]
        %v231 = vld [vmem:[%s1 + $0x18] sm:$0xf]
        %v232 = vld [vmem:[%s1 + $0x1c] sm:$0xf]
        %v233 = vld [vmem:[%s1 + $0x20] sm:$0xf]
        %v234 = vld [vmem:[%s1 + $0x24] sm:$0xf]
        %v235 = vld [vmem:[%s1 + $0x28] sm:$0xf]
        %v236 = vld [vmem:[%s1 + $0x2c] sm:$0xf]
        %v237 = vld [vmem:[%s1 + $0x30] sm:$0xf]
        %v238 = vld [vmem:[%s1 + $0x34] sm:$0xf]
        %v239 = vld [vmem:[%s1 + $0x38] sm:$0xf]
        %v240 = vld [vmem:[%s1 + $0x3c] sm:$0xf]
        %v241 = vld [vmem:[%s2] sm:$0x1]
        %v243 = vlaneseq
        %v244 = vshrl.u32 %v243, 7
        %v245 = vsub.s32 0, %v244
        %v246 = vrot.slane %v241, %v245
        %v280 = vunpack.c.l.b16 %v193
        %v281 = vunpack.c.l.b16 %v194
        %v282 = vunpack.c.l.b16 %v195
        %v283 = vunpack.c.l.b16 %v196
        %v284 = vunpack.c.l.b16 %v197
        %v285 = vunpack.c.l.b16 %v198
        %v286 = vunpack.c.l.b16 %v199
        %v287 = vunpack.c.l.b16 %v200
        %v288 = vunpack.c.l.b16 %v201
        %v289 = vunpack.c.l.b16 %v202
        %v290 = vunpack.c.l.b16 %v203
        %v291 = vunpack.c.l.b16 %v204
        %v292 = vunpack.c.l.b16 %v205
        %v293 = vunpack.c.l.b16 %v206
        %v294 = vunpack.c.l.b16 %v207
        %v295 = vunpack.c.l.b16 %v208
        %v296 = vunpack.c.l.b16 %v209
        %v297 = vunpack.c.l.b16 %v210
        %v298 = vunpack.c.l.b16 %v211
        %v299 = vunpack.c.l.b16 %v212
        %v300 = vunpack.c.l.b16 %v213
        %v301 = vunpack.c.l.b16 %v214
        %v302 = vunpack.c.l.b16 %v215
        %v303 = vunpack.c.l.b16 %v216
        %v304 = vunpack.c.l.b16 %v217
        %v305 = vunpack.c.l.b16 %v218
        %v306 = vunpack.c.l.b16 %v219
        %v307 = vunpack.c.l.b16 %v220
        %v308 = vunpack.c.l.b16 %v221
        %v309 = vunpack.c.l.b16 %v222
        %v310 = vunpack.c.l.b16 %v223
        %v311 = vunpack.c.l.b16 %v224
        %v312 = vpack.c.b16 %v281, %v280
        %v313 = vpack.c.b16 %v283, %v282
        %v314 = vpack.c.b16 %v285, %v284
        %v315 = vpack.c.b16 %v287, %v286
        %v316 = vpack.c.b16 %v289, %v288
        %v317 = vpack.c.b16 %v291, %v290
        %v318 = vpack.c.b16 %v293, %v292
        %v319 = vpack.c.b16 %v295, %v294
        %v320 = vpack.c.b16 %v297, %v296
        %v321 = vpack.c.b16 %v299, %v298
        %v322 = vpack.c.b16 %v301, %v300
        %v323 = vpack.c.b16 %v303, %v302
        %v324 = vpack.c.b16 %v305, %v304
        %v325 = vpack.c.b16 %v307, %v306
        %v326 = vpack.c.b16 %v309, %v308
        %v327 = vpack.c.b16 %v311, %v310
        %v360 = vunpack.c.l.b16 %v225
        %v361 = vunpack.c.l.b16 %v226
        %v362 = vunpack.c.l.b16 %v227
        %v363 = vunpack.c.l.b16 %v228
        %v364 = vunpack.c.l.b16 %v229
        %v365 = vunpack.c.l.b16 %v230
        %v366 = vunpack.c.l.b16 %v231
        %v367 = vunpack.c.l.b16 %v232
        %v368 = vunpack.c.l.b16 %v233
        %v369 = vunpack.c.l.b16 %v234
        %v370 = vunpack.c.l.b16 %v235
        %v371 = vunpack.c.l.b16 %v236
        %v372 = vunpack.c.l.b16 %v237
        %v373 = vunpack.c.l.b16 %v238
        %v374 = vunpack.c.l.b16 %v239
        %v375 = vunpack.c.l.b16 %v240
        %v376 = vpack.c.b16 %v361, %v360
        %v377 = vpack.c.b16 %v363, %v362
        %v378 = vpack.c.b16 %v365, %v364
        %v379 = vpack.c.b16 %v367, %v366
        %v380 = vpack.c.b16 %v369, %v368
        %v381 = vpack.c.b16 %v371, %v370
        %v382 = vpack.c.b16 %v373, %v372
        %v383 = vpack.c.b16 %v375, %v374
        %392 = vmatprep.subr.bf16.mxu0 0
        %393 = vmatpush1.bf16.msra.mxu0 %v376
        %394 = vmatprep.subr.bf16.mxu0 0
        %395 = vmatpush1.bf16.msra.mxu0 %v377
        %396 = vmatprep.subr.bf16.mxu0 0
        %397 = vmatpush1.bf16.msra.mxu0 %v378
        %398 = vmatprep.subr.bf16.mxu0 0
        %399 = vmatpush1.bf16.msra.mxu0 %v379
        %400 = vmatprep.subr.bf16.mxu0 0
        %401 = vmatpush1.bf16.msra.mxu0 %v380
        %402 = vmatprep.subr.bf16.mxu0 0
        %403 = vmatpush1.bf16.msra.mxu0 %v381
        %404 = vmatprep.subr.bf16.mxu0 0
        %405 = vmatpush1.bf16.msra.mxu0 %v382
        %406 = vmatprep.subr.bf16.mxu0 0
        %407 = vmatpush1.bf16.msra.mxu0 %v383
        %408 = vmatprep.subr.bf16.mxu0 0
        %409 = vmatpush1.bf16.msra.mxu0 0
        %410 = vmatprep.subr.bf16.mxu0 0
        %411 = vmatpush1.bf16.msra.mxu0 0
        %412 = vmatprep.subr.bf16.mxu0 0
        %413 = vmatpush1.bf16.msra.mxu0 0
        %414 = vmatprep.subr.bf16.mxu0 0
        %415 = vmatpush1.bf16.msra.mxu0 0
        %416 = vmatprep.subr.bf16.mxu0 0
        %417 = vmatpush1.bf16.msra.mxu0 0
        %418 = vmatprep.subr.bf16.mxu0 0
        %419 = vmatpush1.bf16.msra.mxu0 0
        %420 = vmatprep.subr.bf16.mxu0 0
        %421 = vmatpush1.bf16.msra.mxu0 0
        %422 = vmatprep.subr.bf16.mxu0 0
        %423 = vmatpush1.bf16.msra.mxu0 0
        %424 = vmatprep.mubr.bf16.mxu0 0
        %425 = vmatmul.mubr.bf16.gmra.mrb[0].mxu0 %v312
        %v426 = vpop.f32.mrb[0].mxu0
        %v427 = vadd.f32 %v246, %v426
        %v428 = vpop.f32.mrb[0].mxu0
        %v429 = vpop.f32.mrb[0].mxu0
        %v430 = vadd.f32 %v246, %v429
        %v431 = vpop.f32.mrb[0].mxu0
        %432 = vmatprep.mubr.bf16.mxu0 0
        %433 = vmatmul.mubr.bf16.gmra.mrb[0].mxu0 %v313
        %v434 = vpop.f32.mrb[0].mxu0
        %v435 = vadd.f32 %v246, %v434
        %v436 = vpop.f32.mrb[0].mxu0
        %v437 = vpop.f32.mrb[0].mxu0
        %v438 = vadd.f32 %v246, %v437
        %v439 = vpop.f32.mrb[0].mxu0
        %440 = vmatprep.mubr.bf16.mxu0 0
        %441 = vmatmul.mubr.bf16.gmra.mrb[0].mxu0 %v314
        %v442 = vpop.f32.mrb[0].mxu0
        %v443 = vadd.f32 %v246, %v442
        %v444 = vpop.f32.mrb[0].mxu0
        %v445 = vpop.f32.mrb[0].mxu0
        %v446 = vadd.f32 %v246, %v445
        %v447 = vpop.f32.mrb[0].mxu0
        %448 = vmatprep.mubr.bf16.mxu0 0
        %449 = vmatmul.mubr.bf16.gmra.mrb[0].mxu0 %v315
        %v450 = vpop.f32.mrb[0].mxu0
        %v451 = vadd.f32 %v246, %v450
        %v452 = vpop.f32.mrb[0].mxu0
        %v453 = vpop.f32.mrb[0].mxu0
        %v454 = vadd.f32 %v246, %v453
        %v455 = vpop.f32.mrb[0].mxu0
        %456 = vmatprep.mubr.bf16.mxu0 0
        %457 = vmatmul.mubr.bf16.gmra.mrb[0].mxu0 %v316
        %v458 = vpop.f32.mrb[0].mxu0
        %v459 = vadd.f32 %v246, %v458
        %v460 = vpop.f32.mrb[0].mxu0
        %v461 = vpop.f32.mrb[0].mxu0
        %v462 = vadd.f32 %v246, %v461
        %v463 = vpop.f32.mrb[0].mxu0
        %464 = vmatprep.mubr.bf16.mxu0 0
        %465 = vmatmul.mubr.bf16.gmra.mrb[0].mxu0 %v317
        %v466 = vpop.f32.mrb[0].mxu0
        %v467 = vadd.f32 %v246, %v466
        %v468 = vpop.f32.mrb[0].mxu0
        %v469 = vpop.f32.mrb[0].mxu0
        %v470 = vadd.f32 %v246, %v469
        %v471 = vpop.f32.mrb[0].mxu0
        %472 = vmatprep.mubr.bf16.mxu0 0
        %473 = vmatmul.mubr.bf16.gmra.mrb[0].mxu0 %v318
        %v474 = vpop.f32.mrb[0].mxu0
        %v475 = vadd.f32 %v246, %v474
        %v476 = vpop.f32.mrb[0].mxu0
        %v477 = vpop.f32.mrb[0].mxu0
        %v478 = vadd.f32 %v246, %v477
        %v479 = vpop.f32.mrb[0].mxu0
        %480 = vmatprep.mubr.bf16.mxu0 0
        %481 = vmatmul.mubr.bf16.gmra.mrb[0].mxu0 %v319
        %v482 = vpop.f32.mrb[0].mxu0
        %v483 = vadd.f32 %v246, %v482
        %v484 = vpop.f32.mrb[0].mxu0
        %v485 = vpop.f32.mrb[0].mxu0
        %v486 = vadd.f32 %v246, %v485
        %v487 = vpop.f32.mrb[0].mxu0
        %488 = vmatprep.mubr.bf16.mxu0 0
        %489 = vmatmul.mubr.bf16.gmra.mrb[0].mxu0 %v320
        %v490 = vpop.f32.mrb[0].mxu0
        %v491 = vadd.f32 %v246, %v490
        %v492 = vpop.f32.mrb[0].mxu0
        %v493 = vpop.f32.mrb[0].mxu0
        %v494 = vadd.f32 %v246, %v493
        %v495 = vpop.f32.mrb[0].mxu0
        %496 = vmatprep.mubr.bf16.mxu0 0
        %497 = vmatmul.mubr.bf16.gmra.mrb[0].mxu0 %v321
        %v498 = vpop.f32.mrb[0].mxu0
        %v499 = vadd.f32 %v246, %v498
        %v500 = vpop.f32.mrb[0].mxu0
        %v501 = vpop.f32.mrb[0].mxu0
        %v502 = vadd.f32 %v246, %v501
        %v503 = vpop.f32.mrb[0].mxu0
        %504 = vmatprep.mubr.bf16.mxu0 0
        %505 = vmatmul.mubr.bf16.gmra.mrb[0].mxu0 %v322
        %v506 = vpop.f32.mrb[0].mxu0
        %v507 = vadd.f32 %v246, %v506
        %v508 = vpop.f32.mrb[0].mxu0
        %v509 = vpop.f32.mrb[0].mxu0
        %v510 = vadd.f32 %v246, %v509
        %v511 = vpop.f32.mrb[0].mxu0
        %512 = vmatprep.mubr.bf16.mxu0 0
        %513 = vmatmul.mubr.bf16.gmra.mrb[0].mxu0 %v323
        %v514 = vpop.f32.mrb[0].mxu0
        %v515 = vadd.f32 %v246, %v514
        %v516 = vpop.f32.mrb[0].mxu0
        %v517 = vpop.f32.mrb[0].mxu0
        %v518 = vadd.f32 %v246, %v517
        %v519 = vpop.f32.mrb[0].mxu0
        %520 = vmatprep.mubr.bf16.mxu0 0
        %521 = vmatmul.mubr.bf16.gmra.mrb[0].mxu0 %v324
        %v522 = vpop.f32.mrb[0].mxu0
        %v523 = vadd.f32 %v246, %v522
        %v524 = vpop.f32.mrb[0].mxu0
        %v525 = vpop.f32.mrb[0].mxu0
        %v526 = vadd.f32 %v246, %v525
        %v527 = vpop.f32.mrb[0].mxu0
        %528 = vmatprep.mubr.bf16.mxu0 0
        %529 = vmatmul.mubr.bf16.gmra.mrb[0].mxu0 %v325
        %v530 = vpop.f32.mrb[0].mxu0
        %v531 = vadd.f32 %v246, %v530
        %v532 = vpop.f32.mrb[0].mxu0
        %v533 = vpop.f32.mrb[0].mxu0
        %v534 = vadd.f32 %v246, %v533
        %v535 = vpop.f32.mrb[0].mxu0
        %536 = vmatprep.mubr.bf16.mxu0 0
        %537 = vmatmul.mubr.bf16.gmra.mrb[0].mxu0 %v326
        %v538 = vpop.f32.mrb[0].mxu0
        %v539 = vadd.f32 %v246, %v538
        %v540 = vpop.f32.mrb[0].mxu0
        %v541 = vpop.f32.mrb[0].mxu0
        %v542 = vadd.f32 %v246, %v541
        %v543 = vpop.f32.mrb[0].mxu0
        %544 = vmatprep.mubr.bf16.mxu0 0
        %545 = vmatmul.mubr.bf16.gmra.mrb[0].mxu0 %v327
        %v546 = vpop.f32.mrb[0].mxu0
        %v547 = vadd.f32 %v246, %v546
        %v548 = vpop.f32.mrb[0].mxu0
        %v549 = vpop.f32.mrb[0].mxu0
        %v550 = vadd.f32 %v246, %v549
        %v551 = vpop.f32.mrb[0].mxu0
        %552 = vdwg.mxu0
        %v553 = vmax.f32 %v427, 0.0
        %v554 = vmax.f32 %v430, 0.0
        %v555 = vmax.f32 %v435, 0.0
        %v556 = vmax.f32 %v438, 0.0
        %v557 = vmax.f32 %v443, 0.0
        %v558 = vmax.f32 %v446, 0.0
        %v559 = vmax.f32 %v451, 0.0
        %v560 = vmax.f32 %v454, 0.0
        %v561 = vmax.f32 %v459, 0.0
        %v562 = vmax.f32 %v462, 0.0
        %v563 = vmax.f32 %v467, 0.0
        %v564 = vmax.f32 %v470, 0.0
        %v565 = vmax.f32 %v475, 0.0
        %v566 = vmax.f32 %v478, 0.0
        %v567 = vmax.f32 %v483, 0.0
        %v568 = vmax.f32 %v486, 0.0
        %v569 = vmax.f32 %v491, 0.0
        %v570 = vmax.f32 %v494, 0.0
        %v571 = vmax.f32 %v499, 0.0
        %v572 = vmax.f32 %v502, 0.0
        %v573 = vmax.f32 %v507, 0.0
        %v574 = vmax.f32 %v510, 0.0
        %v575 = vmax.f32 %v515, 0.0
        %v576 = vmax.f32 %v518, 0.0
        %v577 = vmax.f32 %v523, 0.0
        %v578 = vmax.f32 %v526, 0.0
        %v579 = vmax.f32 %v531, 0.0
        %v580 = vmax.f32 %v534, 0.0
        %v581 = vmax.f32 %v539, 0.0
        %v582 = vmax.f32 %v542, 0.0
        %v583 = vmax.f32 %v547, 0.0
        %v584 = vmax.f32 %v550, 0.0
        %v585 = vpack.c.bf16 %v554, %v553
        %v586 = vpack.c.bf16 %v556, %v555
        %v587 = vpack.c.bf16 %v558, %v557
        %v588 = vpack.c.bf16 %v560, %v559
        %v589 = vpack.c.bf16 %v562, %v561
        %v590 = vpack.c.bf16 %v564, %v563
        %v591 = vpack.c.bf16 %v566, %v565
        %v592 = vpack.c.bf16 %v568, %v567
        %v593 = vpack.c.bf16 %v570, %v569
        %v594 = vpack.c.bf16 %v572, %v571
        %v595 = vpack.c.bf16 %v574, %v573
        %v596 = vpack.c.bf16 %v576, %v575
        %v597 = vpack.c.bf16 %v578, %v577
        %v598 = vpack.c.bf16 %v580, %v579
        %v599 = vpack.c.bf16 %v582, %v581
        %v600 = vpack.c.bf16 %v584, %v583
        %v617 = vunpack.c.l.b16 %v585
        %v618 = vunpack.c.h.b16 %v585
        %v619 = vunpack.c.l.b16 %v586
        %v620 = vunpack.c.h.b16 %v586
        %v621 = vunpack.c.l.b16 %v587
        %v622 = vunpack.c.h.b16 %v587
        %v623 = vunpack.c.l.b16 %v588
        %v624 = vunpack.c.h.b16 %v588
        %v625 = vunpack.c.l.b16 %v589
        %v626 = vunpack.c.h.b16 %v589
        %v627 = vunpack.c.l.b16 %v590
        %v628 = vunpack.c.h.b16 %v590
        %v629 = vunpack.c.l.b16 %v591
        %v630 = vunpack.c.h.b16 %v591
        %v631 = vunpack.c.l.b16 %v592
        %v632 = vunpack.c.h.b16 %v592
        %v633 = vunpack.c.l.b16 %v593
        %v634 = vunpack.c.h.b16 %v593
        %v635 = vunpack.c.l.b16 %v594
        %v636 = vunpack.c.h.b16 %v594
        %v637 = vunpack.c.l.b16 %v595
        %v638 = vunpack.c.h.b16 %v595
        %v639 = vunpack.c.l.b16 %v596
        %v640 = vunpack.c.h.b16 %v596
        %v641 = vunpack.c.l.b16 %v597
        %v642 = vunpack.c.h.b16 %v597
        %v643 = vunpack.c.l.b16 %v598
        %v644 = vunpack.c.h.b16 %v598
        %v645 = vunpack.c.l.b16 %v599
        %v646 = vunpack.c.h.b16 %v599
        %v647 = vunpack.c.l.b16 %v600
        %v648 = vunpack.c.h.b16 %v600
        %v649 = vpack.c.b16 %v617, %v617
        %v650 = vpack.c.b16 %v618, %v618
        %v651 = vpack.c.b16 %v619, %v619
        %v652 = vpack.c.b16 %v620, %v620
        %v653 = vpack.c.b16 %v621, %v621
        %v654 = vpack.c.b16 %v622, %v622
        %v655 = vpack.c.b16 %v623, %v623
        %v656 = vpack.c.b16 %v624, %v624
        %v657 = vpack.c.b16 %v625, %v625
        %v658 = vpack.c.b16 %v626, %v626
        %v659 = vpack.c.b16 %v627, %v627
        %v660 = vpack.c.b16 %v628, %v628
        %v661 = vpack.c.b16 %v629, %v629
        %v662 = vpack.c.b16 %v630, %v630
        %v663 = vpack.c.b16 %v631, %v631
        %v664 = vpack.c.b16 %v632, %v632
        %v665 = vpack.c.b16 %v633, %v633
        %v666 = vpack.c.b16 %v634, %v634
        %v667 = vpack.c.b16 %v635, %v635
        %v668 = vpack.c.b16 %v636, %v636
        %v669 = vpack.c.b16 %v637, %v637
        %v670 = vpack.c.b16 %v638, %v638
        %v671 = vpack.c.b16 %v639, %v639
        %v672 = vpack.c.b16 %v640, %v640
        %v673 = vpack.c.b16 %v641, %v641
        %v674 = vpack.c.b16 %v642, %v642
        %v675 = vpack.c.b16 %v643, %v643
        %v676 = vpack.c.b16 %v644, %v644
        %v677 = vpack.c.b16 %v645, %v645
        %v678 = vpack.c.b16 %v646, %v646
        %v679 = vpack.c.b16 %v647, %v647
        %v680 = vpack.c.b16 %v648, %v648
        %vm713 = vcmask 125952
        %714 = vst.msk [vmem:[%s172] sm:$0xf] %vm713, %v649
        %715 = vst.msk [vmem:[%s172 + $0x4] sm:$0xf] %vm713, %v650
        %716 = vst.msk [vmem:[%s172 + $0x8] sm:$0xf] %vm713, %v651
        %717 = vst.msk [vmem:[%s172 + $0xc] sm:$0xf] %vm713, %v652
        %718 = vst.msk [vmem:[%s172 + $0x10] sm:$0xf] %vm713, %v653
        %719 = vst.msk [vmem:[%s172 + $0x14] sm:$0xf] %vm713, %v654
        %720 = vst.msk [vmem:[%s172 + $0x18] sm:$0xf] %vm713, %v655
        %721 = vst.msk [vmem:[%s172 + $0x1c] sm:$0xf] %vm713, %v656
        %722 = vst.msk [vmem:[%s172 + $0x20] sm:$0xf] %vm713, %v657
        %723 = vst.msk [vmem:[%s172 + $0x24] sm:$0xf] %vm713, %v658
        %724 = vst.msk [vmem:[%s172 + $0x28] sm:$0xf] %vm713, %v659
        %725 = vst.msk [vmem:[%s172 + $0x2c] sm:$0xf] %vm713, %v660
        %726 = vst.msk [vmem:[%s172 + $0x30] sm:$0xf] %vm713, %v661
        %727 = vst.msk [vmem:[%s172 + $0x34] sm:$0xf] %vm713, %v662
        %728 = vst.msk [vmem:[%s172 + $0x38] sm:$0xf] %vm713, %v663
        %729 = vst.msk [vmem:[%s172 + $0x3c] sm:$0xf] %vm713, %v664
        %730 = vst.msk [vmem:[%s172 + $0x40] sm:$0xf] %vm713, %v665
        %731 = vst.msk [vmem:[%s172 + $0x44] sm:$0xf] %vm713, %v666
        %732 = vst.msk [vmem:[%s172 + $0x48] sm:$0xf] %vm713, %v667
        %733 = vst.msk [vmem:[%s172 + $0x4c] sm:$0xf] %vm713, %v668
        %734 = vst.msk [vmem:[%s172 + $0x50] sm:$0xf] %vm713, %v669
        %735 = vst.msk [vmem:[%s172 + $0x54] sm:$0xf] %vm713, %v670
        %736 = vst.msk [vmem:[%s172 + $0x58] sm:$0xf] %vm713, %v671
        %737 = vst.msk [vmem:[%s172 + $0x5c] sm:$0xf] %vm713, %v672
        %738 = vst.msk [vmem:[%s172 + $0x60] sm:$0xf] %vm713, %v673
        %739 = vst.msk [vmem:[%s172 + $0x64] sm:$0xf] %vm713, %v674
        %740 = vst.msk [vmem:[%s172 + $0x68] sm:$0xf] %vm713, %v675
        %741 = vst.msk [vmem:[%s172 + $0x6c] sm:$0xf] %vm713, %v676
        %742 = vst.msk [vmem:[%s172 + $0x70] sm:$0xf] %vm713, %v677
        %743 = vst.msk [vmem:[%s172 + $0x74] sm:$0xf] %vm713, %v678
        %744 = vst.msk [vmem:[%s172 + $0x78] sm:$0xf] %vm713, %v679
        %745 = vst.msk [vmem:[%s172 + $0x7c] sm:$0xf] %vm713, %v680
        %s746 = sand.u32 %s90, 1
        %s747 = sand.u32 %s90, 1
        %s748 = smul.addr %s747, 128
        %s749 = scalar_lea.vmem [#allocation2], %s748
        // Predicated region
        $region33: #{qnet_forward.6} parent=31 // pred_check
          %p750 = pneg %p100
        $region34: #{qnet_forward.6} parent=31 // pred_check_branch
          %752 = sbr.rel (%p750) target = $region36
        $region35: #{qnet_forward.6} parent=31 // pred_region
          %s753 = smul.u32 32, %s14
          %s754 = ssub.s32 241, %s753
          %p755 = scmp.lt.s32.totalorder %s754, 32
          %s756 = scalar_select %p755, %s754, 32
          %s757 = smul.u32 64, %s756
          %p758 = scmp.ne.s32.totalorder 0, %s757
          %s759 = smul.addr %s753, 4
          %s760 = scalar_lea.vmem %s3, %s759
          // Predicated region
          $region37: #{qnet_forward.6} parent=35 // pred_check
            %p761 = pneg %p758
          $region38: #{qnet_forward.6} parent=35 // pred_check_branch
            %763 = sbr.rel (%p761) target = $region40
          $region39: #{qnet_forward.6} parent=35 // pred_region
            // Predicated region
            $region41: #{qnet_forward.6} parent=39 // pred_check
              _
            $region42: #{qnet_forward.6} parent=39 // pred_check_branch
              %765 = sbr.rel target = $region44
            $region43: #{qnet_forward.6} parent=39 // pred_region
              // Predicated region
              $region63: #{qnet_forward.6} parent=43 // pred_check
                _
              $region64: #{qnet_forward.6} parent=43 // pred_check_branch
                %876 = sbr.rel (0) target = $region66
              $region65: #{qnet_forward.6} parent=43 // pred_region
                %s878 = sshrl.u32 %s756, 5
                // While loop
                $region67: #{qnet_forward.6} parent=65 // loop_pre_header
                  _
                $region68: #{qnet_forward.6} parent=65 // loop_header
                  %s880 = sphi 0, %s882
                  %p881 = scmp.ge.s32.totalorder %s880, %s878
                  %s885 = sphi 0, %s954
                  %s886 = sphi %s749, %s957
                  %s887 = sphi %s760, %s958
                $region69: #{qnet_forward.6} parent=65 // loop_header_branch
                  %884 = sbr.rel (%p881) target = $region73
                $region70: #{qnet_forward.6} parent=65 // loop_body
                  %v888 = vld [vmem:[%s886] sm:$0xf]
                  %889 = vst [vmem:[%s887] sm:$0xf] %v888
                  %v890 = vld [vmem:[%s886 + $0x4] sm:$0xf]
                  %891 = vst [vmem:[%s887 + $0x4] sm:$0xf] %v890
                  %v892 = vld [vmem:[%s886 + $0x8] sm:$0xf]
                  %893 = vst [vmem:[%s887 + $0x8] sm:$0xf] %v892
                  %v894 = vld [vmem:[%s886 + $0xc] sm:$0xf]
                  %895 = vst [vmem:[%s887 + $0xc] sm:$0xf] %v894
                  %v896 = vld [vmem:[%s886 + $0x10] sm:$0xf]
                  %897 = vst [vmem:[%s887 + $0x10] sm:$0xf] %v896
                  %v898 = vld [vmem:[%s886 + $0x14] sm:$0xf]
                  %899 = vst [vmem:[%s887 + $0x14] sm:$0xf] %v898
                  %v900 = vld [vmem:[%s886 + $0x18] sm:$0xf]
                  %901 = vst [vmem:[%s887 + $0x18] sm:$0xf] %v900
                  %v902 = vld [vmem:[%s886 + $0x1c] sm:$0xf]
                  %903 = vst [vmem:[%s887 + $0x1c] sm:$0xf] %v902
                  %v904 = vld [vmem:[%s886 + $0x20] sm:$0xf]
                  %905 = vst [vmem:[%s887 + $0x20] sm:$0xf] %v904
                  %v906 = vld [vmem:[%s886 + $0x24] sm:$0xf]
                  %907 = vst [vmem:[%s887 + $0x24] sm:$0xf] %v906
                  %v908 = vld [vmem:[%s886 + $0x28] sm:$0xf]
                  %909 = vst [vmem:[%s887 + $0x28] sm:$0xf] %v908
                  %v910 = vld [vmem:[%s886 + $0x2c] sm:$0xf]
                  %911 = vst [vmem:[%s887 + $0x2c] sm:$0xf] %v910
                  %v912 = vld [vmem:[%s886 + $0x30] sm:$0xf]
                  %913 = vst [vmem:[%s887 + $0x30] sm:$0xf] %v912
                  %v914 = vld [vmem:[%s886 + $0x34] sm:$0xf]
                  %915 = vst [vmem:[%s887 + $0x34] sm:$0xf] %v914
                  %v916 = vld [vmem:[%s886 + $0x38] sm:$0xf]
                  %917 = vst [vmem:[%s887 + $0x38] sm:$0xf] %v916
                  %v918 = vld [vmem:[%s886 + $0x3c] sm:$0xf]
                  %919 = vst [vmem:[%s887 + $0x3c] sm:$0xf] %v918
                  %v920 = vld [vmem:[%s886 + $0x40] sm:$0xf]
                  %921 = vst [vmem:[%s887 + $0x40] sm:$0xf] %v920
                  %v922 = vld [vmem:[%s886 + $0x44] sm:$0xf]
                  %923 = vst [vmem:[%s887 + $0x44] sm:$0xf] %v922
                  %v924 = vld [vmem:[%s886 + $0x48] sm:$0xf]
                  %925 = vst [vmem:[%s887 + $0x48] sm:$0xf] %v924
                  %v926 = vld [vmem:[%s886 + $0x4c] sm:$0xf]
                  %927 = vst [vmem:[%s887 + $0x4c] sm:$0xf] %v926
                  %v928 = vld [vmem:[%s886 + $0x50] sm:$0xf]
                  %929 = vst [vmem:[%s887 + $0x50] sm:$0xf] %v928
                  %v930 = vld [vmem:[%s886 + $0x54] sm:$0xf]
                  %931 = vst [vmem:[%s887 + $0x54] sm:$0xf] %v930
                  %v932 = vld [vmem:[%s886 + $0x58] sm:$0xf]
                  %933 = vst [vmem:[%s887 + $0x58] sm:$0xf] %v932
                  %v934 = vld [vmem:[%s886 + $0x5c] sm:$0xf]
                  %935 = vst [vmem:[%s887 + $0x5c] sm:$0xf] %v934
                  %v936 = vld [vmem:[%s886 + $0x60] sm:$0xf]
                  %937 = vst [vmem:[%s887 + $0x60] sm:$0xf] %v936
                  %v938 = vld [vmem:[%s886 + $0x64] sm:$0xf]
                  %939 = vst [vmem:[%s887 + $0x64] sm:$0xf] %v938
                  %v940 = vld [vmem:[%s886 + $0x68] sm:$0xf]
                  %941 = vst [vmem:[%s887 + $0x68] sm:$0xf] %v940
                  %v942 = vld [vmem:[%s886 + $0x6c] sm:$0xf]
                  %943 = vst [vmem:[%s887 + $0x6c] sm:$0xf] %v942
                  %v944 = vld [vmem:[%s886 + $0x70] sm:$0xf]
                  %945 = vst [vmem:[%s887 + $0x70] sm:$0xf] %v944
                  %v946 = vld [vmem:[%s886 + $0x74] sm:$0xf]
                  %947 = vst [vmem:[%s887 + $0x74] sm:$0xf] %v946
                  %v948 = vld [vmem:[%s886 + $0x78] sm:$0xf]
                  %949 = vst [vmem:[%s887 + $0x78] sm:$0xf] %v948
                  %v950 = vld [vmem:[%s886 + $0x7c] sm:$0xf]
                  %951 = vst [vmem:[%s887 + $0x7c] sm:$0xf] %v950
                  %s952 = sadd.s32 1, %s885
                  %p953 = scmp.ge.s32.totalorder %s952, %s878
                  %s954 = scalar_select %p953, 0, %s952
                  %s955 = smul.u32 %s954, 128
                  %s956 = smul.u32 %s954, 128
                  %s957 = scalar_lea.vmem %s749, %s955 [#allocation2]
                  %s958 = scalar_lea.vmem %s760, %s956
                $region71: #{qnet_forward.6} parent=65 // loop_footer
                  %s882 = sadd.s32 %s880, 1
                $region72: #{qnet_forward.6} parent=65 // loop_footer_branch
                  %879 = sbr.rel target = $region68
                $region73: #{qnet_forward.6} parent=65 // loop_exit
                  _
                %s959 = sshrl.u32 %s756, 5
                %s960 = sand.u32 %s756, 31
                %s961 = smul.u32 %s959, 32
                %s962 = smul.u32 4, %s961
                %s963 = scalar_lea.vmem %s749, %s962 [#allocation2]
                %s964 = smul.u32 4, %s961
                %s965 = scalar_lea.vmem %s760, %s964
                // While loop
                $region74: #{qnet_forward.6} parent=65 // loop_pre_header
                  _
                $region75: #{qnet_forward.6} parent=65 // loop_header
                  %s967 = sphi 0, %s969
                  %p968 = scmp.ge.s32.totalorder %s967, %s960
                  %s972 = sphi 0, %s979
                  %s973 = sphi %s963, %s982
                  %s974 = sphi %s965, %s983
                $region76: #{qnet_forward.6} parent=65 // loop_header_branch
                  %971 = sbr.rel (%p968) target = $region80
                $region77: #{qnet_forward.6} parent=65 // loop_body
                  %v975 = vld [vmem:[%s973] sm:$0xf]
                  %976 = vst [vmem:[%s974] sm:$0xf] %v975
                  %s977 = sadd.s32 1, %s972
                  %p978 = scmp.ge.s32.totalorder %s977, %s960
                  %s979 = scalar_select %p978, 0, %s977
                  %s980 = smul.u32 %s979, 4
                  %s981 = smul.u32 %s979, 4
                  %s982 = scalar_lea.vmem %s963, %s980 [#allocation2]
                  %s983 = scalar_lea.vmem %s965, %s981
                $region78: #{qnet_forward.6} parent=65 // loop_footer
                  %s969 = sadd.s32 %s967, 1
                $region79: #{qnet_forward.6} parent=65 // loop_footer_branch
                  %966 = sbr.rel target = $region75
                $region80: #{qnet_forward.6} parent=65 // loop_exit
                  _
              $region66: #{qnet_forward.6} parent=43 // pred_fallthru
                _
            $region44: #{qnet_forward.6} parent=39 // pred_fallthru
              _
            // Predicated region
            $region45: #{qnet_forward.6} parent=39 // pred_check
              _
            $region46: #{qnet_forward.6} parent=39 // pred_check_branch
              %767 = sbr.rel (0) target = $region48
            $region47: #{qnet_forward.6} parent=39 // pred_region
              %s769 = sshrl.u32 %s756, 5
              // While loop
              $region49: #{qnet_forward.6} parent=47 // loop_pre_header
                _
              $region50: #{qnet_forward.6} parent=47 // loop_header
                %s771 = sphi 0, %s773
                %p772 = scmp.ge.s32.totalorder %s771, %s769
                %s776 = sphi 0, %s845
                %s777 = sphi %s749, %s848
                %s778 = sphi %s760, %s849
              $region51: #{qnet_forward.6} parent=47 // loop_header_branch
                %775 = sbr.rel (%p772) target = $region55
              $region52: #{qnet_forward.6} parent=47 // loop_body
                %v779 = vld [vmem:[%s777] sm:$0xf]
                %780 = vst [vmem:[%s778] sm:$0xf] %v779
                %v781 = vld [vmem:[%s777 + $0x4] sm:$0xf]
                %782 = vst [vmem:[%s778 + $0x4] sm:$0xf] %v781
                %v783 = vld [vmem:[%s777 + $0x8] sm:$0xf]
                %784 = vst [vmem:[%s778 + $0x8] sm:$0xf] %v783
                %v785 = vld [vmem:[%s777 + $0xc] sm:$0xf]
                %786 = vst [vmem:[%s778 + $0xc] sm:$0xf] %v785
                %v787 = vld [vmem:[%s777 + $0x10] sm:$0xf]
                %788 = vst [vmem:[%s778 + $0x10] sm:$0xf] %v787
                %v789 = vld [vmem:[%s777 + $0x14] sm:$0xf]
                %790 = vst [vmem:[%s778 + $0x14] sm:$0xf] %v789
                %v791 = vld [vmem:[%s777 + $0x18] sm:$0xf]
                %792 = vst [vmem:[%s778 + $0x18] sm:$0xf] %v791
                %v793 = vld [vmem:[%s777 + $0x1c] sm:$0xf]
                %794 = vst [vmem:[%s778 + $0x1c] sm:$0xf] %v793
                %v795 = vld [vmem:[%s777 + $0x20] sm:$0xf]
                %796 = vst [vmem:[%s778 + $0x20] sm:$0xf] %v795
                %v797 = vld [vmem:[%s777 + $0x24] sm:$0xf]
                %798 = vst [vmem:[%s778 + $0x24] sm:$0xf] %v797
                %v799 = vld [vmem:[%s777 + $0x28] sm:$0xf]
                %800 = vst [vmem:[%s778 + $0x28] sm:$0xf] %v799
                %v801 = vld [vmem:[%s777 + $0x2c] sm:$0xf]
                %802 = vst [vmem:[%s778 + $0x2c] sm:$0xf] %v801
                %v803 = vld [vmem:[%s777 + $0x30] sm:$0xf]
                %804 = vst [vmem:[%s778 + $0x30] sm:$0xf] %v803
                %v805 = vld [vmem:[%s777 + $0x34] sm:$0xf]
                %806 = vst [vmem:[%s778 + $0x34] sm:$0xf] %v805
                %v807 = vld [vmem:[%s777 + $0x38] sm:$0xf]
                %808 = vst [vmem:[%s778 + $0x38] sm:$0xf] %v807
                %v809 = vld [vmem:[%s777 + $0x3c] sm:$0xf]
                %810 = vst [vmem:[%s778 + $0x3c] sm:$0xf] %v809
                %v811 = vld [vmem:[%s777 + $0x40] sm:$0xf]
                %812 = vst [vmem:[%s778 + $0x40] sm:$0xf] %v811
                %v813 = vld [vmem:[%s777 + $0x44] sm:$0xf]
                %814 = vst [vmem:[%s778 + $0x44] sm:$0xf] %v813
                %v815 = vld [vmem:[%s777 + $0x48] sm:$0xf]
                %816 = vst [vmem:[%s778 + $0x48] sm:$0xf] %v815
                %v817 = vld [vmem:[%s777 + $0x4c] sm:$0xf]
                %818 = vst [vmem:[%s778 + $0x4c] sm:$0xf] %v817
                %v819 = vld [vmem:[%s777 + $0x50] sm:$0xf]
                %820 = vst [vmem:[%s778 + $0x50] sm:$0xf] %v819
                %v821 = vld [vmem:[%s777 + $0x54] sm:$0xf]
                %822 = vst [vmem:[%s778 + $0x54] sm:$0xf] %v821
                %v823 = vld [vmem:[%s777 + $0x58] sm:$0xf]
                %824 = vst [vmem:[%s778 + $0x58] sm:$0xf] %v823
                %v825 = vld [vmem:[%s777 + $0x5c] sm:$0xf]
                %826 = vst [vmem:[%s778 + $0x5c] sm:$0xf] %v825
                %v827 = vld [vmem:[%s777 + $0x60] sm:$0xf]
                %828 = vst [vmem:[%s778 + $0x60] sm:$0xf] %v827
                %v829 = vld [vmem:[%s777 + $0x64] sm:$0xf]
                %830 = vst [vmem:[%s778 + $0x64] sm:$0xf] %v829
                %v831 = vld [vmem:[%s777 + $0x68] sm:$0xf]
                %832 = vst [vmem:[%s778 + $0x68] sm:$0xf] %v831
                %v833 = vld [vmem:[%s777 + $0x6c] sm:$0xf]
                %834 = vst [vmem:[%s778 + $0x6c] sm:$0xf] %v833
                %v835 = vld [vmem:[%s777 + $0x70] sm:$0xf]
                %836 = vst [vmem:[%s778 + $0x70] sm:$0xf] %v835
                %v837 = vld [vmem:[%s777 + $0x74] sm:$0xf]
                %838 = vst [vmem:[%s778 + $0x74] sm:$0xf] %v837
                %v839 = vld [vmem:[%s777 + $0x78] sm:$0xf]
                %840 = vst [vmem:[%s778 + $0x78] sm:$0xf] %v839
                %v841 = vld [vmem:[%s777 + $0x7c] sm:$0xf]
                %842 = vst [vmem:[%s778 + $0x7c] sm:$0xf] %v841
                %s843 = sadd.s32 1, %s776
                %p844 = scmp.ge.s32.totalorder %s843, %s769
                %s845 = scalar_select %p844, 0, %s843
                %s846 = smul.u32 %s845, 128
                %s847 = smul.u32 %s845, 128
                %s848 = scalar_lea.vmem %s749, %s846 [#allocation2]
                %s849 = scalar_lea.vmem %s760, %s847
              $region53: #{qnet_forward.6} parent=47 // loop_footer
                %s773 = sadd.s32 %s771, 1
              $region54: #{qnet_forward.6} parent=47 // loop_footer_branch
                %770 = sbr.rel target = $region50
              $region55: #{qnet_forward.6} parent=47 // loop_exit
                _
              %s850 = sshrl.u32 %s756, 5
              %s851 = sand.u32 %s756, 31
              %s852 = smul.u32 %s850, 32
              %s853 = smul.u32 4, %s852
              %s854 = scalar_lea.vmem %s749, %s853 [#allocation2]
              %s855 = smul.u32 4, %s852
              %s856 = scalar_lea.vmem %s760, %s855
              // While loop
              $region56: #{qnet_forward.6} parent=47 // loop_pre_header
                _
              $region57: #{qnet_forward.6} parent=47 // loop_header
                %s858 = sphi 0, %s860
                %p859 = scmp.ge.s32.totalorder %s858, %s851
                %s863 = sphi 0, %s870
                %s864 = sphi %s854, %s873
                %s865 = sphi %s856, %s874
              $region58: #{qnet_forward.6} parent=47 // loop_header_branch
                %862 = sbr.rel (%p859) target = $region62
              $region59: #{qnet_forward.6} parent=47 // loop_body
                %v866 = vld [vmem:[%s864] sm:$0xf]
                %867 = vst [vmem:[%s865] sm:$0xf] %v866
                %s868 = sadd.s32 1, %s863
                %p869 = scmp.ge.s32.totalorder %s868, %s851
                %s870 = scalar_select %p869, 0, %s868
                %s871 = smul.u32 %s870, 4
                %s872 = smul.u32 %s870, 4
                %s873 = scalar_lea.vmem %s854, %s871 [#allocation2]
                %s874 = scalar_lea.vmem %s856, %s872
              $region60: #{qnet_forward.6} parent=47 // loop_footer
                %s860 = sadd.s32 %s858, 1
              $region61: #{qnet_forward.6} parent=47 // loop_footer_branch
                %857 = sbr.rel target = $region57
              $region62: #{qnet_forward.6} parent=47 // loop_exit
                _
            $region48: #{qnet_forward.6} parent=39 // pred_fallthru
              _
          $region40: #{qnet_forward.6} parent=35 // pred_fallthru
            _
          %984 = vnop
        $region36: #{qnet_forward.6} parent=31 // pred_fallthru
          _
      $region32: #{qnet_forward.6} parent=5 // pred_fallthru
        _
      %p985 = scmp.le.s32.totalorder 2, %s9
      // Predicated region
      $region81: #{qnet_forward.6} parent=5 // pred_check
        %p986 = pneg %p985
      $region82: #{qnet_forward.6} parent=5 // pred_check_branch
        %988 = sbr.rel (%p986) target = $region84
      $region83: #{qnet_forward.6} parent=5 // pred_region
        %s989 = ssub.s32 %s9, 2
        // Predicated region
        $region85: #{qnet_forward.6} parent=83 // pred_check
          %p990 = pneg %p106
        $region86: #{qnet_forward.6} parent=83 // pred_check_branch
          %992 = sbr.rel (%p990) target = $region88
        $region87: #{qnet_forward.6} parent=83 // pred_region
          %s993 = sand.u32 %s91, 1
          %s994 = sand.u32 %s91, 1
          %s995 = smul.addr %s994, 128
          %s996 = scalar_lea.vmem [#allocation2], %s995
        $region88: #{qnet_forward.6} parent=83 // pred_fallthru
          _
      $region84: #{qnet_forward.6} parent=5 // pred_fallthru
        _
    $region6: #{qnet_forward.6} parent=1 // loop_footer
      %s13 = sadd.s32 1, %s9
    $region7: #{qnet_forward.6} parent=1 // loop_footer_branch
      %8 = sbr.rel target = $region3
    $region8: #{qnet_forward.6} parent=1 // loop_exit
      _

// kernel: qnet_forward.7
$region0: #{qnet_forward.7}
  #allocation0 [shape = 'u32[]', space=smem, size = 0x4, offset = 0x4, fixed_abs, tag = 'smem constant byte address 0x4 - core index']
  #allocation1 [shape = 'u32[144,128]{1,0:T(1,128)}', space=vmem, size = 0x12000, scoped, tag = 'internal scratch']
  %s0 = inlined_call_operand.vmem [shape: bf16[1568,256], index: 0, kind: input, shape index: {}]
  %s1 = inlined_call_operand.vmem [shape: bf16[256,32], index: 1, kind: input, shape index: {}]
  %s2 = inlined_call_operand.vmem [shape: f32[1,32], index: 2, kind: input, shape index: {}]
  %s3 = inlined_call_operand.vmem [shape: bf16[1568,32], index: 3, kind: output, shape index: {}]
  %s4 = sld [smem:[#allocation0]]
  $region89: #{qnet_forward.7} parent=0
    _
  %s6 = ssub.s32 1, %s4
  %s7 = scalar_select 0, %s6, %s4
  $region1: #{qnet_forward.7} parent=0
    #allocation2 [shape = 'u8[131072]{0}', space=vmem, size = 0x20000, scoped, tag = 'output window, operand 0']
    loop: start=0, step=1, limit=9
    $region2: #{qnet_forward.7} parent=1 // loop_pre_header
      _
    $region3: #{qnet_forward.7} parent=1 // loop_header
      %s9 = sphi 0, %s13
      %p10 = scmp.ge.s32.totalorder %s9, 9
      %s19 = sphi 0, %s21
      %s22 = sphi 0, %s19
      %s23 = sphi 0, %s22
      %s39 = sphi 0, %s23
      %s43 = sphi 0, %s43
      %s45 = sphi 0, %s43
      %s46 = sphi 0, %s45
      %s60 = sphi 0, %s46
      %s64 = sphi 0, %s64
      %s66 = sphi 0, %s64
      %s67 = sphi 0, %s66
      %s81 = sphi 0, %s67
      %s87 = sphi 0, %s89
      %s90 = sphi 0, %s87
      %s91 = sphi 0, %s90
      %s107 = sphi 0, %s91
    $region4: #{qnet_forward.7} parent=1 // loop_header_branch
      %12 = sbr.rel (%p10) target = $region8
    $region5: #{qnet_forward.7} parent=1 // loop_body
      %s14 = ssub.s32 %s9, 1
      %s15 = ssub.s32 %s9, 2
      %s16 = sadd.s32 %s9, 1
      %s17 = ssub.s32 %s9, %s16
      %p18 = scmp.eq.s32.totalorder %s17, 0
      %s20 = sadd.s32 %s19, 1
      %s21 = scalar_select %p18, %s19, %s20
      %p24 = pneg %p18
      %p25 = scmp.eq.s32.totalorder %s9, 6
      %p26 = por %p24, %p25
      %p27 = scmp.ne.s32.totalorder %s19, %s22
      %p28 = scmp.eq.s32.totalorder %s9, 0
      %p29 = por %p27, %p28
      %p30 = scmp.ne.s32.totalorder %s19, %s22
      %p31 = scmp.eq.s32.totalorder %s14, 6
      %p32 = por %p30, %p31
      %p33 = scmp.ne.s32.totalorder %s22, %s23
      %p34 = scmp.eq.s32.totalorder %s14, 0
      %p35 = por %p33, %p34
      %p36 = scmp.ne.s32.totalorder %s22, %s23
      %p37 = scmp.eq.s32.totalorder %s15, 6
      %p38 = por %p36, %p37
      %p40 = scmp.ne.s32.totalorder %s23, %s39
      %p41 = scmp.eq.s32.totalorder %s15, 0
      %p42 = por %p40, %p41
      %s44 = sadd.s32 %s43, 1
      %p47 = scmp.eq.s32.totalorder %s9, 6
      %p48 = scmp.ne.s32.totalorder %s43, %s45
      %p49 = scmp.eq.s32.totalorder %s9, 0
      %p50 = por %p48, %p49
      %p51 = scmp.ne.s32.totalorder %s43, %s45
      %p52 = scmp.eq.s32.totalorder %s14, 6
      %p53 = por %p51, %p52
      %p54 = scmp.ne.s32.totalorder %s45, %s46
      %p55 = scmp.eq.s32.totalorder %s14, 0
      %p56 = por %p54, %p55
      %p57 = scmp.ne.s32.totalorder %s45, %s46
      %p58 = scmp.eq.s32.totalorder %s15, 6
      %p59 = por %p57, %p58
      %p61 = scmp.ne.s32.totalorder %s46, %s60
      %p62 = scmp.eq.s32.totalorder %s15, 0
      %p63 = por %p61, %p62
      %s65 = sadd.s32 %s64, 1
      %p68 = scmp.eq.s32.totalorder %s9, 6
      %p69 = scmp.ne.s32.totalorder %s64, %s66
      %p70 = scmp.eq.s32.totalorder %s9, 0
      %p71 = por %p69, %p70
      %p72 = scmp.ne.s32.totalorder %s64, %s66
      %p73 = scmp.eq.s32.totalorder %s14, 6
      %p74 = por %p72, %p73
      %p75 = scmp.ne.s32.totalorder %s66, %s67
      %p76 = scmp.eq.s32.totalorder %s14, 0
      %p77 = por %p75, %p76
      %p78 = scmp.ne.s32.totalorder %s66, %s67
      %p79 = scmp.eq.s32.totalorder %s15, 6
      %p80 = por %p78, %p79
      %p82 = scmp.ne.s32.totalorder %s67, %s81
      %p83 = scmp.eq.s32.totalorder %s15, 0
      %p84 = por %p82, %p83
      %s85 = ssub.s32 %s9, %s16
      %p86 = scmp.eq.s32.totalorder %s85, 0
      %s88 = sadd.s32 %s87, 1
      %s89 = scalar_select %p86, %s87, %s88
      %p92 = pneg %p86
      %p93 = scmp.eq.s32.totalorder %s9, 6
      %p94 = por %p92, %p93
      %p95 = scmp.ne.s32.totalorder %s87, %s90
      %p96 = scmp.eq.s32.totalorder %s9, 0
      %p97 = por %p95, %p96
      %p98 = scmp.ne.s32.totalorder %s87, %s90
      %p99 = scmp.eq.s32.totalorder %s14, 6
      %p100 = por %p98, %p99
      %p101 = scmp.ne.s32.totalorder %s90, %s91
      %p102 = scmp.eq.s32.totalorder %s14, 0
      %p103 = por %p101, %p102
      %p104 = scmp.ne.s32.totalorder %s90, %s91
      %p105 = scmp.eq.s32.totalorder %s15, 6
      %p106 = por %p104, %p105
      %p108 = scmp.ne.s32.totalorder %s91, %s107
      %p109 = scmp.eq.s32.totalorder %s15, 0
      %p110 = por %p108, %p109
      %p111 = scmp.le.s32.totalorder 1, %s9
      %p112 = scmp.lt.s32.totalorder %s9, 8
      %p113 = pnand %p111, %p112
      %p114 = pneg %p113
      // Predicated region
      $region9: #{qnet_forward.7} parent=5 // pred_check
        _
      $region10: #{qnet_forward.7} parent=5 // pred_check_branch
        %116 = sbr.rel (%p113) target = $region12
      $region11: #{qnet_forward.7} parent=5 // pred_region
        %s117 = ssub.s32 %s9, 1
        // Predicated region
        $region13: #{qnet_forward.7} parent=11 // pred_check
          %p118 = pneg %p56
        $region14: #{qnet_forward.7} parent=11 // pred_check_branch
          %120 = sbr.rel (%p118) target = $region16
        $region15: #{qnet_forward.7} parent=11 // pred_region
          _
        $region16: #{qnet_forward.7} parent=11 // pred_fallthru
          _
        // Predicated region
        $region17: #{qnet_forward.7} parent=11 // pred_check
          %p121 = pneg %p77
        $region18: #{qnet_forward.7} parent=11 // pred_check_branch
          %123 = sbr.rel (%p121) target = $region20
        $region19: #{qnet_forward.7} parent=11 // pred_region
          _
        $region20: #{qnet_forward.7} parent=11 // pred_fallthru
          _
      $region12: #{qnet_forward.7} parent=5 // pred_fallthru
        _
      %p124 = scmp.lt.s32.totalorder %s9, 7
      // Predicated region
      $region21: #{qnet_forward.7} parent=5 // pred_check
        %p125 = pneg %p124
      $region22: #{qnet_forward.7} parent=5 // pred_check_branch
        %127 = sbr.rel (%p125) target = $region24
      $region23: #{qnet_forward.7} parent=5 // pred_region
        // Predicated region
        $region25: #{qnet_forward.7} parent=23 // pred_check
          %p128 = pneg %p29
        $region26: #{qnet_forward.7} parent=23 // pred_check_branch
          %130 = sbr.rel (%p128) target = $region28
        $region27: #{qnet_forward.7} parent=23 // pred_region
          %s131 = smul.u32 32, %s9
          %s132 = ssub.s32 196, %s131
          %p133 = scmp.lt.s32.totalorder %s132, 32
          %s134 = scalar_select %p133, %s132, 32
          %s135 = smul.u32 64, %s134
          %s136 = smul.u32 %s135, 2
          %p137 = scmp.lt.s32.totalorder %s131, 195
          %s138 = scalar_select %p137, %s131, 195
          %s139 = smul.addr %s138, 2
          %s140 = smul.addr %s139, 4
          %s141 = scalar_lea.vmem %s0, %s140
          %s142 = smul.u32 32, %s9
          %s143 = ssub.s32 196, %s142
          %p144 = scmp.lt.s32.totalorder %s143, 32
          %s145 = scalar_select %p144, %s143, 32
          %s146 = smul.u32 64, %s145
          %s147 = smul.u32 %s146, 2
        $region28: #{qnet_forward.7} parent=23 // pred_fallthru
          _
      $region24: #{qnet_forward.7} parent=5 // pred_fallthru
        _
      %p148 = scmp.le.s32.totalorder 1, %s9
      %p149 = scmp.lt.s32.totalorder %s9, 8
      %p150 = pnand %p148, %p149
      %p151 = pneg %p150
      // Predicated region
      $region29: #{qnet_forward.7} parent=5 // pred_check
        _
      $region30: #{qnet_forward.7} parent=5 // pred_check_branch
        %153 = sbr.rel (%p150) target = $region32
      $region31: #{qnet_forward.7} parent=5 // pred_region
        %s154 = ssub.s32 %s9, 1
        %s155 = smul.u32 32, %s14
        %s156 = ssub.s32 196, %s155
        %p157 = scmp.lt.s32.totalorder %s156, 32
        %s158 = scalar_select %p157, %s156, 32
        %s159 = smul.u32 64, %s158
        %s160 = smul.u32 %s159, 2
        %p161 = scmp.lt.s32.totalorder %s155, 195
        %s162 = scalar_select %p161, %s155, 195
        %s163 = smul.addr %s162, 2
        %s164 = smul.addr %s163, 4
        %s165 = scalar_lea.vmem %s0, %s164
        %p166 = pneg %p35
        %p167 = pneg %p32
        %p168 = pneg %p56
        %p169 = pneg %p53
        %p170 = pneg %p77
        %p171 = pneg %p74
        %p172 = pneg %p103
        %p173 = pneg %p100
        %s174 = sand.u32 %s90, 1
        %s175 = sand.u32 %s90, 1
        %s176 = smul.addr %s175, 128
        %s177 = scalar_lea.vmem [#allocation2], %s176
        %s178 = smul.u32 32, %s14
        %s179 = ssub.s32 196, %s178
        %p180 = scmp.lt.s32.totalorder %s179, 32
        %s181 = scalar_select %p180, %s179, 32
        %s182 = smul.u32 64, %s181
        %s183 = smul.u32 %s182, 2
        %p184 = scmp.lt.s32.totalorder %s178, 195
        %s185 = scalar_select %p184, %s178, 195
        %s186 = smul.addr %s185, 2
        %s187 = smul.addr %s186, 4
        %s188 = scalar_lea.vmem %s0, %s187
        %s189 = smul.u32 32, %s14
        %s190 = ssub.s32 196, %s189
        %p191 = scmp.lt.s32.totalorder %s190, 32
        %s192 = scalar_select %p191, %s190, 32
        %s193 = smul.u32 64, %s192
        %s194 = smul.u32 %s193, 2
        %s195 = smul.u32 32, %s14
        %s196 = ssub.s32 196, %s195
        %p197 = scmp.lt.s32.totalorder %s196, 32
        %s198 = scalar_select %p197, %s196, 32
        %s199 = smul.u32 64, %s198
        %v201 = vld [vmem:[%s188] sm:$0xff]
        %v202 = vld [vmem:[%s188 + $0x8] sm:$0xff]
        %v203 = vld [vmem:[%s188 + $0x10] sm:$0xff]
        %v204 = vld [vmem:[%s188 + $0x18] sm:$0xff]
        %v205 = vld [vmem:[%s188 + $0x20] sm:$0xff]
        %v206 = vld [vmem:[%s188 + $0x28] sm:$0xff]
        %v207 = vld [vmem:[%s188 + $0x30] sm:$0xff]
        %v208 = vld [vmem:[%s188 + $0x38] sm:$0xff]
        %v209 = vld [vmem:[%s188 + $0x40] sm:$0xff]
        %v210 = vld [vmem:[%s188 + $0x48] sm:$0xff]
        %v211 = vld [vmem:[%s188 + $0x50] sm:$0xff]
        %v212 = vld [vmem:[%s188 + $0x58] sm:$0xff]
        %v213 = vld [vmem:[%s188 + $0x60] sm:$0xff]
        %v214 = vld [vmem:[%s188 + $0x68] sm:$0xff]
        %v215 = vld [vmem:[%s188 + $0x70] sm:$0xff]
        %v216 = vld [vmem:[%s188 + $0x78] sm:$0xff]
        %v217 = vld [vmem:[%s188 + $0x80] sm:$0xff]
        %v218 = vld [vmem:[%s188 + $0x88] sm:$0xff]
        %v219 = vld [vmem:[%s188 + $0x90] sm:$0xff]
        %v220 = vld [vmem:[%s188 + $0x98] sm:$0xff]
        %v221 = vld [vmem:[%s188 + $0xa0] sm:$0xff]
        %v222 = vld [vmem:[%s188 + $0xa8] sm:$0xff]
        %v223 = vld [vmem:[%s188 + $0xb0] sm:$0xff]
        %v224 = vld [vmem:[%s188 + $0xb8] sm:$0xff]
        %v225 = vld [vmem:[%s188 + $0xc0] sm:$0xff]
        %v226 = vld [vmem:[%s188 + $0xc8] sm:$0xff]
        %v227 = vld [vmem:[%s188 + $0xd0] sm:$0xff]
        %v228 = vld [vmem:[%s188 + $0xd8] sm:$0xff]
        %v229 = vld [vmem:[%s188 + $0xe0] sm:$0xff]
        %v230 = vld [vmem:[%s188 + $0xe8] sm:$0xff]
        %v231 = vld [vmem:[%s188 + $0xf0] sm:$0xff]
        %v232 = vld [vmem:[%s188 + $0xf8] sm:$0xff]
        %v233 = vld [vmem:[%s1] sm:$0xf]
        %v234 = vld [vmem:[%s1 + $0x4] sm:$0xf]
        %v235 = vld [vmem:[%s1 + $0x8] sm:$0xf]
        %v236 = vld [vmem:[%s1 + $0xc] sm:$0xf]
        %v237 = vld [vmem:[%s1 + $0x10] sm:$0xf]
        %v238 = vld [vmem:[%s1 + $0x14] sm:$0xf]
        %v239 = vld [vmem:[%s1 + $0x18] sm:$0xf]
        %v240 = vld [vmem:[%s1 + $0x1c] sm:$0xf]
        %v241 = vld [vmem:[%s1 + $0x20] sm:$0xf]
        %v242 = vld [vmem:[%s1 + $0x24] sm:$0xf]
        %v243 = vld [vmem:[%s1 + $0x28] sm:$0xf]
        %v244 = vld [vmem:[%s1 + $0x2c] sm:$0xf]
        %v245 = vld [vmem:[%s1 + $0x30] sm:$0xf]
        %v246 = vld [vmem:[%s1 + $0x34] sm:$0xf]
        %v247 = vld [vmem:[%s1 + $0x38] sm:$0xf]
        %v248 = vld [vmem:[%s1 + $0x3c] sm:$0xf]
        %v249 = vld [vmem:[%s1 + $0x40] sm:$0xf]
        %v250 = vld [vmem:[%s1 + $0x44] sm:$0xf]
        %v251 = vld [vmem:[%s1 + $0x48] sm:$0xf]
        %v252 = vld [vmem:[%s1 + $0x4c] sm:$0xf]
        %v253 = vld [vmem:[%s1 + $0x50] sm:$0xf]
        %v254 = vld [vmem:[%s1 + $0x54] sm:$0xf]
        %v255 = vld [vmem:[%s1 + $0x58] sm:$0xf]
        %v256 = vld [vmem:[%s1 + $0x5c] sm:$0xf]
        %v257 = vld [vmem:[%s1 + $0x60] sm:$0xf]
        %v258 = vld [vmem:[%s1 + $0x64] sm:$0xf]
        %v259 = vld [vmem:[%s1 + $0x68] sm:$0xf]
        %v260 = vld [vmem:[%s1 + $0x6c] sm:$0xf]
        %v261 = vld [vmem:[%s1 + $0x70] sm:$0xf]
        %v262 = vld [vmem:[%s1 + $0x74] sm:$0xf]
        %v263 = vld [vmem:[%s1 + $0x78] sm:$0xf]
        %v264 = vld [vmem:[%s1 + $0x7c] sm:$0xf]
        %v265 = vld [vmem:[%s2] sm:$0x1]
        %v267 = vlaneseq
        %v268 = vshrl.u32 %v267, 7
        %v269 = vsub.s32 0, %v268
        %v270 = vrot.slane %v265, %v269
        %v304 = vunpack.c.l.b16 %v201
        %v305 = vunpack.c.h.b16 %v201
        %v306 = vunpack.c.l.b16 %v202
        %v307 = vunpack.c.h.b16 %v202
        %v308 = vunpack.c.l.b16 %v203
        %v309 = vunpack.c.h.b16 %v203
        %v310 = vunpack.c.l.b16 %v204
        %v311 = vunpack.c.h.b16 %v204
        %v312 = vunpack.c.l.b16 %v205
        %v313 = vunpack.c.h.b16 %v205
        %v314 = vunpack.c.l.b16 %v206
        %v315 = vunpack.c.h.b16 %v206
        %v316 = vunpack.c.l.b16 %v207
        %v317 = vunpack.c.h.b16 %v207
        %v318 = vunpack.c.l.b16 %v208
        %v319 = vunpack.c.h.b16 %v208
        %v320 = vunpack.c.l.b16 %v209
        %v321 = vunpack.c.h.b16 %v209
        %v322 = vunpack.c.l.b16 %v210
        %v323 = vunpack.c.h.b16 %v210
        %v324 = vunpack.c.l.b16 %v211
        %v325 = vunpack.c.h.b16 %v211
        %v326 = vunpack.c.l.b16 %v212
        %v327 = vunpack.c.h.b16 %v212
        %v328 = vunpack.c.l.b16 %v213
        %v329 = vunpack.c.h.b16 %v213
        %v330 = vunpack.c.l.b16 %v214
        %v331 = vunpack.c.h.b16 %v214
        %v332 = vunpack.c.l.b16 %v215
        %v333 = vunpack.c.h.b16 %v215
        %v334 = vunpack.c.l.b16 %v216
        %v335 = vunpack.c.h.b16 %v216
        %v336 = vunpack.c.l.b16 %v217
        %v337 = vunpack.c.h.b16 %v217
        %v338 = vunpack.c.l.b16 %v218
        %v339 = vunpack.c.h.b16 %v218
        %v340 = vunpack.c.l.b16 %v219
        %v341 = vunpack.c.h.b16 %v219
        %v342 = vunpack.c.l.b16 %v220
        %v343 = vunpack.c.h.b16 %v220
        %v344 = vunpack.c.l.b16 %v221
        %v345 = vunpack.c.h.b16 %v221
        %v346 = vunpack.c.l.b16 %v222
        %v347 = vunpack.c.h.b16 %v222
        %v348 = vunpack.c.l.b16 %v223
        %v349 = vunpack.c.h.b16 %v223
        %v350 = vunpack.c.l.b16 %v224
        %v351 = vunpack.c.h.b16 %v224
        %v352 = vunpack.c.l.b16 %v225
        %v353 = vunpack.c.h.b16 %v225
        %v354 = vunpack.c.l.b16 %v226
        %v355 = vunpack.c.h.b16 %v226
        %v356 = vunpack.c.l.b16 %v227
        %v357 = vunpack.c.h.b16 %v227
        %v358 = vunpack.c.l.b16 %v228
        %v359 = vunpack.c.h.b16 %v228
        %v360 = vunpack.c.l.b16 %v229
        %v361 = vunpack.c.h.b16 %v229
        %v362 = vunpack.c.l.b16 %v230
        %v363 = vunpack.c.h.b16 %v230
        %v364 = vunpack.c.l.b16 %v231
        %v365 = vunpack.c.h.b16 %v231
        %v366 = vunpack.c.l.b16 %v232
        %v367 = vunpack.c.h.b16 %v232
        %v368 = vpack.c.b16 %v306, %v304
        %v369 = vpack.c.b16 %v307, %v305
        %v370 = vpack.c.b16 %v310, %v308
        %v371 = vpack.c.b16 %v311, %v309
        %v372 = vpack.c.b16 %v314, %v312
        %v373 = vpack.c.b16 %v315, %v313
        %v374 = vpack.c.b16 %v318, %v316
        %v375 = vpack.c.b16 %v319, %v317
        %v376 = vpack.c.b16 %v322, %v320
        %v377 = vpack.c.b16 %v323, %v321
        %v378 = vpack.c.b16 %v326, %v324
        %v379 = vpack.c.b16 %v327, %v325
        %v380 = vpack.c.b16 %v330, %v328
        %v381 = vpack.c.b16 %v331, %v329
        %v382 = vpack.c.b16 %v334, %v332
        %v383 = vpack.c.b16 %v335, %v333
        %v384 = vpack.c.b16 %v338, %v336
        %v385 = vpack.c.b16 %v339, %v337
        %v386 = vpack.c.b16 %v342, %v340
        %v387 = vpack.c.b16 %v343, %v341
        %v388 = vpack.c.b16 %v346, %v344
        %v389 = vpack.c.b16 %v347, %v345
        %v390 = vpack.c.b16 %v350, %v348
        %v391 = vpack.c.b16 %v351, %v349
        %v392 = vpack.c.b16 %v354, %v352
        %v393 = vpack.c.b16 %v355, %v353
        %v394 = vpack.c.b16 %v358, %v356
        %v395 = vpack.c.b16 %v359, %v357
        %v396 = vpack.c.b16 %v362, %v360
        %v397 = vpack.c.b16 %v363, %v361
        %v398 = vpack.c.b16 %v366, %v364
        %v399 = vpack.c.b16 %v367, %v365
        %v464 = vunpack.c.l.b16 %v233
        %v465 = vunpack.c.l.b16 %v234
        %v466 = vunpack.c.l.b16 %v235
        %v467 = vunpack.c.l.b16 %v236
        %v468 = vunpack.c.l.b16 %v237
        %v469 = vunpack.c.l.b16 %v238
        %v470 = vunpack.c.l.b16 %v239
        %v471 = vunpack.c.l.b16 %v240
        %v472 = vunpack.c.l.b16 %v241
        %v473 = vunpack.c.l.b16 %v242
        %v474 = vunpack.c.l.b16 %v243
        %v475 = vunpack.c.l.b16 %v244
        %v476 = vunpack.c.l.b16 %v245
        %v477 = vunpack.c.l.b16 %v246
        %v478 = vunpack.c.l.b16 %v247
        %v479 = vunpack.c.l.b16 %v248
        %v480 = vunpack.c.l.b16 %v249
        %v481 = vunpack.c.l.b16 %v250
        %v482 = vunpack.c.l.b16 %v251
        %v483 = vunpack.c.l.b16 %v252
        %v484 = vunpack.c.l.b16 %v253
        %v485 = vunpack.c.l.b16 %v254
        %v486 = vunpack.c.l.b16 %v255
        %v487 = vunpack.c.l.b16 %v256
        %v488 = vunpack.c.l.b16 %v257
        %v489 = vunpack.c.l.b16 %v258
        %v490 = vunpack.c.l.b16 %v259
        %v491 = vunpack.c.l.b16 %v260
        %v492 = vunpack.c.l.b16 %v261
        %v493 = vunpack.c.l.b16 %v262
        %v494 = vunpack.c.l.b16 %v263
        %v495 = vunpack.c.l.b16 %v264
        %v496 = vpack.c.b16 %v465, %v464
        %v497 = vpack.c.b16 %v467, %v466
        %v498 = vpack.c.b16 %v469, %v468
        %v499 = vpack.c.b16 %v471, %v470
        %v500 = vpack.c.b16 %v473, %v472
        %v501 = vpack.c.b16 %v475, %v474
        %v502 = vpack.c.b16 %v477, %v476
        %v503 = vpack.c.b16 %v479, %v478
        %v504 = vpack.c.b16 %v481, %v480
        %v505 = vpack.c.b16 %v483, %v482
        %v506 = vpack.c.b16 %v485, %v484
        %v507 = vpack.c.b16 %v487, %v486
        %v508 = vpack.c.b16 %v489, %v488
        %v509 = vpack.c.b16 %v491, %v490
        %v510 = vpack.c.b16 %v493, %v492
        %v511 = vpack.c.b16 %v495, %v494
        %528 = vmatprep.subr.bf16.mxu0 0
        %529 = vmatpush1.bf16.msra.mxu0 %v496
        %530 = vmatprep.subr.bf16.mxu0 0
        %531 = vmatpush1.bf16.msra.mxu0 %v497
        %532 = vmatprep.subr.bf16.mxu0 0
        %533 = vmatpush1.bf16.msra.mxu0 %v498
        %534 = vmatprep.subr.bf16.mxu0 0
        %535 = vmatpush1.bf16.msra.mxu0 %v499
        %536 = vmatprep.subr.bf16.mxu0 0
        %537 = vmatpush1.bf16.msra.mxu0 %v500
        %538 = vmatprep.subr.bf16.mxu0 0
        %539 = vmatpush1.bf16.msra.mxu0 %v501
        %540 = vmatprep.subr.bf16.mxu0 0
        %541 = vmatpush1.bf16.msra.mxu0 %v502
        %542 = vmatprep.subr.bf16.mxu0 0
        %543 = vmatpush1.bf16.msra.mxu0 %v503
        %544 = vmatprep.subr.bf16.mxu0 0
        %545 = vmatpush1.bf16.msra.mxu0 %v504
        %546 = vmatprep.subr.bf16.mxu0 0
        %547 = vmatpush1.bf16.msra.mxu0 %v505
        %548 = vmatprep.subr.bf16.mxu0 0
        %549 = vmatpush1.bf16.msra.mxu0 %v506
        %550 = vmatprep.subr.bf16.mxu0 0
        %551 = vmatpush1.bf16.msra.mxu0 %v507
        %552 = vmatprep.subr.bf16.mxu0 0
        %553 = vmatpush1.bf16.msra.mxu0 %v508
        %554 = vmatprep.subr.bf16.mxu0 0
        %555 = vmatpush1.bf16.msra.mxu0 %v509
        %556 = vmatprep.subr.bf16.mxu0 0
        %557 = vmatpush1.bf16.msra.mxu0 %v510
        %558 = vmatprep.subr.bf16.mxu0 0
        %559 = vmatpush1.bf16.msra.mxu0 %v511
        %560 = vmatprep.mubr.bf16.mxu0 %v369
        %561 = vmatmul.mubr.bf16.gmra.mrb[0].mxu0 %v368
        %v562 = vpop.f32.mrb[0].mxu0
        %v563 = vadd.f32 %v270, %v562
        %v564 = vpop.f32.mrb[0].mxu0
        %v565 = vpop.f32.mrb[0].mxu0
        %v566 = vadd.f32 %v270, %v565
        %v567 = vpop.f32.mrb[0].mxu0
        %568 = vmatprep.mubr.bf16.mxu0 %v371
        %569 = vmatmul.mubr.bf16.gmra.mrb[0].mxu0 %v370
        %v570 = vpop.f32.mrb[0].mxu0
        %v571 = vadd.f32 %v270, %v570
        %v572 = vpop.f32.mrb[0].mxu0
        %v573 = vpop.f32.mrb[0].mxu0
        %v574 = vadd.f32 %v270, %v573
        %v575 = vpop.f32.mrb[0].mxu0
        %576 = vmatprep.mubr.bf16.mxu0 %v373
        %577 = vmatmul.mubr.bf16.gmra.mrb[0].mxu0 %v372
        %v578 = vpop.f32.mrb[0].mxu0
        %v579 = vadd.f32 %v270, %v578
        %v580 = vpop.f32.mrb[0].mxu0
        %v581 = vpop.f32.mrb[0].mxu0
        %v582 = vadd.f32 %v270, %v581
        %v583 = vpop.f32.mrb[0].mxu0
        %584 = vmatprep.mubr.bf16.mxu0 %v375
        %585 = vmatmul.mubr.bf16.gmra.mrb[0].mxu0 %v374
        %v586 = vpop.f32.mrb[0].mxu0
        %v587 = vadd.f32 %v270, %v586
        %v588 = vpop.f32.mrb[0].mxu0
        %v589 = vpop.f32.mrb[0].mxu0
        %v590 = vadd.f32 %v270, %v589
        %v591 = vpop.f32.mrb[0].mxu0
        %592 = vmatprep.mubr.bf16.mxu0 %v377
        %593 = vmatmul.mubr.bf16.gmra.mrb[0].mxu0 %v376
        %v594 = vpop.f32.mrb[0].mxu0
        %v595 = vadd.f32 %v270, %v594
        %v596 = vpop.f32.mrb[0].mxu0
        %v597 = vpop.f32.mrb[0].mxu0
        %v598 = vadd.f32 %v270, %v597
        %v599 = vpop.f32.mrb[0].mxu0
        %600 = vmatprep.mubr.bf16.mxu0 %v379
        %601 = vmatmul.mubr.bf16.gmra.mrb[0].mxu0 %v378
        %v602 = vpop.f32.mrb[0].mxu0
        %v603 = vadd.f32 %v270, %v602
        %v604 = vpop.f32.mrb[0].mxu0
        %v605 = vpop.f32.mrb[0].mxu0
        %v606 = vadd.f32 %v270, %v605
        %v607 = vpop.f32.mrb[0].mxu0
        %608 = vmatprep.mubr.bf16.mxu0 %v381
        %609 = vmatmul.mubr.bf16.gmra.mrb[0].mxu0 %v380
        %v610 = vpop.f32.mrb[0].mxu0
        %v611 = vadd.f32 %v270, %v610
        %v612 = vpop.f32.mrb[0].mxu0
        %v613 = vpop.f32.mrb[0].mxu0
        %v614 = vadd.f32 %v270, %v613
        %v615 = vpop.f32.mrb[0].mxu0
        %616 = vmatprep.mubr.bf16.mxu0 %v383
        %617 = vmatmul.mubr.bf16.gmra.mrb[0].mxu0 %v382
        %v618 = vpop.f32.mrb[0].mxu0
        %v619 = vadd.f32 %v270, %v618
        %v620 = vpop.f32.mrb[0].mxu0
        %v621 = vpop.f32.mrb[0].mxu0
        %v622 = vadd.f32 %v270, %v621
        %v623 = vpop.f32.mrb[0].mxu0
        %624 = vmatprep.mubr.bf16.mxu0 %v385
        %625 = vmatmul.mubr.bf16.gmra.mrb[0].mxu0 %v384
        %v626 = vpop.f32.mrb[0].mxu0
        %v627 = vadd.f32 %v270, %v626
        %v628 = vpop.f32.mrb[0].mxu0
        %v629 = vpop.f32.mrb[0].mxu0
        %v630 = vadd.f32 %v270, %v629
        %v631 = vpop.f32.mrb[0].mxu0
        %632 = vmatprep.mubr.bf16.mxu0 %v387
        %633 = vmatmul.mubr.bf16.gmra.mrb[0].mxu0 %v386
        %v634 = vpop.f32.mrb[0].mxu0
        %v635 = vadd.f32 %v270, %v634
        %v636 = vpop.f32.mrb[0].mxu0
        %v637 = vpop.f32.mrb[0].mxu0
        %v638 = vadd.f32 %v270, %v637
        %v639 = vpop.f32.mrb[0].mxu0
        %640 = vmatprep.mubr.bf16.mxu0 %v389
        %641 = vmatmul.mubr.bf16.gmra.mrb[0].mxu0 %v388
        %v642 = vpop.f32.mrb[0].mxu0
        %v643 = vadd.f32 %v270, %v642
        %v644 = vpop.f32.mrb[0].mxu0
        %v645 = vpop.f32.mrb[0].mxu0
        %v646 = vadd.f32 %v270, %v645
        %v647 = vpop.f32.mrb[0].mxu0
        %648 = vmatprep.mubr.bf16.mxu0 %v391
        %649 = vmatmul.mubr.bf16.gmra.mrb[0].mxu0 %v390
        %v650 = vpop.f32.mrb[0].mxu0
        %v651 = vadd.f32 %v270, %v650
        %v652 = vpop.f32.mrb[0].mxu0
        %v653 = vpop.f32.mrb[0].mxu0
        %v654 = vadd.f32 %v270, %v653
        %v655 = vpop.f32.mrb[0].mxu0
        %656 = vmatprep.mubr.bf16.mxu0 %v393
        %657 = vmatmul.mubr.bf16.gmra.mrb[0].mxu0 %v392
        %v658 = vpop.f32.mrb[0].mxu0
        %v659 = vadd.f32 %v270, %v658
        %v660 = vpop.f32.mrb[0].mxu0
        %v661 = vpop.f32.mrb[0].mxu0
        %v662 = vadd.f32 %v270, %v661
        %v663 = vpop.f32.mrb[0].mxu0
        %664 = vmatprep.mubr.bf16.mxu0 %v395
        %665 = vmatmul.mubr.bf16.gmra.mrb[0].mxu0 %v394
        %v666 = vpop.f32.mrb[0].mxu0
        %v667 = vadd.f32 %v270, %v666
        %v668 = vpop.f32.mrb[0].mxu0
        %v669 = vpop.f32.mrb[0].mxu0
        %v670 = vadd.f32 %v270, %v669
        %v671 = vpop.f32.mrb[0].mxu0
        %672 = vmatprep.mubr.bf16.mxu0 %v397
        %673 = vmatmul.mubr.bf16.gmra.mrb[0].mxu0 %v396
        %v674 = vpop.f32.mrb[0].mxu0
        %v675 = vadd.f32 %v270, %v674
        %v676 = vpop.f32.mrb[0].mxu0
        %v677 = vpop.f32.mrb[0].mxu0
        %v678 = vadd.f32 %v270, %v677
        %v679 = vpop.f32.mrb[0].mxu0
        %680 = vmatprep.mubr.bf16.mxu0 %v399
        %681 = vmatmul.mubr.bf16.gmra.mrb[0].mxu0 %v398
        %v682 = vpop.f32.mrb[0].mxu0
        %v683 = vadd.f32 %v270, %v682
        %v684 = vpop.f32.mrb[0].mxu0
        %v685 = vpop.f32.mrb[0].mxu0
        %v686 = vadd.f32 %v270, %v685
        %v687 = vpop.f32.mrb[0].mxu0
        %688 = vdwg.mxu0
        %v689 = vmax.f32 %v563, 0.0
        %v690 = vmax.f32 %v566, 0.0
        %v691 = vmax.f32 %v571, 0.0
        %v692 = vmax.f32 %v574, 0.0
        %v693 = vmax.f32 %v579, 0.0
        %v694 = vmax.f32 %v582, 0.0
        %v695 = vmax.f32 %v587, 0.0
        %v696 = vmax.f32 %v590, 0.0
        %v697 = vmax.f32 %v595, 0.0
        %v698 = vmax.f32 %v598, 0.0
        %v699 = vmax.f32 %v603, 0.0
        %v700 = vmax.f32 %v606, 0.0
        %v701 = vmax.f32 %v611, 0.0
        %v702 = vmax.f32 %v614, 0.0
        %v703 = vmax.f32 %v619, 0.0
        %v704 = vmax.f32 %v622, 0.0
        %v705 = vmax.f32 %v627, 0.0
        %v706 = vmax.f32 %v630, 0.0
        %v707 = vmax.f32 %v635, 0.0
        %v708 = vmax.f32 %v638, 0.0
        %v709 = vmax.f32 %v643, 0.0
        %v710 = vmax.f32 %v646, 0.0
        %v711 = vmax.f32 %v651, 0.0
        %v712 = vmax.f32 %v654, 0.0
        %v713 = vmax.f32 %v659, 0.0
        %v714 = vmax.f32 %v662, 0.0
        %v715 = vmax.f32 %v667, 0.0
        %v716 = vmax.f32 %v670, 0.0
        %v717 = vmax.f32 %v675, 0.0
        %v718 = vmax.f32 %v678, 0.0
        %v719 = vmax.f32 %v683, 0.0
        %v720 = vmax.f32 %v686, 0.0
        %v721 = vpack.c.bf16 %v690, %v689
        %v722 = vpack.c.bf16 %v692, %v691
        %v723 = vpack.c.bf16 %v694, %v693
        %v724 = vpack.c.bf16 %v696, %v695
        %v725 = vpack.c.bf16 %v698, %v697
        %v726 = vpack.c.bf16 %v700, %v699
        %v727 = vpack.c.bf16 %v702, %v701
        %v728 = vpack.c.bf16 %v704, %v703
        %v729 = vpack.c.bf16 %v706, %v705
        %v730 = vpack.c.bf16 %v708, %v707
        %v731 = vpack.c.bf16 %v710, %v709
        %v732 = vpack.c.bf16 %v712, %v711
        %v733 = vpack.c.bf16 %v714, %v713
        %v734 = vpack.c.bf16 %v716, %v715
        %v735 = vpack.c.bf16 %v718, %v717
        %v736 = vpack.c.bf16 %v720, %v719
        %v753 = vunpack.c.l.b16 %v721
        %v754 = vunpack.c.h.b16 %v721
        %v755 = vunpack.c.l.b16 %v722
        %v756 = vunpack.c.h.b16 %v722
        %v757 = vunpack.c.l.b16 %v723
        %v758 = vunpack.c.h.b16 %v723
        %v759 = vunpack.c.l.b16 %v724
        %v760 = vunpack.c.h.b16 %v724
        %v761 = vunpack.c.l.b16 %v725
        %v762 = vunpack.c.h.b16 %v725
        %v763 = vunpack.c.l.b16 %v726
        %v764 = vunpack.c.h.b16 %v726
        %v765 = vunpack.c.l.b16 %v727
        %v766 = vunpack.c.h.b16 %v727
        %v767 = vunpack.c.l.b16 %v728
        %v768 = vunpack.c.h.b16 %v728
        %v769 = vunpack.c.l.b16 %v729
        %v770 = vunpack.c.h.b16 %v729
        %v771 = vunpack.c.l.b16 %v730
        %v772 = vunpack.c.h.b16 %v730
        %v773 = vunpack.c.l.b16 %v731
        %v774 = vunpack.c.h.b16 %v731
        %v775 = vunpack.c.l.b16 %v732
        %v776 = vunpack.c.h.b16 %v732
        %v777 = vunpack.c.l.b16 %v733
        %v778 = vunpack.c.h.b16 %v733
        %v779 = vunpack.c.l.b16 %v734
        %v780 = vunpack.c.h.b16 %v734
        %v781 = vunpack.c.l.b16 %v735
        %v782 = vunpack.c.h.b16 %v735
        %v783 = vunpack.c.l.b16 %v736
        %v784 = vunpack.c.h.b16 %v736
        %v785 = vpack.c.b16 %v753, %v753
        %v786 = vpack.c.b16 %v754, %v754
        %v787 = vpack.c.b16 %v755, %v755
        %v788 = vpack.c.b16 %v756, %v756
        %v789 = vpack.c.b16 %v757, %v757
        %v790 = vpack.c.b16 %v758, %v758
        %v791 = vpack.c.b16 %v759, %v759
        %v792 = vpack.c.b16 %v760, %v760
        %v793 = vpack.c.b16 %v761, %v761
        %v794 = vpack.c.b16 %v762, %v762
        %v795 = vpack.c.b16 %v763, %v763
        %v796 = vpack.c.b16 %v764, %v764
        %v797 = vpack.c.b16 %v765, %v765
        %v798 = vpack.c.b16 %v766, %v766
        %v799 = vpack.c.b16 %v767, %v767
        %v800 = vpack.c.b16 %v768, %v768
        %v801 = vpack.c.b16 %v769, %v769
        %v802 = vpack.c.b16 %v770, %v770
        %v803 = vpack.c.b16 %v771, %v771
        %v804 = vpack.c.b16 %v772, %v772
        %v805 = vpack.c.b16 %v773, %v773
        %v806 = vpack.c.b16 %v774, %v774
        %v807 = vpack.c.b16 %v775, %v775
        %v808 = vpack.c.b16 %v776, %v776
        %v809 = vpack.c.b16 %v777, %v777
        %v810 = vpack.c.b16 %v778, %v778
        %v811 = vpack.c.b16 %v779, %v779
        %v812 = vpack.c.b16 %v780, %v780
        %v813 = vpack.c.b16 %v781, %v781
        %v814 = vpack.c.b16 %v782, %v782
        %v815 = vpack.c.b16 %v783, %v783
        %v816 = vpack.c.b16 %v784, %v784
        %vm849 = vcmask 257024
        %850 = vst.msk [vmem:[%s177] sm:$0xf] %vm849, %v785
        %851 = vst.msk [vmem:[%s177 + $0x4] sm:$0xf] %vm849, %v786
        %852 = vst.msk [vmem:[%s177 + $0x8] sm:$0xf] %vm849, %v787
        %853 = vst.msk [vmem:[%s177 + $0xc] sm:$0xf] %vm849, %v788
        %854 = vst.msk [vmem:[%s177 + $0x10] sm:$0xf] %vm849, %v789
        %855 = vst.msk [vmem:[%s177 + $0x14] sm:$0xf] %vm849, %v790
        %856 = vst.msk [vmem:[%s177 + $0x18] sm:$0xf] %vm849, %v791
        %857 = vst.msk [vmem:[%s177 + $0x1c] sm:$0xf] %vm849, %v792
        %858 = vst.msk [vmem:[%s177 + $0x20] sm:$0xf] %vm849, %v793
        %859 = vst.msk [vmem:[%s177 + $0x24] sm:$0xf] %vm849, %v794
        %860 = vst.msk [vmem:[%s177 + $0x28] sm:$0xf] %vm849, %v795
        %861 = vst.msk [vmem:[%s177 + $0x2c] sm:$0xf] %vm849, %v796
        %862 = vst.msk [vmem:[%s177 + $0x30] sm:$0xf] %vm849, %v797
        %863 = vst.msk [vmem:[%s177 + $0x34] sm:$0xf] %vm849, %v798
        %864 = vst.msk [vmem:[%s177 + $0x38] sm:$0xf] %vm849, %v799
        %865 = vst.msk [vmem:[%s177 + $0x3c] sm:$0xf] %vm849, %v800
        %866 = vst.msk [vmem:[%s177 + $0x40] sm:$0xf] %vm849, %v801
        %867 = vst.msk [vmem:[%s177 + $0x44] sm:$0xf] %vm849, %v802
        %868 = vst.msk [vmem:[%s177 + $0x48] sm:$0xf] %vm849, %v803
        %869 = vst.msk [vmem:[%s177 + $0x4c] sm:$0xf] %vm849, %v804
        %870 = vst.msk [vmem:[%s177 + $0x50] sm:$0xf] %vm849, %v805
        %871 = vst.msk [vmem:[%s177 + $0x54] sm:$0xf] %vm849, %v806
        %872 = vst.msk [vmem:[%s177 + $0x58] sm:$0xf] %vm849, %v807
        %873 = vst.msk [vmem:[%s177 + $0x5c] sm:$0xf] %vm849, %v808
        %874 = vst.msk [vmem:[%s177 + $0x60] sm:$0xf] %vm849, %v809
        %875 = vst.msk [vmem:[%s177 + $0x64] sm:$0xf] %vm849, %v810
        %876 = vst.msk [vmem:[%s177 + $0x68] sm:$0xf] %vm849, %v811
        %877 = vst.msk [vmem:[%s177 + $0x6c] sm:$0xf] %vm849, %v812
        %878 = vst.msk [vmem:[%s177 + $0x70] sm:$0xf] %vm849, %v813
        %879 = vst.msk [vmem:[%s177 + $0x74] sm:$0xf] %vm849, %v814
        %880 = vst.msk [vmem:[%s177 + $0x78] sm:$0xf] %vm849, %v815
        %881 = vst.msk [vmem:[%s177 + $0x7c] sm:$0xf] %vm849, %v816
        %s882 = sand.u32 %s90, 1
        %s883 = sand.u32 %s90, 1
        %s884 = smul.addr %s883, 128
        %s885 = scalar_lea.vmem [#allocation2], %s884
        // Predicated region
        $region33: #{qnet_forward.7} parent=31 // pred_check
          %p886 = pneg %p100
        $region34: #{qnet_forward.7} parent=31 // pred_check_branch
          %888 = sbr.rel (%p886) target = $region36
        $region35: #{qnet_forward.7} parent=31 // pred_region
          %s889 = smul.u32 32, %s14
          %s890 = ssub.s32 196, %s889
          %p891 = scmp.lt.s32.totalorder %s890, 32
          %s892 = scalar_select %p891, %s890, 32
          %s893 = smul.u32 64, %s892
          %p894 = scmp.ne.s32.totalorder 0, %s893
          %s895 = smul.addr %s889, 4
          %s896 = scalar_lea.vmem %s3, %s895
          // Predicated region
          $region37: #{qnet_forward.7} parent=35 // pred_check
            %p897 = pneg %p894
          $region38: #{qnet_forward.7} parent=35 // pred_check_branch
            %899 = sbr.rel (%p897) target = $region40
          $region39: #{qnet_forward.7} parent=35 // pred_region
            // Predicated region
            $region41: #{qnet_forward.7} parent=39 // pred_check
              _
            $region42: #{qnet_forward.7} parent=39 // pred_check_branch
              %901 = sbr.rel target = $region44
            $region43: #{qnet_forward.7} parent=39 // pred_region
              // Predicated region
              $region63: #{qnet_forward.7} parent=43 // pred_check
                _
              $region64: #{qnet_forward.7} parent=43 // pred_check_branch
                %1012 = sbr.rel (0) target = $region66
              $region65: #{qnet_forward.7} parent=43 // pred_region
                %s1014 = sshrl.u32 %s892, 5
                // While loop
                $region67: #{qnet_forward.7} parent=65 // loop_pre_header
                  _
                $region68: #{qnet_forward.7} parent=65 // loop_header
                  %s1016 = sphi 0, %s1018
                  %p1017 = scmp.ge.s32.totalorder %s1016, %s1014
                  %s1021 = sphi 0, %s1090
                  %s1022 = sphi %s885, %s1093
                  %s1023 = sphi %s896, %s1094
                $region69: #{qnet_forward.7} parent=65 // loop_header_branch
                  %1020 = sbr.rel (%p1017) target = $region73
                $region70: #{qnet_forward.7} parent=65 // loop_body
                  %v1024 = vld [vmem:[%s1022] sm:$0xf]
                  %1025 = vst [vmem:[%s1023] sm:$0xf] %v1024
                  %v1026 = vld [vmem:[%s1022 + $0x4] sm:$0xf]
                  %1027 = vst [vmem:[%s1023 + $0x4] sm:$0xf] %v1026
                  %v1028 = vld [vmem:[%s1022 + $0x8] sm:$0xf]
                  %1029 = vst [vmem:[%s1023 + $0x8] sm:$0xf] %v1028
                  %v1030 = vld [vmem:[%s1022 + $0xc] sm:$0xf]
                  %1031 = vst [vmem:[%s1023 + $0xc] sm:$0xf] %v1030
                  %v1032 = vld [vmem:[%s1022 + $0x10] sm:$0xf]
                  %1033 = vst [vmem:[%s1023 + $0x10] sm:$0xf] %v1032
                  %v1034 = vld [vmem:[%s1022 + $0x14] sm:$0xf]
                  %1035 = vst [vmem:[%s1023 + $0x14] sm:$0xf] %v1034
                  %v1036 = vld [vmem:[%s1022 + $0x18] sm:$0xf]
                  %1037 = vst [vmem:[%s1023 + $0x18] sm:$0xf] %v1036
                  %v1038 = vld [vmem:[%s1022 + $0x1c] sm:$0xf]
                  %1039 = vst [vmem:[%s1023 + $0x1c] sm:$0xf] %v1038
                  %v1040 = vld [vmem:[%s1022 + $0x20] sm:$0xf]
                  %1041 = vst [vmem:[%s1023 + $0x20] sm:$0xf] %v1040
                  %v1042 = vld [vmem:[%s1022 + $0x24] sm:$0xf]
                  %1043 = vst [vmem:[%s1023 + $0x24] sm:$0xf] %v1042
                  %v1044 = vld [vmem:[%s1022 + $0x28] sm:$0xf]
                  %1045 = vst [vmem:[%s1023 + $0x28] sm:$0xf] %v1044
                  %v1046 = vld [vmem:[%s1022 + $0x2c] sm:$0xf]
                  %1047 = vst [vmem:[%s1023 + $0x2c] sm:$0xf] %v1046
                  %v1048 = vld [vmem:[%s1022 + $0x30] sm:$0xf]
                  %1049 = vst [vmem:[%s1023 + $0x30] sm:$0xf] %v1048
                  %v1050 = vld [vmem:[%s1022 + $0x34] sm:$0xf]
                  %1051 = vst [vmem:[%s1023 + $0x34] sm:$0xf] %v1050
                  %v1052 = vld [vmem:[%s1022 + $0x38] sm:$0xf]
                  %1053 = vst [vmem:[%s1023 + $0x38] sm:$0xf] %v1052
                  %v1054 = vld [vmem:[%s1022 + $0x3c] sm:$0xf]
                  %1055 = vst [vmem:[%s1023 + $0x3c] sm:$0xf] %v1054
                  %v1056 = vld [vmem:[%s1022 + $0x40] sm:$0xf]
                  %1057 = vst [vmem:[%s1023 + $0x40] sm:$0xf] %v1056
                  %v1058 = vld [vmem:[%s1022 + $0x44] sm:$0xf]
                  %1059 = vst [vmem:[%s1023 + $0x44] sm:$0xf] %v1058
                  %v1060 = vld [vmem:[%s1022 + $0x48] sm:$0xf]
                  %1061 = vst [vmem:[%s1023 + $0x48] sm:$0xf] %v1060
                  %v1062 = vld [vmem:[%s1022 + $0x4c] sm:$0xf]
                  %1063 = vst [vmem:[%s1023 + $0x4c] sm:$0xf] %v1062
                  %v1064 = vld [vmem:[%s1022 + $0x50] sm:$0xf]
                  %1065 = vst [vmem:[%s1023 + $0x50] sm:$0xf] %v1064
                  %v1066 = vld [vmem:[%s1022 + $0x54] sm:$0xf]
                  %1067 = vst [vmem:[%s1023 + $0x54] sm:$0xf] %v1066
                  %v1068 = vld [vmem:[%s1022 + $0x58] sm:$0xf]
                  %1069 = vst [vmem:[%s1023 + $0x58] sm:$0xf] %v1068
                  %v1070 = vld [vmem:[%s1022 + $0x5c] sm:$0xf]
                  %1071 = vst [vmem:[%s1023 + $0x5c] sm:$0xf] %v1070
                  %v1072 = vld [vmem:[%s1022 + $0x60] sm:$0xf]
                  %1073 = vst [vmem:[%s1023 + $0x60] sm:$0xf] %v1072
                  %v1074 = vld [vmem:[%s1022 + $0x64] sm:$0xf]
                  %1075 = vst [vmem:[%s1023 + $0x64] sm:$0xf] %v1074
                  %v1076 = vld [vmem:[%s1022 + $0x68] sm:$0xf]
                  %1077 = vst [vmem:[%s1023 + $0x68] sm:$0xf] %v1076
                  %v1078 = vld [vmem:[%s1022 + $0x6c] sm:$0xf]
                  %1079 = vst [vmem:[%s1023 + $0x6c] sm:$0xf] %v1078
                  %v1080 = vld [vmem:[%s1022 + $0x70] sm:$0xf]
                  %1081 = vst [vmem:[%s1023 + $0x70] sm:$0xf] %v1080
                  %v1082 = vld [vmem:[%s1022 + $0x74] sm:$0xf]
                  %1083 = vst [vmem:[%s1023 + $0x74] sm:$0xf] %v1082
                  %v1084 = vld [vmem:[%s1022 + $0x78] sm:$0xf]
                  %1085 = vst [vmem:[%s1023 + $0x78] sm:$0xf] %v1084
                  %v1086 = vld [vmem:[%s1022 + $0x7c] sm:$0xf]
                  %1087 = vst [vmem:[%s1023 + $0x7c] sm:$0xf] %v1086
                  %s1088 = sadd.s32 1, %s1021
                  %p1089 = scmp.ge.s32.totalorder %s1088, %s1014
                  %s1090 = scalar_select %p1089, 0, %s1088
                  %s1091 = smul.u32 %s1090, 128
                  %s1092 = smul.u32 %s1090, 128
                  %s1093 = scalar_lea.vmem %s885, %s1091 [#allocation2]
                  %s1094 = scalar_lea.vmem %s896, %s1092
                $region71: #{qnet_forward.7} parent=65 // loop_footer
                  %s1018 = sadd.s32 %s1016, 1
                $region72: #{qnet_forward.7} parent=65 // loop_footer_branch
                  %1015 = sbr.rel target = $region68
                $region73: #{qnet_forward.7} parent=65 // loop_exit
                  _
                %s1095 = sshrl.u32 %s892, 5
                %s1096 = sand.u32 %s892, 31
                %s1097 = smul.u32 %s1095, 32
                %s1098 = smul.u32 4, %s1097
                %s1099 = scalar_lea.vmem %s885, %s1098 [#allocation2]
                %s1100 = smul.u32 4, %s1097
                %s1101 = scalar_lea.vmem %s896, %s1100
                // While loop
                $region74: #{qnet_forward.7} parent=65 // loop_pre_header
                  _
                $region75: #{qnet_forward.7} parent=65 // loop_header
                  %s1103 = sphi 0, %s1105
                  %p1104 = scmp.ge.s32.totalorder %s1103, %s1096
                  %s1108 = sphi 0, %s1115
                  %s1109 = sphi %s1099, %s1118
                  %s1110 = sphi %s1101, %s1119
                $region76: #{qnet_forward.7} parent=65 // loop_header_branch
                  %1107 = sbr.rel (%p1104) target = $region80
                $region77: #{qnet_forward.7} parent=65 // loop_body
                  %v1111 = vld [vmem:[%s1109] sm:$0xf]
                  %1112 = vst [vmem:[%s1110] sm:$0xf] %v1111
                  %s1113 = sadd.s32 1, %s1108
                  %p1114 = scmp.ge.s32.totalorder %s1113, %s1096
                  %s1115 = scalar_select %p1114, 0, %s1113
                  %s1116 = smul.u32 %s1115, 4
                  %s1117 = smul.u32 %s1115, 4
                  %s1118 = scalar_lea.vmem %s1099, %s1116 [#allocation2]
                  %s1119 = scalar_lea.vmem %s1101, %s1117
                $region78: #{qnet_forward.7} parent=65 // loop_footer
                  %s1105 = sadd.s32 %s1103, 1
                $region79: #{qnet_forward.7} parent=65 // loop_footer_branch
                  %1102 = sbr.rel target = $region75
                $region80: #{qnet_forward.7} parent=65 // loop_exit
                  _
              $region66: #{qnet_forward.7} parent=43 // pred_fallthru
                _
            $region44: #{qnet_forward.7} parent=39 // pred_fallthru
              _
            // Predicated region
            $region45: #{qnet_forward.7} parent=39 // pred_check
              _
            $region46: #{qnet_forward.7} parent=39 // pred_check_branch
              %903 = sbr.rel (0) target = $region48
            $region47: #{qnet_forward.7} parent=39 // pred_region
              %s905 = sshrl.u32 %s892, 5
              // While loop
              $region49: #{qnet_forward.7} parent=47 // loop_pre_header
                _
              $region50: #{qnet_forward.7} parent=47 // loop_header
                %s907 = sphi 0, %s909
                %p908 = scmp.ge.s32.totalorder %s907, %s905
                %s912 = sphi 0, %s981
                %s913 = sphi %s885, %s984
                %s914 = sphi %s896, %s985
              $region51: #{qnet_forward.7} parent=47 // loop_header_branch
                %911 = sbr.rel (%p908) target = $region55
              $region52: #{qnet_forward.7} parent=47 // loop_body
                %v915 = vld [vmem:[%s913] sm:$0xf]
                %916 = vst [vmem:[%s914] sm:$0xf] %v915
                %v917 = vld [vmem:[%s913 + $0x4] sm:$0xf]
                %918 = vst [vmem:[%s914 + $0x4] sm:$0xf] %v917
                %v919 = vld [vmem:[%s913 + $0x8] sm:$0xf]
                %920 = vst [vmem:[%s914 + $0x8] sm:$0xf] %v919
                %v921 = vld [vmem:[%s913 + $0xc] sm:$0xf]
                %922 = vst [vmem:[%s914 + $0xc] sm:$0xf] %v921
                %v923 = vld [vmem:[%s913 + $0x10] sm:$0xf]
                %924 = vst [vmem:[%s914 + $0x10] sm:$0xf] %v923
                %v925 = vld [vmem:[%s913 + $0x14] sm:$0xf]
                %926 = vst [vmem:[%s914 + $0x14] sm:$0xf] %v925
                %v927 = vld [vmem:[%s913 + $0x18] sm:$0xf]
                %928 = vst [vmem:[%s914 + $0x18] sm:$0xf] %v927
                %v929 = vld [vmem:[%s913 + $0x1c] sm:$0xf]
                %930 = vst [vmem:[%s914 + $0x1c] sm:$0xf] %v929
                %v931 = vld [vmem:[%s913 + $0x20] sm:$0xf]
                %932 = vst [vmem:[%s914 + $0x20] sm:$0xf] %v931
                %v933 = vld [vmem:[%s913 + $0x24] sm:$0xf]
                %934 = vst [vmem:[%s914 + $0x24] sm:$0xf] %v933
                %v935 = vld [vmem:[%s913 + $0x28] sm:$0xf]
                %936 = vst [vmem:[%s914 + $0x28] sm:$0xf] %v935
                %v937 = vld [vmem:[%s913 + $0x2c] sm:$0xf]
                %938 = vst [vmem:[%s914 + $0x2c] sm:$0xf] %v937
                %v939 = vld [vmem:[%s913 + $0x30] sm:$0xf]
                %940 = vst [vmem:[%s914 + $0x30] sm:$0xf] %v939
                %v941 = vld [vmem:[%s913 + $0x34] sm:$0xf]
                %942 = vst [vmem:[%s914 + $0x34] sm:$0xf] %v941
                %v943 = vld [vmem:[%s913 + $0x38] sm:$0xf]
                %944 = vst [vmem:[%s914 + $0x38] sm:$0xf] %v943
                %v945 = vld [vmem:[%s913 + $0x3c] sm:$0xf]
                %946 = vst [vmem:[%s914 + $0x3c] sm:$0xf] %v945
                %v947 = vld [vmem:[%s913 + $0x40] sm:$0xf]
                %948 = vst [vmem:[%s914 + $0x40] sm:$0xf] %v947
                %v949 = vld [vmem:[%s913 + $0x44] sm:$0xf]
                %950 = vst [vmem:[%s914 + $0x44] sm:$0xf] %v949
                %v951 = vld [vmem:[%s913 + $0x48] sm:$0xf]
                %952 = vst [vmem:[%s914 + $0x48] sm:$0xf] %v951
                %v953 = vld [vmem:[%s913 + $0x4c] sm:$0xf]
                %954 = vst [vmem:[%s914 + $0x4c] sm:$0xf] %v953
                %v955 = vld [vmem:[%s913 + $0x50] sm:$0xf]
                %956 = vst [vmem:[%s914 + $0x50] sm:$0xf] %v955
                %v957 = vld [vmem:[%s913 + $0x54] sm:$0xf]
                %958 = vst [vmem:[%s914 + $0x54] sm:$0xf] %v957
                %v959 = vld [vmem:[%s913 + $0x58] sm:$0xf]
                %960 = vst [vmem:[%s914 + $0x58] sm:$0xf] %v959
                %v961 = vld [vmem:[%s913 + $0x5c] sm:$0xf]
                %962 = vst [vmem:[%s914 + $0x5c] sm:$0xf] %v961
                %v963 = vld [vmem:[%s913 + $0x60] sm:$0xf]
                %964 = vst [vmem:[%s914 + $0x60] sm:$0xf] %v963
                %v965 = vld [vmem:[%s913 + $0x64] sm:$0xf]
                %966 = vst [vmem:[%s914 + $0x64] sm:$0xf] %v965
                %v967 = vld [vmem:[%s913 + $0x68] sm:$0xf]
                %968 = vst [vmem:[%s914 + $0x68] sm:$0xf] %v967
                %v969 = vld [vmem:[%s913 + $0x6c] sm:$0xf]
                %970 = vst [vmem:[%s914 + $0x6c] sm:$0xf] %v969
                %v971 = vld [vmem:[%s913 + $0x70] sm:$0xf]
                %972 = vst [vmem:[%s914 + $0x70] sm:$0xf] %v971
                %v973 = vld [vmem:[%s913 + $0x74] sm:$0xf]
                %974 = vst [vmem:[%s914 + $0x74] sm:$0xf] %v973
                %v975 = vld [vmem:[%s913 + $0x78] sm:$0xf]
                %976 = vst [vmem:[%s914 + $0x78] sm:$0xf] %v975
                %v977 = vld [vmem:[%s913 + $0x7c] sm:$0xf]
                %978 = vst [vmem:[%s914 + $0x7c] sm:$0xf] %v977
                %s979 = sadd.s32 1, %s912
                %p980 = scmp.ge.s32.totalorder %s979, %s905
                %s981 = scalar_select %p980, 0, %s979
                %s982 = smul.u32 %s981, 128
                %s983 = smul.u32 %s981, 128
                %s984 = scalar_lea.vmem %s885, %s982 [#allocation2]
                %s985 = scalar_lea.vmem %s896, %s983
              $region53: #{qnet_forward.7} parent=47 // loop_footer
                %s909 = sadd.s32 %s907, 1
              $region54: #{qnet_forward.7} parent=47 // loop_footer_branch
                %906 = sbr.rel target = $region50
              $region55: #{qnet_forward.7} parent=47 // loop_exit
                _
              %s986 = sshrl.u32 %s892, 5
              %s987 = sand.u32 %s892, 31
              %s988 = smul.u32 %s986, 32
              %s989 = smul.u32 4, %s988
              %s990 = scalar_lea.vmem %s885, %s989 [#allocation2]
              %s991 = smul.u32 4, %s988
              %s992 = scalar_lea.vmem %s896, %s991
              // While loop
              $region56: #{qnet_forward.7} parent=47 // loop_pre_header
                _
              $region57: #{qnet_forward.7} parent=47 // loop_header
                %s994 = sphi 0, %s996
                %p995 = scmp.ge.s32.totalorder %s994, %s987
                %s999 = sphi 0, %s1006
                %s1000 = sphi %s990, %s1009
                %s1001 = sphi %s992, %s1010
              $region58: #{qnet_forward.7} parent=47 // loop_header_branch
                %998 = sbr.rel (%p995) target = $region62
              $region59: #{qnet_forward.7} parent=47 // loop_body
                %v1002 = vld [vmem:[%s1000] sm:$0xf]
                %1003 = vst [vmem:[%s1001] sm:$0xf] %v1002
                %s1004 = sadd.s32 1, %s999
                %p1005 = scmp.ge.s32.totalorder %s1004, %s987
                %s1006 = scalar_select %p1005, 0, %s1004
                %s1007 = smul.u32 %s1006, 4
                %s1008 = smul.u32 %s1006, 4
                %s1009 = scalar_lea.vmem %s990, %s1007 [#allocation2]
                %s1010 = scalar_lea.vmem %s992, %s1008
              $region60: #{qnet_forward.7} parent=47 // loop_footer
                %s996 = sadd.s32 %s994, 1
              $region61: #{qnet_forward.7} parent=47 // loop_footer_branch
                %993 = sbr.rel target = $region57
              $region62: #{qnet_forward.7} parent=47 // loop_exit
                _
            $region48: #{qnet_forward.7} parent=39 // pred_fallthru
              _
          $region40: #{qnet_forward.7} parent=35 // pred_fallthru
            _
          %1120 = vnop
        $region36: #{qnet_forward.7} parent=31 // pred_fallthru
          _
      $region32: #{qnet_forward.7} parent=5 // pred_fallthru
        _
      %p1121 = scmp.le.s32.totalorder 2, %s9
      // Predicated region
      $region81: #{qnet_forward.7} parent=5 // pred_check
        %p1122 = pneg %p1121
      $region82: #{qnet_forward.7} parent=5 // pred_check_branch
        %1124 = sbr.rel (%p1122) target = $region84
      $region83: #{qnet_forward.7} parent=5 // pred_region
        %s1125 = ssub.s32 %s9, 2
        // Predicated region
        $region85: #{qnet_forward.7} parent=83 // pred_check
          %p1126 = pneg %p106
        $region86: #{qnet_forward.7} parent=83 // pred_check_branch
          %1128 = sbr.rel (%p1126) target = $region88
        $region87: #{qnet_forward.7} parent=83 // pred_region
          %s1129 = sand.u32 %s91, 1
          %s1130 = sand.u32 %s91, 1
          %s1131 = smul.addr %s1130, 128
          %s1132 = scalar_lea.vmem [#allocation2], %s1131
        $region88: #{qnet_forward.7} parent=83 // pred_fallthru
          _
      $region84: #{qnet_forward.7} parent=5 // pred_fallthru
        _
    $region6: #{qnet_forward.7} parent=1 // loop_footer
      %s13 = sadd.s32 1, %s9
    $region7: #{qnet_forward.7} parent=1 // loop_footer_branch
      %8 = sbr.rel target = $region3
    $region8: #{qnet_forward.7} parent=1 // loop_exit
      _

// kernel: qnet_forward.8
$region0: #{qnet_forward.8}
  #allocation0 [shape = 'u32[]', space=smem, size = 0x4, offset = 0x4, fixed_abs, tag = 'smem constant byte address 0x4 - core index']
  #allocation1 [shape = 'u32[144,128]{1,0:T(1,128)}', space=vmem, size = 0x12000, scoped, tag = 'internal scratch']
  %s0 = inlined_call_operand.vmem [shape: bf16[2,128], index: 0, kind: input, shape index: {}]
  %s1 = inlined_call_operand.vmem [shape: bf16[128,784], index: 1, kind: input, shape index: {}]
  %s2 = inlined_call_operand.vmem [shape: f32[1,784], index: 2, kind: input, shape index: {}]
  %s3 = inlined_call_operand.vmem [shape: bf16[2,784], index: 3, kind: output, shape index: {}]
  %s4 = sld [smem:[#allocation0]]
  $region22: #{qnet_forward.8} parent=0
    _
  %s6 = ssub.s32 1, %s4
  %s7 = scalar_select 0, %s6, %s4
  // Predicated region
  $region2: #{qnet_forward.8} parent=0 // pred_check
    _
  $region3: #{qnet_forward.8} parent=0 // pred_check_branch
    %9 = sbr.rel (0) target = $region5
  $region4: #{qnet_forward.8} parent=0 // pred_region
    _
  $region5: #{qnet_forward.8} parent=0 // pred_fallthru
    _
  // Predicated region
  $region6: #{qnet_forward.8} parent=0 // pred_check
    _
  $region7: #{qnet_forward.8} parent=0 // pred_check_branch
    %11 = sbr.rel (0) target = $region9
  $region8: #{qnet_forward.8} parent=0 // pred_region
    _
  $region9: #{qnet_forward.8} parent=0 // pred_fallthru
    _
  // Predicated region
  $region10: #{qnet_forward.8} parent=0 // pred_check
    _
  $region11: #{qnet_forward.8} parent=0 // pred_check_branch
    %13 = sbr.rel (0) target = $region13
  $region12: #{qnet_forward.8} parent=0 // pred_region
    _
  $region13: #{qnet_forward.8} parent=0 // pred_fallthru
    _
  %v15 = vld [vmem:[%s0] sm:$0x1]
  %v16 = vld [vmem:[%s1] sm:$0xff]
  %v17 = vld [vmem:[%s1 + $0x8] sm:$0xff]
  %v18 = vld [vmem:[%s1 + $0x10] sm:$0xff]
  %v19 = vld [vmem:[%s1 + $0x18] sm:$0xf]
  %v20 = vld [vmem:[%s1 + $0x1c] sm:$0xff]
  %v21 = vld [vmem:[%s1 + $0x24] sm:$0xff]
  %v22 = vld [vmem:[%s1 + $0x2c] sm:$0xff]
  %v23 = vld [vmem:[%s1 + $0x34] sm:$0xf]
  %v24 = vld [vmem:[%s1 + $0x38] sm:$0xff]
  %v25 = vld [vmem:[%s1 + $0x40] sm:$0xff]
  %v26 = vld [vmem:[%s1 + $0x48] sm:$0xff]
  %v27 = vld [vmem:[%s1 + $0x50] sm:$0xf]
  %v28 = vld [vmem:[%s1 + $0x54] sm:$0xff]
  %v29 = vld [vmem:[%s1 + $0x5c] sm:$0xff]
  %v30 = vld [vmem:[%s1 + $0x64] sm:$0xff]
  %v31 = vld [vmem:[%s1 + $0x6c] sm:$0xf]
  %v32 = vld [vmem:[%s1 + $0x70] sm:$0xff]
  %v33 = vld [vmem:[%s1 + $0x78] sm:$0xff]
  %v34 = vld [vmem:[%s1 + $0x80] sm:$0xff]
  %v35 = vld [vmem:[%s1 + $0x88] sm:$0xf]
  %v36 = vld [vmem:[%s1 + $0x8c] sm:$0xff]
  %v37 = vld [vmem:[%s1 + $0x94] sm:$0xff]
  %v38 = vld [vmem:[%s1 + $0x9c] sm:$0xff]
  %v39 = vld [vmem:[%s1 + $0xa4] sm:$0xf]
  %v40 = vld [vmem:[%s1 + $0xa8] sm:$0xff]
  %v41 = vld [vmem:[%s1 + $0xb0] sm:$0xff]
  %v42 = vld [vmem:[%s1 + $0xb8] sm:$0xff]
  %v43 = vld [vmem:[%s1 + $0xc0] sm:$0xf]
  %v44 = vld [vmem:[%s1 + $0xc4] sm:$0xff]
  %v45 = vld [vmem:[%s1 + $0xcc] sm:$0xff]
  %v46 = vld [vmem:[%s1 + $0xd4] sm:$0xff]
  %v47 = vld [vmem:[%s1 + $0xdc] sm:$0xf]
  %v48 = vld [vmem:[%s1 + $0xe0] sm:$0xff]
  %v49 = vld [vmem:[%s1 + $0xe8] sm:$0xff]
  %v50 = vld [vmem:[%s1 + $0xf0] sm:$0xff]
  %v51 = vld [vmem:[%s1 + $0xf8] sm:$0xf]
  %v52 = vld [vmem:[%s1 + $0xfc] sm:$0xff]
  %v53 = vld [vmem:[%s1 + $0x104] sm:$0xff]
  %v54 = vld [vmem:[%s1 + $0x10c] sm:$0xff]
  %v55 = vld [vmem:[%s1 + $0x114] sm:$0xf]
  %v56 = vld [vmem:[%s1 + $0x118] sm:$0xff]
  %v57 = vld [vmem:[%s1 + $0x120] sm:$0xff]
  %v58 = vld [vmem:[%s1 + $0x128] sm:$0xff]
  %v59 = vld [vmem:[%s1 + $0x130] sm:$0xf]
  %v60 = vld [vmem:[%s1 + $0x134] sm:$0xff]
  %v61 = vld [vmem:[%s1 + $0x13c] sm:$0xff]
  %v62 = vld [vmem:[%s1 + $0x144] sm:$0xff]
  %v63 = vld [vmem:[%s1 + $0x14c] sm:$0xf]
  %v64 = vld [vmem:[%s1 + $0x150] sm:$0xff]
  %v65 = vld [vmem:[%s1 + $0x158] sm:$0xff]
  %v66 = vld [vmem:[%s1 + $0x160] sm:$0xff]
  %v67 = vld [vmem:[%s1 + $0x168] sm:$0xf]
  %v68 = vld [vmem:[%s1 + $0x16c] sm:$0xff]
  %v69 = vld [vmem:[%s1 + $0x174] sm:$0xff]
  %v70 = vld [vmem:[%s1 + $0x17c] sm:$0xff]
  %v71 = vld [vmem:[%s1 + $0x184] sm:$0xf]
  %v72 = vld [vmem:[%s1 + $0x188] sm:$0xff]
  %v73 = vld [vmem:[%s1 + $0x190] sm:$0xff]
  %v74 = vld [vmem:[%s1 + $0x198] sm:$0xff]
  %v75 = vld [vmem:[%s1 + $0x1a0] sm:$0xf]
  %v76 = vld [vmem:[%s1 + $0x1a4] sm:$0xff]
  %v77 = vld [vmem:[%s1 + $0x1ac] sm:$0xff]
  %v78 = vld [vmem:[%s1 + $0x1b4] sm:$0xff]
  %v79 = vld [vmem:[%s1 + $0x1bc] sm:$0xf]
  %v80 = vld [vmem:[%s2] sm:$0x7f]
  %v82 = vlaneseq
  %v83 = vshrl.u32 %v82, 7
  %v84 = vsub.s32 0, %v83
  %v85 = vrot.slane %v80, %v84
  %v86 = vlaneseq
  %v87 = vshrl.u32 %v86, 7
  %v88 = vsub.s32 1, %v87
  %v89 = vrot.slane %v80, %v88
  %v90 = vlaneseq
  %v91 = vshrl.u32 %v90, 7
  %v92 = vsub.s32 2, %v91
  %v93 = vrot.slane %v80, %v92
  %v94 = vlaneseq
  %v95 = vshrl.u32 %v94, 7
  %v96 = vsub.s32 3, %v95
  %v97 = vrot.slane %v80, %v96
  %v98 = vlaneseq
  %v99 = vshrl.u32 %v98, 7
  %v100 = vsub.s32 4, %v99
  %v101 = vrot.slane %v80, %v100
  %v102 = vlaneseq
  %v103 = vshrl.u32 %v102, 7
  %v104 = vsub.s32 5, %v103
  %v105 = vrot.slane %v80, %v104
  %v106 = vlaneseq
  %v107 = vshrl.u32 %v106, 7
  %v108 = vsub.s32 6, %v107
  %v109 = vrot.slane %v80, %v108
  %v181 = vunpack.c.l.b16 %v16
  %v182 = vunpack.c.h.b16 %v16
  %v183 = vunpack.c.l.b16 %v17
  %v184 = vunpack.c.h.b16 %v17
  %v185 = vunpack.c.l.b16 %v18
  %v186 = vunpack.c.h.b16 %v18
  %v187 = vunpack.c.l.b16 %v19
  %v188 = vunpack.c.l.b16 %v20
  %v189 = vunpack.c.h.b16 %v20
  %v190 = vunpack.c.l.b16 %v21
  %v191 = vunpack.c.h.b16 %v21
  %v192 = vunpack.c.l.b16 %v22
  %v193 = vunpack.c.h.b16 %v22
  %v194 = vunpack.c.l.b16 %v23
  %v195 = vunpack.c.l.b16 %v24
  %v196 = vunpack.c.h.b16 %v24
  %v197 = vunpack.c.l.b16 %v25
  %v198 = vunpack.c.h.b16 %v25
  %v199 = vunpack.c.l.b16 %v26
  %v200 = vunpack.c.h.b16 %v26
  %v201 = vunpack.c.l.b16 %v27
  %v202 = vunpack.c.l.b16 %v28
  %v203 = vunpack.c.h.b16 %v28
  %v204 = vunpack.c.l.b16 %v29
  %v205 = vunpack.c.h.b16 %v29
  %v206 = vunpack.c.l.b16 %v30
  %v207 = vunpack.c.h.b16 %v30
  %v208 = vunpack.c.l.b16 %v31
  %v209 = vunpack.c.l.b16 %v32
  %v210 = vunpack.c.h.b16 %v32
  %v211 = vunpack.c.l.b16 %v33
  %v212 = vunpack.c.h.b16 %v33
  %v213 = vunpack.c.l.b16 %v34
  %v214 = vunpack.c.h.b16 %v34
  %v215 = vunpack.c.l.b16 %v35
  %v216 = vunpack.c.l.b16 %v36
  %v217 = vunpack.c.h.b16 %v36
  %v218 = vunpack.c.l.b16 %v37
  %v219 = vunpack.c.h.b16 %v37
  %v220 = vunpack.c.l.b16 %v38
  %v221 = vunpack.c.h.b16 %v38
  %v222 = vunpack.c.l.b16 %v39
  %v223 = vunpack.c.l.b16 %v40
  %v224 = vunpack.c.h.b16 %v40
  %v225 = vunpack.c.l.b16 %v41
  %v226 = vunpack.c.h.b16 %v41
  %v227 = vunpack.c.l.b16 %v42
  %v228 = vunpack.c.h.b16 %v42
  %v229 = vunpack.c.l.b16 %v43
  %v230 = vunpack.c.l.b16 %v44
  %v231 = vunpack.c.h.b16 %v44
  %v232 = vunpack.c.l.b16 %v45
  %v233 = vunpack.c.h.b16 %v45
  %v234 = vunpack.c.l.b16 %v46
  %v235 = vunpack.c.h.b16 %v46
  %v236 = vunpack.c.l.b16 %v47
  %v237 = vunpack.c.l.b16 %v48
  %v238 = vunpack.c.h.b16 %v48
  %v239 = vunpack.c.l.b16 %v49
  %v240 = vunpack.c.h.b16 %v49
  %v241 = vunpack.c.l.b16 %v50
  %v242 = vunpack.c.h.b16 %v50
  %v243 = vunpack.c.l.b16 %v51
  %v244 = vunpack.c.l.b16 %v52
  %v245 = vunpack.c.h.b16 %v52
  %v246 = vunpack.c.l.b16 %v53
  %v247 = vunpack.c.h.b16 %v53
  %v248 = vunpack.c.l.b16 %v54
  %v249 = vunpack.c.h.b16 %v54
  %v250 = vunpack.c.l.b16 %v55
  %v251 = vunpack.c.l.b16 %v56
  %v252 = vunpack.c.h.b16 %v56
  %v253 = vunpack.c.l.b16 %v57
  %v254 = vunpack.c.h.b16 %v57
  %v255 = vunpack.c.l.b16 %v58
  %v256 = vunpack.c.h.b16 %v58
  %v257 = vunpack.c.l.b16 %v59
  %v258 = vunpack.c.l.b16 %v60
  %v259 = vunpack.c.h.b16 %v60
  %v260 = vunpack.c.l.b16 %v61
  %v261 = vunpack.c.h.b16 %v61
  %v262 = vunpack.c.l.b16 %v62
  %v263 = vunpack.c.h.b16 %v62
  %v264 = vunpack.c.l.b16 %v63
  %v265 = vunpack.c.l.b16 %v64
  %v266 = vunpack.c.h.b16 %v64
  %v267 = vunpack.c.l.b16 %v65
  %v268 = vunpack.c.h.b16 %v65
  %v269 = vunpack.c.l.b16 %v66
  %v270 = vunpack.c.h.b16 %v66
  %v271 = vunpack.c.l.b16 %v67
  %v272 = vunpack.c.l.b16 %v68
  %v273 = vunpack.c.h.b16 %v68
  %v274 = vunpack.c.l.b16 %v69
  %v275 = vunpack.c.h.b16 %v69
  %v276 = vunpack.c.l.b16 %v70
  %v277 = vunpack.c.h.b16 %v70
  %v278 = vunpack.c.l.b16 %v71
  %v279 = vunpack.c.l.b16 %v72
  %v280 = vunpack.c.h.b16 %v72
  %v281 = vunpack.c.l.b16 %v73
  %v282 = vunpack.c.h.b16 %v73
  %v283 = vunpack.c.l.b16 %v74
  %v284 = vunpack.c.h.b16 %v74
  %v285 = vunpack.c.l.b16 %v75
  %v286 = vunpack.c.l.b16 %v76
  %v287 = vunpack.c.h.b16 %v76
  %v288 = vunpack.c.l.b16 %v77
  %v289 = vunpack.c.h.b16 %v77
  %v290 = vunpack.c.l.b16 %v78
  %v291 = vunpack.c.h.b16 %v78
  %v292 = vunpack.c.l.b16 %v79
  %v293 = vpack.c.b16 %v188, %v181
  %v294 = vpack.c.b16 %v189, %v182
  %v295 = vpack.c.b16 %v190, %v183
  %v296 = vpack.c.b16 %v191, %v184
  %v297 = vpack.c.b16 %v192, %v185
  %v298 = vpack.c.b16 %v193, %v186
  %v299 = vpack.c.b16 %v194, %v187
  %v300 = vpack.c.b16 %v202, %v195
  %v301 = vpack.c.b16 %v203, %v196
  %v302 = vpack.c.b16 %v204, %v197
  %v303 = vpack.c.b16 %v205, %v198
  %v304 = vpack.c.b16 %v206, %v199
  %v305 = vpack.c.b16 %v207, %v200
  %v306 = vpack.c.b16 %v208, %v201
  %v307 = vpack.c.b16 %v216, %v209
  %v308 = vpack.c.b16 %v217, %v210
  %v309 = vpack.c.b16 %v218, %v211
  %v310 = vpack.c.b16 %v219, %v212
  %v311 = vpack.c.b16 %v220, %v213
  %v312 = vpack.c.b16 %v221, %v214
  %v313 = vpack.c.b16 %v222, %v215
  %v314 = vpack.c.b16 %v230, %v223
  %v315 = vpack.c.b16 %v231, %v224
  %v316 = vpack.c.b16 %v232, %v225
  %v317 = vpack.c.b16 %v233, %v226
  %v318 = vpack.c.b16 %v234, %v227
  %v319 = vpack.c.b16 %v235, %v228
  %v320 = vpack.c.b16 %v236, %v229
  %v321 = vpack.c.b16 %v244, %v237
  %v322 = vpack.c.b16 %v245, %v238
  %v323 = vpack.c.b16 %v246, %v239
  %v324 = vpack.c.b16 %v247, %v240
  %v325 = vpack.c.b16 %v248, %v241
  %v326 = vpack.c.b16 %v249, %v242
  %v327 = vpack.c.b16 %v250, %v243
  %v328 = vpack.c.b16 %v258, %v251
  %v329 = vpack.c.b16 %v259, %v252
  %v330 = vpack.c.b16 %v260, %v253
  %v331 = vpack.c.b16 %v261, %v254
  %v332 = vpack.c.b16 %v262, %v255
  %v333 = vpack.c.b16 %v263, %v256
  %v334 = vpack.c.b16 %v264, %v257
  %v335 = vpack.c.b16 %v272, %v265
  %v336 = vpack.c.b16 %v273, %v266
  %v337 = vpack.c.b16 %v274, %v267
  %v338 = vpack.c.b16 %v275, %v268
  %v339 = vpack.c.b16 %v276, %v269
  %v340 = vpack.c.b16 %v277, %v270
  %v341 = vpack.c.b16 %v278, %v271
  %v342 = vpack.c.b16 %v286, %v279
  %v343 = vpack.c.b16 %v287, %v280
  %v344 = vpack.c.b16 %v288, %v281
  %v345 = vpack.c.b16 %v289, %v282
  %v346 = vpack.c.b16 %v290, %v283
  %v347 = vpack.c.b16 %v291, %v284
  %v348 = vpack.c.b16 %v292, %v285
  %405 = vmatprep.subr.bf16.mxu0 %v294
  %406 = vmatpush1.bf16.msra.mxu0 %v293
  %407 = vmatprep.subr.bf16.mxu0 %v301
  %408 = vmatpush1.bf16.msra.mxu0 %v300
  %409 = vmatprep.subr.bf16.mxu0 %v308
  %410 = vmatpush1.bf16.msra.mxu0 %v307
  %411 = vmatprep.subr.bf16.mxu0 %v315
  %412 = vmatpush1.bf16.msra.mxu0 %v314
  %413 = vmatprep.subr.bf16.mxu0 %v322
  %414 = vmatpush1.bf16.msra.mxu0 %v321
  %415 = vmatprep.subr.bf16.mxu0 %v329
  %416 = vmatpush1.bf16.msra.mxu0 %v328
  %417 = vmatprep.subr.bf16.mxu0 %v336
  %418 = vmatpush1.bf16.msra.mxu0 %v335
  %419 = vmatprep.subr.bf16.mxu0 %v343
  %420 = vmatpush1.bf16.msra.mxu0 %v342
  %421 = vmatprep.subr.bf16.mxu0 0
  %422 = vmatpush1.bf16.msra.mxu0 0
  %423 = vmatprep.subr.bf16.mxu0 0
  %424 = vmatpush1.bf16.msra.mxu0 0
  %425 = vmatprep.subr.bf16.mxu0 0
  %426 = vmatpush1.bf16.msra.mxu0 0
  %427 = vmatprep.subr.bf16.mxu0 0
  %428 = vmatpush1.bf16.msra.mxu0 0
  %429 = vmatprep.subr.bf16.mxu0 0
  %430 = vmatpush1.bf16.msra.mxu0 0
  %431 = vmatprep.subr.bf16.mxu0 0
  %432 = vmatpush1.bf16.msra.mxu0 0
  %433 = vmatprep.subr.bf16.mxu0 0
  %434 = vmatpush1.bf16.msra.mxu0 0
  %435 = vmatprep.subr.bf16.mxu0 0
  %436 = vmatpush1.bf16.msra.mxu0 0
  %437 = vmatprep.mubr.bf16.mxu0 0
  %438 = vmatmul.mubr.bf16.gmra.mrb[0].mxu0 %v15
  %v439 = vpop.f32.mrb[0].mxu0
  %v440 = vadd.f32 %v85, %v439
  %v441 = vpop.f32.mrb[0].mxu0
  %v442 = vadd.f32 %v89, %v441
  %v443 = vpop.f32.mrb[0].mxu0
  %v444 = vpop.f32.mrb[0].mxu0
  %445 = vdwg.mxu0
  %446 = vmatprep.subr.bf16.mxu0 %v296
  %447 = vmatpush1.bf16.msra.mxu0 %v295
  %448 = vmatprep.subr.bf16.mxu0 %v303
  %449 = vmatpush1.bf16.msra.mxu0 %v302
  %450 = vmatprep.subr.bf16.mxu0 %v310
  %451 = vmatpush1.bf16.msra.mxu0 %v309
  %452 = vmatprep.subr.bf16.mxu0 %v317
  %453 = vmatpush1.bf16.msra.mxu0 %v316
  %454 = vmatprep.subr.bf16.mxu0 %v324
  %455 = vmatpush1.bf16.msra.mxu0 %v323
  %456 = vmatprep.subr.bf16.mxu0 %v331
  %457 = vmatpush1.bf16.msra.mxu0 %v330
  %458 = vmatprep.subr.bf16.mxu0 %v338
  %459 = vmatpush1.bf16.msra.mxu0 %v337
  %460 = vmatprep.subr.bf16.mxu0 %v345
  %461 = vmatpush1.bf16.msra.mxu0 %v344
  %462 = vmatprep.subr.bf16.mxu0 0
  %463 = vmatpush1.bf16.msra.mxu0 0
  %464 = vmatprep.subr.bf16.mxu0 0
  %465 = vmatpush1.bf16.msra.mxu0 0
  %466 = vmatprep.subr.bf16.mxu0 0
  %467 = vmatpush1.bf16.msra.mxu0 0
  %468 = vmatprep.subr.bf16.mxu0 0
  %469 = vmatpush1.bf16.msra.mxu0 0
  %470 = vmatprep.subr.bf16.mxu0 0
  %471 = vmatpush1.bf16.msra.mxu0 0
  %472 = vmatprep.subr.bf16.mxu0 0
  %473 = vmatpush1.bf16.msra.mxu0 0
  %474 = vmatprep.subr.bf16.mxu0 0
  %475 = vmatpush1.bf16.msra.mxu0 0
  %476 = vmatprep.subr.bf16.mxu0 0
  %477 = vmatpush1.bf16.msra.mxu0 0
  %478 = vmatprep.mubr.bf16.mxu0 0
  %479 = vmatmul.mubr.bf16.gmra.mrb[0].mxu0 %v15
  %v480 = vpop.f32.mrb[0].mxu0
  %v481 = vadd.f32 %v93, %v480
  %v482 = vpop.f32.mrb[0].mxu0
  %v483 = vadd.f32 %v97, %v482
  %v484 = vpop.f32.mrb[0].mxu0
  %v485 = vpop.f32.mrb[0].mxu0
  %486 = vdwg.mxu0
  %487 = vmatprep.subr.bf16.mxu0 %v298
  %488 = vmatpush1.bf16.msra.mxu0 %v297
  %489 = vmatprep.subr.bf16.mxu0 %v305
  %490 = vmatpush1.bf16.msra.mxu0 %v304
  %491 = vmatprep.subr.bf16.mxu0 %v312
  %492 = vmatpush1.bf16.msra.mxu0 %v311
  %493 = vmatprep.subr.bf16.mxu0 %v319
  %494 = vmatpush1.bf16.msra.mxu0 %v318
  %495 = vmatprep.subr.bf16.mxu0 %v326
  %496 = vmatpush1.bf16.msra.mxu0 %v325
  %497 = vmatprep.subr.bf16.mxu0 %v333
  %498 = vmatpush1.bf16.msra.mxu0 %v332
  %499 = vmatprep.subr.bf16.mxu0 %v340
  %500 = vmatpush1.bf16.msra.mxu0 %v339
  %501 = vmatprep.subr.bf16.mxu0 %v347
  %502 = vmatpush1.bf16.msra.mxu0 %v346
  %503 = vmatprep.subr.bf16.mxu0 0
  %504 = vmatpush1.bf16.msra.mxu0 0
  %505 = vmatprep.subr.bf16.mxu0 0
  %506 = vmatpush1.bf16.msra.mxu0 0
  %507 = vmatprep.subr.bf16.mxu0 0
  %508 = vmatpush1.bf16.msra.mxu0 0
  %509 = vmatprep.subr.bf16.mxu0 0
  %510 = vmatpush1.bf16.msra.mxu0 0
  %511 = vmatprep.subr.bf16.mxu0 0
  %512 = vmatpush1.bf16.msra.mxu0 0
  %513 = vmatprep.subr.bf16.mxu0 0
  %514 = vmatpush1.bf16.msra.mxu0 0
  %515 = vmatprep.subr.bf16.mxu0 0
  %516 = vmatpush1.bf16.msra.mxu0 0
  %517 = vmatprep.subr.bf16.mxu0 0
  %518 = vmatpush1.bf16.msra.mxu0 0
  %519 = vmatprep.mubr.bf16.mxu0 0
  %520 = vmatmul.mubr.bf16.gmra.mrb[0].mxu0 %v15
  %v521 = vpop.f32.mrb[0].mxu0
  %v522 = vadd.f32 %v101, %v521
  %v523 = vpop.f32.mrb[0].mxu0
  %v524 = vadd.f32 %v105, %v523
  %v525 = vpop.f32.mrb[0].mxu0
  %v526 = vpop.f32.mrb[0].mxu0
  %527 = vdwg.mxu0
  %528 = vmatprep.subr.bf16.mxu0 0
  %529 = vmatpush1.bf16.msra.mxu0 %v299
  %530 = vmatprep.subr.bf16.mxu0 0
  %531 = vmatpush1.bf16.msra.mxu0 %v306
  %532 = vmatprep.subr.bf16.mxu0 0
  %533 = vmatpush1.bf16.msra.mxu0 %v313
  %534 = vmatprep.subr.bf16.mxu0 0
  %535 = vmatpush1.bf16.msra.mxu0 %v320
  %536 = vmatprep.subr.bf16.mxu0 0
  %537 = vmatpush1.bf16.msra.mxu0 %v327
  %538 = vmatprep.subr.bf16.mxu0 0
  %539 = vmatpush1.bf16.msra.mxu0 %v334
  %540 = vmatprep.subr.bf16.mxu0 0
  %541 = vmatpush1.bf16.msra.mxu0 %v341
  %542 = vmatprep.subr.bf16.mxu0 0
  %543 = vmatpush1.bf16.msra.mxu0 %v348
  %544 = vmatprep.subr.bf16.mxu0 0
  %545 = vmatpush1.bf16.msra.mxu0 0
  %546 = vmatprep.subr.bf16.mxu0 0
  %547 = vmatpush1.bf16.msra.mxu0 0
  %548 = vmatprep.subr.bf16.mxu0 0
  %549 = vmatpush1.bf16.msra.mxu0 0
  %550 = vmatprep.subr.bf16.mxu0 0
  %551 = vmatpush1.bf16.msra.mxu0 0
  %552 = vmatprep.subr.bf16.mxu0 0
  %553 = vmatpush1.bf16.msra.mxu0 0
  %554 = vmatprep.subr.bf16.mxu0 0
  %555 = vmatpush1.bf16.msra.mxu0 0
  %556 = vmatprep.subr.bf16.mxu0 0
  %557 = vmatpush1.bf16.msra.mxu0 0
  %558 = vmatprep.subr.bf16.mxu0 0
  %559 = vmatpush1.bf16.msra.mxu0 0
  %560 = vmatprep.mubr.bf16.mxu0 0
  %561 = vmatmul.mubr.bf16.gmra.mrb[0].mxu0 %v15
  %v562 = vpop.f32.mrb[0].mxu0
  %v563 = vadd.f32 %v109, %v562
  %v564 = vpop.f32.mrb[0].mxu0
  %v565 = vpop.f32.mrb[0].mxu0
  %v566 = vpop.f32.mrb[0].mxu0
  %567 = vdwg.mxu0
  %v568 = vmax.f32 %v440, 0.0
  %v569 = vmax.f32 %v442, 0.0
  %v570 = vmax.f32 %v481, 0.0
  %v571 = vmax.f32 %v483, 0.0
  %v572 = vmax.f32 %v522, 0.0
  %v573 = vmax.f32 %v524, 0.0
  %v574 = vmax.f32 %v563, 0.0
  %v575 = vpack.c.bf16 %v568, %v568
  %v576 = vpack.c.bf16 %v569, %v569
  %v577 = vpack.c.bf16 %v570, %v570
  %v578 = vpack.c.bf16 %v571, %v571
  %v579 = vpack.c.bf16 %v572, %v572
  %v580 = vpack.c.bf16 %v573, %v573
  %v581 = vpack.c.bf16 %v574, %v574
  %v589 = vcombine.low %v575, %v576
  %v590 = vcombine.low %v577, %v578
  %v591 = vcombine.low %v579, %v580
  %v593 = vunpack.c.l.s4 1966171168
  %v594 = vunpack.c.0.s8 %v593
  %v595 = vlaneseq
  %v596 = vshrl.u32 %v595, 7
  %v597 = vsub.s32 %v594, %v596
  %v598 = vrot.slane %v589, %v597
  %v600 = vunpack.c.l.s4 1966171168
  %v601 = vunpack.c.0.s8 %v600
  %v602 = vlaneseq
  %v603 = vshrl.u32 %v602, 7
  %v604 = vsub.s32 %v601, %v603
  %v605 = vrot.slane %v590, %v604
  %v607 = vunpack.c.l.s4 1966171168
  %v608 = vunpack.c.0.s8 %v607
  %v609 = vlaneseq
  %v610 = vshrl.u32 %v609, 7
  %v611 = vsub.s32 %v608, %v610
  %v612 = vrot.slane %v591, %v611
  %v614 = vunpack.c.l.s4 1966171168
  %v615 = vunpack.c.0.s8 %v614
  %v616 = vlaneseq
  %v617 = vshrl.u32 %v616, 7
  %v618 = vsub.s32 %v615, %v617
  %v619 = vrot.slane %v581, %v618
  %v620 = vcombine.low %v598, %v605
  %v621 = vcombine.low %v612, %v619
  %v623 = vunpack.c.l.s4 1966171168
  %v624 = vunpack.c.0.s8 %v623
  %v625 = vlaneseq
  %v626 = vshrl.u32 %v625, 7
  %v627 = vsub.s32 %v624, %v626
  %v628 = vrot.slane %v620, %v627
  %v630 = vunpack.c.l.s4 1966171168
  %v631 = vunpack.c.0.s8 %v630
  %v632 = vlaneseq
  %v633 = vshrl.u32 %v632, 7
  %v634 = vsub.s32 %v631, %v633
  %v635 = vrot.slane %v621, %v634
  %v636 = vcombine.low %v628, %v635
  %vm638 = vcmask 1040384
  %vm639 = vcmask 1041409
  %vm640 = vmor %vm639, %vm638
  %vm641 = vcmask 1042434
  %vm642 = vmor %vm641, %vm640
  %vm643 = vcmask 1043459
  %vm644 = vmor %vm643, %vm642
  %vm645 = vcmask 1044484
  %vm646 = vmor %vm645, %vm644
  %vm647 = vcmask 1045509
  %vm648 = vmor %vm647, %vm646
  %vm649 = vcmask 129030
  %vm650 = vmor %vm649, %vm648
  %651 = vst.msk [vmem:[%s3] sm:$0x7f] %vm650, %v636
  // Predicated region
  $region14: #{qnet_forward.8} parent=0 // pred_check
    _
  $region15: #{qnet_forward.8} parent=0 // pred_check_branch
    %653 = sbr.rel (0) target = $region17
  $region16: #{qnet_forward.8} parent=0 // pred_region
    _
  $region17: #{qnet_forward.8} parent=0 // pred_fallthru
    _
  // Predicated region
  $region18: #{qnet_forward.8} parent=0 // pred_check
    _
  $region19: #{qnet_forward.8} parent=0 // pred_check_branch
    %655 = sbr.rel (0) target = $region21
  $region20: #{qnet_forward.8} parent=0 // pred_region
    _
  $region21: #{qnet_forward.8} parent=0 // pred_fallthru
    _

// kernel: qnet_forward.9
$region0: #{qnet_forward.9}
  #allocation0 [shape = 'u32[]', space=smem, size = 0x4, offset = 0x4, fixed_abs, tag = 'smem constant byte address 0x4 - core index']
  #allocation1 [shape = 'u32[144,128]{1,0:T(1,128)}', space=vmem, size = 0x12000, scoped, tag = 'internal scratch']
  %s0 = inlined_call_operand.vmem [shape: bf16[1352,384], index: 0, kind: input, shape index: {}]
  %s1 = inlined_call_operand.vmem [shape: bf16[384,32], index: 1, kind: input, shape index: {}]
  %s2 = inlined_call_operand.vmem [shape: f32[1,32], index: 2, kind: input, shape index: {}]
  %s3 = inlined_call_operand.vmem [shape: bf16[1352,32], index: 3, kind: output, shape index: {}]
  %s4 = sld [smem:[#allocation0]]
  $region89: #{qnet_forward.9} parent=0
    _
  %s6 = ssub.s32 1, %s4
  %s7 = scalar_select 0, %s6, %s4
  $region1: #{qnet_forward.9} parent=0
    #allocation2 [shape = 'u8[131072]{0}', space=vmem, size = 0x20000, scoped, tag = 'output window, operand 0']
    loop: start=0, step=1, limit=8
    $region2: #{qnet_forward.9} parent=1 // loop_pre_header
      _
    $region3: #{qnet_forward.9} parent=1 // loop_header
      %s9 = sphi 0, %s13
      %p10 = scmp.ge.s32.totalorder %s9, 8
      %s19 = sphi 0, %s21
      %s22 = sphi 0, %s19
      %s23 = sphi 0, %s22
      %s39 = sphi 0, %s23
      %s43 = sphi 0, %s43
      %s45 = sphi 0, %s43
      %s46 = sphi 0, %s45
      %s60 = sphi 0, %s46
      %s64 = sphi 0, %s64
      %s66 = sphi 0, %s64
      %s67 = sphi 0, %s66
      %s81 = sphi 0, %s67
      %s87 = sphi 0, %s89
      %s90 = sphi 0, %s87
      %s91 = sphi 0, %s90
      %s107 = sphi 0, %s91
    $region4: #{qnet_forward.9} parent=1 // loop_header_branch
      %12 = sbr.rel (%p10) target = $region8
    $region5: #{qnet_forward.9} parent=1 // loop_body
      %s14 = ssub.s32 %s9, 1
      %s15 = ssub.s32 %s9, 2
      %s16 = sadd.s32 %s9, 1
      %s17 = ssub.s32 %s9, %s16
      %p18 = scmp.eq.s32.totalorder %s17, 0
      %s20 = sadd.s32 %s19, 1
      %s21 = scalar_select %p18, %s19, %s20
      %p24 = pneg %p18
      %p25 = scmp.eq.s32.totalorder %s9, 5
      %p26 = por %p24, %p25
      %p27 = scmp.ne.s32.totalorder %s19, %s22
      %p28 = scmp.eq.s32.totalorder %s9, 0
      %p29 = por %p27, %p28
      %p30 = scmp.ne.s32.totalorder %s19, %s22
      %p31 = scmp.eq.s32.totalorder %s14, 5
      %p32 = por %p30, %p31
      %p33 = scmp.ne.s32.totalorder %s22, %s23
      %p34 = scmp.eq.s32.totalorder %s14, 0
      %p35 = por %p33, %p34
      %p36 = scmp.ne.s32.totalorder %s22, %s23
      %p37 = scmp.eq.s32.totalorder %s15, 5
      %p38 = por %p36, %p37
      %p40 = scmp.ne.s32.totalorder %s23, %s39
      %p41 = scmp.eq.s32.totalorder %s15, 0
      %p42 = por %p40, %p41
      %s44 = sadd.s32 %s43, 1
      %p47 = scmp.eq.s32.totalorder %s9, 5
      %p48 = scmp.ne.s32.totalorder %s43, %s45
      %p49 = scmp.eq.s32.totalorder %s9, 0
      %p50 = por %p48, %p49
      %p51 = scmp.ne.s32.totalorder %s43, %s45
      %p52 = scmp.eq.s32.totalorder %s14, 5
      %p53 = por %p51, %p52
      %p54 = scmp.ne.s32.totalorder %s45, %s46
      %p55 = scmp.eq.s32.totalorder %s14, 0
      %p56 = por %p54, %p55
      %p57 = scmp.ne.s32.totalorder %s45, %s46
      %p58 = scmp.eq.s32.totalorder %s15, 5
      %p59 = por %p57, %p58
      %p61 = scmp.ne.s32.totalorder %s46, %s60
      %p62 = scmp.eq.s32.totalorder %s15, 0
      %p63 = por %p61, %p62
      %s65 = sadd.s32 %s64, 1
      %p68 = scmp.eq.s32.totalorder %s9, 5
      %p69 = scmp.ne.s32.totalorder %s64, %s66
      %p70 = scmp.eq.s32.totalorder %s9, 0
      %p71 = por %p69, %p70
      %p72 = scmp.ne.s32.totalorder %s64, %s66
      %p73 = scmp.eq.s32.totalorder %s14, 5
      %p74 = por %p72, %p73
      %p75 = scmp.ne.s32.totalorder %s66, %s67
      %p76 = scmp.eq.s32.totalorder %s14, 0
      %p77 = por %p75, %p76
      %p78 = scmp.ne.s32.totalorder %s66, %s67
      %p79 = scmp.eq.s32.totalorder %s15, 5
      %p80 = por %p78, %p79
      %p82 = scmp.ne.s32.totalorder %s67, %s81
      %p83 = scmp.eq.s32.totalorder %s15, 0
      %p84 = por %p82, %p83
      %s85 = ssub.s32 %s9, %s16
      %p86 = scmp.eq.s32.totalorder %s85, 0
      %s88 = sadd.s32 %s87, 1
      %s89 = scalar_select %p86, %s87, %s88
      %p92 = pneg %p86
      %p93 = scmp.eq.s32.totalorder %s9, 5
      %p94 = por %p92, %p93
      %p95 = scmp.ne.s32.totalorder %s87, %s90
      %p96 = scmp.eq.s32.totalorder %s9, 0
      %p97 = por %p95, %p96
      %p98 = scmp.ne.s32.totalorder %s87, %s90
      %p99 = scmp.eq.s32.totalorder %s14, 5
      %p100 = por %p98, %p99
      %p101 = scmp.ne.s32.totalorder %s90, %s91
      %p102 = scmp.eq.s32.totalorder %s14, 0
      %p103 = por %p101, %p102
      %p104 = scmp.ne.s32.totalorder %s90, %s91
      %p105 = scmp.eq.s32.totalorder %s15, 5
      %p106 = por %p104, %p105
      %p108 = scmp.ne.s32.totalorder %s91, %s107
      %p109 = scmp.eq.s32.totalorder %s15, 0
      %p110 = por %p108, %p109
      %p111 = scmp.le.s32.totalorder 1, %s9
      %p112 = scmp.lt.s32.totalorder %s9, 7
      %p113 = pnand %p111, %p112
      %p114 = pneg %p113
      // Predicated region
      $region9: #{qnet_forward.9} parent=5 // pred_check
        _
      $region10: #{qnet_forward.9} parent=5 // pred_check_branch
        %116 = sbr.rel (%p113) target = $region12
      $region11: #{qnet_forward.9} parent=5 // pred_region
        %s117 = ssub.s32 %s9, 1
        // Predicated region
        $region13: #{qnet_forward.9} parent=11 // pred_check
          %p118 = pneg %p56
        $region14: #{qnet_forward.9} parent=11 // pred_check_branch
          %120 = sbr.rel (%p118) target = $region16
        $region15: #{qnet_forward.9} parent=11 // pred_region
          _
        $region16: #{qnet_forward.9} parent=11 // pred_fallthru
          _
        // Predicated region
        $region17: #{qnet_forward.9} parent=11 // pred_check
          %p121 = pneg %p77
        $region18: #{qnet_forward.9} parent=11 // pred_check_branch
          %123 = sbr.rel (%p121) target = $region20
        $region19: #{qnet_forward.9} parent=11 // pred_region
          _
        $region20: #{qnet_forward.9} parent=11 // pred_fallthru
          _
      $region12: #{qnet_forward.9} parent=5 // pred_fallthru
        _
      %p124 = scmp.lt.s32.totalorder %s9, 6
      // Predicated region
      $region21: #{qnet_forward.9} parent=5 // pred_check
        %p125 = pneg %p124
      $region22: #{qnet_forward.9} parent=5 // pred_check_branch
        %127 = sbr.rel (%p125) target = $region24
      $region23: #{qnet_forward.9} parent=5 // pred_region
        // Predicated region
        $region25: #{qnet_forward.9} parent=23 // pred_check
          %p128 = pneg %p29
        $region26: #{qnet_forward.9} parent=23 // pred_check_branch
          %130 = sbr.rel (%p128) target = $region28
        $region27: #{qnet_forward.9} parent=23 // pred_region
          %s131 = smul.u32 32, %s9
          %s132 = ssub.s32 169, %s131
          %p133 = scmp.lt.s32.totalorder %s132, 32
          %s134 = scalar_select %p133, %s132, 32
          %s135 = smul.u32 64, %s134
          %s136 = smul.u32 %s135, 3
          %p137 = scmp.lt.s32.totalorder %s131, 168
          %s138 = scalar_select %p137, %s131, 168
          %s139 = smul.addr %s138, 3
          %s140 = smul.addr %s139, 4
          %s141 = scalar_lea.vmem %s0, %s140
          %s142 = smul.u32 32, %s9
          %s143 = ssub.s32 169, %s142
          %p144 = scmp.lt.s32.totalorder %s143, 32
          %s145 = scalar_select %p144, %s143, 32
          %s146 = smul.u32 64, %s145
          %s147 = smul.u32 %s146, 3
        $region28: #{qnet_forward.9} parent=23 // pred_fallthru
          _
      $region24: #{qnet_forward.9} parent=5 // pred_fallthru
        _
      %p148 = scmp.le.s32.totalorder 1, %s9
      %p149 = scmp.lt.s32.totalorder %s9, 7
      %p150 = pnand %p148, %p149
      %p151 = pneg %p150
      // Predicated region
      $region29: #{qnet_forward.9} parent=5 // pred_check
        _
      $region30: #{qnet_forward.9} parent=5 // pred_check_branch
        %153 = sbr.rel (%p150) target = $region32
      $region31: #{qnet_forward.9} parent=5 // pred_region
        %s154 = ssub.s32 %s9, 1
        %s155 = smul.u32 32, %s14
        %s156 = ssub.s32 169, %s155
        %p157 = scmp.lt.s32.totalorder %s156, 32
        %s158 = scalar_select %p157, %s156, 32
        %s159 = smul.u32 64, %s158
        %s160 = smul.u32 %s159, 3
        %p161 = scmp.lt.s32.totalorder %s155, 168
        %s162 = scalar_select %p161, %s155, 168
        %s163 = smul.addr %s162, 3
        %s164 = smul.addr %s163, 4
        %s165 = scalar_lea.vmem %s0, %s164
        %p166 = pneg %p35
        %p167 = pneg %p32
        %p168 = pneg %p56
        %p169 = pneg %p53
        %p170 = pneg %p77
        %p171 = pneg %p74
        %p172 = pneg %p103
        %p173 = pneg %p100
        %s174 = sand.u32 %s90, 1
        %s175 = sand.u32 %s90, 1
        %s176 = smul.addr %s175, 128
        %s177 = scalar_lea.vmem [#allocation2], %s176
        %s178 = smul.u32 32, %s14
        %s179 = ssub.s32 169, %s178
        %p180 = scmp.lt.s32.totalorder %s179, 32
        %s181 = scalar_select %p180, %s179, 32
        %s182 = smul.u32 64, %s181
        %s183 = smul.u32 %s182, 3
        %p184 = scmp.lt.s32.totalorder %s178, 168
        %s185 = scalar_select %p184, %s178, 168
        %s186 = smul.addr %s185, 3
        %s187 = smul.addr %s186, 4
        %s188 = scalar_lea.vmem %s0, %s187
        %s189 = smul.u32 32, %s14
        %s190 = ssub.s32 169, %s189
        %p191 = scmp.lt.s32.totalorder %s190, 32
        %s192 = scalar_select %p191, %s190, 32
        %s193 = smul.u32 64, %s192
        %s194 = smul.u32 %s193, 3
        %s195 = smul.u32 32, %s14
        %s196 = ssub.s32 169, %s195
        %p197 = scmp.lt.s32.totalorder %s196, 32
        %s198 = scalar_select %p197, %s196, 32
        %s199 = smul.u32 64, %s198
        %v201 = vld [vmem:[%s188] sm:$0xff]
        %v202 = vld [vmem:[%s188 + $0x8] sm:$0xf]
        %v203 = vld [vmem:[%s188 + $0xc] sm:$0xff]
        %v204 = vld [vmem:[%s188 + $0x14] sm:$0xf]
        %v205 = vld [vmem:[%s188 + $0x18] sm:$0xff]
        %v206 = vld [vmem:[%s188 + $0x20] sm:$0xf]
        %v207 = vld [vmem:[%s188 + $0x24] sm:$0xff]
        %v208 = vld [vmem:[%s188 + $0x2c] sm:$0xf]
        %v209 = vld [vmem:[%s188 + $0x30] sm:$0xff]
        %v210 = vld [vmem:[%s188 + $0x38] sm:$0xf]
        %v211 = vld [vmem:[%s188 + $0x3c] sm:$0xff]
        %v212 = vld [vmem:[%s188 + $0x44] sm:$0xf]
        %v213 = vld [vmem:[%s188 + $0x48] sm:$0xff]
        %v214 = vld [vmem:[%s188 + $0x50] sm:$0xf]
        %v215 = vld [vmem:[%s188 + $0x54] sm:$0xff]
        %v216 = vld [vmem:[%s188 + $0x5c] sm:$0xf]
        %v217 = vld [vmem:[%s188 + $0x60] sm:$0xff]
        %v218 = vld [vmem:[%s188 + $0x68] sm:$0xf]
        %v219 = vld [vmem:[%s188 + $0x6c] sm:$0xff]
        %v220 = vld [vmem:[%s188 + $0x74] sm:$0xf]
        %v221 = vld [vmem:[%s188 + $0x78] sm:$0xff]
        %v222 = vld [vmem:[%s188 + $0x80] sm:$0xf]
        %v223 = vld [vmem:[%s188 + $0x84] sm:$0xff]
        %v224 = vld [vmem:[%s188 + $0x8c] sm:$0xf]
        %v225 = vld [vmem:[%s188 + $0x90] sm:$0xff]
        %v226 = vld [vmem:[%s188 + $0x98] sm:$0xf]
        %v227 = vld [vmem:[%s188 + $0x9c] sm:$0xff]
        %v228 = vld [vmem:[%s188 + $0xa4] sm:$0xf]
        %v229 = vld [vmem:[%s188 + $0xa8] sm:$0xff]
        %v230 = vld [vmem:[%s188 + $0xb0] sm:$0xf]
        %v231 = vld [vmem:[%s188 + $0xb4] sm:$0xff]
        %v232 = vld [vmem:[%s188 + $0xbc] sm:$0xf]
        %v233 = vld [vmem:[%s188 + $0xc0] sm:$0xff]
        %v234 = vld [vmem:[%s188 + $0xc8] sm:$0xf]
        %v235 = vld [vmem:[%s188 + $0xcc] sm:$0xff]
        %v236 = vld [vmem:[%s188 + $0xd4] sm:$0xf]
        %v237 = vld [vmem:[%s188 + $0xd8] sm:$0xff]
        %v238 = vld [vmem:[%s188 + $0xe0] sm:$0xf]
        %v239 = vld [vmem:[%s188 + $0xe4] sm:$0xff]
        %v240 = vld [vmem:[%s188 + $0xec] sm:$0xf]
        %v241 = vld [vmem:[%s188 + $0xf0] sm:$0xff]
        %v242 = vld [vmem:[%s188 + $0xf8] sm:$0xf]
        %v243 = vld [vmem:[%s188 + $0xfc] sm:$0xff]
        %v244 = vld [vmem:[%s188 + $0x104] sm:$0xf]
        %v245 = vld [vmem:[%s188 + $0x108] sm:$0xff]
        %v246 = vld [vmem:[%s188 + $0x110] sm:$0xf]
        %v247 = vld [vmem:[%s188 + $0x114] sm:$0xff]
        %v248 = vld [vmem:[%s188 + $0x11c] sm:$0xf]
        %v249 = vld [vmem:[%s188 + $0x120] sm:$0xff]
        %v250 = vld [vmem:[%s188 + $0x128] sm:$0xf]
        %v251 = vld [vmem:[%s188 + $0x12c] sm:$0xff]
        %v252 = vld [vmem:[%s188 + $0x134] sm:$0xf]
        %v253 = vld [vmem:[%s188 + $0x138] sm:$0xff]
        %v254 = vld [vmem:[%s188 + $0x140] sm:$0xf]
        %v255 = vld [vmem:[%s188 + $0x144] sm:$0xff]
        %v256 = vld [vmem:[%s188 + $0x14c] sm:$0xf]
        %v257 = vld [vmem:[%s188 + $0x150] sm:$0xff]
        %v258 = vld [vmem:[%s188 + $0x158] sm:$0xf]
        %v259 = vld [vmem:[%s188 + $0x15c] sm:$0xff]
        %v260 = vld [vmem:[%s188 + $0x164] sm:$0xf]
        %v261 = vld [vmem:[%s188 + $0x168] sm:$0xff]
        %v262 = vld [vmem:[%s188 + $0x170] sm:$0xf]
        %v263 = vld [vmem:[%s188 + $0x174] sm:$0xff]
        %v264 = vld [vmem:[%s188 + $0x17c] sm:$0xf]
        %v265 = vld [vmem:[%s1] sm:$0xf]
        %v266 = vld [vmem:[%s1 + $0x4] sm:$0xf]
        %v267 = vld [vmem:[%s1 + $0x8] sm:$0xf]
        %v268 = vld [vmem:[%s1 + $0xc] sm:$0xf]
        %v269 = vld [vmem:[%s1 + $0x10] sm:$0xf]
        %v270 = vld [vmem:[%s1 + $0x14] sm:$0xf]
        %v271 = vld [vmem:[%s1 + $0x18] sm:$0xf]
        %v272 = vld [vmem:[%s1 + $0x1c] sm:$0xf]
        %v273 = vld [vmem:[%s1 + $0x20] sm:$0xf]
        %v274 = vld [vmem:[%s1 + $0x24] sm:$0xf]
        %v275 = vld [vmem:[%s1 + $0x28] sm:$0xf]
        %v276 = vld [vmem:[%s1 + $0x2c] sm:$0xf]
        %v277 = vld [vmem:[%s1 + $0x30] sm:$0xf]
        %v278 = vld [vmem:[%s1 + $0x34] sm:$0xf]
        %v279 = vld [vmem:[%s1 + $0x38] sm:$0xf]
        %v280 = vld [vmem:[%s1 + $0x3c] sm:$0xf]
        %v281 = vld [vmem:[%s1 + $0x40] sm:$0xf]
        %v282 = vld [vmem:[%s1 + $0x44] sm:$0xf]
        %v283 = vld [vmem:[%s1 + $0x48] sm:$0xf]
        %v284 = vld [vmem:[%s1 + $0x4c] sm:$0xf]
        %v285 = vld [vmem:[%s1 + $0x50] sm:$0xf]
        %v286 = vld [vmem:[%s1 + $0x54] sm:$0xf]
        %v287 = vld [vmem:[%s1 + $0x58] sm:$0xf]
        %v288 = vld [vmem:[%s1 + $0x5c] sm:$0xf]
        %v289 = vld [vmem:[%s1 + $0x60] sm:$0xf]
        %v290 = vld [vmem:[%s1 + $0x64] sm:$0xf]
        %v291 = vld [vmem:[%s1 + $0x68] sm:$0xf]
        %v292 = vld [vmem:[%s1 + $0x6c] sm:$0xf]
        %v293 = vld [vmem:[%s1 + $0x70] sm:$0xf]
        %v294 = vld [vmem:[%s1 + $0x74] sm:$0xf]
        %v295 = vld [vmem:[%s1 + $0x78] sm:$0xf]
        %v296 = vld [vmem:[%s1 + $0x7c] sm:$0xf]
        %v297 = vld [vmem:[%s1 + $0x80] sm:$0xf]
        %v298 = vld [vmem:[%s1 + $0x84] sm:$0xf]
        %v299 = vld [vmem:[%s1 + $0x88] sm:$0xf]
        %v300 = vld [vmem:[%s1 + $0x8c] sm:$0xf]
        %v301 = vld [vmem:[%s1 + $0x90] sm:$0xf]
        %v302 = vld [vmem:[%s1 + $0x94] sm:$0xf]
        %v303 = vld [vmem:[%s1 + $0x98] sm:$0xf]
        %v304 = vld [vmem:[%s1 + $0x9c] sm:$0xf]
        %v305 = vld [vmem:[%s1 + $0xa0] sm:$0xf]
        %v306 = vld [vmem:[%s1 + $0xa4] sm:$0xf]
        %v307 = vld [vmem:[%s1 + $0xa8] sm:$0xf]
        %v308 = vld [vmem:[%s1 + $0xac] sm:$0xf]
        %v309 = vld [vmem:[%s1 + $0xb0] sm:$0xf]
        %v310 = vld [vmem:[%s1 + $0xb4] sm:$0xf]
        %v311 = vld [vmem:[%s1 + $0xb8] sm:$0xf]
        %v312 = vld [vmem:[%s1 + $0xbc] sm:$0xf]
        %v313 = vld [vmem:[%s2] sm:$0x1]
        %v315 = vlaneseq
        %v316 = vshrl.u32 %v315, 7
        %v317 = vsub.s32 0, %v316
        %v318 = vrot.slane %v313, %v317
        %v384 = vunpack.c.l.b16 %v201
        %v385 = vunpack.c.h.b16 %v201
        %v386 = vunpack.c.l.b16 %v202
        %v387 = vunpack.c.l.b16 %v203
        %v388 = vunpack.c.h.b16 %v203
        %v389 = vunpack.c.l.b16 %v204
        %v390 = vunpack.c.l.b16 %v205
        %v391 = vunpack.c.h.b16 %v205
        %v392 = vunpack.c.l.b16 %v206
        %v393 = vunpack.c.l.b16 %v207
        %v394 = vunpack.c.h.b16 %v207
        %v395 = vunpack.c.l.b16 %v208
        %v396 = vunpack.c.l.b16 %v209
        %v397 = vunpack.c.h.b16 %v209
        %v398 = vunpack.c.l.b16 %v210
        %v399 = vunpack.c.l.b16 %v211
        %v400 = vunpack.c.h.b16 %v211
        %v401 = vunpack.c.l.b16 %v212
        %v402 = vunpack.c.l.b16 %v213
        %v403 = vunpack.c.h.b16 %v213
        %v404 = vunpack.c.l.b16 %v214
        %v405 = vunpack.c.l.b16 %v215
        %v406 = vunpack.c.h.b16 %v215
        %v407 = vunpack.c.l.b16 %v216
        %v408 = vunpack.c.l.b16 %v217
        %v409 = vunpack.c.h.b16 %v217
        %v410 = vunpack.c.l.b16 %v218
        %v411 = vunpack.c.l.b16 %v219
        %v412 = vunpack.c.h.b16 %v219
        %v413 = vunpack.c.l.b16 %v220
        %v414 = vunpack.c.l.b16 %v221
        %v415 = vunpack.c.h.b16 %v221
        %v416 = vunpack.c.l.b16 %v222
        %v417 = vunpack.c.l.b16 %v223
        %v418 = vunpack.c.h.b16 %v223
        %v419 = vunpack.c.l.b16 %v224
        %v420 = vunpack.c.l.b16 %v225
        %v421 = vunpack.c.h.b16 %v225
        %v422 = vunpack.c.l.b16 %v226
        %v423 = vunpack.c.l.b16 %v227
        %v424 = vunpack.c.h.b16 %v227
        %v425 = vunpack.c.l.b16 %v228
        %v426 = vunpack.c.l.b16 %v229
        %v427 = vunpack.c.h.b16 %v229
        %v428 = vunpack.c.l.b16 %v230
        %v429 = vunpack.c.l.b16 %v231
        %v430 = vunpack.c.h.b16 %v231
        %v431 = vunpack.c.l.b16 %v232
        %v432 = vunpack.c.l.b16 %v233
        %v433 = vunpack.c.h.b16 %v233
        %v434 = vunpack.c.l.b16 %v234
        %v435 = vunpack.c.l.b16 %v235
        %v436 = vunpack.c.h.b16 %v235
        %v437 = vunpack.c.l.b16 %v236
        %v438 = vunpack.c.l.b16 %v237
        %v439 = vunpack.c.h.b16 %v237
        %v440 = vunpack.c.l.b16 %v238
        %v441 = vunpack.c.l.b16 %v239
        %v442 = vunpack.c.h.b16 %v239
        %v443 = vunpack.c.l.b16 %v240
        %v444 = vunpack.c.l.b16 %v241
        %v445 = vunpack.c.h.b16 %v241
        %v446 = vunpack.c.l.b16 %v242
        %v447 = vunpack.c.l.b16 %v243
        %v448 = vunpack.c.h.b16 %v243
        %v449 = vunpack.c.l.b16 %v244
        %v450 = vunpack.c.l.b16 %v245
        %v451 = vunpack.c.h.b16 %v245
        %v452 = vunpack.c.l.b16 %v246
        %v453 = vunpack.c.l.b16 %v247
        %v454 = vunpack.c.h.b16 %v247
        %v455 = vunpack.c.l.b16 %v248
        %v456 = vunpack.c.l.b16 %v249
        %v457 = vunpack.c.h.b16 %v249
        %v458 = vunpack.c.l.b16 %v250
        %v459 = vunpack.c.l.b16 %v251
        %v460 = vunpack.c.h.b16 %v251
        %v461 = vunpack.c.l.b16 %v252
        %v462 = vunpack.c.l.b16 %v253
        %v463 = vunpack.c.h.b16 %v253
        %v464 = vunpack.c.l.b16 %v254
        %v465 = vunpack.c.l.b16 %v255
        %v466 = vunpack.c.h.b16 %v255
        %v467 = vunpack.c.l.b16 %v256
        %v468 = vunpack.c.l.b16 %v257
        %v469 = vunpack.c.h.b16 %v257
        %v470 = vunpack.c.l.b16 %v258
        %v471 = vunpack.c.l.b16 %v259
        %v472 = vunpack.c.h.b16 %v259
        %v473 = vunpack.c.l.b16 %v260
        %v474 = vunpack.c.l.b16 %v261
        %v475 = vunpack.c.h.b16 %v261
        %v476 = vunpack.c.l.b16 %v262
        %v477 = vunpack.c.l.b16 %v263
        %v478 = vunpack.c.h.b16 %v263
        %v479 = vunpack.c.l.b16 %v264
        %v480 = vpack.c.b16 %v387, %v384
        %v481 = vpack.c.b16 %v388, %v385
        %v482 = vpack.c.b16 %v389, %v386
        %v483 = vpack.c.b16 %v393, %v390
        %v484 = vpack.c.b16 %v394, %v391
        %v485 = vpack.c.b16 %v395, %v392
        %v486 = vpack.c.b16 %v399, %v396
        %v487 = vpack.c.b16 %v400, %v397
        %v488 = vpack.c.b16 %v401, %v398
        %v489 = vpack.c.b16 %v405, %v402
        %v490 = vpack.c.b16 %v406, %v403
        %v491 = vpack.c.b16 %v407, %v404
        %v492 = vpack.c.b16 %v411, %v408
        %v493 = vpack.c.b16 %v412, %v409
        %v494 = vpack.c.b16 %v413, %v410
        %v495 = vpack.c.b16 %v417, %v414
        %v496 = vpack.c.b16 %v418, %v415
        %v497 = vpack.c.b16 %v419, %v416
        %v498 = vpack.c.b16 %v423, %v420
        %v499 = vpack.c.b16 %v424, %v421
        %v500 = vpack.c.b16 %v425, %v422
        %v501 = vpack.c.b16 %v429, %v426
        %v502 = vpack.c.b16 %v430, %v427
        %v503 = vpack.c.b16 %v431, %v428
        %v504 = vpack.c.b16 %v435, %v432
        %v505 = vpack.c.b16 %v436, %v433
        %v506 = vpack.c.b16 %v437, %v434
        %v507 = vpack.c.b16 %v441, %v438
        %v508 = vpack.c.b16 %v442, %v439
        %v509 = vpack.c.b16 %v443, %v440
        %v510 = vpack.c.b16 %v447, %v444
        %v511 = vpack.c.b16 %v448, %v445
        %v512 = vpack.c.b16 %v449, %v446
        %v513 = vpack.c.b16 %v453, %v450
        %v514 = vpack.c.b16 %v454, %v451
        %v515 = vpack.c.b16 %v455, %v452
        %v516 = vpack.c.b16 %v459, %v456
        %v517 = vpack.c.b16 %v460, %v457
        %v518 = vpack.c.b16 %v461, %v458
        %v519 = vpack.c.b16 %v465, %v462
        %v520 = vpack.c.b16 %v466, %v463
        %v521 = vpack.c.b16 %v467, %v464
        %v522 = vpack.c.b16 %v471, %v468
        %v523 = vpack.c.b16 %v472, %v469
        %v524 = vpack.c.b16 %v473, %v470
        %v525 = vpack.c.b16 %v477, %v474
        %v526 = vpack.c.b16 %v478, %v475
        %v527 = vpack.c.b16 %v479, %v476
        %v624 = vunpack.c.l.b16 %v265
        %v625 = vunpack.c.l.b16 %v266
        %v626 = vunpack.c.l.b16 %v267
        %v627 = vunpack.c.l.b16 %v268
        %v628 = vunpack.c.l.b16 %v269
        %v629 = vunpack.c.l.b16 %v270
        %v630 = vunpack.c.l.b16 %v271
        %v631 = vunpack.c.l.b16 %v272
        %v632 = vunpack.c.l.b16 %v273
        %v633 = vunpack.c.l.b16 %v274
        %v634 = vunpack.c.l.b16 %v275
        %v635 = vunpack.c.l.b16 %v276
        %v636 = vunpack.c.l.b16 %v277
        %v637 = vunpack.c.l.b16 %v278
        %v638 = vunpack.c.l.b16 %v279
        %v639 = vunpack.c.l.b16 %v280
        %v640 = vunpack.c.l.b16 %v281
        %v641 = vunpack.c.l.b16 %v282
        %v642 = vunpack.c.l.b16 %v283
        %v643 = vunpack.c.l.b16 %v284
        %v644 = vunpack.c.l.b16 %v285
        %v645 = vunpack.c.l.b16 %v286
        %v646 = vunpack.c.l.b16 %v287
        %v647 = vunpack.c.l.b16 %v288
        %v648 = vunpack.c.l.b16 %v289
        %v649 = vunpack.c.l.b16 %v290
        %v650 = vunpack.c.l.b16 %v291
        %v651 = vunpack.c.l.b16 %v292
        %v652 = vunpack.c.l.b16 %v293
        %v653 = vunpack.c.l.b16 %v294
        %v654 = vunpack.c.l.b16 %v295
        %v655 = vunpack.c.l.b16 %v296
        %v656 = vunpack.c.l.b16 %v297
        %v657 = vunpack.c.l.b16 %v298
        %v658 = vunpack.c.l.b16 %v299
        %v659 = vunpack.c.l.b16 %v300
        %v660 = vunpack.c.l.b16 %v301
        %v661 = vunpack.c.l.b16 %v302
        %v662 = vunpack.c.l.b16 %v303
        %v663 = vunpack.c.l.b16 %v304
        %v664 = vunpack.c.l.b16 %v305
        %v665 = vunpack.c.l.b16 %v306
        %v666 = vunpack.c.l.b16 %v307
        %v667 = vunpack.c.l.b16 %v308
        %v668 = vunpack.c.l.b16 %v309
        %v669 = vunpack.c.l.b16 %v310
        %v670 = vunpack.c.l.b16 %v311
        %v671 = vunpack.c.l.b16 %v312
        %v672 = vpack.c.b16 %v625, %v624
        %v673 = vpack.c.b16 %v627, %v626
        %v674 = vpack.c.b16 %v629, %v628
        %v675 = vpack.c.b16 %v631, %v630
        %v676 = vpack.c.b16 %v633, %v632
        %v677 = vpack.c.b16 %v635, %v634
        %v678 = vpack.c.b16 %v637, %v636
        %v679 = vpack.c.b16 %v639, %v638
        %v680 = vpack.c.b16 %v641, %v640
        %v681 = vpack.c.b16 %v643, %v642
        %v682 = vpack.c.b16 %v645, %v644
        %v683 = vpack.c.b16 %v647, %v646
        %v684 = vpack.c.b16 %v649, %v648
        %v685 = vpack.c.b16 %v651, %v650
        %v686 = vpack.c.b16 %v653, %v652
        %v687 = vpack.c.b16 %v655, %v654
        %v688 = vpack.c.b16 %v657, %v656
        %v689 = vpack.c.b16 %v659, %v658
        %v690 = vpack.c.b16 %v661, %v660
        %v691 = vpack.c.b16 %v663, %v662
        %v692 = vpack.c.b16 %v665, %v664
        %v693 = vpack.c.b16 %v667, %v666
        %v694 = vpack.c.b16 %v669, %v668
        %v695 = vpack.c.b16 %v671, %v670
        %720 = vmatprep.subr.bf16.mxu0 0
        %721 = vmatpush1.bf16.msra.mxu0 %v672
        %722 = vmatprep.subr.bf16.mxu0 0
        %723 = vmatpush1.bf16.msra.mxu0 %v673
        %724 = vmatprep.subr.bf16.mxu0 0
        %725 = vmatpush1.bf16.msra.mxu0 %v674
        %726 = vmatprep.subr.bf16.mxu0 0
        %727 = vmatpush1.bf16.msra.mxu0 %v675
        %728 = vmatprep.subr.bf16.mxu0 0
        %729 = vmatpush1.bf16.msra.mxu0 %v676
        %730 = vmatprep.subr.bf16.mxu0 0
        %731 = vmatpush1.bf16.msra.mxu0 %v677
        %732 = vmatprep.subr.bf16.mxu0 0
        %733 = vmatpush1.bf16.msra.mxu0 %v678
        %734 = vmatprep.subr.bf16.mxu0 0
        %735 = vmatpush1.bf16.msra.mxu0 %v679
        %736 = vmatprep.subr.bf16.mxu0 0
        %737 = vmatpush1.bf16.msra.mxu0 %v680
        %738 = vmatprep.subr.bf16.mxu0 0
        %739 = vmatpush1.bf16.msra.mxu0 %v681
        %740 = vmatprep.subr.bf16.mxu0 0
        %741 = vmatpush1.bf16.msra.mxu0 %v682
        %742 = vmatprep.subr.bf16.mxu0 0
        %743 = vmatpush1.bf16.msra.mxu0 %v683
        %744 = vmatprep.subr.bf16.mxu0 0
        %745 = vmatpush1.bf16.msra.mxu0 %v684
        %746 = vmatprep.subr.bf16.mxu0 0
        %747 = vmatpush1.bf16.msra.mxu0 %v685
        %748 = vmatprep.subr.bf16.mxu0 0
        %749 = vmatpush1.bf16.msra.mxu0 %v686
        %750 = vmatprep.subr.bf16.mxu0 0
        %751 = vmatpush1.bf16.msra.mxu0 %v687
        %752 = vmatprep.mubr.bf16.mxu0 %v481
        %753 = vmatmul.mubr.bf16.gmra.mrb[0].mxu0 %v480
        %v754 = vpop.f32.mrb[0].mxu0
        %v755 = vadd.f32 %v318, %v754
        %v756 = vpop.f32.mrb[0].mxu0
        %v757 = vpop.f32.mrb[0].mxu0
        %v758 = vadd.f32 %v318, %v757
        %v759 = vpop.f32.mrb[0].mxu0
        %760 = vmatprep.mubr.bf16.mxu0 %v484
        %761 = vmatmul.mubr.bf16.gmra.mrb[0].mxu0 %v483
        %v762 = vpop.f32.mrb[0].mxu0
        %v763 = vadd.f32 %v318, %v762
        %v764 = vpop.f32.mrb[0].mxu0
        %v765 = vpop.f32.mrb[0].mxu0
        %v766 = vadd.f32 %v318, %v765
        %v767 = vpop.f32.mrb[0].mxu0
        %768 = vmatprep.mubr.bf16.mxu0 %v487
        %769 = vmatmul.mubr.bf16.gmra.mrb[0].mxu0 %v486
        %v770 = vpop.f32.mrb[0].mxu0
        %v771 = vadd.f32 %v318, %v770
        %v772 = vpop.f32.mrb[0].mxu0
        %v773 = vpop.f32.mrb[0].mxu0
        %v774 = vadd.f32 %v318, %v773
        %v775 = vpop.f32.mrb[0].mxu0
        %776 = vmatprep.mubr.bf16.mxu0 %v490
        %777 = vmatmul.mubr.bf16.gmra.mrb[0].mxu0 %v489
        %v778 = vpop.f32.mrb[0].mxu0
        %v779 = vadd.f32 %v318, %v778
        %v780 = vpop.f32.mrb[0].mxu0
        %v781 = vpop.f32.mrb[0].mxu0
        %v782 = vadd.f32 %v318, %v781
        %v783 = vpop.f32.mrb[0].mxu0
        %784 = vmatprep.mubr.bf16.mxu0 %v493
        %785 = vmatmul.mubr.bf16.gmra.mrb[0].mxu0 %v492
        %v786 = vpop.f32.mrb[0].mxu0
        %v787 = vadd.f32 %v318, %v786
        %v788 = vpop.f32.mrb[0].mxu0
        %v789 = vpop.f32.mrb[0].mxu0
        %v790 = vadd.f32 %v318, %v789
        %v791 = vpop.f32.mrb[0].mxu0
        %792 = vmatprep.mubr.bf16.mxu0 %v496
        %793 = vmatmul.mubr.bf16.gmra.mrb[0].mxu0 %v495
        %v794 = vpop.f32.mrb[0].mxu0
        %v795 = vadd.f32 %v318, %v794
        %v796 = vpop.f32.mrb[0].mxu0
        %v797 = vpop.f32.mrb[0].mxu0
        %v798 = vadd.f32 %v318, %v797
        %v799 = vpop.f32.mrb[0].mxu0
        %800 = vmatprep.mubr.bf16.mxu0 %v499
        %801 = vmatmul.mubr.bf16.gmra.mrb[0].mxu0 %v498
        %v802 = vpop.f32.mrb[0].mxu0
        %v803 = vadd.f32 %v318, %v802
        %v804 = vpop.f32.mrb[0].mxu0
        %v805 = vpop.f32.mrb[0].mxu0
        %v806 = vadd.f32 %v318, %v805
        %v807 = vpop.f32.mrb[0].mxu0
        %808 = vmatprep.mubr.bf16.mxu0 %v502
        %809 = vmatmul.mubr.bf16.gmra.mrb[0].mxu0 %v501
        %v810 = vpop.f32.mrb[0].mxu0
        %v811 = vadd.f32 %v318, %v810
        %v812 = vpop.f32.mrb[0].mxu0
        %v813 = vpop.f32.mrb[0].mxu0
        %v814 = vadd.f32 %v318, %v813
        %v815 = vpop.f32.mrb[0].mxu0
        %816 = vmatprep.mubr.bf16.mxu0 %v505
        %817 = vmatmul.mubr.bf16.gmra.mrb[0].mxu0 %v504
        %v818 = vpop.f32.mrb[0].mxu0
        %v819 = vadd.f32 %v318, %v818
        %v820 = vpop.f32.mrb[0].mxu0
        %v821 = vpop.f32.mrb[0].mxu0
        %v822 = vadd.f32 %v318, %v821
        %v823 = vpop.f32.mrb[0].mxu0
        %824 = vmatprep.mubr.bf16.mxu0 %v508
        %825 = vmatmul.mubr.bf16.gmra.mrb[0].mxu0 %v507
        %v826 = vpop.f32.mrb[0].mxu0
        %v827 = vadd.f32 %v318, %v826
        %v828 = vpop.f32.mrb[0].mxu0
        %v829 = vpop.f32.mrb[0].mxu0
        %v830 = vadd.f32 %v318, %v829
        %v831 = vpop.f32.mrb[0].mxu0
        %832 = vmatprep.mubr.bf16.mxu0 %v511
        %833 = vmatmul.mubr.bf16.gmra.mrb[0].mxu0 %v510
        %v834 = vpop.f32.mrb[0].mxu0
        %v835 = vadd.f32 %v318, %v834
        %v836 = vpop.f32.mrb[0].mxu0
        %v837 = vpop.f32.mrb[0].mxu0
        %v838 = vadd.f32 %v318, %v837
        %v839 = vpop.f32.mrb[0].mxu0
        %840 = vmatprep.mubr.bf16.mxu0 %v514
        %841 = vmatmul.mubr.bf16.gmra.mrb[0].mxu0 %v513
        %v842 = vpop.f32.mrb[0].mxu0
        %v843 = vadd.f32 %v318, %v842
        %v844 = vpop.f32.mrb[0].mxu0
        %v845 = vpop.f32.mrb[0].mxu0
        %v846 = vadd.f32 %v318, %v845
        %v847 = vpop.f32.mrb[0].mxu0
        %848 = vmatprep.mubr.bf16.mxu0 %v517
        %849 = vmatmul.mubr.bf16.gmra.mrb[0].mxu0 %v516
        %v850 = vpop.f32.mrb[0].mxu0
        %v851 = vadd.f32 %v318, %v850
        %v852 = vpop.f32.mrb[0].mxu0
        %v853 = vpop.f32.mrb[0].mxu0
        %v854 = vadd.f32 %v318, %v853
        %v855 = vpop.f32.mrb[0].mxu0
        %856 = vmatprep.mubr.bf16.mxu0 %v520
        %857 = vmatmul.mubr.bf16.gmra.mrb[0].mxu0 %v519
        %v858 = vpop.f32.mrb[0].mxu0
        %v859 = vadd.f32 %v318, %v858
        %v860 = vpop.f32.mrb[0].mxu0
        %v861 = vpop.f32.mrb[0].mxu0
        %v862 = vadd.f32 %v318, %v861
        %v863 = vpop.f32.mrb[0].mxu0
        %864 = vmatprep.mubr.bf16.mxu0 %v523
        %865 = vmatmul.mubr.bf16.gmra.mrb[0].mxu0 %v522
        %v866 = vpop.f32.mrb[0].mxu0
        %v867 = vadd.f32 %v318, %v866
        %v868 = vpop.f32.mrb[0].mxu0
        %v869 = vpop.f32.mrb[0].mxu0
        %v870 = vadd.f32 %v318, %v869
        %v871 = vpop.f32.mrb[0].mxu0
        %872 = vmatprep.mubr.bf16.mxu0 %v526
        %873 = vmatmul.mubr.bf16.gmra.mrb[0].mxu0 %v525
        %v874 = vpop.f32.mrb[0].mxu0
        %v875 = vadd.f32 %v318, %v874
        %v876 = vpop.f32.mrb[0].mxu0
        %v877 = vpop.f32.mrb[0].mxu0
        %v878 = vadd.f32 %v318, %v877
        %v879 = vpop.f32.mrb[0].mxu0
        %880 = vdwg.mxu0
        %881 = vmatprep.subr.bf16.mxu0 0
        %882 = vmatpush1.bf16.msra.mxu0 %v688
        %883 = vmatprep.subr.bf16.mxu0 0
        %884 = vmatpush1.bf16.msra.mxu0 %v689
        %885 = vmatprep.subr.bf16.mxu0 0
        %886 = vmatpush1.bf16.msra.mxu0 %v690
        %887 = vmatprep.subr.bf16.mxu0 0
        %888 = vmatpush1.bf16.msra.mxu0 %v691
        %889 = vmatprep.subr.bf16.mxu0 0
        %890 = vmatpush1.bf16.msra.mxu0 %v692
        %891 = vmatprep.subr.bf16.mxu0 0
        %892 = vmatpush1.bf16.msra.mxu0 %v693
        %893 = vmatprep.subr.bf16.mxu0 0
        %894 = vmatpush1.bf16.msra.mxu0 %v694
        %895 = vmatprep.subr.bf16.mxu0 0
        %896 = vmatpush1.bf16.msra.mxu0 %v695
        %897 = vmatprep.subr.bf16.mxu0 0
        %898 = vmatpush1.bf16.msra.mxu0 0
        %899 = vmatprep.subr.bf16.mxu0 0
        %900 = vmatpush1.bf16.msra.mxu0 0
        %901 = vmatprep.subr.bf16.mxu0 0
        %902 = vmatpush1.bf16.msra.mxu0 0
        %903 = vmatprep.subr.bf16.mxu0 0
        %904 = vmatpush1.bf16.msra.mxu0 0
        %905 = vmatprep.subr.bf16.mxu0 0
        %906 = vmatpush1.bf16.msra.mxu0 0
        %907 = vmatprep.subr.bf16.mxu0 0
        %908 = vmatpush1.bf16.msra.mxu0 0
        %909 = vmatprep.subr.bf16.mxu0 0
        %910 = vmatpush1.bf16.msra.mxu0 0
        %911 = vmatprep.subr.bf16.mxu0 0
        %912 = vmatpush1.bf16.msra.mxu0 0
        %913 = vmatprep.mubr.bf16.mxu0 0
        %914 = vmatmul.mubr.bf16.gmra.mrb[0].mxu0 %v482
        %v915 = vpop.f32.mrb[0].mxu0
        %v916 = vadd.f32 %v755, %v915
        %v917 = vpop.f32.mrb[0].mxu0
        %v918 = vpop.f32.mrb[0].mxu0
        %v919 = vadd.f32 %v758, %v918
        %v920 = vpop.f32.mrb[0].mxu0
        %921 = vmatprep.mubr.bf16.mxu0 0
        %922 = vmatmul.mubr.bf16.gmra.mrb[0].mxu0 %v485
        %v923 = vpop.f32.mrb[0].mxu0
        %v924 = vadd.f32 %v763, %v923
        %v925 = vpop.f32.mrb[0].mxu0
        %v926 = vpop.f32.mrb[0].mxu0
        %v927 = vadd.f32 %v766, %v926
        %v928 = vpop.f32.mrb[0].mxu0
        %929 = vmatprep.mubr.bf16.mxu0 0
        %930 = vmatmul.mubr.bf16.gmra.mrb[0].mxu0 %v488
        %v931 = vpop.f32.mrb[0].mxu0
        %v932 = vadd.f32 %v771, %v931
        %v933 = vpop.f32.mrb[0].mxu0
        %v934 = vpop.f32.mrb[0].mxu0
        %v935 = vadd.f32 %v774, %v934
        %v936 = vpop.f32.mrb[0].mxu0
        %937 = vmatprep.mubr.bf16.mxu0 0
        %938 = vmatmul.mubr.bf16.gmra.mrb[0].mxu0 %v491
        %v939 = vpop.f32.mrb[0].mxu0
        %v940 = vadd.f32 %v779, %v939
        %v941 = vpop.f32.mrb[0].mxu0
        %v942 = vpop.f32.mrb[0].mxu0
        %v943 = vadd.f32 %v782, %v942
        %v944 = vpop.f32.mrb[0].mxu0
        %945 = vmatprep.mubr.bf16.mxu0 0
        %946 = vmatmul.mubr.bf16.gmra.mrb[0].mxu0 %v494
        %v947 = vpop.f32.mrb[0].mxu0
        %v948 = vadd.f32 %v787, %v947
        %v949 = vpop.f32.mrb[0].mxu0
        %v950 = vpop.f32.mrb[0].mxu0
        %v951 = vadd.f32 %v790, %v950
        %v952 = vpop.f32.mrb[0].mxu0
        %953 = vmatprep.mubr.bf16.mxu0 0
        %954 = vmatmul.mubr.bf16.gmra.mrb[0].mxu0 %v497
        %v955 = vpop.f32.mrb[0].mxu0
        %v956 = vadd.f32 %v795, %v955
        %v957 = vpop.f32.mrb[0].mxu0
        %v958 = vpop.f32.mrb[0].mxu0
        %v959 = vadd.f32 %v798, %v958
        %v960 = vpop.f32.mrb[0].mxu0
        %961 = vmatprep.mubr.bf16.mxu0 0
        %962 = vmatmul.mubr.bf16.gmra.mrb[0].mxu0 %v500
        %v963 = vpop.f32.mrb[0].mxu0
        %v964 = vadd.f32 %v803, %v963
        %v965 = vpop.f32.mrb[0].mxu0
        %v966 = vpop.f32.mrb[0].mxu0
        %v967 = vadd.f32 %v806, %v966
        %v968 = vpop.f32.mrb[0].mxu0
        %969 = vmatprep.mubr.bf16.mxu0 0
        %970 = vmatmul.mubr.bf16.gmra.mrb[0].mxu0 %v503
        %v971 = vpop.f32.mrb[0].mxu0
        %v972 = vadd.f32 %v811, %v971
        %v973 = vpop.f32.mrb[0].mxu0
        %v974 = vpop.f32.mrb[0].mxu0
        %v975 = vadd.f32 %v814, %v974
        %v976 = vpop.f32.mrb[0].mxu0
        %977 = vmatprep.mubr.bf16.mxu0 0
        %978 = vmatmul.mubr.bf16.gmra.mrb[0].mxu0 %v506
        %v979 = vpop.f32.mrb[0].mxu0
        %v980 = vadd.f32 %v819, %v979
        %v981 = vpop.f32.mrb[0].mxu0
        %v982 = vpop.f32.mrb[0].mxu0
        %v983 = vadd.f32 %v822, %v982
        %v984 = vpop.f32.mrb[0].mxu0
        %985 = vmatprep.mubr.bf16.mxu0 0
        %986 = vmatmul.mubr.bf16.gmra.mrb[0].mxu0 %v509
        %v987 = vpop.f32.mrb[0].mxu0
        %v988 = vadd.f32 %v827, %v987
        %v989 = vpop.f32.mrb[0].mxu0
        %v990 = vpop.f32.mrb[0].mxu0
        %v991 = vadd.f32 %v830, %v990
        %v992 = vpop.f32.mrb[0].mxu0
        %993 = vmatprep.mubr.bf16.mxu0 0
        %994 = vmatmul.mubr.bf16.gmra.mrb[0].mxu0 %v512
        %v995 = vpop.f32.mrb[0].mxu0
        %v996 = vadd.f32 %v835, %v995
        %v997 = vpop.f32.mrb[0].mxu0
        %v998 = vpop.f32.mrb[0].mxu0
        %v999 = vadd.f32 %v838, %v998
        %v1000 = vpop.f32.mrb[0].mxu0
        %1001 = vmatprep.mubr.bf16.mxu0 0
        %1002 = vmatmul.mubr.bf16.gmra.mrb[0].mxu0 %v515
        %v1003 = vpop.f32.mrb[0].mxu0
        %v1004 = vadd.f32 %v843, %v1003
        %v1005 = vpop.f32.mrb[0].mxu0
        %v1006 = vpop.f32.mrb[0].mxu0
        %v1007 = vadd.f32 %v846, %v1006
        %v1008 = vpop.f32.mrb[0].mxu0
        %1009 = vmatprep.mubr.bf16.mxu0 0
        %1010 = vmatmul.mubr.bf16.gmra.mrb[0].mxu0 %v518
        %v1011 = vpop.f32.mrb[0].mxu0
        %v1012 = vadd.f32 %v851, %v1011
        %v1013 = vpop.f32.mrb[0].mxu0
        %v1014 = vpop.f32.mrb[0].mxu0
        %v1015 = vadd.f32 %v854, %v1014
        %v1016 = vpop.f32.mrb[0].mxu0
        %1017 = vmatprep.mubr.bf16.mxu0 0
        %1018 = vmatmul.mubr.bf16.gmra.mrb[0].mxu0 %v521
        %v1019 = vpop.f32.mrb[0].mxu0
        %v1020 = vadd.f32 %v859, %v1019
        %v1021 = vpop.f32.mrb[0].mxu0
        %v1022 = vpop.f32.mrb[0].mxu0
        %v1023 = vadd.f32 %v862, %v1022
        %v1024 = vpop.f32.mrb[0].mxu0
        %1025 = vmatprep.mubr.bf16.mxu0 0
        %1026 = vmatmul.mubr.bf16.gmra.mrb[0].mxu0 %v524
        %v1027 = vpop.f32.mrb[0].mxu0
        %v1028 = vadd.f32 %v867, %v1027
        %v1029 = vpop.f32.mrb[0].mxu0
        %v1030 = vpop.f32.mrb[0].mxu0
        %v1031 = vadd.f32 %v870, %v1030
        %v1032 = vpop.f32.mrb[0].mxu0
        %1033 = vmatprep.mubr.bf16.mxu0 0
        %1034 = vmatmul.mubr.bf16.gmra.mrb[0].mxu0 %v527
        %v1035 = vpop.f32.mrb[0].mxu0
        %v1036 = vadd.f32 %v875, %v1035
        %v1037 = vpop.f32.mrb[0].mxu0
        %v1038 = vpop.f32.mrb[0].mxu0
        %v1039 = vadd.f32 %v878, %v1038
        %v1040 = vpop.f32.mrb[0].mxu0
        %1041 = vdwg.mxu0
        %v1042 = vmax.f32 %v916, 0.0
        %v1043 = vmax.f32 %v919, 0.0
        %v1044 = vmax.f32 %v924, 0.0
        %v1045 = vmax.f32 %v927, 0.0
        %v1046 = vmax.f32 %v932, 0.0
        %v1047 = vmax.f32 %v935, 0.0
        %v1048 = vmax.f32 %v940, 0.0
        %v1049 = vmax.f32 %v943, 0.0
        %v1050 = vmax.f32 %v948, 0.0
        %v1051 = vmax.f32 %v951, 0.0
        %v1052 = vmax.f32 %v956, 0.0
        %v1053 = vmax.f32 %v959, 0.0
        %v1054 = vmax.f32 %v964, 0.0
        %v1055 = vmax.f32 %v967, 0.0
        %v1056 = vmax.f32 %v972, 0.0
        %v1057 = vmax.f32 %v975, 0.0
        %v1058 = vmax.f32 %v980, 0.0
        %v1059 = vmax.f32 %v983, 0.0
        %v1060 = vmax.f32 %v988, 0.0
        %v1061 = vmax.f32 %v991, 0.0
        %v1062 = vmax.f32 %v996, 0.0
        %v1063 = vmax.f32 %v999, 0.0
        %v1064 = vmax.f32 %v1004, 0.0
        %v1065 = vmax.f32 %v1007, 0.0
        %v1066 = vmax.f32 %v1012, 0.0
        %v1067 = vmax.f32 %v1015, 0.0
        %v1068 = vmax.f32 %v1020, 0.0
        %v1069 = vmax.f32 %v1023, 0.0
        %v1070 = vmax.f32 %v1028, 0.0
        %v1071 = vmax.f32 %v1031, 0.0
        %v1072 = vmax.f32 %v1036, 0.0
        %v1073 = vmax.f32 %v1039, 0.0
        %v1074 = vpack.c.bf16 %v1043, %v1042
        %v1075 = vpack.c.bf16 %v1045, %v1044
        %v1076 = vpack.c.bf16 %v1047, %v1046
        %v1077 = vpack.c.bf16 %v1049, %v1048
        %v1078 = vpack.c.bf16 %v1051, %v1050
        %v1079 = vpack.c.bf16 %v1053, %v1052
        %v1080 = vpack.c.bf16 %v1055, %v1054
        %v1081 = vpack.c.bf16 %v1057, %v1056
        %v1082 = vpack.c.bf16 %v1059, %v1058
        %v1083 = vpack.c.bf16 %v1061, %v1060
        %v1084 = vpack.c.bf16 %v1063, %v1062
        %v1085 = vpack.c.bf16 %v1065, %v1064
        %v1086 = vpack.c.bf16 %v1067, %v1066
        %v1087 = vpack.c.bf16 %v1069, %v1068
        %v1088 = vpack.c.bf16 %v1071, %v1070
        %v1089 = vpack.c.bf16 %v1073, %v1072
        %v1106 = vunpack.c.l.b16 %v1074
        %v1107 = vunpack.c.h.b16 %v1074
        %v1108 = vunpack.c.l.b16 %v1075
        %v1109 = vunpack.c.h.b16 %v1075
        %v1110 = vunpack.c.l.b16 %v1076
        %v1111 = vunpack.c.h.b16 %v1076
        %v1112 = vunpack.c.l.b16 %v1077
        %v1113 = vunpack.c.h.b16 %v1077
        %v1114 = vunpack.c.l.b16 %v1078
        %v1115 = vunpack.c.h.b16 %v1078
        %v1116 = vunpack.c.l.b16 %v1079
        %v1117 = vunpack.c.h.b16 %v1079
        %v1118 = vunpack.c.l.b16 %v1080
        %v1119 = vunpack.c.h.b16 %v1080
        %v1120 = vunpack.c.l.b16 %v1081
        %v1121 = vunpack.c.h.b16 %v1081
        %v1122 = vunpack.c.l.b16 %v1082
        %v1123 = vunpack.c.h.b16 %v1082
        %v1124 = vunpack.c.l.b16 %v1083
        %v1125 = vunpack.c.h.b16 %v1083
        %v1126 = vunpack.c.l.b16 %v1084
        %v1127 = vunpack.c.h.b16 %v1084
        %v1128 = vunpack.c.l.b16 %v1085
        %v1129 = vunpack.c.h.b16 %v1085
        %v1130 = vunpack.c.l.b16 %v1086
        %v1131 = vunpack.c.h.b16 %v1086
        %v1132 = vunpack.c.l.b16 %v1087
        %v1133 = vunpack.c.h.b16 %v1087
        %v1134 = vunpack.c.l.b16 %v1088
        %v1135 = vunpack.c.h.b16 %v1088
        %v1136 = vunpack.c.l.b16 %v1089
        %v1137 = vunpack.c.h.b16 %v1089
        %v1138 = vpack.c.b16 %v1106, %v1106
        %v1139 = vpack.c.b16 %v1107, %v1107
        %v1140 = vpack.c.b16 %v1108, %v1108
        %v1141 = vpack.c.b16 %v1109, %v1109
        %v1142 = vpack.c.b16 %v1110, %v1110
        %v1143 = vpack.c.b16 %v1111, %v1111
        %v1144 = vpack.c.b16 %v1112, %v1112
        %v1145 = vpack.c.b16 %v1113, %v1113
        %v1146 = vpack.c.b16 %v1114, %v1114
        %v1147 = vpack.c.b16 %v1115, %v1115
        %v1148 = vpack.c.b16 %v1116, %v1116
        %v1149 = vpack.c.b16 %v1117, %v1117
        %v1150 = vpack.c.b16 %v1118, %v1118
        %v1151 = vpack.c.b16 %v1119, %v1119
        %v1152 = vpack.c.b16 %v1120, %v1120
        %v1153 = vpack.c.b16 %v1121, %v1121
        %v1154 = vpack.c.b16 %v1122, %v1122
        %v1155 = vpack.c.b16 %v1123, %v1123
        %v1156 = vpack.c.b16 %v1124, %v1124
        %v1157 = vpack.c.b16 %v1125, %v1125
        %v1158 = vpack.c.b16 %v1126, %v1126
        %v1159 = vpack.c.b16 %v1127, %v1127
        %v1160 = vpack.c.b16 %v1128, %v1128
        %v1161 = vpack.c.b16 %v1129, %v1129
        %v1162 = vpack.c.b16 %v1130, %v1130
        %v1163 = vpack.c.b16 %v1131, %v1131
        %v1164 = vpack.c.b16 %v1132, %v1132
        %v1165 = vpack.c.b16 %v1133, %v1133
        %v1166 = vpack.c.b16 %v1134, %v1134
        %v1167 = vpack.c.b16 %v1135, %v1135
        %v1168 = vpack.c.b16 %v1136, %v1136
        %v1169 = vpack.c.b16 %v1137, %v1137
        %vm1202 = vcmask 257024
        %1203 = vst.msk [vmem:[%s177] sm:$0xf] %vm1202, %v1138
        %1204 = vst.msk [vmem:[%s177 + $0x4] sm:$0xf] %vm1202, %v1139
        %1205 = vst.msk [vmem:[%s177 + $0x8] sm:$0xf] %vm1202, %v1140
        %1206 = vst.msk [vmem:[%s177 + $0xc] sm:$0xf] %vm1202, %v1141
        %1207 = vst.msk [vmem:[%s177 + $0x10] sm:$0xf] %vm1202, %v1142
        %1208 = vst.msk [vmem:[%s177 + $0x14] sm:$0xf] %vm1202, %v1143
        %1209 = vst.msk [vmem:[%s177 + $0x18] sm:$0xf] %vm1202, %v1144
        %1210 = vst.msk [vmem:[%s177 + $0x1c] sm:$0xf] %vm1202, %v1145
        %1211 = vst.msk [vmem:[%s177 + $0x20] sm:$0xf] %vm1202, %v1146
        %1212 = vst.msk [vmem:[%s177 + $0x24] sm:$0xf] %vm1202, %v1147
        %1213 = vst.msk [vmem:[%s177 + $0x28] sm:$0xf] %vm1202, %v1148
        %1214 = vst.msk [vmem:[%s177 + $0x2c] sm:$0xf] %vm1202, %v1149
        %1215 = vst.msk [vmem:[%s177 + $0x30] sm:$0xf] %vm1202, %v1150
        %1216 = vst.msk [vmem:[%s177 + $0x34] sm:$0xf] %vm1202, %v1151
        %1217 = vst.msk [vmem:[%s177 + $0x38] sm:$0xf] %vm1202, %v1152
        %1218 = vst.msk [vmem:[%s177 + $0x3c] sm:$0xf] %vm1202, %v1153
        %1219 = vst.msk [vmem:[%s177 + $0x40] sm:$0xf] %vm1202, %v1154
        %1220 = vst.msk [vmem:[%s177 + $0x44] sm:$0xf] %vm1202, %v1155
        %1221 = vst.msk [vmem:[%s177 + $0x48] sm:$0xf] %vm1202, %v1156
        %1222 = vst.msk [vmem:[%s177 + $0x4c] sm:$0xf] %vm1202, %v1157
        %1223 = vst.msk [vmem:[%s177 + $0x50] sm:$0xf] %vm1202, %v1158
        %1224 = vst.msk [vmem:[%s177 + $0x54] sm:$0xf] %vm1202, %v1159
        %1225 = vst.msk [vmem:[%s177 + $0x58] sm:$0xf] %vm1202, %v1160
        %1226 = vst.msk [vmem:[%s177 + $0x5c] sm:$0xf] %vm1202, %v1161
        %1227 = vst.msk [vmem:[%s177 + $0x60] sm:$0xf] %vm1202, %v1162
        %1228 = vst.msk [vmem:[%s177 + $0x64] sm:$0xf] %vm1202, %v1163
        %1229 = vst.msk [vmem:[%s177 + $0x68] sm:$0xf] %vm1202, %v1164
        %1230 = vst.msk [vmem:[%s177 + $0x6c] sm:$0xf] %vm1202, %v1165
        %1231 = vst.msk [vmem:[%s177 + $0x70] sm:$0xf] %vm1202, %v1166
        %1232 = vst.msk [vmem:[%s177 + $0x74] sm:$0xf] %vm1202, %v1167
        %1233 = vst.msk [vmem:[%s177 + $0x78] sm:$0xf] %vm1202, %v1168
        %1234 = vst.msk [vmem:[%s177 + $0x7c] sm:$0xf] %vm1202, %v1169
        %s1235 = sand.u32 %s90, 1
        %s1236 = sand.u32 %s90, 1
        %s1237 = smul.addr %s1236, 128
        %s1238 = scalar_lea.vmem [#allocation2], %s1237
        // Predicated region
        $region33: #{qnet_forward.9} parent=31 // pred_check
          %p1239 = pneg %p100
        $region34: #{qnet_forward.9} parent=31 // pred_check_branch
          %1241 = sbr.rel (%p1239) target = $region36
        $region35: #{qnet_forward.9} parent=31 // pred_region
          %s1242 = smul.u32 32, %s14
          %s1243 = ssub.s32 169, %s1242
          %p1244 = scmp.lt.s32.totalorder %s1243, 32
          %s1245 = scalar_select %p1244, %s1243, 32
          %s1246 = smul.u32 64, %s1245
          %p1247 = scmp.ne.s32.totalorder 0, %s1246
          %s1248 = smul.addr %s1242, 4
          %s1249 = scalar_lea.vmem %s3, %s1248
          // Predicated region
          $region37: #{qnet_forward.9} parent=35 // pred_check
            %p1250 = pneg %p1247
          $region38: #{qnet_forward.9} parent=35 // pred_check_branch
            %1252 = sbr.rel (%p1250) target = $region40
          $region39: #{qnet_forward.9} parent=35 // pred_region
            // Predicated region
            $region41: #{qnet_forward.9} parent=39 // pred_check
              _
            $region42: #{qnet_forward.9} parent=39 // pred_check_branch
              %1254 = sbr.rel target = $region44
            $region43: #{qnet_forward.9} parent=39 // pred_region
              // Predicated region
              $region63: #{qnet_forward.9} parent=43 // pred_check
                _
              $region64: #{qnet_forward.9} parent=43 // pred_check_branch
                %1365 = sbr.rel (0) target = $region66
              $region65: #{qnet_forward.9} parent=43 // pred_region
                %s1367 = sshrl.u32 %s1245, 5
                // While loop
                $region67: #{qnet_forward.9} parent=65 // loop_pre_header
                  _
                $region68: #{qnet_forward.9} parent=65 // loop_header
                  %s1369 = sphi 0, %s1371
                  %p1370 = scmp.ge.s32.totalorder %s1369, %s1367
                  %s1374 = sphi 0, %s1443
                  %s1375 = sphi %s1238, %s1446
                  %s1376 = sphi %s1249, %s1447
                $region69: #{qnet_forward.9} parent=65 // loop_header_branch
                  %1373 = sbr.rel (%p1370) target = $region73
                $region70: #{qnet_forward.9} parent=65 // loop_body
                  %v1377 = vld [vmem:[%s1375] sm:$0xf]
                  %1378 = vst [vmem:[%s1376] sm:$0xf] %v1377
                  %v1379 = vld [vmem:[%s1375 + $0x4] sm:$0xf]
                  %1380 = vst [vmem:[%s1376 + $0x4] sm:$0xf] %v1379
                  %v1381 = vld [vmem:[%s1375 + $0x8] sm:$0xf]
                  %1382 = vst [vmem:[%s1376 + $0x8] sm:$0xf] %v1381
                  %v1383 = vld [vmem:[%s1375 + $0xc] sm:$0xf]
                  %1384 = vst [vmem:[%s1376 + $0xc] sm:$0xf] %v1383
                  %v1385 = vld [vmem:[%s1375 + $0x10] sm:$0xf]
                  %1386 = vst [vmem:[%s1376 + $0x10] sm:$0xf] %v1385
                  %v1387 = vld [vmem:[%s1375 + $0x14] sm:$0xf]
                  %1388 = vst [vmem:[%s1376 + $0x14] sm:$0xf] %v1387
                  %v1389 = vld [vmem:[%s1375 + $0x18] sm:$0xf]
                  %1390 = vst [vmem:[%s1376 + $0x18] sm:$0xf] %v1389
                  %v1391 = vld [vmem:[%s1375 + $0x1c] sm:$0xf]
                  %1392 = vst [vmem:[%s1376 + $0x1c] sm:$0xf] %v1391
                  %v1393 = vld [vmem:[%s1375 + $0x20] sm:$0xf]
                  %1394 = vst [vmem:[%s1376 + $0x20] sm:$0xf] %v1393
                  %v1395 = vld [vmem:[%s1375 + $0x24] sm:$0xf]
                  %1396 = vst [vmem:[%s1376 + $0x24] sm:$0xf] %v1395
                  %v1397 = vld [vmem:[%s1375 + $0x28] sm:$0xf]
                  %1398 = vst [vmem:[%s1376 + $0x28] sm:$0xf] %v1397
                  %v1399 = vld [vmem:[%s1375 + $0x2c] sm:$0xf]
                  %1400 = vst [vmem:[%s1376 + $0x2c] sm:$0xf] %v1399
                  %v1401 = vld [vmem:[%s1375 + $0x30] sm:$0xf]
                  %1402 = vst [vmem:[%s1376 + $0x30] sm:$0xf] %v1401
                  %v1403 = vld [vmem:[%s1375 + $0x34] sm:$0xf]
                  %1404 = vst [vmem:[%s1376 + $0x34] sm:$0xf] %v1403
                  %v1405 = vld [vmem:[%s1375 + $0x38] sm:$0xf]
                  %1406 = vst [vmem:[%s1376 + $0x38] sm:$0xf] %v1405
                  %v1407 = vld [vmem:[%s1375 + $0x3c] sm:$0xf]
                  %1408 = vst [vmem:[%s1376 + $0x3c] sm:$0xf] %v1407
                  %v1409 = vld [vmem:[%s1375 + $0x40] sm:$0xf]
                  %1410 = vst [vmem:[%s1376 + $0x40] sm:$0xf] %v1409
                  %v1411 = vld [vmem:[%s1375 + $0x44] sm:$0xf]
                  %1412 = vst [vmem:[%s1376 + $0x44] sm:$0xf] %v1411
                  %v1413 = vld [vmem:[%s1375 + $0x48] sm:$0xf]
                  %1414 = vst [vmem:[%s1376 + $0x48] sm:$0xf] %v1413
                  %v1415 = vld [vmem:[%s1375 + $0x4c] sm:$0xf]
                  %1416 = vst [vmem:[%s1376 + $0x4c] sm:$0xf] %v1415
                  %v1417 = vld [vmem:[%s1375 + $0x50] sm:$0xf]
                  %1418 = vst [vmem:[%s1376 + $0x50] sm:$0xf] %v1417
                  %v1419 = vld [vmem:[%s1375 + $0x54] sm:$0xf]
                  %1420 = vst [vmem:[%s1376 + $0x54] sm:$0xf] %v1419
                  %v1421 = vld [vmem:[%s1375 + $0x58] sm:$0xf]
                  %1422 = vst [vmem:[%s1376 + $0x58] sm:$0xf] %v1421
                  %v1423 = vld [vmem:[%s1375 + $0x5c] sm:$0xf]
                  %1424 = vst [vmem:[%s1376 + $0x5c] sm:$0xf] %v1423
                  %v1425 = vld [vmem:[%s1375 + $0x60] sm:$0xf]
                  %1426 = vst [vmem:[%s1376 + $0x60] sm:$0xf] %v1425
                  %v1427 = vld [vmem:[%s1375 + $0x64] sm:$0xf]
                  %1428 = vst [vmem:[%s1376 + $0x64] sm:$0xf] %v1427
                  %v1429 = vld [vmem:[%s1375 + $0x68] sm:$0xf]
                  %1430 = vst [vmem:[%s1376 + $0x68] sm:$0xf] %v1429
                  %v1431 = vld [vmem:[%s1375 + $0x6c] sm:$0xf]
                  %1432 = vst [vmem:[%s1376 + $0x6c] sm:$0xf] %v1431
                  %v1433 = vld [vmem:[%s1375 + $0x70] sm:$0xf]
                  %1434 = vst [vmem:[%s1376 + $0x70] sm:$0xf] %v1433
                  %v1435 = vld [vmem:[%s1375 + $0x74] sm:$0xf]
                  %1436 = vst [vmem:[%s1376 + $0x74] sm:$0xf] %v1435
                  %v1437 = vld [vmem:[%s1375 + $0x78] sm:$0xf]
                  %1438 = vst [vmem:[%s1376 + $0x78] sm:$0xf] %v1437
                  %v1439 = vld [vmem:[%s1375 + $0x7c] sm:$0xf]
                  %1440 = vst [vmem:[%s1376 + $0x7c] sm:$0xf] %v1439
                  %s1441 = sadd.s32 1, %s1374
                  %p1442 = scmp.ge.s32.totalorder %s1441, %s1367
                  %s1443 = scalar_select %p1442, 0, %s1441
                  %s1444 = smul.u32 %s1443, 128
                  %s1445 = smul.u32 %s1443, 128
                  %s1446 = scalar_lea.vmem %s1238, %s1444 [#allocation2]
                  %s1447 = scalar_lea.vmem %s1249, %s1445
                $region71: #{qnet_forward.9} parent=65 // loop_footer
                  %s1371 = sadd.s32 %s1369, 1
                $region72: #{qnet_forward.9} parent=65 // loop_footer_branch
                  %1368 = sbr.rel target = $region68
                $region73: #{qnet_forward.9} parent=65 // loop_exit
                  _
                %s1448 = sshrl.u32 %s1245, 5
                %s1449 = sand.u32 %s1245, 31
                %s1450 = smul.u32 %s1448, 32
                %s1451 = smul.u32 4, %s1450
                %s1452 = scalar_lea.vmem %s1238, %s1451 [#allocation2]
                %s1453 = smul.u32 4, %s1450
                %s1454 = scalar_lea.vmem %s1249, %s1453
                // While loop
                $region74: #{qnet_forward.9} parent=65 // loop_pre_header
                  _
                $region75: #{qnet_forward.9} parent=65 // loop_header
                  %s1456 = sphi 0, %s1458
                  %p1457 = scmp.ge.s32.totalorder %s1456, %s1449
                  %s1461 = sphi 0, %s1468
                  %s1462 = sphi %s1452, %s1471
                  %s1463 = sphi %s1454, %s1472
                $region76: #{qnet_forward.9} parent=65 // loop_header_branch
                  %1460 = sbr.rel (%p1457) target = $region80
                $region77: #{qnet_forward.9} parent=65 // loop_body
                  %v1464 = vld [vmem:[%s1462] sm:$0xf]
                  %1465 = vst [vmem:[%s1463] sm:$0xf] %v1464
                  %s1466 = sadd.s32 1, %s1461
                  %p1467 = scmp.ge.s32.totalorder %s1466, %s1449
                  %s1468 = scalar_select %p1467, 0, %s1466
                  %s1469 = smul.u32 %s1468, 4
                  %s1470 = smul.u32 %s1468, 4
                  %s1471 = scalar_lea.vmem %s1452, %s1469 [#allocation2]
                  %s1472 = scalar_lea.vmem %s1454, %s1470
                $region78: #{qnet_forward.9} parent=65 // loop_footer
                  %s1458 = sadd.s32 %s1456, 1
                $region79: #{qnet_forward.9} parent=65 // loop_footer_branch
                  %1455 = sbr.rel target = $region75
                $region80: #{qnet_forward.9} parent=65 // loop_exit
                  _
              $region66: #{qnet_forward.9} parent=43 // pred_fallthru
                _
            $region44: #{qnet_forward.9} parent=39 // pred_fallthru
              _
            // Predicated region
            $region45: #{qnet_forward.9} parent=39 // pred_check
              _
            $region46: #{qnet_forward.9} parent=39 // pred_check_branch
              %1256 = sbr.rel (0) target = $region48
            $region47: #{qnet_forward.9} parent=39 // pred_region
              %s1258 = sshrl.u32 %s1245, 5
              // While loop
              $region49: #{qnet_forward.9} parent=47 // loop_pre_header
                _
              $region50: #{qnet_forward.9} parent=47 // loop_header
                %s1260 = sphi 0, %s1262
                %p1261 = scmp.ge.s32.totalorder %s1260, %s1258
                %s1265 = sphi 0, %s1334
                %s1266 = sphi %s1238, %s1337
                %s1267 = sphi %s1249, %s1338
              $region51: #{qnet_forward.9} parent=47 // loop_header_branch
                %1264 = sbr.rel (%p1261) target = $region55
              $region52: #{qnet_forward.9} parent=47 // loop_body
                %v1268 = vld [vmem:[%s1266] sm:$0xf]
                %1269 = vst [vmem:[%s1267] sm:$0xf] %v1268
                %v1270 = vld [vmem:[%s1266 + $0x4] sm:$0xf]
                %1271 = vst [vmem:[%s1267 + $0x4] sm:$0xf] %v1270
                %v1272 = vld [vmem:[%s1266 + $0x8] sm:$0xf]
                %1273 = vst [vmem:[%s1267 + $0x8] sm:$0xf] %v1272
                %v1274 = vld [vmem:[%s1266 + $0xc] sm:$0xf]
                %1275 = vst [vmem:[%s1267 + $0xc] sm:$0xf] %v1274
                %v1276 = vld [vmem:[%s1266 + $0x10] sm:$0xf]
                %1277 = vst [vmem:[%s1267 + $0x10] sm:$0xf] %v1276
                %v1278 = vld [vmem:[%s1266 + $0x14] sm:$0xf]
                %1279 = vst [vmem:[%s1267 + $0x14] sm:$0xf] %v1278
                %v1280 = vld [vmem:[%s1266 + $0x18] sm:$0xf]
                %1281 = vst [vmem:[%s1267 + $0x18] sm:$0xf] %v1280
                %v1282 = vld [vmem:[%s1266 + $0x1c] sm:$0xf]
                %1283 = vst [vmem:[%s1267 + $0x1c] sm:$0xf] %v1282
                %v1284 = vld [vmem:[%s1266 + $0x20] sm:$0xf]
                %1285 = vst [vmem:[%s1267 + $0x20] sm:$0xf] %v1284
                %v1286 = vld [vmem:[%s1266 + $0x24] sm:$0xf]
                %1287 = vst [vmem:[%s1267 + $0x24] sm:$0xf] %v1286
                %v1288 = vld [vmem:[%s1266 + $0x28] sm:$0xf]
                %1289 = vst [vmem:[%s1267 + $0x28] sm:$0xf] %v1288
                %v1290 = vld [vmem:[%s1266 + $0x2c] sm:$0xf]
                %1291 = vst [vmem:[%s1267 + $0x2c] sm:$0xf] %v1290
                %v1292 = vld [vmem:[%s1266 + $0x30] sm:$0xf]
                %1293 = vst [vmem:[%s1267 + $0x30] sm:$0xf] %v1292
                %v1294 = vld [vmem:[%s1266 + $0x34] sm:$0xf]
                %1295 = vst [vmem:[%s1267 + $0x34] sm:$0xf] %v1294
                %v1296 = vld [vmem:[%s1266 + $0x38] sm:$0xf]
                %1297 = vst [vmem:[%s1267 + $0x38] sm:$0xf] %v1296
                %v1298 = vld [vmem:[%s1266 + $0x3c] sm:$0xf]
                %1299 = vst [vmem:[%s1267 + $0x3c] sm:$0xf] %v1298
                %v1300 = vld [vmem:[%s1266 + $0x40] sm:$0xf]
                %1301 = vst [vmem:[%s1267 + $0x40] sm:$0xf] %v1300
                %v1302 = vld [vmem:[%s1266 + $0x44] sm:$0xf]
                %1303 = vst [vmem:[%s1267 + $0x44] sm:$0xf] %v1302
                %v1304 = vld [vmem:[%s1266 + $0x48] sm:$0xf]
                %1305 = vst [vmem:[%s1267 + $0x48] sm:$0xf] %v1304
                %v1306 = vld [vmem:[%s1266 + $0x4c] sm:$0xf]
                %1307 = vst [vmem:[%s1267 + $0x4c] sm:$0xf] %v1306
                %v1308 = vld [vmem:[%s1266 + $0x50] sm:$0xf]
                %1309 = vst [vmem:[%s1267 + $0x50] sm:$0xf] %v1308
                %v1310 = vld [vmem:[%s1266 + $0x54] sm:$0xf]
                %1311 = vst [vmem:[%s1267 + $0x54] sm:$0xf] %v1310
                %v1312 = vld [vmem:[%s1266 + $0x58] sm:$0xf]
                %1313 = vst [vmem:[%s1267 + $0x58] sm:$0xf] %v1312
                %v1314 = vld [vmem:[%s1266 + $0x5c] sm:$0xf]
                %1315 = vst [vmem:[%s1267 + $0x5c] sm:$0xf] %v1314
                %v1316 = vld [vmem:[%s1266 + $0x60] sm:$0xf]
                %1317 = vst [vmem:[%s1267 + $0x60] sm:$0xf] %v1316
                %v1318 = vld [vmem:[%s1266 + $0x64] sm:$0xf]
                %1319 = vst [vmem:[%s1267 + $0x64] sm:$0xf] %v1318
                %v1320 = vld [vmem:[%s1266 + $0x68] sm:$0xf]
                %1321 = vst [vmem:[%s1267 + $0x68] sm:$0xf] %v1320
                %v1322 = vld [vmem:[%s1266 + $0x6c] sm:$0xf]
                %1323 = vst [vmem:[%s1267 + $0x6c] sm:$0xf] %v1322
                %v1324 = vld [vmem:[%s1266 + $0x70] sm:$0xf]
                %1325 = vst [vmem:[%s1267 + $0x70] sm:$0xf] %v1324
                %v1326 = vld [vmem:[%s1266 + $0x74] sm:$0xf]
                %1327 = vst [vmem:[%s1267 + $0x74] sm:$0xf] %v1326
                %v1328 = vld [vmem:[%s1266 + $0x78] sm:$0xf]
                %1329 = vst [vmem:[%s1267 + $0x78] sm:$0xf] %v1328
                %v1330 = vld [vmem:[%s1266 + $0x7c] sm:$0xf]
                %1331 = vst [vmem:[%s1267 + $0x7c] sm:$0xf] %v1330
                %s1332 = sadd.s32 1, %s1265
                %p1333 = scmp.ge.s32.totalorder %s1332, %s1258
                %s1334 = scalar_select %p1333, 0, %s1332
                %s1335 = smul.u32 %s1334, 128
                %s1336 = smul.u32 %s1334, 128
                %s1337 = scalar_lea.vmem %s1238, %s1335 [#allocation2]
                %s1338 = scalar_lea.vmem %s1249, %s1336
              $region53: #{qnet_forward.9} parent=47 // loop_footer
                %s1262 = sadd.s32 %s1260, 1
              $region54: #{qnet_forward.9} parent=47 // loop_footer_branch
                %1259 = sbr.rel target = $region50
              $region55: #{qnet_forward.9} parent=47 // loop_exit
                _
              %s1339 = sshrl.u32 %s1245, 5
              %s1340 = sand.u32 %s1245, 31
              %s1341 = smul.u32 %s1339, 32
              %s1342 = smul.u32 4, %s1341
              %s1343 = scalar_lea.vmem %s1238, %s1342 [#allocation2]
              %s1344 = smul.u32 4, %s1341
              %s1345 = scalar_lea.vmem %s1249, %s1344
              // While loop
              $region56: #{qnet_forward.9} parent=47 // loop_pre_header
                _
              $region57: #{qnet_forward.9} parent=47 // loop_header
                %s1347 = sphi 0, %s1349
                %p1348 = scmp.ge.s32.totalorder %s1347, %s1340
                %s1352 = sphi 0, %s1359
                %s1353 = sphi %s1343, %s1362
                %s1354 = sphi %s1345, %s1363
              $region58: #{qnet_forward.9} parent=47 // loop_header_branch
                %1351 = sbr.rel (%p1348) target = $region62
              $region59: #{qnet_forward.9} parent=47 // loop_body
                %v1355 = vld [vmem:[%s1353] sm:$0xf]
                %1356 = vst [vmem:[%s1354] sm:$0xf] %v1355
                %s1357 = sadd.s32 1, %s1352
                %p1358 = scmp.ge.s32.totalorder %s1357, %s1340
                %s1359 = scalar_select %p1358, 0, %s1357
                %s1360 = smul.u32 %s1359, 4
                %s1361 = smul.u32 %s1359, 4
                %s1362 = scalar_lea.vmem %s1343, %s1360 [#allocation2]
                %s1363 = scalar_lea.vmem %s1345, %s1361
              $region60: #{qnet_forward.9} parent=47 // loop_footer
                %s1349 = sadd.s32 %s1347, 1
              $region61: #{qnet_forward.9} parent=47 // loop_footer_branch
                %1346 = sbr.rel target = $region57
              $region62: #{qnet_forward.9} parent=47 // loop_exit
                _
            $region48: #{qnet_forward.9} parent=39 // pred_fallthru
              _
          $region40: #{qnet_forward.9} parent=35 // pred_fallthru
            _
          %1473 = vnop
        $region36: #{qnet_forward.9} parent=31 // pred_fallthru
          _
      $region32: #{qnet_forward.9} parent=5 // pred_fallthru
        _
      %p1474 = scmp.le.s32.totalorder 2, %s9
      // Predicated region
      $region81: #{qnet_forward.9} parent=5 // pred_check
        %p1475 = pneg %p1474
      $region82: #{qnet_forward.9} parent=5 // pred_check_branch
        %1477 = sbr.rel (%p1475) target = $region84
      $region83: #{qnet_forward.9} parent=5 // pred_region
        %s1478 = ssub.s32 %s9, 2
        // Predicated region
        $region85: #{qnet_forward.9} parent=83 // pred_check
          %p1479 = pneg %p106
        $region86: #{qnet_forward.9} parent=83 // pred_check_branch
          %1481 = sbr.rel (%p1479) target = $region88
        $region87: #{qnet_forward.9} parent=83 // pred_region
          %s1482 = sand.u32 %s91, 1
          %s1483 = sand.u32 %s91, 1
          %s1484 = smul.addr %s1483, 128
          %s1485 = scalar_lea.vmem [#allocation2], %s1484
        $region88: #{qnet_forward.9} parent=83 // pred_fallthru
          _
      $region84: #{qnet_forward.9} parent=5 // pred_fallthru
        _
    $region6: #{qnet_forward.9} parent=1 // loop_footer
      %s13 = sadd.s32 1, %s9
    $region7: #{qnet_forward.9} parent=1 // loop_footer_branch
      %8 = sbr.rel target = $region3
    $region8: #{qnet_forward.9} parent=1 // loop_exit
      _

// kernel: qnet_forward.10
$region0: #{qnet_forward.10}
  #allocation0 [shape = 'u32[]', space=smem, size = 0x4, offset = 0x4, fixed_abs, tag = 'smem constant byte address 0x4 - core index']
  #allocation1 [shape = 'u32[144,128]{1,0:T(1,128)}', space=vmem, size = 0x12000, scoped, tag = 'internal scratch']
  %s0 = inlined_call_operand.vmem [shape: bf16[1152,384], index: 0, kind: input, shape index: {}]
  %s1 = inlined_call_operand.vmem [shape: bf16[384,16], index: 1, kind: input, shape index: {}]
  %s2 = inlined_call_operand.vmem [shape: f32[1,16], index: 2, kind: input, shape index: {}]
  %s3 = inlined_call_operand.vmem [shape: bf16[1152,16], index: 3, kind: output, shape index: {}]
  %s4 = sld [smem:[#allocation0]]
  $region89: #{qnet_forward.10} parent=0
    _
  %s6 = ssub.s32 1, %s4
  %s7 = scalar_select 0, %s6, %s4
  $region1: #{qnet_forward.10} parent=0
    #allocation2 [shape = 'u8[131072]{0}', space=vmem, size = 0x20000, scoped, tag = 'output window, operand 0']
    loop: start=0, step=1, limit=7
    $region2: #{qnet_forward.10} parent=1 // loop_pre_header
      _
    $region3: #{qnet_forward.10} parent=1 // loop_header
      %s9 = sphi 0, %s13
      %p10 = scmp.ge.s32.totalorder %s9, 7
      %s19 = sphi 0, %s21
      %s22 = sphi 0, %s19
      %s23 = sphi 0, %s22
      %s39 = sphi 0, %s23
      %s43 = sphi 0, %s43
      %s45 = sphi 0, %s43
      %s46 = sphi 0, %s45
      %s60 = sphi 0, %s46
      %s64 = sphi 0, %s64
      %s66 = sphi 0, %s64
      %s67 = sphi 0, %s66
      %s81 = sphi 0, %s67
      %s87 = sphi 0, %s89
      %s90 = sphi 0, %s87
      %s91 = sphi 0, %s90
      %s107 = sphi 0, %s91
    $region4: #{qnet_forward.10} parent=1 // loop_header_branch
      %12 = sbr.rel (%p10) target = $region8
    $region5: #{qnet_forward.10} parent=1 // loop_body
      %s14 = ssub.s32 %s9, 1
      %s15 = ssub.s32 %s9, 2
      %s16 = sadd.s32 %s9, 1
      %s17 = ssub.s32 %s9, %s16
      %p18 = scmp.eq.s32.totalorder %s17, 0
      %s20 = sadd.s32 %s19, 1
      %s21 = scalar_select %p18, %s19, %s20
      %p24 = pneg %p18
      %p25 = scmp.eq.s32.totalorder %s9, 4
      %p26 = por %p24, %p25
      %p27 = scmp.ne.s32.totalorder %s19, %s22
      %p28 = scmp.eq.s32.totalorder %s9, 0
      %p29 = por %p27, %p28
      %p30 = scmp.ne.s32.totalorder %s19, %s22
      %p31 = scmp.eq.s32.totalorder %s14, 4
      %p32 = por %p30, %p31
      %p33 = scmp.ne.s32.totalorder %s22, %s23
      %p34 = scmp.eq.s32.totalorder %s14, 0
      %p35 = por %p33, %p34
      %p36 = scmp.ne.s32.totalorder %s22, %s23
      %p37 = scmp.eq.s32.totalorder %s15, 4
      %p38 = por %p36, %p37
      %p40 = scmp.ne.s32.totalorder %s23, %s39
      %p41 = scmp.eq.s32.totalorder %s15, 0
      %p42 = por %p40, %p41
      %s44 = sadd.s32 %s43, 1
      %p47 = scmp.eq.s32.totalorder %s9, 4
      %p48 = scmp.ne.s32.totalorder %s43, %s45
      %p49 = scmp.eq.s32.totalorder %s9, 0
      %p50 = por %p48, %p49
      %p51 = scmp.ne.s32.totalorder %s43, %s45
      %p52 = scmp.eq.s32.totalorder %s14, 4
      %p53 = por %p51, %p52
      %p54 = scmp.ne.s32.totalorder %s45, %s46
      %p55 = scmp.eq.s32.totalorder %s14, 0
      %p56 = por %p54, %p55
      %p57 = scmp.ne.s32.totalorder %s45, %s46
      %p58 = scmp.eq.s32.totalorder %s15, 4
      %p59 = por %p57, %p58
      %p61 = scmp.ne.s32.totalorder %s46, %s60
      %p62 = scmp.eq.s32.totalorder %s15, 0
      %p63 = por %p61, %p62
      %s65 = sadd.s32 %s64, 1
      %p68 = scmp.eq.s32.totalorder %s9, 4
      %p69 = scmp.ne.s32.totalorder %s64, %s66
      %p70 = scmp.eq.s32.totalorder %s9, 0
      %p71 = por %p69, %p70
      %p72 = scmp.ne.s32.totalorder %s64, %s66
      %p73 = scmp.eq.s32.totalorder %s14, 4
      %p74 = por %p72, %p73
      %p75 = scmp.ne.s32.totalorder %s66, %s67
      %p76 = scmp.eq.s32.totalorder %s14, 0
      %p77 = por %p75, %p76
      %p78 = scmp.ne.s32.totalorder %s66, %s67
      %p79 = scmp.eq.s32.totalorder %s15, 4
      %p80 = por %p78, %p79
      %p82 = scmp.ne.s32.totalorder %s67, %s81
      %p83 = scmp.eq.s32.totalorder %s15, 0
      %p84 = por %p82, %p83
      %s85 = ssub.s32 %s9, %s16
      %p86 = scmp.eq.s32.totalorder %s85, 0
      %s88 = sadd.s32 %s87, 1
      %s89 = scalar_select %p86, %s87, %s88
      %p92 = pneg %p86
      %p93 = scmp.eq.s32.totalorder %s9, 4
      %p94 = por %p92, %p93
      %p95 = scmp.ne.s32.totalorder %s87, %s90
      %p96 = scmp.eq.s32.totalorder %s9, 0
      %p97 = por %p95, %p96
      %p98 = scmp.ne.s32.totalorder %s87, %s90
      %p99 = scmp.eq.s32.totalorder %s14, 4
      %p100 = por %p98, %p99
      %p101 = scmp.ne.s32.totalorder %s90, %s91
      %p102 = scmp.eq.s32.totalorder %s14, 0
      %p103 = por %p101, %p102
      %p104 = scmp.ne.s32.totalorder %s90, %s91
      %p105 = scmp.eq.s32.totalorder %s15, 4
      %p106 = por %p104, %p105
      %p108 = scmp.ne.s32.totalorder %s91, %s107
      %p109 = scmp.eq.s32.totalorder %s15, 0
      %p110 = por %p108, %p109
      %p111 = scmp.le.s32.totalorder 1, %s9
      %p112 = scmp.lt.s32.totalorder %s9, 6
      %p113 = pnand %p111, %p112
      %p114 = pneg %p113
      // Predicated region
      $region9: #{qnet_forward.10} parent=5 // pred_check
        _
      $region10: #{qnet_forward.10} parent=5 // pred_check_branch
        %116 = sbr.rel (%p113) target = $region12
      $region11: #{qnet_forward.10} parent=5 // pred_region
        %s117 = ssub.s32 %s9, 1
        // Predicated region
        $region13: #{qnet_forward.10} parent=11 // pred_check
          %p118 = pneg %p56
        $region14: #{qnet_forward.10} parent=11 // pred_check_branch
          %120 = sbr.rel (%p118) target = $region16
        $region15: #{qnet_forward.10} parent=11 // pred_region
          _
        $region16: #{qnet_forward.10} parent=11 // pred_fallthru
          _
        // Predicated region
        $region17: #{qnet_forward.10} parent=11 // pred_check
          %p121 = pneg %p77
        $region18: #{qnet_forward.10} parent=11 // pred_check_branch
          %123 = sbr.rel (%p121) target = $region20
        $region19: #{qnet_forward.10} parent=11 // pred_region
          _
        $region20: #{qnet_forward.10} parent=11 // pred_fallthru
          _
      $region12: #{qnet_forward.10} parent=5 // pred_fallthru
        _
      %p124 = scmp.lt.s32.totalorder %s9, 5
      // Predicated region
      $region21: #{qnet_forward.10} parent=5 // pred_check
        %p125 = pneg %p124
      $region22: #{qnet_forward.10} parent=5 // pred_check_branch
        %127 = sbr.rel (%p125) target = $region24
      $region23: #{qnet_forward.10} parent=5 // pred_region
        // Predicated region
        $region25: #{qnet_forward.10} parent=23 // pred_check
          %p128 = pneg %p29
        $region26: #{qnet_forward.10} parent=23 // pred_check_branch
          %130 = sbr.rel (%p128) target = $region28
        $region27: #{qnet_forward.10} parent=23 // pred_region
          %s131 = smul.u32 32, %s9
          %s132 = ssub.s32 144, %s131
          %p133 = scmp.lt.s32.totalorder %s132, 32
          %s134 = scalar_select %p133, %s132, 32
          %s135 = smul.u32 64, %s134
          %s136 = smul.u32 %s135, 3
          %p137 = scmp.lt.s32.totalorder %s131, 143
          %s138 = scalar_select %p137, %s131, 143
          %s139 = smul.addr %s138, 3
          %s140 = smul.addr %s139, 4
          %s141 = scalar_lea.vmem %s0, %s140
          %s142 = smul.u32 32, %s9
          %s143 = ssub.s32 144, %s142
          %p144 = scmp.lt.s32.totalorder %s143, 32
          %s145 = scalar_select %p144, %s143, 32
          %s146 = smul.u32 64, %s145
          %s147 = smul.u32 %s146, 3
        $region28: #{qnet_forward.10} parent=23 // pred_fallthru
          _
      $region24: #{qnet_forward.10} parent=5 // pred_fallthru
        _
      %p148 = scmp.le.s32.totalorder 1, %s9
      %p149 = scmp.lt.s32.totalorder %s9, 6
      %p150 = pnand %p148, %p149
      %p151 = pneg %p150
      // Predicated region
      $region29: #{qnet_forward.10} parent=5 // pred_check
        _
      $region30: #{qnet_forward.10} parent=5 // pred_check_branch
        %153 = sbr.rel (%p150) target = $region32
      $region31: #{qnet_forward.10} parent=5 // pred_region
        %s154 = ssub.s32 %s9, 1
        %s155 = smul.u32 32, %s14
        %s156 = ssub.s32 144, %s155
        %p157 = scmp.lt.s32.totalorder %s156, 32
        %s158 = scalar_select %p157, %s156, 32
        %s159 = smul.u32 64, %s158
        %s160 = smul.u32 %s159, 3
        %p161 = scmp.lt.s32.totalorder %s155, 143
        %s162 = scalar_select %p161, %s155, 143
        %s163 = smul.addr %s162, 3
        %s164 = smul.addr %s163, 4
        %s165 = scalar_lea.vmem %s0, %s164
        %p166 = pneg %p35
        %p167 = pneg %p32
        %p168 = pneg %p56
        %p169 = pneg %p53
        %p170 = pneg %p77
        %p171 = pneg %p74
        %p172 = pneg %p103
        %p173 = pneg %p100
        %s174 = sand.u32 %s90, 1
        %s175 = sand.u32 %s90, 1
        %s176 = smul.addr %s175, 128
        %s177 = scalar_lea.vmem [#allocation2], %s176
        %s178 = smul.u32 32, %s14
        %s179 = ssub.s32 144, %s178
        %p180 = scmp.lt.s32.totalorder %s179, 32
        %s181 = scalar_select %p180, %s179, 32
        %s182 = smul.u32 64, %s181
        %s183 = smul.u32 %s182, 3
        %p184 = scmp.lt.s32.totalorder %s178, 143
        %s185 = scalar_select %p184, %s178, 143
        %s186 = smul.addr %s185, 3
        %s187 = smul.addr %s186, 4
        %s188 = scalar_lea.vmem %s0, %s187
        %s189 = smul.u32 32, %s14
        %s190 = ssub.s32 144, %s189
        %p191 = scmp.lt.s32.totalorder %s190, 32
        %s192 = scalar_select %p191, %s190, 32
        %s193 = smul.u32 64, %s192
        %s194 = smul.u32 %s193, 3
        %s195 = smul.u32 32, %s14
        %s196 = ssub.s32 144, %s195
        %p197 = scmp.lt.s32.totalorder %s196, 32
        %s198 = scalar_select %p197, %s196, 32
        %s199 = smul.u32 64, %s198
        %v201 = vld [vmem:[%s188] sm:$0xff]
        %v202 = vld [vmem:[%s188 + $0x8] sm:$0xf]
        %v203 = vld [vmem:[%s188 + $0xc] sm:$0xff]
        %v204 = vld [vmem:[%s188 + $0x14] sm:$0xf]
        %v205 = vld [vmem:[%s188 + $0x18] sm:$0xff]
        %v206 = vld [vmem:[%s188 + $0x20] sm:$0xf]
        %v207 = vld [vmem:[%s188 + $0x24] sm:$0xff]
        %v208 = vld [vmem:[%s188 + $0x2c] sm:$0xf]
        %v209 = vld [vmem:[%s188 + $0x30] sm:$0xff]
        %v210 = vld [vmem:[%s188 + $0x38] sm:$0xf]
        %v211 = vld [vmem:[%s188 + $0x3c] sm:$0xff]
        %v212 = vld [vmem:[%s188 + $0x44] sm:$0xf]
        %v213 = vld [vmem:[%s188 + $0x48] sm:$0xff]
        %v214 = vld [vmem:[%s188 + $0x50] sm:$0xf]
        %v215 = vld [vmem:[%s188 + $0x54] sm:$0xff]
        %v216 = vld [vmem:[%s188 + $0x5c] sm:$0xf]
        %v217 = vld [vmem:[%s188 + $0x60] sm:$0xff]
        %v218 = vld [vmem:[%s188 + $0x68] sm:$0xf]
        %v219 = vld [vmem:[%s188 + $0x6c] sm:$0xff]
        %v220 = vld [vmem:[%s188 + $0x74] sm:$0xf]
        %v221 = vld [vmem:[%s188 + $0x78] sm:$0xff]
        %v222 = vld [vmem:[%s188 + $0x80] sm:$0xf]
        %v223 = vld [vmem:[%s188 + $0x84] sm:$0xff]
        %v224 = vld [vmem:[%s188 + $0x8c] sm:$0xf]
        %v225 = vld [vmem:[%s188 + $0x90] sm:$0xff]
        %v226 = vld [vmem:[%s188 + $0x98] sm:$0xf]
        %v227 = vld [vmem:[%s188 + $0x9c] sm:$0xff]
        %v228 = vld [vmem:[%s188 + $0xa4] sm:$0xf]
        %v229 = vld [vmem:[%s188 + $0xa8] sm:$0xff]
        %v230 = vld [vmem:[%s188 + $0xb0] sm:$0xf]
        %v231 = vld [vmem:[%s188 + $0xb4] sm:$0xff]
        %v232 = vld [vmem:[%s188 + $0xbc] sm:$0xf]
        %v233 = vld [vmem:[%s188 + $0xc0] sm:$0xff]
        %v234 = vld [vmem:[%s188 + $0xc8] sm:$0xf]
        %v235 = vld [vmem:[%s188 + $0xcc] sm:$0xff]
        %v236 = vld [vmem:[%s188 + $0xd4] sm:$0xf]
        %v237 = vld [vmem:[%s188 + $0xd8] sm:$0xff]
        %v238 = vld [vmem:[%s188 + $0xe0] sm:$0xf]
        %v239 = vld [vmem:[%s188 + $0xe4] sm:$0xff]
        %v240 = vld [vmem:[%s188 + $0xec] sm:$0xf]
        %v241 = vld [vmem:[%s188 + $0xf0] sm:$0xff]
        %v242 = vld [vmem:[%s188 + $0xf8] sm:$0xf]
        %v243 = vld [vmem:[%s188 + $0xfc] sm:$0xff]
        %v244 = vld [vmem:[%s188 + $0x104] sm:$0xf]
        %v245 = vld [vmem:[%s188 + $0x108] sm:$0xff]
        %v246 = vld [vmem:[%s188 + $0x110] sm:$0xf]
        %v247 = vld [vmem:[%s188 + $0x114] sm:$0xff]
        %v248 = vld [vmem:[%s188 + $0x11c] sm:$0xf]
        %v249 = vld [vmem:[%s188 + $0x120] sm:$0xff]
        %v250 = vld [vmem:[%s188 + $0x128] sm:$0xf]
        %v251 = vld [vmem:[%s188 + $0x12c] sm:$0xff]
        %v252 = vld [vmem:[%s188 + $0x134] sm:$0xf]
        %v253 = vld [vmem:[%s188 + $0x138] sm:$0xff]
        %v254 = vld [vmem:[%s188 + $0x140] sm:$0xf]
        %v255 = vld [vmem:[%s188 + $0x144] sm:$0xff]
        %v256 = vld [vmem:[%s188 + $0x14c] sm:$0xf]
        %v257 = vld [vmem:[%s188 + $0x150] sm:$0xff]
        %v258 = vld [vmem:[%s188 + $0x158] sm:$0xf]
        %v259 = vld [vmem:[%s188 + $0x15c] sm:$0xff]
        %v260 = vld [vmem:[%s188 + $0x164] sm:$0xf]
        %v261 = vld [vmem:[%s188 + $0x168] sm:$0xff]
        %v262 = vld [vmem:[%s188 + $0x170] sm:$0xf]
        %v263 = vld [vmem:[%s188 + $0x174] sm:$0xff]
        %v264 = vld [vmem:[%s188 + $0x17c] sm:$0xf]
        %v265 = vld [vmem:[%s1] sm:$0xf]
        %v266 = vld [vmem:[%s1 + $0x4] sm:$0xf]
        %v267 = vld [vmem:[%s1 + $0x8] sm:$0xf]
        %v268 = vld [vmem:[%s1 + $0xc] sm:$0xf]
        %v269 = vld [vmem:[%s1 + $0x10] sm:$0xf]
        %v270 = vld [vmem:[%s1 + $0x14] sm:$0xf]
        %v271 = vld [vmem:[%s1 + $0x18] sm:$0xf]
        %v272 = vld [vmem:[%s1 + $0x1c] sm:$0xf]
        %v273 = vld [vmem:[%s1 + $0x20] sm:$0xf]
        %v274 = vld [vmem:[%s1 + $0x24] sm:$0xf]
        %v275 = vld [vmem:[%s1 + $0x28] sm:$0xf]
        %v276 = vld [vmem:[%s1 + $0x2c] sm:$0xf]
        %v277 = vld [vmem:[%s1 + $0x30] sm:$0xf]
        %v278 = vld [vmem:[%s1 + $0x34] sm:$0xf]
        %v279 = vld [vmem:[%s1 + $0x38] sm:$0xf]
        %v280 = vld [vmem:[%s1 + $0x3c] sm:$0xf]
        %v281 = vld [vmem:[%s1 + $0x40] sm:$0xf]
        %v282 = vld [vmem:[%s1 + $0x44] sm:$0xf]
        %v283 = vld [vmem:[%s1 + $0x48] sm:$0xf]
        %v284 = vld [vmem:[%s1 + $0x4c] sm:$0xf]
        %v285 = vld [vmem:[%s1 + $0x50] sm:$0xf]
        %v286 = vld [vmem:[%s1 + $0x54] sm:$0xf]
        %v287 = vld [vmem:[%s1 + $0x58] sm:$0xf]
        %v288 = vld [vmem:[%s1 + $0x5c] sm:$0xf]
        %v289 = vld [vmem:[%s1 + $0x60] sm:$0xf]
        %v290 = vld [vmem:[%s1 + $0x64] sm:$0xf]
        %v291 = vld [vmem:[%s1 + $0x68] sm:$0xf]
        %v292 = vld [vmem:[%s1 + $0x6c] sm:$0xf]
        %v293 = vld [vmem:[%s1 + $0x70] sm:$0xf]
        %v294 = vld [vmem:[%s1 + $0x74] sm:$0xf]
        %v295 = vld [vmem:[%s1 + $0x78] sm:$0xf]
        %v296 = vld [vmem:[%s1 + $0x7c] sm:$0xf]
        %v297 = vld [vmem:[%s1 + $0x80] sm:$0xf]
        %v298 = vld [vmem:[%s1 + $0x84] sm:$0xf]
        %v299 = vld [vmem:[%s1 + $0x88] sm:$0xf]
        %v300 = vld [vmem:[%s1 + $0x8c] sm:$0xf]
        %v301 = vld [vmem:[%s1 + $0x90] sm:$0xf]
        %v302 = vld [vmem:[%s1 + $0x94] sm:$0xf]
        %v303 = vld [vmem:[%s1 + $0x98] sm:$0xf]
        %v304 = vld [vmem:[%s1 + $0x9c] sm:$0xf]
        %v305 = vld [vmem:[%s1 + $0xa0] sm:$0xf]
        %v306 = vld [vmem:[%s1 + $0xa4] sm:$0xf]
        %v307 = vld [vmem:[%s1 + $0xa8] sm:$0xf]
        %v308 = vld [vmem:[%s1 + $0xac] sm:$0xf]
        %v309 = vld [vmem:[%s1 + $0xb0] sm:$0xf]
        %v310 = vld [vmem:[%s1 + $0xb4] sm:$0xf]
        %v311 = vld [vmem:[%s1 + $0xb8] sm:$0xf]
        %v312 = vld [vmem:[%s1 + $0xbc] sm:$0xf]
        %v313 = vld [vmem:[%s2] sm:$0x1]
        %v315 = vlaneseq
        %v316 = vshrl.u32 %v315, 7
        %v317 = vsub.s32 0, %v316
        %v318 = vrot.slane %v313, %v317
        %v384 = vunpack.c.l.b16 %v201
        %v385 = vunpack.c.h.b16 %v201
        %v386 = vunpack.c.l.b16 %v202
        %v387 = vunpack.c.l.b16 %v203
        %v388 = vunpack.c.h.b16 %v203
        %v389 = vunpack.c.l.b16 %v204
        %v390 = vunpack.c.l.b16 %v205
        %v391 = vunpack.c.h.b16 %v205
        %v392 = vunpack.c.l.b16 %v206
        %v393 = vunpack.c.l.b16 %v207
        %v394 = vunpack.c.h.b16 %v207
        %v395 = vunpack.c.l.b16 %v208
        %v396 = vunpack.c.l.b16 %v209
        %v397 = vunpack.c.h.b16 %v209
        %v398 = vunpack.c.l.b16 %v210
        %v399 = vunpack.c.l.b16 %v211
        %v400 = vunpack.c.h.b16 %v211
        %v401 = vunpack.c.l.b16 %v212
        %v402 = vunpack.c.l.b16 %v213
        %v403 = vunpack.c.h.b16 %v213
        %v404 = vunpack.c.l.b16 %v214
        %v405 = vunpack.c.l.b16 %v215
        %v406 = vunpack.c.h.b16 %v215
        %v407 = vunpack.c.l.b16 %v216
        %v408 = vunpack.c.l.b16 %v217
        %v409 = vunpack.c.h.b16 %v217
        %v410 = vunpack.c.l.b16 %v218
        %v411 = vunpack.c.l.b16 %v219
        %v412 = vunpack.c.h.b16 %v219
        %v413 = vunpack.c.l.b16 %v220
        %v414 = vunpack.c.l.b16 %v221
        %v415 = vunpack.c.h.b16 %v221
        %v416 = vunpack.c.l.b16 %v222
        %v417 = vunpack.c.l.b16 %v223
        %v418 = vunpack.c.h.b16 %v223
        %v419 = vunpack.c.l.b16 %v224
        %v420 = vunpack.c.l.b16 %v225
        %v421 = vunpack.c.h.b16 %v225
        %v422 = vunpack.c.l.b16 %v226
        %v423 = vunpack.c.l.b16 %v227
        %v424 = vunpack.c.h.b16 %v227
        %v425 = vunpack.c.l.b16 %v228
        %v426 = vunpack.c.l.b16 %v229
        %v427 = vunpack.c.h.b16 %v229
        %v428 = vunpack.c.l.b16 %v230
        %v429 = vunpack.c.l.b16 %v231
        %v430 = vunpack.c.h.b16 %v231
        %v431 = vunpack.c.l.b16 %v232
        %v432 = vunpack.c.l.b16 %v233
        %v433 = vunpack.c.h.b16 %v233
        %v434 = vunpack.c.l.b16 %v234
        %v435 = vunpack.c.l.b16 %v235
        %v436 = vunpack.c.h.b16 %v235
        %v437 = vunpack.c.l.b16 %v236
        %v438 = vunpack.c.l.b16 %v237
        %v439 = vunpack.c.h.b16 %v237
        %v440 = vunpack.c.l.b16 %v238
        %v441 = vunpack.c.l.b16 %v239
        %v442 = vunpack.c.h.b16 %v239
        %v443 = vunpack.c.l.b16 %v240
        %v444 = vunpack.c.l.b16 %v241
        %v445 = vunpack.c.h.b16 %v241
        %v446 = vunpack.c.l.b16 %v242
        %v447 = vunpack.c.l.b16 %v243
        %v448 = vunpack.c.h.b16 %v243
        %v449 = vunpack.c.l.b16 %v244
        %v450 = vunpack.c.l.b16 %v245
        %v451 = vunpack.c.h.b16 %v245
        %v452 = vunpack.c.l.b16 %v246
        %v453 = vunpack.c.l.b16 %v247
        %v454 = vunpack.c.h.b16 %v247
        %v455 = vunpack.c.l.b16 %v248
        %v456 = vunpack.c.l.b16 %v249
        %v457 = vunpack.c.h.b16 %v249
        %v458 = vunpack.c.l.b16 %v250
        %v459 = vunpack.c.l.b16 %v251
        %v460 = vunpack.c.h.b16 %v251
        %v461 = vunpack.c.l.b16 %v252
        %v462 = vunpack.c.l.b16 %v253
        %v463 = vunpack.c.h.b16 %v253
        %v464 = vunpack.c.l.b16 %v254
        %v465 = vunpack.c.l.b16 %v255
        %v466 = vunpack.c.h.b16 %v255
        %v467 = vunpack.c.l.b16 %v256
        %v468 = vunpack.c.l.b16 %v257
        %v469 = vunpack.c.h.b16 %v257
        %v470 = vunpack.c.l.b16 %v258
        %v471 = vunpack.c.l.b16 %v259
        %v472 = vunpack.c.h.b16 %v259
        %v473 = vunpack.c.l.b16 %v260
        %v474 = vunpack.c.l.b16 %v261
        %v475 = vunpack.c.h.b16 %v261
        %v476 = vunpack.c.l.b16 %v262
        %v477 = vunpack.c.l.b16 %v263
        %v478 = vunpack.c.h.b16 %v263
        %v479 = vunpack.c.l.b16 %v264
        %v480 = vpack.c.b16 %v387, %v384
        %v481 = vpack.c.b16 %v388, %v385
        %v482 = vpack.c.b16 %v389, %v386
        %v483 = vpack.c.b16 %v393, %v390
        %v484 = vpack.c.b16 %v394, %v391
        %v485 = vpack.c.b16 %v395, %v392
        %v486 = vpack.c.b16 %v399, %v396
        %v487 = vpack.c.b16 %v400, %v397
        %v488 = vpack.c.b16 %v401, %v398
        %v489 = vpack.c.b16 %v405, %v402
        %v490 = vpack.c.b16 %v406, %v403
        %v491 = vpack.c.b16 %v407, %v404
        %v492 = vpack.c.b16 %v411, %v408
        %v493 = vpack.c.b16 %v412, %v409
        %v494 = vpack.c.b16 %v413, %v410
        %v495 = vpack.c.b16 %v417, %v414
        %v496 = vpack.c.b16 %v418, %v415
        %v497 = vpack.c.b16 %v419, %v416
        %v498 = vpack.c.b16 %v423, %v420
        %v499 = vpack.c.b16 %v424, %v421
        %v500 = vpack.c.b16 %v425, %v422
        %v501 = vpack.c.b16 %v429, %v426
        %v502 = vpack.c.b16 %v430, %v427
        %v503 = vpack.c.b16 %v431, %v428
        %v504 = vpack.c.b16 %v435, %v432
        %v505 = vpack.c.b16 %v436, %v433
        %v506 = vpack.c.b16 %v437, %v434
        %v507 = vpack.c.b16 %v441, %v438
        %v508 = vpack.c.b16 %v442, %v439
        %v509 = vpack.c.b16 %v443, %v440
        %v510 = vpack.c.b16 %v447, %v444
        %v511 = vpack.c.b16 %v448, %v445
        %v512 = vpack.c.b16 %v449, %v446
        %v513 = vpack.c.b16 %v453, %v450
        %v514 = vpack.c.b16 %v454, %v451
        %v515 = vpack.c.b16 %v455, %v452
        %v516 = vpack.c.b16 %v459, %v456
        %v517 = vpack.c.b16 %v460, %v457
        %v518 = vpack.c.b16 %v461, %v458
        %v519 = vpack.c.b16 %v465, %v462
        %v520 = vpack.c.b16 %v466, %v463
        %v521 = vpack.c.b16 %v467, %v464
        %v522 = vpack.c.b16 %v471, %v468
        %v523 = vpack.c.b16 %v472, %v469
        %v524 = vpack.c.b16 %v473, %v470
        %v525 = vpack.c.b16 %v477, %v474
        %v526 = vpack.c.b16 %v478, %v475
        %v527 = vpack.c.b16 %v479, %v476
        %v624 = vunpack.c.l.b16 %v265
        %v625 = vunpack.c.l.b16 %v266
        %v626 = vunpack.c.l.b16 %v267
        %v627 = vunpack.c.l.b16 %v268
        %v628 = vunpack.c.l.b16 %v269
        %v629 = vunpack.c.l.b16 %v270
        %v630 = vunpack.c.l.b16 %v271
        %v631 = vunpack.c.l.b16 %v272
        %v632 = vunpack.c.l.b16 %v273
        %v633 = vunpack.c.l.b16 %v274
        %v634 = vunpack.c.l.b16 %v275
        %v635 = vunpack.c.l.b16 %v276
        %v636 = vunpack.c.l.b16 %v277
        %v637 = vunpack.c.l.b16 %v278
        %v638 = vunpack.c.l.b16 %v279
        %v639 = vunpack.c.l.b16 %v280
        %v640 = vunpack.c.l.b16 %v281
        %v641 = vunpack.c.l.b16 %v282
        %v642 = vunpack.c.l.b16 %v283
        %v643 = vunpack.c.l.b16 %v284
        %v644 = vunpack.c.l.b16 %v285
        %v645 = vunpack.c.l.b16 %v286
        %v646 = vunpack.c.l.b16 %v287
        %v647 = vunpack.c.l.b16 %v288
        %v648 = vunpack.c.l.b16 %v289
        %v649 = vunpack.c.l.b16 %v290
        %v650 = vunpack.c.l.b16 %v291
        %v651 = vunpack.c.l.b16 %v292
        %v652 = vunpack.c.l.b16 %v293
        %v653 = vunpack.c.l.b16 %v294
        %v654 = vunpack.c.l.b16 %v295
        %v655 = vunpack.c.l.b16 %v296
        %v656 = vunpack.c.l.b16 %v297
        %v657 = vunpack.c.l.b16 %v298
        %v658 = vunpack.c.l.b16 %v299
        %v659 = vunpack.c.l.b16 %v300
        %v660 = vunpack.c.l.b16 %v301
        %v661 = vunpack.c.l.b16 %v302
        %v662 = vunpack.c.l.b16 %v303
        %v663 = vunpack.c.l.b16 %v304
        %v664 = vunpack.c.l.b16 %v305
        %v665 = vunpack.c.l.b16 %v306
        %v666 = vunpack.c.l.b16 %v307
        %v667 = vunpack.c.l.b16 %v308
        %v668 = vunpack.c.l.b16 %v309
        %v669 = vunpack.c.l.b16 %v310
        %v670 = vunpack.c.l.b16 %v311
        %v671 = vunpack.c.l.b16 %v312
        %v672 = vpack.c.b16 %v625, %v624
        %v673 = vpack.c.b16 %v627, %v626
        %v674 = vpack.c.b16 %v629, %v628
        %v675 = vpack.c.b16 %v631, %v630
        %v676 = vpack.c.b16 %v633, %v632
        %v677 = vpack.c.b16 %v635, %v634
        %v678 = vpack.c.b16 %v637, %v636
        %v679 = vpack.c.b16 %v639, %v638
        %v680 = vpack.c.b16 %v641, %v640
        %v681 = vpack.c.b16 %v643, %v642
        %v682 = vpack.c.b16 %v645, %v644
        %v683 = vpack.c.b16 %v647, %v646
        %v684 = vpack.c.b16 %v649, %v648
        %v685 = vpack.c.b16 %v651, %v650
        %v686 = vpack.c.b16 %v653, %v652
        %v687 = vpack.c.b16 %v655, %v654
        %v688 = vpack.c.b16 %v657, %v656
        %v689 = vpack.c.b16 %v659, %v658
        %v690 = vpack.c.b16 %v661, %v660
        %v691 = vpack.c.b16 %v663, %v662
        %v692 = vpack.c.b16 %v665, %v664
        %v693 = vpack.c.b16 %v667, %v666
        %v694 = vpack.c.b16 %v669, %v668
        %v695 = vpack.c.b16 %v671, %v670
        %720 = vmatprep.subr.bf16.mxu0 0
        %721 = vmatpush1.bf16.msra.mxu0 %v672
        %722 = vmatprep.subr.bf16.mxu0 0
        %723 = vmatpush1.bf16.msra.mxu0 %v673
        %724 = vmatprep.subr.bf16.mxu0 0
        %725 = vmatpush1.bf16.msra.mxu0 %v674
        %726 = vmatprep.subr.bf16.mxu0 0
        %727 = vmatpush1.bf16.msra.mxu0 %v675
        %728 = vmatprep.subr.bf16.mxu0 0
        %729 = vmatpush1.bf16.msra.mxu0 %v676
        %730 = vmatprep.subr.bf16.mxu0 0
        %731 = vmatpush1.bf16.msra.mxu0 %v677
        %732 = vmatprep.subr.bf16.mxu0 0
        %733 = vmatpush1.bf16.msra.mxu0 %v678
        %734 = vmatprep.subr.bf16.mxu0 0
        %735 = vmatpush1.bf16.msra.mxu0 %v679
        %736 = vmatprep.subr.bf16.mxu0 0
        %737 = vmatpush1.bf16.msra.mxu0 %v680
        %738 = vmatprep.subr.bf16.mxu0 0
        %739 = vmatpush1.bf16.msra.mxu0 %v681
        %740 = vmatprep.subr.bf16.mxu0 0
        %741 = vmatpush1.bf16.msra.mxu0 %v682
        %742 = vmatprep.subr.bf16.mxu0 0
        %743 = vmatpush1.bf16.msra.mxu0 %v683
        %744 = vmatprep.subr.bf16.mxu0 0
        %745 = vmatpush1.bf16.msra.mxu0 %v684
        %746 = vmatprep.subr.bf16.mxu0 0
        %747 = vmatpush1.bf16.msra.mxu0 %v685
        %748 = vmatprep.subr.bf16.mxu0 0
        %749 = vmatpush1.bf16.msra.mxu0 %v686
        %750 = vmatprep.subr.bf16.mxu0 0
        %751 = vmatpush1.bf16.msra.mxu0 %v687
        %752 = vmatprep.mubr.bf16.mxu0 %v481
        %753 = vmatmul.mubr.bf16.gmra.mrb[0].mxu0 %v480
        %v754 = vpop.f32.mrb[0].mxu0
        %v755 = vadd.f32 %v318, %v754
        %v756 = vpop.f32.mrb[0].mxu0
        %v757 = vpop.f32.mrb[0].mxu0
        %v758 = vadd.f32 %v318, %v757
        %v759 = vpop.f32.mrb[0].mxu0
        %760 = vmatprep.mubr.bf16.mxu0 %v484
        %761 = vmatmul.mubr.bf16.gmra.mrb[0].mxu0 %v483
        %v762 = vpop.f32.mrb[0].mxu0
        %v763 = vadd.f32 %v318, %v762
        %v764 = vpop.f32.mrb[0].mxu0
        %v765 = vpop.f32.mrb[0].mxu0
        %v766 = vadd.f32 %v318, %v765
        %v767 = vpop.f32.mrb[0].mxu0
        %768 = vmatprep.mubr.bf16.mxu0 %v487
        %769 = vmatmul.mubr.bf16.gmra.mrb[0].mxu0 %v486
        %v770 = vpop.f32.mrb[0].mxu0
        %v771 = vadd.f32 %v318, %v770
        %v772 = vpop.f32.mrb[0].mxu0
        %v773 = vpop.f32.mrb[0].mxu0
        %v774 = vadd.f32 %v318, %v773
        %v775 = vpop.f32.mrb[0].mxu0
        %776 = vmatprep.mubr.bf16.mxu0 %v490
        %777 = vmatmul.mubr.bf16.gmra.mrb[0].mxu0 %v489
        %v778 = vpop.f32.mrb[0].mxu0
        %v779 = vadd.f32 %v318, %v778
        %v780 = vpop.f32.mrb[0].mxu0
        %v781 = vpop.f32.mrb[0].mxu0
        %v782 = vadd.f32 %v318, %v781
        %v783 = vpop.f32.mrb[0].mxu0
        %784 = vmatprep.mubr.bf16.mxu0 %v493
        %785 = vmatmul.mubr.bf16.gmra.mrb[0].mxu0 %v492
        %v786 = vpop.f32.mrb[0].mxu0
        %v787 = vadd.f32 %v318, %v786
        %v788 = vpop.f32.mrb[0].mxu0
        %v789 = vpop.f32.mrb[0].mxu0
        %v790 = vadd.f32 %v318, %v789
        %v791 = vpop.f32.mrb[0].mxu0
        %792 = vmatprep.mubr.bf16.mxu0 %v496
        %793 = vmatmul.mubr.bf16.gmra.mrb[0].mxu0 %v495
        %v794 = vpop.f32.mrb[0].mxu0
        %v795 = vadd.f32 %v318, %v794
        %v796 = vpop.f32.mrb[0].mxu0
        %v797 = vpop.f32.mrb[0].mxu0
        %v798 = vadd.f32 %v318, %v797
        %v799 = vpop.f32.mrb[0].mxu0
        %800 = vmatprep.mubr.bf16.mxu0 %v499
        %801 = vmatmul.mubr.bf16.gmra.mrb[0].mxu0 %v498
        %v802 = vpop.f32.mrb[0].mxu0
        %v803 = vadd.f32 %v318, %v802
        %v804 = vpop.f32.mrb[0].mxu0
        %v805 = vpop.f32.mrb[0].mxu0
        %v806 = vadd.f32 %v318, %v805
        %v807 = vpop.f32.mrb[0].mxu0
        %808 = vmatprep.mubr.bf16.mxu0 %v502
        %809 = vmatmul.mubr.bf16.gmra.mrb[0].mxu0 %v501
        %v810 = vpop.f32.mrb[0].mxu0
        %v811 = vadd.f32 %v318, %v810
        %v812 = vpop.f32.mrb[0].mxu0
        %v813 = vpop.f32.mrb[0].mxu0
        %v814 = vadd.f32 %v318, %v813
        %v815 = vpop.f32.mrb[0].mxu0
        %816 = vmatprep.mubr.bf16.mxu0 %v505
        %817 = vmatmul.mubr.bf16.gmra.mrb[0].mxu0 %v504
        %v818 = vpop.f32.mrb[0].mxu0
        %v819 = vadd.f32 %v318, %v818
        %v820 = vpop.f32.mrb[0].mxu0
        %v821 = vpop.f32.mrb[0].mxu0
        %v822 = vadd.f32 %v318, %v821
        %v823 = vpop.f32.mrb[0].mxu0
        %824 = vmatprep.mubr.bf16.mxu0 %v508
        %825 = vmatmul.mubr.bf16.gmra.mrb[0].mxu0 %v507
        %v826 = vpop.f32.mrb[0].mxu0
        %v827 = vadd.f32 %v318, %v826
        %v828 = vpop.f32.mrb[0].mxu0
        %v829 = vpop.f32.mrb[0].mxu0
        %v830 = vadd.f32 %v318, %v829
        %v831 = vpop.f32.mrb[0].mxu0
        %832 = vmatprep.mubr.bf16.mxu0 %v511
        %833 = vmatmul.mubr.bf16.gmra.mrb[0].mxu0 %v510
        %v834 = vpop.f32.mrb[0].mxu0
        %v835 = vadd.f32 %v318, %v834
        %v836 = vpop.f32.mrb[0].mxu0
        %v837 = vpop.f32.mrb[0].mxu0
        %v838 = vadd.f32 %v318, %v837
        %v839 = vpop.f32.mrb[0].mxu0
        %840 = vmatprep.mubr.bf16.mxu0 %v514
        %841 = vmatmul.mubr.bf16.gmra.mrb[0].mxu0 %v513
        %v842 = vpop.f32.mrb[0].mxu0
        %v843 = vadd.f32 %v318, %v842
        %v844 = vpop.f32.mrb[0].mxu0
        %v845 = vpop.f32.mrb[0].mxu0
        %v846 = vadd.f32 %v318, %v845
        %v847 = vpop.f32.mrb[0].mxu0
        %848 = vmatprep.mubr.bf16.mxu0 %v517
        %849 = vmatmul.mubr.bf16.gmra.mrb[0].mxu0 %v516
        %v850 = vpop.f32.mrb[0].mxu0
        %v851 = vadd.f32 %v318, %v850
        %v852 = vpop.f32.mrb[0].mxu0
        %v853 = vpop.f32.mrb[0].mxu0
        %v854 = vadd.f32 %v318, %v853
        %v855 = vpop.f32.mrb[0].mxu0
        %856 = vmatprep.mubr.bf16.mxu0 %v520
        %857 = vmatmul.mubr.bf16.gmra.mrb[0].mxu0 %v519
        %v858 = vpop.f32.mrb[0].mxu0
        %v859 = vadd.f32 %v318, %v858
        %v860 = vpop.f32.mrb[0].mxu0
        %v861 = vpop.f32.mrb[0].mxu0
        %v862 = vadd.f32 %v318, %v861
        %v863 = vpop.f32.mrb[0].mxu0
        %864 = vmatprep.mubr.bf16.mxu0 %v523
        %865 = vmatmul.mubr.bf16.gmra.mrb[0].mxu0 %v522
        %v866 = vpop.f32.mrb[0].mxu0
        %v867 = vadd.f32 %v318, %v866
        %v868 = vpop.f32.mrb[0].mxu0
        %v869 = vpop.f32.mrb[0].mxu0
        %v870 = vadd.f32 %v318, %v869
        %v871 = vpop.f32.mrb[0].mxu0
        %872 = vmatprep.mubr.bf16.mxu0 %v526
        %873 = vmatmul.mubr.bf16.gmra.mrb[0].mxu0 %v525
        %v874 = vpop.f32.mrb[0].mxu0
        %v875 = vadd.f32 %v318, %v874
        %v876 = vpop.f32.mrb[0].mxu0
        %v877 = vpop.f32.mrb[0].mxu0
        %v878 = vadd.f32 %v318, %v877
        %v879 = vpop.f32.mrb[0].mxu0
        %880 = vdwg.mxu0
        %881 = vmatprep.subr.bf16.mxu0 0
        %882 = vmatpush1.bf16.msra.mxu0 %v688
        %883 = vmatprep.subr.bf16.mxu0 0
        %884 = vmatpush1.bf16.msra.mxu0 %v689
        %885 = vmatprep.subr.bf16.mxu0 0
        %886 = vmatpush1.bf16.msra.mxu0 %v690
        %887 = vmatprep.subr.bf16.mxu0 0
        %888 = vmatpush1.bf16.msra.mxu0 %v691
        %889 = vmatprep.subr.bf16.mxu0 0
        %890 = vmatpush1.bf16.msra.mxu0 %v692
        %891 = vmatprep.subr.bf16.mxu0 0
        %892 = vmatpush1.bf16.msra.mxu0 %v693
        %893 = vmatprep.subr.bf16.mxu0 0
        %894 = vmatpush1.bf16.msra.mxu0 %v694
        %895 = vmatprep.subr.bf16.mxu0 0
        %896 = vmatpush1.bf16.msra.mxu0 %v695
        %897 = vmatprep.subr.bf16.mxu0 0
        %898 = vmatpush1.bf16.msra.mxu0 0
        %899 = vmatprep.subr.bf16.mxu0 0
        %900 = vmatpush1.bf16.msra.mxu0 0
        %901 = vmatprep.subr.bf16.mxu0 0
        %902 = vmatpush1.bf16.msra.mxu0 0
        %903 = vmatprep.subr.bf16.mxu0 0
        %904 = vmatpush1.bf16.msra.mxu0 0
        %905 = vmatprep.subr.bf16.mxu0 0
        %906 = vmatpush1.bf16.msra.mxu0 0
        %907 = vmatprep.subr.bf16.mxu0 0
        %908 = vmatpush1.bf16.msra.mxu0 0
        %909 = vmatprep.subr.bf16.mxu0 0
        %910 = vmatpush1.bf16.msra.mxu0 0
        %911 = vmatprep.subr.bf16.mxu0 0
        %912 = vmatpush1.bf16.msra.mxu0 0
        %913 = vmatprep.mubr.bf16.mxu0 0
        %914 = vmatmul.mubr.bf16.gmra.mrb[0].mxu0 %v482
        %v915 = vpop.f32.mrb[0].mxu0
        %v916 = vadd.f32 %v755, %v915
        %v917 = vpop.f32.mrb[0].mxu0
        %v918 = vpop.f32.mrb[0].mxu0
        %v919 = vadd.f32 %v758, %v918
        %v920 = vpop.f32.mrb[0].mxu0
        %921 = vmatprep.mubr.bf16.mxu0 0
        %922 = vmatmul.mubr.bf16.gmra.mrb[0].mxu0 %v485
        %v923 = vpop.f32.mrb[0].mxu0
        %v924 = vadd.f32 %v763, %v923
        %v925 = vpop.f32.mrb[0].mxu0
        %v926 = vpop.f32.mrb[0].mxu0
        %v927 = vadd.f32 %v766, %v926
        %v928 = vpop.f32.mrb[0].mxu0
        %929 = vmatprep.mubr.bf16.mxu0 0
        %930 = vmatmul.mubr.bf16.gmra.mrb[0].mxu0 %v488
        %v931 = vpop.f32.mrb[0].mxu0
        %v932 = vadd.f32 %v771, %v931
        %v933 = vpop.f32.mrb[0].mxu0
        %v934 = vpop.f32.mrb[0].mxu0
        %v935 = vadd.f32 %v774, %v934
        %v936 = vpop.f32.mrb[0].mxu0
        %937 = vmatprep.mubr.bf16.mxu0 0
        %938 = vmatmul.mubr.bf16.gmra.mrb[0].mxu0 %v491
        %v939 = vpop.f32.mrb[0].mxu0
        %v940 = vadd.f32 %v779, %v939
        %v941 = vpop.f32.mrb[0].mxu0
        %v942 = vpop.f32.mrb[0].mxu0
        %v943 = vadd.f32 %v782, %v942
        %v944 = vpop.f32.mrb[0].mxu0
        %945 = vmatprep.mubr.bf16.mxu0 0
        %946 = vmatmul.mubr.bf16.gmra.mrb[0].mxu0 %v494
        %v947 = vpop.f32.mrb[0].mxu0
        %v948 = vadd.f32 %v787, %v947
        %v949 = vpop.f32.mrb[0].mxu0
        %v950 = vpop.f32.mrb[0].mxu0
        %v951 = vadd.f32 %v790, %v950
        %v952 = vpop.f32.mrb[0].mxu0
        %953 = vmatprep.mubr.bf16.mxu0 0
        %954 = vmatmul.mubr.bf16.gmra.mrb[0].mxu0 %v497
        %v955 = vpop.f32.mrb[0].mxu0
        %v956 = vadd.f32 %v795, %v955
        %v957 = vpop.f32.mrb[0].mxu0
        %v958 = vpop.f32.mrb[0].mxu0
        %v959 = vadd.f32 %v798, %v958
        %v960 = vpop.f32.mrb[0].mxu0
        %961 = vmatprep.mubr.bf16.mxu0 0
        %962 = vmatmul.mubr.bf16.gmra.mrb[0].mxu0 %v500
        %v963 = vpop.f32.mrb[0].mxu0
        %v964 = vadd.f32 %v803, %v963
        %v965 = vpop.f32.mrb[0].mxu0
        %v966 = vpop.f32.mrb[0].mxu0
        %v967 = vadd.f32 %v806, %v966
        %v968 = vpop.f32.mrb[0].mxu0
        %969 = vmatprep.mubr.bf16.mxu0 0
        %970 = vmatmul.mubr.bf16.gmra.mrb[0].mxu0 %v503
        %v971 = vpop.f32.mrb[0].mxu0
        %v972 = vadd.f32 %v811, %v971
        %v973 = vpop.f32.mrb[0].mxu0
        %v974 = vpop.f32.mrb[0].mxu0
        %v975 = vadd.f32 %v814, %v974
        %v976 = vpop.f32.mrb[0].mxu0
        %977 = vmatprep.mubr.bf16.mxu0 0
        %978 = vmatmul.mubr.bf16.gmra.mrb[0].mxu0 %v506
        %v979 = vpop.f32.mrb[0].mxu0
        %v980 = vadd.f32 %v819, %v979
        %v981 = vpop.f32.mrb[0].mxu0
        %v982 = vpop.f32.mrb[0].mxu0
        %v983 = vadd.f32 %v822, %v982
        %v984 = vpop.f32.mrb[0].mxu0
        %985 = vmatprep.mubr.bf16.mxu0 0
        %986 = vmatmul.mubr.bf16.gmra.mrb[0].mxu0 %v509
        %v987 = vpop.f32.mrb[0].mxu0
        %v988 = vadd.f32 %v827, %v987
        %v989 = vpop.f32.mrb[0].mxu0
        %v990 = vpop.f32.mrb[0].mxu0
        %v991 = vadd.f32 %v830, %v990
        %v992 = vpop.f32.mrb[0].mxu0
        %993 = vmatprep.mubr.bf16.mxu0 0
        %994 = vmatmul.mubr.bf16.gmra.mrb[0].mxu0 %v512
        %v995 = vpop.f32.mrb[0].mxu0
        %v996 = vadd.f32 %v835, %v995
        %v997 = vpop.f32.mrb[0].mxu0
        %v998 = vpop.f32.mrb[0].mxu0
        %v999 = vadd.f32 %v838, %v998
        %v1000 = vpop.f32.mrb[0].mxu0
        %1001 = vmatprep.mubr.bf16.mxu0 0
        %1002 = vmatmul.mubr.bf16.gmra.mrb[0].mxu0 %v515
        %v1003 = vpop.f32.mrb[0].mxu0
        %v1004 = vadd.f32 %v843, %v1003
        %v1005 = vpop.f32.mrb[0].mxu0
        %v1006 = vpop.f32.mrb[0].mxu0
        %v1007 = vadd.f32 %v846, %v1006
        %v1008 = vpop.f32.mrb[0].mxu0
        %1009 = vmatprep.mubr.bf16.mxu0 0
        %1010 = vmatmul.mubr.bf16.gmra.mrb[0].mxu0 %v518
        %v1011 = vpop.f32.mrb[0].mxu0
        %v1012 = vadd.f32 %v851, %v1011
        %v1013 = vpop.f32.mrb[0].mxu0
        %v1014 = vpop.f32.mrb[0].mxu0
        %v1015 = vadd.f32 %v854, %v1014
        %v1016 = vpop.f32.mrb[0].mxu0
        %1017 = vmatprep.mubr.bf16.mxu0 0
        %1018 = vmatmul.mubr.bf16.gmra.mrb[0].mxu0 %v521
        %v1019 = vpop.f32.mrb[0].mxu0
        %v1020 = vadd.f32 %v859, %v1019
        %v1021 = vpop.f32.mrb[0].mxu0
        %v1022 = vpop.f32.mrb[0].mxu0
        %v1023 = vadd.f32 %v862, %v1022
        %v1024 = vpop.f32.mrb[0].mxu0
        %1025 = vmatprep.mubr.bf16.mxu0 0
        %1026 = vmatmul.mubr.bf16.gmra.mrb[0].mxu0 %v524
        %v1027 = vpop.f32.mrb[0].mxu0
        %v1028 = vadd.f32 %v867, %v1027
        %v1029 = vpop.f32.mrb[0].mxu0
        %v1030 = vpop.f32.mrb[0].mxu0
        %v1031 = vadd.f32 %v870, %v1030
        %v1032 = vpop.f32.mrb[0].mxu0
        %1033 = vmatprep.mubr.bf16.mxu0 0
        %1034 = vmatmul.mubr.bf16.gmra.mrb[0].mxu0 %v527
        %v1035 = vpop.f32.mrb[0].mxu0
        %v1036 = vadd.f32 %v875, %v1035
        %v1037 = vpop.f32.mrb[0].mxu0
        %v1038 = vpop.f32.mrb[0].mxu0
        %v1039 = vadd.f32 %v878, %v1038
        %v1040 = vpop.f32.mrb[0].mxu0
        %1041 = vdwg.mxu0
        %v1042 = vmax.f32 %v916, 0.0
        %v1043 = vmax.f32 %v919, 0.0
        %v1044 = vmax.f32 %v924, 0.0
        %v1045 = vmax.f32 %v927, 0.0
        %v1046 = vmax.f32 %v932, 0.0
        %v1047 = vmax.f32 %v935, 0.0
        %v1048 = vmax.f32 %v940, 0.0
        %v1049 = vmax.f32 %v943, 0.0
        %v1050 = vmax.f32 %v948, 0.0
        %v1051 = vmax.f32 %v951, 0.0
        %v1052 = vmax.f32 %v956, 0.0
        %v1053 = vmax.f32 %v959, 0.0
        %v1054 = vmax.f32 %v964, 0.0
        %v1055 = vmax.f32 %v967, 0.0
        %v1056 = vmax.f32 %v972, 0.0
        %v1057 = vmax.f32 %v975, 0.0
        %v1058 = vmax.f32 %v980, 0.0
        %v1059 = vmax.f32 %v983, 0.0
        %v1060 = vmax.f32 %v988, 0.0
        %v1061 = vmax.f32 %v991, 0.0
        %v1062 = vmax.f32 %v996, 0.0
        %v1063 = vmax.f32 %v999, 0.0
        %v1064 = vmax.f32 %v1004, 0.0
        %v1065 = vmax.f32 %v1007, 0.0
        %v1066 = vmax.f32 %v1012, 0.0
        %v1067 = vmax.f32 %v1015, 0.0
        %v1068 = vmax.f32 %v1020, 0.0
        %v1069 = vmax.f32 %v1023, 0.0
        %v1070 = vmax.f32 %v1028, 0.0
        %v1071 = vmax.f32 %v1031, 0.0
        %v1072 = vmax.f32 %v1036, 0.0
        %v1073 = vmax.f32 %v1039, 0.0
        %v1074 = vpack.c.bf16 %v1043, %v1042
        %v1075 = vpack.c.bf16 %v1045, %v1044
        %v1076 = vpack.c.bf16 %v1047, %v1046
        %v1077 = vpack.c.bf16 %v1049, %v1048
        %v1078 = vpack.c.bf16 %v1051, %v1050
        %v1079 = vpack.c.bf16 %v1053, %v1052
        %v1080 = vpack.c.bf16 %v1055, %v1054
        %v1081 = vpack.c.bf16 %v1057, %v1056
        %v1082 = vpack.c.bf16 %v1059, %v1058
        %v1083 = vpack.c.bf16 %v1061, %v1060
        %v1084 = vpack.c.bf16 %v1063, %v1062
        %v1085 = vpack.c.bf16 %v1065, %v1064
        %v1086 = vpack.c.bf16 %v1067, %v1066
        %v1087 = vpack.c.bf16 %v1069, %v1068
        %v1088 = vpack.c.bf16 %v1071, %v1070
        %v1089 = vpack.c.bf16 %v1073, %v1072
        %v1106 = vunpack.c.l.b16 %v1074
        %v1107 = vunpack.c.h.b16 %v1074
        %v1108 = vunpack.c.l.b16 %v1075
        %v1109 = vunpack.c.h.b16 %v1075
        %v1110 = vunpack.c.l.b16 %v1076
        %v1111 = vunpack.c.h.b16 %v1076
        %v1112 = vunpack.c.l.b16 %v1077
        %v1113 = vunpack.c.h.b16 %v1077
        %v1114 = vunpack.c.l.b16 %v1078
        %v1115 = vunpack.c.h.b16 %v1078
        %v1116 = vunpack.c.l.b16 %v1079
        %v1117 = vunpack.c.h.b16 %v1079
        %v1118 = vunpack.c.l.b16 %v1080
        %v1119 = vunpack.c.h.b16 %v1080
        %v1120 = vunpack.c.l.b16 %v1081
        %v1121 = vunpack.c.h.b16 %v1081
        %v1122 = vunpack.c.l.b16 %v1082
        %v1123 = vunpack.c.h.b16 %v1082
        %v1124 = vunpack.c.l.b16 %v1083
        %v1125 = vunpack.c.h.b16 %v1083
        %v1126 = vunpack.c.l.b16 %v1084
        %v1127 = vunpack.c.h.b16 %v1084
        %v1128 = vunpack.c.l.b16 %v1085
        %v1129 = vunpack.c.h.b16 %v1085
        %v1130 = vunpack.c.l.b16 %v1086
        %v1131 = vunpack.c.h.b16 %v1086
        %v1132 = vunpack.c.l.b16 %v1087
        %v1133 = vunpack.c.h.b16 %v1087
        %v1134 = vunpack.c.l.b16 %v1088
        %v1135 = vunpack.c.h.b16 %v1088
        %v1136 = vunpack.c.l.b16 %v1089
        %v1137 = vunpack.c.h.b16 %v1089
        %v1138 = vpack.c.b16 %v1106, %v1106
        %v1139 = vpack.c.b16 %v1107, %v1107
        %v1140 = vpack.c.b16 %v1108, %v1108
        %v1141 = vpack.c.b16 %v1109, %v1109
        %v1142 = vpack.c.b16 %v1110, %v1110
        %v1143 = vpack.c.b16 %v1111, %v1111
        %v1144 = vpack.c.b16 %v1112, %v1112
        %v1145 = vpack.c.b16 %v1113, %v1113
        %v1146 = vpack.c.b16 %v1114, %v1114
        %v1147 = vpack.c.b16 %v1115, %v1115
        %v1148 = vpack.c.b16 %v1116, %v1116
        %v1149 = vpack.c.b16 %v1117, %v1117
        %v1150 = vpack.c.b16 %v1118, %v1118
        %v1151 = vpack.c.b16 %v1119, %v1119
        %v1152 = vpack.c.b16 %v1120, %v1120
        %v1153 = vpack.c.b16 %v1121, %v1121
        %v1154 = vpack.c.b16 %v1122, %v1122
        %v1155 = vpack.c.b16 %v1123, %v1123
        %v1156 = vpack.c.b16 %v1124, %v1124
        %v1157 = vpack.c.b16 %v1125, %v1125
        %v1158 = vpack.c.b16 %v1126, %v1126
        %v1159 = vpack.c.b16 %v1127, %v1127
        %v1160 = vpack.c.b16 %v1128, %v1128
        %v1161 = vpack.c.b16 %v1129, %v1129
        %v1162 = vpack.c.b16 %v1130, %v1130
        %v1163 = vpack.c.b16 %v1131, %v1131
        %v1164 = vpack.c.b16 %v1132, %v1132
        %v1165 = vpack.c.b16 %v1133, %v1133
        %v1166 = vpack.c.b16 %v1134, %v1134
        %v1167 = vpack.c.b16 %v1135, %v1135
        %v1168 = vpack.c.b16 %v1136, %v1136
        %v1169 = vpack.c.b16 %v1137, %v1137
        %vm1202 = vcmask 125952
        %1203 = vst.msk [vmem:[%s177] sm:$0xf] %vm1202, %v1138
        %1204 = vst.msk [vmem:[%s177 + $0x4] sm:$0xf] %vm1202, %v1139
        %1205 = vst.msk [vmem:[%s177 + $0x8] sm:$0xf] %vm1202, %v1140
        %1206 = vst.msk [vmem:[%s177 + $0xc] sm:$0xf] %vm1202, %v1141
        %1207 = vst.msk [vmem:[%s177 + $0x10] sm:$0xf] %vm1202, %v1142
        %1208 = vst.msk [vmem:[%s177 + $0x14] sm:$0xf] %vm1202, %v1143
        %1209 = vst.msk [vmem:[%s177 + $0x18] sm:$0xf] %vm1202, %v1144
        %1210 = vst.msk [vmem:[%s177 + $0x1c] sm:$0xf] %vm1202, %v1145
        %1211 = vst.msk [vmem:[%s177 + $0x20] sm:$0xf] %vm1202, %v1146
        %1212 = vst.msk [vmem:[%s177 + $0x24] sm:$0xf] %vm1202, %v1147
        %1213 = vst.msk [vmem:[%s177 + $0x28] sm:$0xf] %vm1202, %v1148
        %1214 = vst.msk [vmem:[%s177 + $0x2c] sm:$0xf] %vm1202, %v1149
        %1215 = vst.msk [vmem:[%s177 + $0x30] sm:$0xf] %vm1202, %v1150
        %1216 = vst.msk [vmem:[%s177 + $0x34] sm:$0xf] %vm1202, %v1151
        %1217 = vst.msk [vmem:[%s177 + $0x38] sm:$0xf] %vm1202, %v1152
        %1218 = vst.msk [vmem:[%s177 + $0x3c] sm:$0xf] %vm1202, %v1153
        %1219 = vst.msk [vmem:[%s177 + $0x40] sm:$0xf] %vm1202, %v1154
        %1220 = vst.msk [vmem:[%s177 + $0x44] sm:$0xf] %vm1202, %v1155
        %1221 = vst.msk [vmem:[%s177 + $0x48] sm:$0xf] %vm1202, %v1156
        %1222 = vst.msk [vmem:[%s177 + $0x4c] sm:$0xf] %vm1202, %v1157
        %1223 = vst.msk [vmem:[%s177 + $0x50] sm:$0xf] %vm1202, %v1158
        %1224 = vst.msk [vmem:[%s177 + $0x54] sm:$0xf] %vm1202, %v1159
        %1225 = vst.msk [vmem:[%s177 + $0x58] sm:$0xf] %vm1202, %v1160
        %1226 = vst.msk [vmem:[%s177 + $0x5c] sm:$0xf] %vm1202, %v1161
        %1227 = vst.msk [vmem:[%s177 + $0x60] sm:$0xf] %vm1202, %v1162
        %1228 = vst.msk [vmem:[%s177 + $0x64] sm:$0xf] %vm1202, %v1163
        %1229 = vst.msk [vmem:[%s177 + $0x68] sm:$0xf] %vm1202, %v1164
        %1230 = vst.msk [vmem:[%s177 + $0x6c] sm:$0xf] %vm1202, %v1165
        %1231 = vst.msk [vmem:[%s177 + $0x70] sm:$0xf] %vm1202, %v1166
        %1232 = vst.msk [vmem:[%s177 + $0x74] sm:$0xf] %vm1202, %v1167
        %1233 = vst.msk [vmem:[%s177 + $0x78] sm:$0xf] %vm1202, %v1168
        %1234 = vst.msk [vmem:[%s177 + $0x7c] sm:$0xf] %vm1202, %v1169
        %s1235 = sand.u32 %s90, 1
        %s1236 = sand.u32 %s90, 1
        %s1237 = smul.addr %s1236, 128
        %s1238 = scalar_lea.vmem [#allocation2], %s1237
        // Predicated region
        $region33: #{qnet_forward.10} parent=31 // pred_check
          %p1239 = pneg %p100
        $region34: #{qnet_forward.10} parent=31 // pred_check_branch
          %1241 = sbr.rel (%p1239) target = $region36
        $region35: #{qnet_forward.10} parent=31 // pred_region
          %s1242 = smul.u32 32, %s14
          %s1243 = ssub.s32 144, %s1242
          %p1244 = scmp.lt.s32.totalorder %s1243, 32
          %s1245 = scalar_select %p1244, %s1243, 32
          %s1246 = smul.u32 64, %s1245
          %p1247 = scmp.ne.s32.totalorder 0, %s1246
          %s1248 = smul.addr %s1242, 4
          %s1249 = scalar_lea.vmem %s3, %s1248
          // Predicated region
          $region37: #{qnet_forward.10} parent=35 // pred_check
            %p1250 = pneg %p1247
          $region38: #{qnet_forward.10} parent=35 // pred_check_branch
            %1252 = sbr.rel (%p1250) target = $region40
          $region39: #{qnet_forward.10} parent=35 // pred_region
            // Predicated region
            $region41: #{qnet_forward.10} parent=39 // pred_check
              _
            $region42: #{qnet_forward.10} parent=39 // pred_check_branch
              %1254 = sbr.rel target = $region44
            $region43: #{qnet_forward.10} parent=39 // pred_region
              // Predicated region
              $region63: #{qnet_forward.10} parent=43 // pred_check
                _
              $region64: #{qnet_forward.10} parent=43 // pred_check_branch
                %1365 = sbr.rel (0) target = $region66
              $region65: #{qnet_forward.10} parent=43 // pred_region
                %s1367 = sshrl.u32 %s1245, 5
                // While loop
                $region67: #{qnet_forward.10} parent=65 // loop_pre_header
                  _
                $region68: #{qnet_forward.10} parent=65 // loop_header
                  %s1369 = sphi 0, %s1371
                  %p1370 = scmp.ge.s32.totalorder %s1369, %s1367
                  %s1374 = sphi 0, %s1443
                  %s1375 = sphi %s1238, %s1446
                  %s1376 = sphi %s1249, %s1447
                $region69: #{qnet_forward.10} parent=65 // loop_header_branch
                  %1373 = sbr.rel (%p1370) target = $region73
                $region70: #{qnet_forward.10} parent=65 // loop_body
                  %v1377 = vld [vmem:[%s1375] sm:$0xf]
                  %1378 = vst [vmem:[%s1376] sm:$0xf] %v1377
                  %v1379 = vld [vmem:[%s1375 + $0x4] sm:$0xf]
                  %1380 = vst [vmem:[%s1376 + $0x4] sm:$0xf] %v1379
                  %v1381 = vld [vmem:[%s1375 + $0x8] sm:$0xf]
                  %1382 = vst [vmem:[%s1376 + $0x8] sm:$0xf] %v1381
                  %v1383 = vld [vmem:[%s1375 + $0xc] sm:$0xf]
                  %1384 = vst [vmem:[%s1376 + $0xc] sm:$0xf] %v1383
                  %v1385 = vld [vmem:[%s1375 + $0x10] sm:$0xf]
                  %1386 = vst [vmem:[%s1376 + $0x10] sm:$0xf] %v1385
                  %v1387 = vld [vmem:[%s1375 + $0x14] sm:$0xf]
                  %1388 = vst [vmem:[%s1376 + $0x14] sm:$0xf] %v1387
                  %v1389 = vld [vmem:[%s1375 + $0x18] sm:$0xf]
                  %1390 = vst [vmem:[%s1376 + $0x18] sm:$0xf] %v1389
                  %v1391 = vld [vmem:[%s1375 + $0x1c] sm:$0xf]
                  %1392 = vst [vmem:[%s1376 + $0x1c] sm:$0xf] %v1391
                  %v1393 = vld [vmem:[%s1375 + $0x20] sm:$0xf]
                  %1394 = vst [vmem:[%s1376 + $0x20] sm:$0xf] %v1393
                  %v1395 = vld [vmem:[%s1375 + $0x24] sm:$0xf]
                  %1396 = vst [vmem:[%s1376 + $0x24] sm:$0xf] %v1395
                  %v1397 = vld [vmem:[%s1375 + $0x28] sm:$0xf]
                  %1398 = vst [vmem:[%s1376 + $0x28] sm:$0xf] %v1397
                  %v1399 = vld [vmem:[%s1375 + $0x2c] sm:$0xf]
                  %1400 = vst [vmem:[%s1376 + $0x2c] sm:$0xf] %v1399
                  %v1401 = vld [vmem:[%s1375 + $0x30] sm:$0xf]
                  %1402 = vst [vmem:[%s1376 + $0x30] sm:$0xf] %v1401
                  %v1403 = vld [vmem:[%s1375 + $0x34] sm:$0xf]
                  %1404 = vst [vmem:[%s1376 + $0x34] sm:$0xf] %v1403
                  %v1405 = vld [vmem:[%s1375 + $0x38] sm:$0xf]
                  %1406 = vst [vmem:[%s1376 + $0x38] sm:$0xf] %v1405
                  %v1407 = vld [vmem:[%s1375 + $0x3c] sm:$0xf]
                  %1408 = vst [vmem:[%s1376 + $0x3c] sm:$0xf] %v1407
                  %v1409 = vld [vmem:[%s1375 + $0x40] sm:$0xf]
                  %1410 = vst [vmem:[%s1376 + $0x40] sm:$0xf] %v1409
                  %v1411 = vld [vmem:[%s1375 + $0x44] sm:$0xf]
                  %1412 = vst [vmem:[%s1376 + $0x44] sm:$0xf] %v1411
                  %v1413 = vld [vmem:[%s1375 + $0x48] sm:$0xf]
                  %1414 = vst [vmem:[%s1376 + $0x48] sm:$0xf] %v1413
                  %v1415 = vld [vmem:[%s1375 + $0x4c] sm:$0xf]
                  %1416 = vst [vmem:[%s1376 + $0x4c] sm:$0xf] %v1415
                  %v1417 = vld [vmem:[%s1375 + $0x50] sm:$0xf]
                  %1418 = vst [vmem:[%s1376 + $0x50] sm:$0xf] %v1417
                  %v1419 = vld [vmem:[%s1375 + $0x54] sm:$0xf]
                  %1420 = vst [vmem:[%s1376 + $0x54] sm:$0xf] %v1419
                  %v1421 = vld [vmem:[%s1375 + $0x58] sm:$0xf]
                  %1422 = vst [vmem:[%s1376 + $0x58] sm:$0xf] %v1421
                  %v1423 = vld [vmem:[%s1375 + $0x5c] sm:$0xf]
                  %1424 = vst [vmem:[%s1376 + $0x5c] sm:$0xf] %v1423
                  %v1425 = vld [vmem:[%s1375 + $0x60] sm:$0xf]
                  %1426 = vst [vmem:[%s1376 + $0x60] sm:$0xf] %v1425
                  %v1427 = vld [vmem:[%s1375 + $0x64] sm:$0xf]
                  %1428 = vst [vmem:[%s1376 + $0x64] sm:$0xf] %v1427
                  %v1429 = vld [vmem:[%s1375 + $0x68] sm:$0xf]
                  %1430 = vst [vmem:[%s1376 + $0x68] sm:$0xf] %v1429
                  %v1431 = vld [vmem:[%s1375 + $0x6c] sm:$0xf]
                  %1432 = vst [vmem:[%s1376 + $0x6c] sm:$0xf] %v1431
                  %v1433 = vld [vmem:[%s1375 + $0x70] sm:$0xf]
                  %1434 = vst [vmem:[%s1376 + $0x70] sm:$0xf] %v1433
                  %v1435 = vld [vmem:[%s1375 + $0x74] sm:$0xf]
                  %1436 = vst [vmem:[%s1376 + $0x74] sm:$0xf] %v1435
                  %v1437 = vld [vmem:[%s1375 + $0x78] sm:$0xf]
                  %1438 = vst [vmem:[%s1376 + $0x78] sm:$0xf] %v1437
                  %v1439 = vld [vmem:[%s1375 + $0x7c] sm:$0xf]
                  %1440 = vst [vmem:[%s1376 + $0x7c] sm:$0xf] %v1439
                  %s1441 = sadd.s32 1, %s1374
                  %p1442 = scmp.ge.s32.totalorder %s1441, %s1367
                  %s1443 = scalar_select %p1442, 0, %s1441
                  %s1444 = smul.u32 %s1443, 128
                  %s1445 = smul.u32 %s1443, 128
                  %s1446 = scalar_lea.vmem %s1238, %s1444 [#allocation2]
                  %s1447 = scalar_lea.vmem %s1249, %s1445
                $region71: #{qnet_forward.10} parent=65 // loop_footer
                  %s1371 = sadd.s32 %s1369, 1
                $region72: #{qnet_forward.10} parent=65 // loop_footer_branch
                  %1368 = sbr.rel target = $region68
                $region73: #{qnet_forward.10} parent=65 // loop_exit
                  _
                %s1448 = sshrl.u32 %s1245, 5
                %s1449 = sand.u32 %s1245, 31
                %s1450 = smul.u32 %s1448, 32
                %s1451 = smul.u32 4, %s1450
                %s1452 = scalar_lea.vmem %s1238, %s1451 [#allocation2]
                %s1453 = smul.u32 4, %s1450
                %s1454 = scalar_lea.vmem %s1249, %s1453
                // While loop
                $region74: #{qnet_forward.10} parent=65 // loop_pre_header
                  _
                $region75: #{qnet_forward.10} parent=65 // loop_header
                  %s1456 = sphi 0, %s1458
                  %p1457 = scmp.ge.s32.totalorder %s1456, %s1449
                  %s1461 = sphi 0, %s1468
                  %s1462 = sphi %s1452, %s1471
                  %s1463 = sphi %s1454, %s1472
                $region76: #{qnet_forward.10} parent=65 // loop_header_branch
                  %1460 = sbr.rel (%p1457) target = $region80
                $region77: #{qnet_forward.10} parent=65 // loop_body
                  %v1464 = vld [vmem:[%s1462] sm:$0xf]
                  %1465 = vst [vmem:[%s1463] sm:$0xf] %v1464
                  %s1466 = sadd.s32 1, %s1461
                  %p1467 = scmp.ge.s32.totalorder %s1466, %s1449
                  %s1468 = scalar_select %p1467, 0, %s1466
                  %s1469 = smul.u32 %s1468, 4
                  %s1470 = smul.u32 %s1468, 4
                  %s1471 = scalar_lea.vmem %s1452, %s1469 [#allocation2]
                  %s1472 = scalar_lea.vmem %s1454, %s1470
                $region78: #{qnet_forward.10} parent=65 // loop_footer
                  %s1458 = sadd.s32 %s1456, 1
                $region79: #{qnet_forward.10} parent=65 // loop_footer_branch
                  %1455 = sbr.rel target = $region75
                $region80: #{qnet_forward.10} parent=65 // loop_exit
                  _
              $region66: #{qnet_forward.10} parent=43 // pred_fallthru
                _
            $region44: #{qnet_forward.10} parent=39 // pred_fallthru
              _
            // Predicated region
            $region45: #{qnet_forward.10} parent=39 // pred_check
              _
            $region46: #{qnet_forward.10} parent=39 // pred_check_branch
              %1256 = sbr.rel (0) target = $region48
            $region47: #{qnet_forward.10} parent=39 // pred_region
              %s1258 = sshrl.u32 %s1245, 5
              // While loop
              $region49: #{qnet_forward.10} parent=47 // loop_pre_header
                _
              $region50: #{qnet_forward.10} parent=47 // loop_header
                %s1260 = sphi 0, %s1262
                %p1261 = scmp.ge.s32.totalorder %s1260, %s1258
                %s1265 = sphi 0, %s1334
                %s1266 = sphi %s1238, %s1337
                %s1267 = sphi %s1249, %s1338
              $region51: #{qnet_forward.10} parent=47 // loop_header_branch
                %1264 = sbr.rel (%p1261) target = $region55
              $region52: #{qnet_forward.10} parent=47 // loop_body
                %v1268 = vld [vmem:[%s1266] sm:$0xf]
                %1269 = vst [vmem:[%s1267] sm:$0xf] %v1268
                %v1270 = vld [vmem:[%s1266 + $0x4] sm:$0xf]
                %1271 = vst [vmem:[%s1267 + $0x4] sm:$0xf] %v1270
                %v1272 = vld [vmem:[%s1266 + $0x8] sm:$0xf]
                %1273 = vst [vmem:[%s1267 + $0x8] sm:$0xf] %v1272
                %v1274 = vld [vmem:[%s1266 + $0xc] sm:$0xf]
                %1275 = vst [vmem:[%s1267 + $0xc] sm:$0xf] %v1274
                %v1276 = vld [vmem:[%s1266 + $0x10] sm:$0xf]
                %1277 = vst [vmem:[%s1267 + $0x10] sm:$0xf] %v1276
                %v1278 = vld [vmem:[%s1266 + $0x14] sm:$0xf]
                %1279 = vst [vmem:[%s1267 + $0x14] sm:$0xf] %v1278
                %v1280 = vld [vmem:[%s1266 + $0x18] sm:$0xf]
                %1281 = vst [vmem:[%s1267 + $0x18] sm:$0xf] %v1280
                %v1282 = vld [vmem:[%s1266 + $0x1c] sm:$0xf]
                %1283 = vst [vmem:[%s1267 + $0x1c] sm:$0xf] %v1282
                %v1284 = vld [vmem:[%s1266 + $0x20] sm:$0xf]
                %1285 = vst [vmem:[%s1267 + $0x20] sm:$0xf] %v1284
                %v1286 = vld [vmem:[%s1266 + $0x24] sm:$0xf]
                %1287 = vst [vmem:[%s1267 + $0x24] sm:$0xf] %v1286
                %v1288 = vld [vmem:[%s1266 + $0x28] sm:$0xf]
                %1289 = vst [vmem:[%s1267 + $0x28] sm:$0xf] %v1288
                %v1290 = vld [vmem:[%s1266 + $0x2c] sm:$0xf]
                %1291 = vst [vmem:[%s1267 + $0x2c] sm:$0xf] %v1290
                %v1292 = vld [vmem:[%s1266 + $0x30] sm:$0xf]
                %1293 = vst [vmem:[%s1267 + $0x30] sm:$0xf] %v1292
                %v1294 = vld [vmem:[%s1266 + $0x34] sm:$0xf]
                %1295 = vst [vmem:[%s1267 + $0x34] sm:$0xf] %v1294
                %v1296 = vld [vmem:[%s1266 + $0x38] sm:$0xf]
                %1297 = vst [vmem:[%s1267 + $0x38] sm:$0xf] %v1296
                %v1298 = vld [vmem:[%s1266 + $0x3c] sm:$0xf]
                %1299 = vst [vmem:[%s1267 + $0x3c] sm:$0xf] %v1298
                %v1300 = vld [vmem:[%s1266 + $0x40] sm:$0xf]
                %1301 = vst [vmem:[%s1267 + $0x40] sm:$0xf] %v1300
                %v1302 = vld [vmem:[%s1266 + $0x44] sm:$0xf]
                %1303 = vst [vmem:[%s1267 + $0x44] sm:$0xf] %v1302
                %v1304 = vld [vmem:[%s1266 + $0x48] sm:$0xf]
                %1305 = vst [vmem:[%s1267 + $0x48] sm:$0xf] %v1304
                %v1306 = vld [vmem:[%s1266 + $0x4c] sm:$0xf]
                %1307 = vst [vmem:[%s1267 + $0x4c] sm:$0xf] %v1306
                %v1308 = vld [vmem:[%s1266 + $0x50] sm:$0xf]
                %1309 = vst [vmem:[%s1267 + $0x50] sm:$0xf] %v1308
                %v1310 = vld [vmem:[%s1266 + $0x54] sm:$0xf]
                %1311 = vst [vmem:[%s1267 + $0x54] sm:$0xf] %v1310
                %v1312 = vld [vmem:[%s1266 + $0x58] sm:$0xf]
                %1313 = vst [vmem:[%s1267 + $0x58] sm:$0xf] %v1312
                %v1314 = vld [vmem:[%s1266 + $0x5c] sm:$0xf]
                %1315 = vst [vmem:[%s1267 + $0x5c] sm:$0xf] %v1314
                %v1316 = vld [vmem:[%s1266 + $0x60] sm:$0xf]
                %1317 = vst [vmem:[%s1267 + $0x60] sm:$0xf] %v1316
                %v1318 = vld [vmem:[%s1266 + $0x64] sm:$0xf]
                %1319 = vst [vmem:[%s1267 + $0x64] sm:$0xf] %v1318
                %v1320 = vld [vmem:[%s1266 + $0x68] sm:$0xf]
                %1321 = vst [vmem:[%s1267 + $0x68] sm:$0xf] %v1320
                %v1322 = vld [vmem:[%s1266 + $0x6c] sm:$0xf]
                %1323 = vst [vmem:[%s1267 + $0x6c] sm:$0xf] %v1322
                %v1324 = vld [vmem:[%s1266 + $0x70] sm:$0xf]
                %1325 = vst [vmem:[%s1267 + $0x70] sm:$0xf] %v1324
                %v1326 = vld [vmem:[%s1266 + $0x74] sm:$0xf]
                %1327 = vst [vmem:[%s1267 + $0x74] sm:$0xf] %v1326
                %v1328 = vld [vmem:[%s1266 + $0x78] sm:$0xf]
                %1329 = vst [vmem:[%s1267 + $0x78] sm:$0xf] %v1328
                %v1330 = vld [vmem:[%s1266 + $0x7c] sm:$0xf]
                %1331 = vst [vmem:[%s1267 + $0x7c] sm:$0xf] %v1330
                %s1332 = sadd.s32 1, %s1265
                %p1333 = scmp.ge.s32.totalorder %s1332, %s1258
                %s1334 = scalar_select %p1333, 0, %s1332
                %s1335 = smul.u32 %s1334, 128
                %s1336 = smul.u32 %s1334, 128
                %s1337 = scalar_lea.vmem %s1238, %s1335 [#allocation2]
                %s1338 = scalar_lea.vmem %s1249, %s1336
              $region53: #{qnet_forward.10} parent=47 // loop_footer
                %s1262 = sadd.s32 %s1260, 1
              $region54: #{qnet_forward.10} parent=47 // loop_footer_branch
                %1259 = sbr.rel target = $region50
              $region55: #{qnet_forward.10} parent=47 // loop_exit
                _
              %s1339 = sshrl.u32 %s1245, 5
              %s1340 = sand.u32 %s1245, 31
              %s1341 = smul.u32 %s1339, 32
              %s1342 = smul.u32 4, %s1341
              %s1343 = scalar_lea.vmem %s1238, %s1342 [#allocation2]
              %s1344 = smul.u32 4, %s1341
              %s1345 = scalar_lea.vmem %s1249, %s1344
              // While loop
              $region56: #{qnet_forward.10} parent=47 // loop_pre_header
                _
              $region57: #{qnet_forward.10} parent=47 // loop_header
                %s1347 = sphi 0, %s1349
                %p1348 = scmp.ge.s32.totalorder %s1347, %s1340
                %s1352 = sphi 0, %s1359
                %s1353 = sphi %s1343, %s1362
                %s1354 = sphi %s1345, %s1363
              $region58: #{qnet_forward.10} parent=47 // loop_header_branch
                %1351 = sbr.rel (%p1348) target = $region62
              $region59: #{qnet_forward.10} parent=47 // loop_body
                %v1355 = vld [vmem:[%s1353] sm:$0xf]
                %1356 = vst [vmem:[%s1354] sm:$0xf] %v1355
                %s1357 = sadd.s32 1, %s1352
                %p1358 = scmp.ge.s32.totalorder %s1357, %s1340
                %s1359 = scalar_select %p1358, 0, %s1357
                %s1360 = smul.u32 %s1359, 4
                %s1361 = smul.u32 %s1359, 4
                %s1362 = scalar_lea.vmem %s1343, %s1360 [#allocation2]
                %s1363 = scalar_lea.vmem %s1345, %s1361
              $region60: #{qnet_forward.10} parent=47 // loop_footer
                %s1349 = sadd.s32 %s1347, 1
              $region61: #{qnet_forward.10} parent=47 // loop_footer_branch
                %1346 = sbr.rel target = $region57
              $region62: #{qnet_forward.10} parent=47 // loop_exit
                _
            $region48: #{qnet_forward.10} parent=39 // pred_fallthru
              _
          $region40: #{qnet_forward.10} parent=35 // pred_fallthru
            _
          %1473 = vnop
        $region36: #{qnet_forward.10} parent=31 // pred_fallthru
          _
      $region32: #{qnet_forward.10} parent=5 // pred_fallthru
        _
      %p1474 = scmp.le.s32.totalorder 2, %s9
      // Predicated region
      $region81: #{qnet_forward.10} parent=5 // pred_check
        %p1475 = pneg %p1474
      $region82: #{qnet_forward.10} parent=5 // pred_check_branch
        %1477 = sbr.rel (%p1475) target = $region84
      $region83: #{qnet_forward.10} parent=5 // pred_region
        %s1478 = ssub.s32 %s9, 2
        // Predicated region
        $region85: #{qnet_forward.10} parent=83 // pred_check
          %p1479 = pneg %p106
        $region86: #{qnet_forward.10} parent=83 // pred_check_branch
          %1481 = sbr.rel (%p1479) target = $region88
        $region87: #{qnet_forward.10} parent=83 // pred_region
          %s1482 = sand.u32 %s91, 1
          %s1483 = sand.u32 %s91, 1
          %s1484 = smul.addr %s1483, 128
          %s1485 = scalar_lea.vmem [#allocation2], %s1484
        $region88: #{qnet_forward.10} parent=83 // pred_fallthru
          _
      $region84: #{qnet_forward.10} parent=5 // pred_fallthru
        _
    $region6: #{qnet_forward.10} parent=1 // loop_footer
      %s13 = sadd.s32 1, %s9
    $region7: #{qnet_forward.10} parent=1 // loop_footer_branch
      %8 = sbr.rel target = $region3
    $region8: #{qnet_forward.10} parent=1 // loop_exit
      _

// kernel: qnet_forward.11
$region0: #{qnet_forward.11}
  #allocation0 [shape = 'u32[]', space=smem, size = 0x4, offset = 0x4, fixed_abs, tag = 'smem constant byte address 0x4 - core index']
  #allocation1 [shape = 'u32[144,128]{1,0:T(1,128)}', space=vmem, size = 0x12000, scoped, tag = 'internal scratch']
  #allocation2 [shape = 'f32[2,128]{1,0:T(2,128)}', space=vmem, size = 0x400, scoped, tag = 'scratch operand']
  %s0 = inlined_call_operand.vmem [shape: bf16[2,9216], index: 0, kind: input, shape index: {}]
  %s1 = inlined_call_operand.vmem [shape: bf16[2,9216,128], index: 1, kind: input, shape index: {}]
  %s2 = inlined_call_operand.vmem [shape: f32[2,1,128], index: 2, kind: input, shape index: {}]
  %s3 = inlined_call_operand.vmem [shape: f32[2,128,128], index: 3, kind: input, shape index: {}]
  %s4 = inlined_call_operand.vmem [shape: f32[2,1,128], index: 4, kind: input, shape index: {}]
  %s5 = inlined_call_operand.vmem [shape: f32[2,128,1], index: 5, kind: input, shape index: {}]
  %s6 = inlined_call_operand.vmem [shape: f32[2,1,1], index: 6, kind: input, shape index: {}]
  %s7 = inlined_call_operand.vmem [shape: f32[2,2,1], index: 7, kind: output, shape index: {}]
  %s8 = sld [smem:[#allocation0]]
  $region69: #{qnet_forward.11} parent=0
    _
  %s10 = ssub.s32 1, %s8
  %s11 = scalar_select 0, %s10, %s8
  loop: start=0, step=1, limit=10
  $region2: #{qnet_forward.11} parent=0 // loop_pre_header
    _
  $region3: #{qnet_forward.11} parent=0 // loop_header
    %s13 = sphi 0, %s17
    %p14 = scmp.ge.s32.totalorder %s13, 10
    %s20 = sphi 0, %s32
    %s21 = sphi 0, %s28
    %s22 = sphi 0, %s20
    %s23 = sphi 0, %s21
    %s24 = sphi 0, %s22
    %s25 = sphi 0, %s23
    %s35 = sphi 0, %s37
    %s38 = sphi 0, %s35
    %s39 = sphi 0, %s38
    %s55 = sphi 0, %s39
    %s63 = sphi 0, %s65
    %s66 = sphi 0, %s63
    %s67 = sphi 0, %s66
    %s83 = sphi 0, %s67
    %s89 = sphi 0, %s91
    %s92 = sphi 0, %s89
    %s93 = sphi 0, %s92
    %s109 = sphi 0, %s93
    %s115 = sphi 0, %s117
    %s118 = sphi 0, %s115
    %s119 = sphi 0, %s118
    %s135 = sphi 0, %s119
    %s141 = sphi 0, %s143
    %s144 = sphi 0, %s141
    %s145 = sphi 0, %s144
    %s161 = sphi 0, %s145
    %s167 = sphi 0, %s169
    %s170 = sphi 0, %s167
    %s171 = sphi 0, %s170
    %s187 = sphi 0, %s171
    %s193 = sphi 0, %s195
    %s196 = sphi 0, %s193
    %s197 = sphi 0, %s196
    %s213 = sphi 0, %s197
    %s219 = sphi 0, %s221
    %s222 = sphi 0, %s219
    %s223 = sphi 0, %s222
    %s239 = sphi 0, %s223
  $region4: #{qnet_forward.11} parent=0 // loop_header_branch
    %16 = sbr.rel (%p14) target = $region8
  $region5: #{qnet_forward.11} parent=0 // loop_body
    %s18 = ssub.s32 %s13, 1
    %s19 = ssub.s32 %s13, 2
    %s26 = sadd.s32 1, %s21
    %p27 = scmp.ge.s32.totalorder %s26, 4
    %s28 = scalar_select %p27, 0, %s26
    %s29 = sadd.s32 1, %s20
    %s30 = scalar_select %p27, %s29, %s20
    %p31 = scmp.ge.s32.totalorder %s30, 2
    %s32 = scalar_select %p31, 0, %s30
    %s33 = ssub.s32 %s21, %s28
    %p34 = scmp.eq.s32.totalorder %s33, 0
    %s36 = sadd.s32 %s35, 1
    %s37 = scalar_select %p34, %s35, %s36
    %p40 = pneg %p34
    %p41 = scmp.eq.s32.totalorder %s13, 7
    %p42 = por %p40, %p41
    %p43 = scmp.ne.s32.totalorder %s35, %s38
    %p44 = scmp.eq.s32.totalorder %s13, 0
    %p45 = por %p43, %p44
    %p46 = scmp.ne.s32.totalorder %s35, %s38
    %p47 = scmp.eq.s32.totalorder %s18, 7
    %p48 = por %p46, %p47
    %p49 = scmp.ne.s32.totalorder %s38, %s39
    %p50 = scmp.eq.s32.totalorder %s18, 0
    %p51 = por %p49, %p50
    %p52 = scmp.ne.s32.totalorder %s38, %s39
    %p53 = scmp.eq.s32.totalorder %s19, 7
    %p54 = por %p52, %p53
    %p56 = scmp.ne.s32.totalorder %s39, %s55
    %p57 = scmp.eq.s32.totalorder %s19, 0
    %p58 = por %p56, %p57
    %s59 = ssub.s32 %s20, %s32
    %s60 = ssub.s32 %s21, %s28
    %s61 = sor.u32 %s59, %s60
    %p62 = scmp.eq.s32.totalorder %s61, 0
    %s64 = sadd.s32 %s63, 1
    %s65 = scalar_select %p62, %s63, %s64
    %p68 = pneg %p62
    %p69 = scmp.eq.s32.totalorder %s13, 7
    %p70 = por %p68, %p69
    %p71 = scmp.ne.s32.totalorder %s63, %s66
    %p72 = scmp.eq.s32.totalorder %s13, 0
    %p73 = por %p71, %p72
    %p74 = scmp.ne.s32.totalorder %s63, %s66
    %p75 = scmp.eq.s32.totalorder %s18, 7
    %p76 = por %p74, %p75
    %p77 = scmp.ne.s32.totalorder %s66, %s67
    %p78 = scmp.eq.s32.totalorder %s18, 0
    %p79 = por %p77, %p78
    %p80 = scmp.ne.s32.totalorder %s66, %s67
    %p81 = scmp.eq.s32.totalorder %s19, 7
    %p82 = por %p80, %p81
    %p84 = scmp.ne.s32.totalorder %s67, %s83
    %p85 = scmp.eq.s32.totalorder %s19, 0
    %p86 = por %p84, %p85
    %s87 = ssub.s32 %s20, %s32
    %p88 = scmp.eq.s32.totalorder %s87, 0
    %s90 = sadd.s32 %s89, 1
    %s91 = scalar_select %p88, %s89, %s90
    %p94 = pneg %p88
    %p95 = scmp.eq.s32.totalorder %s13, 7
    %p96 = por %p94, %p95
    %p97 = scmp.ne.s32.totalorder %s89, %s92
    %p98 = scmp.eq.s32.totalorder %s13, 0
    %p99 = por %p97, %p98
    %p100 = scmp.ne.s32.totalorder %s89, %s92
    %p101 = scmp.eq.s32.totalorder %s18, 7
    %p102 = por %p100, %p101
    %p103 = scmp.ne.s32.totalorder %s92, %s93
    %p104 = scmp.eq.s32.totalorder %s18, 0
    %p105 = por %p103, %p104
    %p106 = scmp.ne.s32.totalorder %s92, %s93
    %p107 = scmp.eq.s32.totalorder %s19, 7
    %p108 = por %p106, %p107
    %p110 = scmp.ne.s32.totalorder %s93, %s109
    %p111 = scmp.eq.s32.totalorder %s19, 0
    %p112 = por %p110, %p111
    %s113 = ssub.s32 %s20, %s32
    %p114 = scmp.eq.s32.totalorder %s113, 0
    %s116 = sadd.s32 %s115, 1
    %s117 = scalar_select %p114, %s115, %s116
    %p120 = pneg %p114
    %p121 = scmp.eq.s32.totalorder %s13, 7
    %p122 = por %p120, %p121
    %p123 = scmp.ne.s32.totalorder %s115, %s118
    %p124 = scmp.eq.s32.totalorder %s13, 0
    %p125 = por %p123, %p124
    %p126 = scmp.ne.s32.totalorder %s115, %s118
    %p127 = scmp.eq.s32.totalorder %s18, 7
    %p128 = por %p126, %p127
    %p129 = scmp.ne.s32.totalorder %s118, %s119
    %p130 = scmp.eq.s32.totalorder %s18, 0
    %p131 = por %p129, %p130
    %p132 = scmp.ne.s32.totalorder %s118, %s119
    %p133 = scmp.eq.s32.totalorder %s19, 7
    %p134 = por %p132, %p133
    %p136 = scmp.ne.s32.totalorder %s119, %s135
    %p137 = scmp.eq.s32.totalorder %s19, 0
    %p138 = por %p136, %p137
    %s139 = ssub.s32 %s20, %s32
    %p140 = scmp.eq.s32.totalorder %s139, 0
    %s142 = sadd.s32 %s141, 1
    %s143 = scalar_select %p140, %s141, %s142
    %p146 = pneg %p140
    %p147 = scmp.eq.s32.totalorder %s13, 7
    %p148 = por %p146, %p147
    %p149 = scmp.ne.s32.totalorder %s141, %s144
    %p150 = scmp.eq.s32.totalorder %s13, 0
    %p151 = por %p149, %p150
    %p152 = scmp.ne.s32.totalorder %s141, %s144
    %p153 = scmp.eq.s32.totalorder %s18, 7
    %p154 = por %p152, %p153
    %p155 = scmp.ne.s32.totalorder %s144, %s145
    %p156 = scmp.eq.s32.totalorder %s18, 0
    %p157 = por %p155, %p156
    %p158 = scmp.ne.s32.totalorder %s144, %s145
    %p159 = scmp.eq.s32.totalorder %s19, 7
    %p160 = por %p158, %p159
    %p162 = scmp.ne.s32.totalorder %s145, %s161
    %p163 = scmp.eq.s32.totalorder %s19, 0
    %p164 = por %p162, %p163
    %s165 = ssub.s32 %s20, %s32
    %p166 = scmp.eq.s32.totalorder %s165, 0
    %s168 = sadd.s32 %s167, 1
    %s169 = scalar_select %p166, %s167, %s168
    %p172 = pneg %p166
    %p173 = scmp.eq.s32.totalorder %s13, 7
    %p174 = por %p172, %p173
    %p175 = scmp.ne.s32.totalorder %s167, %s170
    %p176 = scmp.eq.s32.totalorder %s13, 0
    %p177 = por %p175, %p176
    %p178 = scmp.ne.s32.totalorder %s167, %s170
    %p179 = scmp.eq.s32.totalorder %s18, 7
    %p180 = por %p178, %p179
    %p181 = scmp.ne.s32.totalorder %s170, %s171
    %p182 = scmp.eq.s32.totalorder %s18, 0
    %p183 = por %p181, %p182
    %p184 = scmp.ne.s32.totalorder %s170, %s171
    %p185 = scmp.eq.s32.totalorder %s19, 7
    %p186 = por %p184, %p185
    %p188 = scmp.ne.s32.totalorder %s171, %s187
    %p189 = scmp.eq.s32.totalorder %s19, 0
    %p190 = por %p188, %p189
    %s191 = ssub.s32 %s20, %s32
    %p192 = scmp.eq.s32.totalorder %s191, 0
    %s194 = sadd.s32 %s193, 1
    %s195 = scalar_select %p192, %s193, %s194
    %p198 = pneg %p192
    %p199 = scmp.eq.s32.totalorder %s13, 7
    %p200 = por %p198, %p199
    %p201 = scmp.ne.s32.totalorder %s193, %s196
    %p202 = scmp.eq.s32.totalorder %s13, 0
    %p203 = por %p201, %p202
    %p204 = scmp.ne.s32.totalorder %s193, %s196
    %p205 = scmp.eq.s32.totalorder %s18, 7
    %p206 = por %p204, %p205
    %p207 = scmp.ne.s32.totalorder %s196, %s197
    %p208 = scmp.eq.s32.totalorder %s18, 0
    %p209 = por %p207, %p208
    %p210 = scmp.ne.s32.totalorder %s196, %s197
    %p211 = scmp.eq.s32.totalorder %s19, 7
    %p212 = por %p210, %p211
    %p214 = scmp.ne.s32.totalorder %s197, %s213
    %p215 = scmp.eq.s32.totalorder %s19, 0
    %p216 = por %p214, %p215
    %s217 = ssub.s32 %s20, %s32
    %p218 = scmp.eq.s32.totalorder %s217, 0
    %s220 = sadd.s32 %s219, 1
    %s221 = scalar_select %p218, %s219, %s220
    %p224 = pneg %p218
    %p225 = scmp.eq.s32.totalorder %s13, 7
    %p226 = por %p224, %p225
    %p227 = scmp.ne.s32.totalorder %s219, %s222
    %p228 = scmp.eq.s32.totalorder %s13, 0
    %p229 = por %p227, %p228
    %p230 = scmp.ne.s32.totalorder %s219, %s222
    %p231 = scmp.eq.s32.totalorder %s18, 7
    %p232 = por %p230, %p231
    %p233 = scmp.ne.s32.totalorder %s222, %s223
    %p234 = scmp.eq.s32.totalorder %s18, 0
    %p235 = por %p233, %p234
    %p236 = scmp.ne.s32.totalorder %s222, %s223
    %p237 = scmp.eq.s32.totalorder %s19, 7
    %p238 = por %p236, %p237
    %p240 = scmp.ne.s32.totalorder %s223, %s239
    %p241 = scmp.eq.s32.totalorder %s19, 0
    %p242 = por %p240, %p241
    %p243 = scmp.le.s32.totalorder 1, %s13
    %p244 = scmp.lt.s32.totalorder %s13, 9
    %p245 = pnand %p243, %p244
    %p246 = pneg %p245
    // Predicated region
    $region9: #{qnet_forward.11} parent=5 // pred_check
      _
    $region10: #{qnet_forward.11} parent=5 // pred_check_branch
      %248 = sbr.rel (%p245) target = $region12
    $region11: #{qnet_forward.11} parent=5 // pred_region
      %s249 = ssub.s32 %s13, 1
    $region12: #{qnet_forward.11} parent=5 // pred_fallthru
      _
    %p250 = scmp.lt.s32.totalorder %s13, 8
    // Predicated region
    $region13: #{qnet_forward.11} parent=5 // pred_check
      %p251 = pneg %p250
    $region14: #{qnet_forward.11} parent=5 // pred_check_branch
      %253 = sbr.rel (%p251) target = $region16
    $region15: #{qnet_forward.11} parent=5 // pred_region
      // Predicated region
      $region17: #{qnet_forward.11} parent=15 // pred_check
        %p254 = pneg %p45
      $region18: #{qnet_forward.11} parent=15 // pred_check_branch
        %256 = sbr.rel (%p254) target = $region20
      $region19: #{qnet_forward.11} parent=15 // pred_region
        %s257 = smul.u32 18, %s21
        %p258 = scmp.lt.s32.totalorder %s257, 71
        %s259 = scalar_select %p258, %s257, 71
        %s260 = scalar_lea.vmem %s0, %s259
        %s261 = smul.u32 18, %s21
      $region20: #{qnet_forward.11} parent=15 // pred_fallthru
        _
      // Predicated region
      $region21: #{qnet_forward.11} parent=15 // pred_check
        %p262 = pneg %p73
      $region22: #{qnet_forward.11} parent=15 // pred_check_branch
        %264 = sbr.rel (%p262) target = $region24
      $region23: #{qnet_forward.11} parent=15 // pred_region
        %s265 = smul.u32 288, %s21
        %p266 = scmp.lt.s32.totalorder %s20, 1
        %s267 = scalar_select %p266, %s20, 1
        %p268 = scmp.lt.s32.totalorder %s265, 1151
        %s269 = scalar_select %p268, %s265, 1151
        %s270 = smul.addr %s267, 1152
        %s271 = sadd.s32 %s269, %s270
        %s272 = smul.addr %s271, 4
        %s273 = scalar_lea.vmem %s1, %s272
        %s274 = smul.u32 288, %s21
      $region24: #{qnet_forward.11} parent=15 // pred_fallthru
        _
      // Predicated region
      $region25: #{qnet_forward.11} parent=15 // pred_check
        %p275 = pneg %p99
      $region26: #{qnet_forward.11} parent=15 // pred_check_branch
        %277 = sbr.rel (%p275) target = $region28
      $region27: #{qnet_forward.11} parent=15 // pred_region
        %p278 = scmp.lt.s32.totalorder %s20, 1
        %s279 = scalar_select %p278, %s20, 1
        %s280 = scalar_lea.vmem %s2, %s279
      $region28: #{qnet_forward.11} parent=15 // pred_fallthru
        _
      // Predicated region
      $region29: #{qnet_forward.11} parent=15 // pred_check
        %p281 = pneg %p125
      $region30: #{qnet_forward.11} parent=15 // pred_check_branch
        %283 = sbr.rel (%p281) target = $region32
      $region31: #{qnet_forward.11} parent=15 // pred_region
        %p284 = scmp.lt.s32.totalorder %s20, 1
        %s285 = scalar_select %p284, %s20, 1
        %s286 = smul.addr %s285, 16
        %s287 = smul.addr %s286, 8
        %s288 = scalar_lea.vmem %s3, %s287
      $region32: #{qnet_forward.11} parent=15 // pred_fallthru
        _
      // Predicated region
      $region33: #{qnet_forward.11} parent=15 // pred_check
        %p289 = pneg %p151
      $region34: #{qnet_forward.11} parent=15 // pred_check_branch
        %291 = sbr.rel (%p289) target = $region36
      $region35: #{qnet_forward.11} parent=15 // pred_region
        %p292 = scmp.lt.s32.totalorder %s20, 1
        %s293 = scalar_select %p292, %s20, 1
        %s294 = scalar_lea.vmem %s4, %s293
      $region36: #{qnet_forward.11} parent=15 // pred_fallthru
        _
      // Predicated region
      $region37: #{qnet_forward.11} parent=15 // pred_check
        %p295 = pneg %p177
      $region38: #{qnet_forward.11} parent=15 // pred_check_branch
        %297 = sbr.rel (%p295) target = $region40
      $region39: #{qnet_forward.11} parent=15 // pred_region
        %p298 = scmp.lt.s32.totalorder %s20, 1
        %s299 = scalar_select %p298, %s20, 1
        %s300 = smul.addr %s299, 16
        %s301 = smul.addr %s300, 8
        %s302 = scalar_lea.vmem %s5, %s301
      $region40: #{qnet_forward.11} parent=15 // pred_fallthru
        _
      // Predicated region
      $region41: #{qnet_forward.11} parent=15 // pred_check
        %p303 = pneg %p203
      $region42: #{qnet_forward.11} parent=15 // pred_check_branch
        %305 = sbr.rel (%p303) target = $region44
      $region43: #{qnet_forward.11} parent=15 // pred_region
        %p306 = scmp.lt.s32.totalorder %s20, 1
        %s307 = scalar_select %p306, %s20, 1
        %s308 = scalar_lea.vmem %s6, %s307
      $region44: #{qnet_forward.11} parent=15 // pred_fallthru
        _
    $region16: #{qnet_forward.11} parent=5 // pred_fallthru
      _
    %p309 = scmp.le.s32.totalorder 1, %s13
    %p310 = scmp.lt.s32.totalorder %s13, 9
    %p311 = pnand %p309, %p310
    %p312 = pneg %p311
    // Predicated region
    $region45: #{qnet_forward.11} parent=5 // pred_check
      _
    $region46: #{qnet_forward.11} parent=5 // pred_check_branch
      %314 = sbr.rel (%p311) target = $region48
    $region47: #{qnet_forward.11} parent=5 // pred_region
      %s315 = ssub.s32 %s13, 1
      %s316 = smul.u32 18, %s23
      %p317 = scmp.lt.s32.totalorder %s316, 71
      %s318 = scalar_select %p317, %s316, 71
      %s319 = scalar_lea.vmem %s0, %s318
      %p320 = pneg %p51
      %p321 = pneg %p48
      %s322 = smul.u32 288, %s23
      %p323 = scmp.lt.s32.totalorder %s22, 1
      %s324 = scalar_select %p323, %s22, 1
      %p325 = scmp.lt.s32.totalorder %s322, 1151
      %s326 = scalar_select %p325, %s322, 1151
      %s327 = smul.addr %s324, 1152
      %s328 = sadd.s32 %s326, %s327
      %s329 = smul.addr %s328, 4
      %s330 = scalar_lea.vmem %s1, %s329
      %p331 = pneg %p79
      %p332 = pneg %p76
      %p333 = scmp.lt.s32.totalorder %s22, 1
      %s334 = scalar_select %p333, %s22, 1
      %s335 = scalar_lea.vmem %s2, %s334
      %p336 = pneg %p105
      %p337 = pneg %p102
      %p338 = scmp.lt.s32.totalorder %s22, 1
      %s339 = scalar_select %p338, %s22, 1
      %s340 = smul.addr %s339, 16
      %s341 = smul.addr %s340, 8
      %s342 = scalar_lea.vmem %s3, %s341
      %p343 = pneg %p131
      %p344 = pneg %p128
      %p345 = scmp.lt.s32.totalorder %s22, 1
      %s346 = scalar_select %p345, %s22, 1
      %s347 = scalar_lea.vmem %s4, %s346
      %p348 = pneg %p157
      %p349 = pneg %p154
      %p350 = scmp.lt.s32.totalorder %s22, 1
      %s351 = scalar_select %p350, %s22, 1
      %s352 = smul.addr %s351, 16
      %s353 = smul.addr %s352, 8
      %s354 = scalar_lea.vmem %s5, %s353
      %p355 = pneg %p183
      %p356 = pneg %p180
      %p357 = scmp.lt.s32.totalorder %s22, 1
      %s358 = scalar_select %p357, %s22, 1
      %s359 = scalar_lea.vmem %s6, %s358
      %p360 = pneg %p209
      %p361 = pneg %p206
      %p362 = pneg %p235
      %p363 = pneg %p232
      %p364 = scmp.lt.s32.totalorder %s22, 1
      %s365 = scalar_select %p364, %s22, 1
      %s366 = smul.addr %s365, 2
      %s367 = scalar_lea.vmem %s7, %s366
      %s368 = smul.u32 18, %s23
      %p369 = scmp.lt.s32.totalorder %s368, 71
      %s370 = scalar_select %p369, %s368, 71
      %s371 = scalar_lea.vmem %s0, %s370
      %s372 = smul.u32 18, %s23
      %s373 = smul.u32 288, %s23
      %p374 = scmp.lt.s32.totalorder %s22, 1
      %s375 = scalar_select %p374, %s22, 1
      %p376 = scmp.lt.s32.totalorder %s373, 1151
      %s377 = scalar_select %p376, %s373, 1151
      %s378 = smul.addr %s375, 1152
      %s379 = sadd.s32 %s377, %s378
      %s380 = smul.addr %s379, 4
      %s381 = scalar_lea.vmem %s1, %s380
      %s382 = smul.u32 288, %s23
      %p383 = scmp.lt.s32.totalorder %s22, 1
      %s384 = scalar_select %p383, %s22, 1
      %s385 = scalar_lea.vmem %s2, %s384
      %p386 = scmp.lt.s32.totalorder %s22, 1
      %s387 = scalar_select %p386, %s22, 1
      %s388 = smul.addr %s387, 16
      %s389 = smul.addr %s388, 8
      %s390 = scalar_lea.vmem %s3, %s389
      %p391 = scmp.lt.s32.totalorder %s22, 1
      %s392 = scalar_select %p391, %s22, 1
      %s393 = scalar_lea.vmem %s4, %s392
      %p394 = scmp.lt.s32.totalorder %s22, 1
      %s395 = scalar_select %p394, %s22, 1
      %s396 = smul.addr %s395, 16
      %s397 = smul.addr %s396, 8
      %s398 = scalar_lea.vmem %s5, %s397
      %p399 = scmp.lt.s32.totalorder %s22, 1
      %s400 = scalar_select %p399, %s22, 1
      %s401 = scalar_lea.vmem %s6, %s400
      %p402 = scmp.lt.s32.totalorder %s22, 1
      %s403 = scalar_select %p402, %s22, 1
      %s404 = smul.addr %s403, 2
      %s405 = scalar_lea.vmem %s7, %s404
      %p407 = scmp.eq.s32.totalorder %s23, 0
      // Predicated region
      $region49: #{qnet_forward.11} parent=47 // pred_check
        %p408 = pneg %p407
      $region50: #{qnet_forward.11} parent=47 // pred_check_branch
        %410 = sbr.rel (%p408) target = $region52
      $region51: #{qnet_forward.11} parent=47 // pred_region
        %411 = vst [vmem:[#allocation2] sm:$0x3] 0.0
      $region52: #{qnet_forward.11} parent=47 // pred_fallthru
        _
      %v412 = vld [vmem:[#allocation2] sm:$0x3]
      %v413 = vld [vmem:[%s371] sm:$0xff]
      %v414 = vld [vmem:[%s371 + $0x8] sm:$0xff]
      %v415 = vld [vmem:[%s371 + $0x10] sm:$0x3]
      %v416 = vld [vmem:[%s381] sm:$0xf]
      %v417 = vld [vmem:[%s381 + $0x4] sm:$0xf]
      %v418 = vld [vmem:[%s381 + $0x8] sm:$0xf]
      %v419 = vld [vmem:[%s381 + $0xc] sm:$0xf]
      %v420 = vld [vmem:[%s381 + $0x10] sm:$0xf]
      %v421 = vld [vmem:[%s381 + $0x14] sm:$0xf]
      %v422 = vld [vmem:[%s381 + $0x18] sm:$0xf]
      %v423 = vld [vmem:[%s381 + $0x1c] sm:$0xf]
      %v424 = vld [vmem:[%s381 + $0x20] sm:$0xf]
      %v425 = vld [vmem:[%s381 + $0x24] sm:$0xf]
      %v426 = vld [vmem:[%s381 + $0x28] sm:$0xf]
      %v427 = vld [vmem:[%s381 + $0x2c] sm:$0xf]
      %v428 = vld [vmem:[%s381 + $0x30] sm:$0xf]
      %v429 = vld [vmem:[%s381 + $0x34] sm:$0xf]
      %v430 = vld [vmem:[%s381 + $0x38] sm:$0xf]
      %v431 = vld [vmem:[%s381 + $0x3c] sm:$0xf]
      %v432 = vld [vmem:[%s381 + $0x40] sm:$0xf]
      %v433 = vld [vmem:[%s381 + $0x44] sm:$0xf]
      %v434 = vld [vmem:[%s381 + $0x48] sm:$0xf]
      %v435 = vld [vmem:[%s381 + $0x4c] sm:$0xf]
      %v436 = vld [vmem:[%s381 + $0x50] sm:$0xf]
      %v437 = vld [vmem:[%s381 + $0x54] sm:$0xf]
      %v438 = vld [vmem:[%s381 + $0x58] sm:$0xf]
      %v439 = vld [vmem:[%s381 + $0x5c] sm:$0xf]
      %v440 = vld [vmem:[%s381 + $0x60] sm:$0xf]
      %v441 = vld [vmem:[%s381 + $0x64] sm:$0xf]
      %v442 = vld [vmem:[%s381 + $0x68] sm:$0xf]
      %v443 = vld [vmem:[%s381 + $0x6c] sm:$0xf]
      %v444 = vld [vmem:[%s381 + $0x70] sm:$0xf]
      %v445 = vld [vmem:[%s381 + $0x74] sm:$0xf]
      %v446 = vld [vmem:[%s381 + $0x78] sm:$0xf]
      %v447 = vld [vmem:[%s381 + $0x7c] sm:$0xf]
      %v448 = vld [vmem:[%s381 + $0x80] sm:$0xf]
      %v449 = vld [vmem:[%s381 + $0x84] sm:$0xf]
      %v450 = vld [vmem:[%s381 + $0x88] sm:$0xf]
      %v451 = vld [vmem:[%s381 + $0x8c] sm:$0xf]
      %v452 = vld [vmem:[%s381 + $0x90] sm:$0xf]
      %v453 = vld [vmem:[%s381 + $0x94] sm:$0xf]
      %v454 = vld [vmem:[%s381 + $0x98] sm:$0xf]
      %v455 = vld [vmem:[%s381 + $0x9c] sm:$0xf]
      %v456 = vld [vmem:[%s381 + $0xa0] sm:$0xf]
      %v457 = vld [vmem:[%s381 + $0xa4] sm:$0xf]
      %v458 = vld [vmem:[%s381 + $0xa8] sm:$0xf]
      %v459 = vld [vmem:[%s381 + $0xac] sm:$0xf]
      %v460 = vld [vmem:[%s381 + $0xb0] sm:$0xf]
      %v461 = vld [vmem:[%s381 + $0xb4] sm:$0xf]
      %v462 = vld [vmem:[%s381 + $0xb8] sm:$0xf]
      %v463 = vld [vmem:[%s381 + $0xbc] sm:$0xf]
      %v464 = vld [vmem:[%s381 + $0xc0] sm:$0xf]
      %v465 = vld [vmem:[%s381 + $0xc4] sm:$0xf]
      %v466 = vld [vmem:[%s381 + $0xc8] sm:$0xf]
      %v467 = vld [vmem:[%s381 + $0xcc] sm:$0xf]
      %v468 = vld [vmem:[%s381 + $0xd0] sm:$0xf]
      %v469 = vld [vmem:[%s381 + $0xd4] sm:$0xf]
      %v470 = vld [vmem:[%s381 + $0xd8] sm:$0xf]
      %v471 = vld [vmem:[%s381 + $0xdc] sm:$0xf]
      %v472 = vld [vmem:[%s381 + $0xe0] sm:$0xf]
      %v473 = vld [vmem:[%s381 + $0xe4] sm:$0xf]
      %v474 = vld [vmem:[%s381 + $0xe8] sm:$0xf]
      %v475 = vld [vmem:[%s381 + $0xec] sm:$0xf]
      %v476 = vld [vmem:[%s381 + $0xf0] sm:$0xf]
      %v477 = vld [vmem:[%s381 + $0xf4] sm:$0xf]
      %v478 = vld [vmem:[%s381 + $0xf8] sm:$0xf]
      %v479 = vld [vmem:[%s381 + $0xfc] sm:$0xf]
      %v480 = vld [vmem:[%s381 + $0x100] sm:$0xf]
      %v481 = vld [vmem:[%s381 + $0x104] sm:$0xf]
      %v482 = vld [vmem:[%s381 + $0x108] sm:$0xf]
      %v483 = vld [vmem:[%s381 + $0x10c] sm:$0xf]
      %v484 = vld [vmem:[%s381 + $0x110] sm:$0xf]
      %v485 = vld [vmem:[%s381 + $0x114] sm:$0xf]
      %v486 = vld [vmem:[%s381 + $0x118] sm:$0xf]
      %v487 = vld [vmem:[%s381 + $0x11c] sm:$0xf]
      %v488 = vld [vmem:[%s381 + $0x120] sm:$0xf]
      %v489 = vld [vmem:[%s381 + $0x124] sm:$0xf]
      %v490 = vld [vmem:[%s381 + $0x128] sm:$0xf]
      %v491 = vld [vmem:[%s381 + $0x12c] sm:$0xf]
      %v492 = vld [vmem:[%s381 + $0x130] sm:$0xf]
      %v493 = vld [vmem:[%s381 + $0x134] sm:$0xf]
      %v494 = vld [vmem:[%s381 + $0x138] sm:$0xf]
      %v495 = vld [vmem:[%s381 + $0x13c] sm:$0xf]
      %v496 = vld [vmem:[%s381 + $0x140] sm:$0xf]
      %v497 = vld [vmem:[%s381 + $0x144] sm:$0xf]
      %v498 = vld [vmem:[%s381 + $0x148] sm:$0xf]
      %v499 = vld [vmem:[%s381 + $0x14c] sm:$0xf]
      %v500 = vld [vmem:[%s381 + $0x150] sm:$0xf]
      %v501 = vld [vmem:[%s381 + $0x154] sm:$0xf]
      %v502 = vld [vmem:[%s381 + $0x158] sm:$0xf]
      %v503 = vld [vmem:[%s381 + $0x15c] sm:$0xf]
      %v504 = vld [vmem:[%s381 + $0x160] sm:$0xf]
      %v505 = vld [vmem:[%s381 + $0x164] sm:$0xf]
      %v506 = vld [vmem:[%s381 + $0x168] sm:$0xf]
      %v507 = vld [vmem:[%s381 + $0x16c] sm:$0xf]
      %v508 = vld [vmem:[%s381 + $0x170] sm:$0xf]
      %v509 = vld [vmem:[%s381 + $0x174] sm:$0xf]
      %v510 = vld [vmem:[%s381 + $0x178] sm:$0xf]
      %v511 = vld [vmem:[%s381 + $0x17c] sm:$0xf]
      %v512 = vld [vmem:[%s381 + $0x180] sm:$0xf]
      %v513 = vld [vmem:[%s381 + $0x184] sm:$0xf]
      %v514 = vld [vmem:[%s381 + $0x188] sm:$0xf]
      %v515 = vld [vmem:[%s381 + $0x18c] sm:$0xf]
      %v516 = vld [vmem:[%s381 + $0x190] sm:$0xf]
      %v517 = vld [vmem:[%s381 + $0x194] sm:$0xf]
      %v518 = vld [vmem:[%s381 + $0x198] sm:$0xf]
      %v519 = vld [vmem:[%s381 + $0x19c] sm:$0xf]
      %v520 = vld [vmem:[%s381 + $0x1a0] sm:$0xf]
      %v521 = vld [vmem:[%s381 + $0x1a4] sm:$0xf]
      %v522 = vld [vmem:[%s381 + $0x1a8] sm:$0xf]
      %v523 = vld [vmem:[%s381 + $0x1ac] sm:$0xf]
      %v524 = vld [vmem:[%s381 + $0x1b0] sm:$0xf]
      %v525 = vld [vmem:[%s381 + $0x1b4] sm:$0xf]
      %v526 = vld [vmem:[%s381 + $0x1b8] sm:$0xf]
      %v527 = vld [vmem:[%s381 + $0x1bc] sm:$0xf]
      %v528 = vld [vmem:[%s381 + $0x1c0] sm:$0xf]
      %v529 = vld [vmem:[%s381 + $0x1c4] sm:$0xf]
      %v530 = vld [vmem:[%s381 + $0x1c8] sm:$0xf]
      %v531 = vld [vmem:[%s381 + $0x1cc] sm:$0xf]
      %v532 = vld [vmem:[%s381 + $0x1d0] sm:$0xf]
      %v533 = vld [vmem:[%s381 + $0x1d4] sm:$0xf]
      %v534 = vld [vmem:[%s381 + $0x1d8] sm:$0xf]
      %v535 = vld [vmem:[%s381 + $0x1dc] sm:$0xf]
      %v536 = vld [vmem:[%s381 + $0x1e0] sm:$0xf]
      %v537 = vld [vmem:[%s381 + $0x1e4] sm:$0xf]
      %v538 = vld [vmem:[%s381 + $0x1e8] sm:$0xf]
      %v539 = vld [vmem:[%s381 + $0x1ec] sm:$0xf]
      %v540 = vld [vmem:[%s381 + $0x1f0] sm:$0xf]
      %v541 = vld [vmem:[%s381 + $0x1f4] sm:$0xf]
      %v542 = vld [vmem:[%s381 + $0x1f8] sm:$0xf]
      %v543 = vld [vmem:[%s381 + $0x1fc] sm:$0xf]
      %v544 = vld [vmem:[%s381 + $0x200] sm:$0xf]
      %v545 = vld [vmem:[%s381 + $0x204] sm:$0xf]
      %v546 = vld [vmem:[%s381 + $0x208] sm:$0xf]
      %v547 = vld [vmem:[%s381 + $0x20c] sm:$0xf]
      %v548 = vld [vmem:[%s381 + $0x210] sm:$0xf]
      %v549 = vld [vmem:[%s381 + $0x214] sm:$0xf]
      %v550 = vld [vmem:[%s381 + $0x218] sm:$0xf]
      %v551 = vld [vmem:[%s381 + $0x21c] sm:$0xf]
      %v552 = vld [vmem:[%s381 + $0x220] sm:$0xf]
      %v553 = vld [vmem:[%s381 + $0x224] sm:$0xf]
      %v554 = vld [vmem:[%s381 + $0x228] sm:$0xf]
      %v555 = vld [vmem:[%s381 + $0x22c] sm:$0xf]
      %v556 = vld [vmem:[%s381 + $0x230] sm:$0xf]
      %v557 = vld [vmem:[%s381 + $0x234] sm:$0xf]
      %v558 = vld [vmem:[%s381 + $0x238] sm:$0xf]
      %v559 = vld [vmem:[%s381 + $0x23c] sm:$0xf]
      %v560 = vld [vmem:[%s381 + $0x240] sm:$0xf]
      %v561 = vld [vmem:[%s381 + $0x244] sm:$0xf]
      %v562 = vld [vmem:[%s381 + $0x248] sm:$0xf]
      %v563 = vld [vmem:[%s381 + $0x24c] sm:$0xf]
      %v564 = vld [vmem:[%s381 + $0x250] sm:$0xf]
      %v565 = vld [vmem:[%s381 + $0x254] sm:$0xf]
      %v566 = vld [vmem:[%s381 + $0x258] sm:$0xf]
      %v567 = vld [vmem:[%s381 + $0x25c] sm:$0xf]
      %v568 = vld [vmem:[%s381 + $0x260] sm:$0xf]
      %v569 = vld [vmem:[%s381 + $0x264] sm:$0xf]
      %v570 = vld [vmem:[%s381 + $0x268] sm:$0xf]
      %v571 = vld [vmem:[%s381 + $0x26c] sm:$0xf]
      %v572 = vld [vmem:[%s381 + $0x270] sm:$0xf]
      %v573 = vld [vmem:[%s381 + $0x274] sm:$0xf]
      %v574 = vld [vmem:[%s381 + $0x278] sm:$0xf]
      %v575 = vld [vmem:[%s381 + $0x27c] sm:$0xf]
      %v576 = vld [vmem:[%s381 + $0x280] sm:$0xf]
      %v577 = vld [vmem:[%s381 + $0x284] sm:$0xf]
      %v578 = vld [vmem:[%s381 + $0x288] sm:$0xf]
      %v579 = vld [vmem:[%s381 + $0x28c] sm:$0xf]
      %v580 = vld [vmem:[%s381 + $0x290] sm:$0xf]
      %v581 = vld [vmem:[%s381 + $0x294] sm:$0xf]
      %v582 = vld [vmem:[%s381 + $0x298] sm:$0xf]
      %v583 = vld [vmem:[%s381 + $0x29c] sm:$0xf]
      %v584 = vld [vmem:[%s381 + $0x2a0] sm:$0xf]
      %v585 = vld [vmem:[%s381 + $0x2a4] sm:$0xf]
      %v586 = vld [vmem:[%s381 + $0x2a8] sm:$0xf]
      %v587 = vld [vmem:[%s381 + $0x2ac] sm:$0xf]
      %v588 = vld [vmem:[%s381 + $0x2b0] sm:$0xf]
      %v589 = vld [vmem:[%s381 + $0x2b4] sm:$0xf]
      %v590 = vld [vmem:[%s381 + $0x2b8] sm:$0xf]
      %v591 = vld [vmem:[%s381 + $0x2bc] sm:$0xf]
      %v592 = vld [vmem:[%s381 + $0x2c0] sm:$0xf]
      %v593 = vld [vmem:[%s381 + $0x2c4] sm:$0xf]
      %v594 = vld [vmem:[%s381 + $0x2c8] sm:$0xf]
      %v595 = vld [vmem:[%s381 + $0x2cc] sm:$0xf]
      %v596 = vld [vmem:[%s381 + $0x2d0] sm:$0xf]
      %v597 = vld [vmem:[%s381 + $0x2d4] sm:$0xf]
      %v598 = vld [vmem:[%s381 + $0x2d8] sm:$0xf]
      %v599 = vld [vmem:[%s381 + $0x2dc] sm:$0xf]
      %v600 = vld [vmem:[%s381 + $0x2e0] sm:$0xf]
      %v601 = vld [vmem:[%s381 + $0x2e4] sm:$0xf]
      %v602 = vld [vmem:[%s381 + $0x2e8] sm:$0xf]
      %v603 = vld [vmem:[%s381 + $0x2ec] sm:$0xf]
      %v604 = vld [vmem:[%s381 + $0x2f0] sm:$0xf]
      %v605 = vld [vmem:[%s381 + $0x2f4] sm:$0xf]
      %v606 = vld [vmem:[%s381 + $0x2f8] sm:$0xf]
      %v607 = vld [vmem:[%s381 + $0x2fc] sm:$0xf]
      %v608 = vld [vmem:[%s381 + $0x300] sm:$0xf]
      %v609 = vld [vmem:[%s381 + $0x304] sm:$0xf]
      %v610 = vld [vmem:[%s381 + $0x308] sm:$0xf]
      %v611 = vld [vmem:[%s381 + $0x30c] sm:$0xf]
      %v612 = vld [vmem:[%s381 + $0x310] sm:$0xf]
      %v613 = vld [vmem:[%s381 + $0x314] sm:$0xf]
      %v614 = vld [vmem:[%s381 + $0x318] sm:$0xf]
      %v615 = vld [vmem:[%s381 + $0x31c] sm:$0xf]
      %v616 = vld [vmem:[%s381 + $0x320] sm:$0xf]
      %v617 = vld [vmem:[%s381 + $0x324] sm:$0xf]
      %v618 = vld [vmem:[%s381 + $0x328] sm:$0xf]
      %v619 = vld [vmem:[%s381 + $0x32c] sm:$0xf]
      %v620 = vld [vmem:[%s381 + $0x330] sm:$0xf]
      %v621 = vld [vmem:[%s381 + $0x334] sm:$0xf]
      %v622 = vld [vmem:[%s381 + $0x338] sm:$0xf]
      %v623 = vld [vmem:[%s381 + $0x33c] sm:$0xf]
      %v624 = vld [vmem:[%s381 + $0x340] sm:$0xf]
      %v625 = vld [vmem:[%s381 + $0x344] sm:$0xf]
      %v626 = vld [vmem:[%s381 + $0x348] sm:$0xf]
      %v627 = vld [vmem:[%s381 + $0x34c] sm:$0xf]
      %v628 = vld [vmem:[%s381 + $0x350] sm:$0xf]
      %v629 = vld [vmem:[%s381 + $0x354] sm:$0xf]
      %v630 = vld [vmem:[%s381 + $0x358] sm:$0xf]
      %v631 = vld [vmem:[%s381 + $0x35c] sm:$0xf]
      %v632 = vld [vmem:[%s381 + $0x360] sm:$0xf]
      %v633 = vld [vmem:[%s381 + $0x364] sm:$0xf]
      %v634 = vld [vmem:[%s381 + $0x368] sm:$0xf]
      %v635 = vld [vmem:[%s381 + $0x36c] sm:$0xf]
      %v636 = vld [vmem:[%s381 + $0x370] sm:$0xf]
      %v637 = vld [vmem:[%s381 + $0x374] sm:$0xf]
      %v638 = vld [vmem:[%s381 + $0x378] sm:$0xf]
      %v639 = vld [vmem:[%s381 + $0x37c] sm:$0xf]
      %v640 = vld [vmem:[%s381 + $0x380] sm:$0xf]
      %v641 = vld [vmem:[%s381 + $0x384] sm:$0xf]
      %v642 = vld [vmem:[%s381 + $0x388] sm:$0xf]
      %v643 = vld [vmem:[%s381 + $0x38c] sm:$0xf]
      %v644 = vld [vmem:[%s381 + $0x390] sm:$0xf]
      %v645 = vld [vmem:[%s381 + $0x394] sm:$0xf]
      %v646 = vld [vmem:[%s381 + $0x398] sm:$0xf]
      %v647 = vld [vmem:[%s381 + $0x39c] sm:$0xf]
      %v648 = vld [vmem:[%s381 + $0x3a0] sm:$0xf]
      %v649 = vld [vmem:[%s381 + $0x3a4] sm:$0xf]
      %v650 = vld [vmem:[%s381 + $0x3a8] sm:$0xf]
      %v651 = vld [vmem:[%s381 + $0x3ac] sm:$0xf]
      %v652 = vld [vmem:[%s381 + $0x3b0] sm:$0xf]
      %v653 = vld [vmem:[%s381 + $0x3b4] sm:$0xf]
      %v654 = vld [vmem:[%s381 + $0x3b8] sm:$0xf]
      %v655 = vld [vmem:[%s381 + $0x3bc] sm:$0xf]
      %v656 = vld [vmem:[%s381 + $0x3c0] sm:$0xf]
      %v657 = vld [vmem:[%s381 + $0x3c4] sm:$0xf]
      %v658 = vld [vmem:[%s381 + $0x3c8] sm:$0xf]
      %v659 = vld [vmem:[%s381 + $0x3cc] sm:$0xf]
      %v660 = vld [vmem:[%s381 + $0x3d0] sm:$0xf]
      %v661 = vld [vmem:[%s381 + $0x3d4] sm:$0xf]
      %v662 = vld [vmem:[%s381 + $0x3d8] sm:$0xf]
      %v663 = vld [vmem:[%s381 + $0x3dc] sm:$0xf]
      %v664 = vld [vmem:[%s381 + $0x3e0] sm:$0xf]
      %v665 = vld [vmem:[%s381 + $0x3e4] sm:$0xf]
      %v666 = vld [vmem:[%s381 + $0x3e8] sm:$0xf]
      %v667 = vld [vmem:[%s381 + $0x3ec] sm:$0xf]
      %v668 = vld [vmem:[%s381 + $0x3f0] sm:$0xf]
      %v669 = vld [vmem:[%s381 + $0x3f4] sm:$0xf]
      %v670 = vld [vmem:[%s381 + $0x3f8] sm:$0xf]
      %v671 = vld [vmem:[%s381 + $0x3fc] sm:$0xf]
      %v672 = vld [vmem:[%s381 + $0x400] sm:$0xf]
      %v673 = vld [vmem:[%s381 + $0x404] sm:$0xf]
      %v674 = vld [vmem:[%s381 + $0x408] sm:$0xf]
      %v675 = vld [vmem:[%s381 + $0x40c] sm:$0xf]
      %v676 = vld [vmem:[%s381 + $0x410] sm:$0xf]
      %v677 = vld [vmem:[%s381 + $0x414] sm:$0xf]
      %v678 = vld [vmem:[%s381 + $0x418] sm:$0xf]
      %v679 = vld [vmem:[%s381 + $0x41c] sm:$0xf]
      %v680 = vld [vmem:[%s381 + $0x420] sm:$0xf]
      %v681 = vld [vmem:[%s381 + $0x424] sm:$0xf]
      %v682 = vld [vmem:[%s381 + $0x428] sm:$0xf]
      %v683 = vld [vmem:[%s381 + $0x42c] sm:$0xf]
      %v684 = vld [vmem:[%s381 + $0x430] sm:$0xf]
      %v685 = vld [vmem:[%s381 + $0x434] sm:$0xf]
      %v686 = vld [vmem:[%s381 + $0x438] sm:$0xf]
      %v687 = vld [vmem:[%s381 + $0x43c] sm:$0xf]
      %v688 = vld [vmem:[%s381 + $0x440] sm:$0xf]
      %v689 = vld [vmem:[%s381 + $0x444] sm:$0xf]
      %v690 = vld [vmem:[%s381 + $0x448] sm:$0xf]
      %v691 = vld [vmem:[%s381 + $0x44c] sm:$0xf]
      %v692 = vld [vmem:[%s381 + $0x450] sm:$0xf]
      %v693 = vld [vmem:[%s381 + $0x454] sm:$0xf]
      %v694 = vld [vmem:[%s381 + $0x458] sm:$0xf]
      %v695 = vld [vmem:[%s381 + $0x45c] sm:$0xf]
      %v696 = vld [vmem:[%s381 + $0x460] sm:$0xf]
      %v697 = vld [vmem:[%s381 + $0x464] sm:$0xf]
      %v698 = vld [vmem:[%s381 + $0x468] sm:$0xf]
      %v699 = vld [vmem:[%s381 + $0x46c] sm:$0xf]
      %v700 = vld [vmem:[%s381 + $0x470] sm:$0xf]
      %v701 = vld [vmem:[%s381 + $0x474] sm:$0xf]
      %v702 = vld [vmem:[%s381 + $0x478] sm:$0xf]
      %v703 = vld [vmem:[%s381 + $0x47c] sm:$0xf]
      %v707 = vcombine.high %v413, %v413
      %v709 = vunpack.c.l.s4 1966171168
      %v710 = vunpack.c.0.s8 %v709
      %v711 = vlaneseq
      %v712 = vshrl.u32 %v711, 7
      %v713 = vsub.s32 %v710, %v712
      %v714 = vrot.slane %v413, %v713
      %v716 = vunpack.c.l.s4 1966171168
      %v717 = vunpack.c.0.s8 %v716
      %v718 = vlaneseq
      %v719 = vshrl.u32 %v718, 7
      %v720 = vsub.s32 %v717, %v719
      %v721 = vrot.slane %v707, %v720
      %v722 = vcombine.high %v714, %v714
      %v723 = vcombine.high %v721, %v721
      %v725 = vunpack.c.l.s4 1966171168
      %v726 = vunpack.c.0.s8 %v725
      %v727 = vlaneseq
      %v728 = vshrl.u32 %v727, 7
      %v729 = vsub.s32 %v726, %v728
      %v730 = vrot.slane %v714, %v729
      %v732 = vunpack.c.l.s4 1966171168
      %v733 = vunpack.c.0.s8 %v732
      %v734 = vlaneseq
      %v735 = vshrl.u32 %v734, 7
      %v736 = vsub.s32 %v733, %v735
      %v737 = vrot.slane %v721, %v736
      %v739 = vunpack.c.l.s4 1966171168
      %v740 = vunpack.c.0.s8 %v739
      %v741 = vlaneseq
      %v742 = vshrl.u32 %v741, 7
      %v743 = vsub.s32 %v740, %v742
      %v744 = vrot.slane %v722, %v743
      %v746 = vunpack.c.l.s4 1966171168
      %v747 = vunpack.c.0.s8 %v746
      %v748 = vlaneseq
      %v749 = vshrl.u32 %v748, 7
      %v750 = vsub.s32 %v747, %v749
      %v751 = vrot.slane %v723, %v750
      %v752 = vcombine.high %v730, %v730
      %v753 = vcombine.high %v737, %v737
      %v754 = vcombine.high %v744, %v744
      %v755 = vcombine.high %v751, %v751
      %v756 = vcombine.high %v414, %v414
      %v758 = vunpack.c.l.s4 1966171168
      %v759 = vunpack.c.0.s8 %v758
      %v760 = vlaneseq
      %v761 = vshrl.u32 %v760, 7
      %v762 = vsub.s32 %v759, %v761
      %v763 = vrot.slane %v414, %v762
      %v765 = vunpack.c.l.s4 1966171168
      %v766 = vunpack.c.0.s8 %v765
      %v767 = vlaneseq
      %v768 = vshrl.u32 %v767, 7
      %v769 = vsub.s32 %v766, %v768
      %v770 = vrot.slane %v756, %v769
      %v771 = vcombine.high %v763, %v763
      %v772 = vcombine.high %v770, %v770
      %v774 = vunpack.c.l.s4 1966171168
      %v775 = vunpack.c.0.s8 %v774
      %v776 = vlaneseq
      %v777 = vshrl.u32 %v776, 7
      %v778 = vsub.s32 %v775, %v777
      %v779 = vrot.slane %v763, %v778
      %v781 = vunpack.c.l.s4 1966171168
      %v782 = vunpack.c.0.s8 %v781
      %v783 = vlaneseq
      %v784 = vshrl.u32 %v783, 7
      %v785 = vsub.s32 %v782, %v784
      %v786 = vrot.slane %v770, %v785
      %v788 = vunpack.c.l.s4 1966171168
      %v789 = vunpack.c.0.s8 %v788
      %v790 = vlaneseq
      %v791 = vshrl.u32 %v790, 7
      %v792 = vsub.s32 %v789, %v791
      %v793 = vrot.slane %v771, %v792
      %v795 = vunpack.c.l.s4 1966171168
      %v796 = vunpack.c.0.s8 %v795
      %v797 = vlaneseq
      %v798 = vshrl.u32 %v797, 7
      %v799 = vsub.s32 %v796, %v798
      %v800 = vrot.slane %v772, %v799
      %v801 = vcombine.high %v779, %v779
      %v802 = vcombine.high %v786, %v786
      %v803 = vcombine.high %v793, %v793
      %v804 = vcombine.high %v800, %v800
      %v806 = vunpack.c.l.s4 1966171168
      %v807 = vunpack.c.0.s8 %v806
      %v808 = vlaneseq
      %v809 = vshrl.u32 %v808, 7
      %v810 = vsub.s32 %v807, %v809
      %v811 = vrot.slane %v415, %v810
      %v812 = vcombine.high %v811, %v811
      %v814 = vunpack.c.l.s4 1966171168
      %v815 = vunpack.c.0.s8 %v814
      %v816 = vlaneseq
      %v817 = vshrl.u32 %v816, 7
      %v818 = vsub.s32 %v815, %v817
      %v819 = vrot.slane %v811, %v818
      %v821 = vunpack.c.l.s4 1966171168
      %v822 = vunpack.c.0.s8 %v821
      %v823 = vlaneseq
      %v824 = vshrl.u32 %v823, 7
      %v825 = vsub.s32 %v822, %v824
      %v826 = vrot.slane %v812, %v825
      %v1133 = vunpack.c.l.b16 %v416
      %v1134 = vunpack.c.l.b16 %v417
      %v1135 = vunpack.c.l.b16 %v418
      %v1136 = vunpack.c.l.b16 %v419
      %v1137 = vunpack.c.l.b16 %v420
      %v1138 = vunpack.c.l.b16 %v421
      %v1139 = vunpack.c.l.b16 %v422
      %v1140 = vunpack.c.l.b16 %v423
      %v1141 = vunpack.c.l.b16 %v424
      %v1142 = vunpack.c.l.b16 %v425
      %v1143 = vunpack.c.l.b16 %v426
      %v1144 = vunpack.c.l.b16 %v427
      %v1145 = vunpack.c.l.b16 %v428
      %v1146 = vunpack.c.l.b16 %v429
      %v1147 = vunpack.c.l.b16 %v430
      %v1148 = vunpack.c.l.b16 %v431
      %v1149 = vunpack.c.l.b16 %v432
      %v1150 = vunpack.c.l.b16 %v433
      %v1151 = vunpack.c.l.b16 %v434
      %v1152 = vunpack.c.l.b16 %v435
      %v1153 = vunpack.c.l.b16 %v436
      %v1154 = vunpack.c.l.b16 %v437
      %v1155 = vunpack.c.l.b16 %v438
      %v1156 = vunpack.c.l.b16 %v439
      %v1157 = vunpack.c.l.b16 %v440
      %v1158 = vunpack.c.l.b16 %v441
      %v1159 = vunpack.c.l.b16 %v442
      %v1160 = vunpack.c.l.b16 %v443
      %v1161 = vunpack.c.l.b16 %v444
      %v1162 = vunpack.c.l.b16 %v445
      %v1163 = vunpack.c.l.b16 %v446
      %v1164 = vunpack.c.l.b16 %v447
      %v1165 = vunpack.c.l.b16 %v448
      %v1166 = vunpack.c.l.b16 %v449
      %v1167 = vunpack.c.l.b16 %v450
      %v1168 = vunpack.c.l.b16 %v451
      %v1169 = vunpack.c.l.b16 %v452
      %v1170 = vunpack.c.l.b16 %v453
      %v1171 = vunpack.c.l.b16 %v454
      %v1172 = vunpack.c.l.b16 %v455
      %v1173 = vunpack.c.l.b16 %v456
      %v1174 = vunpack.c.l.b16 %v457
      %v1175 = vunpack.c.l.b16 %v458
      %v1176 = vunpack.c.l.b16 %v459
      %v1177 = vunpack.c.l.b16 %v460
      %v1178 = vunpack.c.l.b16 %v461
      %v1179 = vunpack.c.l.b16 %v462
      %v1180 = vunpack.c.l.b16 %v463
      %v1181 = vunpack.c.l.b16 %v464
      %v1182 = vunpack.c.l.b16 %v465
      %v1183 = vunpack.c.l.b16 %v466
      %v1184 = vunpack.c.l.b16 %v467
      %v1185 = vunpack.c.l.b16 %v468
      %v1186 = vunpack.c.l.b16 %v469
      %v1187 = vunpack.c.l.b16 %v470
      %v1188 = vunpack.c.l.b16 %v471
      %v1189 = vunpack.c.l.b16 %v472
      %v1190 = vunpack.c.l.b16 %v473
      %v1191 = vunpack.c.l.b16 %v474
      %v1192 = vunpack.c.l.b16 %v475
      %v1193 = vunpack.c.l.b16 %v476
      %v1194 = vunpack.c.l.b16 %v477
      %v1195 = vunpack.c.l.b16 %v478
      %v1196 = vunpack.c.l.b16 %v479
      %v1197 = vunpack.c.l.b16 %v480
      %v1198 = vunpack.c.l.b16 %v481
      %v1199 = vunpack.c.l.b16 %v482
      %v1200 = vunpack.c.l.b16 %v483
      %v1201 = vunpack.c.l.b16 %v484
      %v1202 = vunpack.c.l.b16 %v485
      %v1203 = vunpack.c.l.b16 %v486
      %v1204 = vunpack.c.l.b16 %v487
      %v1205 = vunpack.c.l.b16 %v488
      %v1206 = vunpack.c.l.b16 %v489
      %v1207 = vunpack.c.l.b16 %v490
      %v1208 = vunpack.c.l.b16 %v491
      %v1209 = vunpack.c.l.b16 %v492
      %v1210 = vunpack.c.l.b16 %v493
      %v1211 = vunpack.c.l.b16 %v494
      %v1212 = vunpack.c.l.b16 %v495
      %v1213 = vunpack.c.l.b16 %v496
      %v1214 = vunpack.c.l.b16 %v497
      %v1215 = vunpack.c.l.b16 %v498
      %v1216 = vunpack.c.l.b16 %v499
      %v1217 = vunpack.c.l.b16 %v500
      %v1218 = vunpack.c.l.b16 %v501
      %v1219 = vunpack.c.l.b16 %v502
      %v1220 = vunpack.c.l.b16 %v503
      %v1221 = vunpack.c.l.b16 %v504
      %v1222 = vunpack.c.l.b16 %v505
      %v1223 = vunpack.c.l.b16 %v506
      %v1224 = vunpack.c.l.b16 %v507
      %v1225 = vunpack.c.l.b16 %v508
      %v1226 = vunpack.c.l.b16 %v509
      %v1227 = vunpack.c.l.b16 %v510
      %v1228 = vunpack.c.l.b16 %v511
      %v1229 = vunpack.c.l.b16 %v512
      %v1230 = vunpack.c.l.b16 %v513
      %v1231 = vunpack.c.l.b16 %v514
      %v1232 = vunpack.c.l.b16 %v515
      %v1233 = vunpack.c.l.b16 %v516
      %v1234 = vunpack.c.l.b16 %v517
      %v1235 = vunpack.c.l.b16 %v518
      %v1236 = vunpack.c.l.b16 %v519
      %v1237 = vunpack.c.l.b16 %v520
      %v1238 = vunpack.c.l.b16 %v521
      %v1239 = vunpack.c.l.b16 %v522
      %v1240 = vunpack.c.l.b16 %v523
      %v1241 = vunpack.c.l.b16 %v524
      %v1242 = vunpack.c.l.b16 %v525
      %v1243 = vunpack.c.l.b16 %v526
      %v1244 = vunpack.c.l.b16 %v527
      %v1245 = vunpack.c.l.b16 %v528
      %v1246 = vunpack.c.l.b16 %v529
      %v1247 = vunpack.c.l.b16 %v530
      %v1248 = vunpack.c.l.b16 %v531
      %v1249 = vunpack.c.l.b16 %v532
      %v1250 = vunpack.c.l.b16 %v533
      %v1251 = vunpack.c.l.b16 %v534
      %v1252 = vunpack.c.l.b16 %v535
      %v1253 = vunpack.c.l.b16 %v536
      %v1254 = vunpack.c.l.b16 %v537
      %v1255 = vunpack.c.l.b16 %v538
      %v1256 = vunpack.c.l.b16 %v539
      %v1257 = vunpack.c.l.b16 %v540
      %v1258 = vunpack.c.l.b16 %v541
      %v1259 = vunpack.c.l.b16 %v542
      %v1260 = vunpack.c.l.b16 %v543
      %v1261 = vunpack.c.l.b16 %v544
      %v1262 = vunpack.c.l.b16 %v545
      %v1263 = vunpack.c.l.b16 %v546
      %v1264 = vunpack.c.l.b16 %v547
      %v1265 = vunpack.c.l.b16 %v548
      %v1266 = vunpack.c.l.b16 %v549
      %v1267 = vunpack.c.l.b16 %v550
      %v1268 = vunpack.c.l.b16 %v551
      %v1269 = vunpack.c.l.b16 %v552
      %v1270 = vunpack.c.l.b16 %v553
      %v1271 = vunpack.c.l.b16 %v554
      %v1272 = vunpack.c.l.b16 %v555
      %v1273 = vunpack.c.l.b16 %v556
      %v1274 = vunpack.c.l.b16 %v557
      %v1275 = vunpack.c.l.b16 %v558
      %v1276 = vunpack.c.l.b16 %v559
      %v1277 = vunpack.c.l.b16 %v560
      %v1278 = vunpack.c.l.b16 %v561
      %v1279 = vunpack.c.l.b16 %v562
      %v1280 = vunpack.c.l.b16 %v563
      %v1281 = vunpack.c.l.b16 %v564
      %v1282 = vunpack.c.l.b16 %v565
      %v1283 = vunpack.c.l.b16 %v566
      %v1284 = vunpack.c.l.b16 %v567
      %v1285 = vunpack.c.l.b16 %v568
      %v1286 = vunpack.c.l.b16 %v569
      %v1287 = vunpack.c.l.b16 %v570
      %v1288 = vunpack.c.l.b16 %v571
      %v1289 = vunpack.c.l.b16 %v572
      %v1290 = vunpack.c.l.b16 %v573
      %v1291 = vunpack.c.l.b16 %v574
      %v1292 = vunpack.c.l.b16 %v575
      %v1293 = vunpack.c.l.b16 %v576
      %v1294 = vunpack.c.l.b16 %v577
      %v1295 = vunpack.c.l.b16 %v578
      %v1296 = vunpack.c.l.b16 %v579
      %v1297 = vunpack.c.l.b16 %v580
      %v1298 = vunpack.c.l.b16 %v581
      %v1299 = vunpack.c.l.b16 %v582
      %v1300 = vunpack.c.l.b16 %v583
      %v1301 = vunpack.c.l.b16 %v584
      %v1302 = vunpack.c.l.b16 %v585
      %v1303 = vunpack.c.l.b16 %v586
      %v1304 = vunpack.c.l.b16 %v587
      %v1305 = vunpack.c.l.b16 %v588
      %v1306 = vunpack.c.l.b16 %v589
      %v1307 = vunpack.c.l.b16 %v590
      %v1308 = vunpack.c.l.b16 %v591
      %v1309 = vunpack.c.l.b16 %v592
      %v1310 = vunpack.c.l.b16 %v593
      %v1311 = vunpack.c.l.b16 %v594
      %v1312 = vunpack.c.l.b16 %v595
      %v1313 = vunpack.c.l.b16 %v596
      %v1314 = vunpack.c.l.b16 %v597
      %v1315 = vunpack.c.l.b16 %v598
      %v1316 = vunpack.c.l.b16 %v599
      %v1317 = vunpack.c.l.b16 %v600
      %v1318 = vunpack.c.l.b16 %v601
      %v1319 = vunpack.c.l.b16 %v602
      %v1320 = vunpack.c.l.b16 %v603
      %v1321 = vunpack.c.l.b16 %v604
      %v1322 = vunpack.c.l.b16 %v605
      %v1323 = vunpack.c.l.b16 %v606
      %v1324 = vunpack.c.l.b16 %v607
      %v1325 = vunpack.c.l.b16 %v608
      %v1326 = vunpack.c.l.b16 %v609
      %v1327 = vunpack.c.l.b16 %v610
      %v1328 = vunpack.c.l.b16 %v611
      %v1329 = vunpack.c.l.b16 %v612
      %v1330 = vunpack.c.l.b16 %v613
      %v1331 = vunpack.c.l.b16 %v614
      %v1332 = vunpack.c.l.b16 %v615
      %v1333 = vunpack.c.l.b16 %v616
      %v1334 = vunpack.c.l.b16 %v617
      %v1335 = vunpack.c.l.b16 %v618
      %v1336 = vunpack.c.l.b16 %v619
      %v1337 = vunpack.c.l.b16 %v620
      %v1338 = vunpack.c.l.b16 %v621
      %v1339 = vunpack.c.l.b16 %v622
      %v1340 = vunpack.c.l.b16 %v623
      %v1341 = vunpack.c.l.b16 %v624
      %v1342 = vunpack.c.l.b16 %v625
      %v1343 = vunpack.c.l.b16 %v626
      %v1344 = vunpack.c.l.b16 %v627
      %v1345 = vunpack.c.l.b16 %v628
      %v1346 = vunpack.c.l.b16 %v629
      %v1347 = vunpack.c.l.b16 %v630
      %v1348 = vunpack.c.l.b16 %v631
      %v1349 = vunpack.c.l.b16 %v632
      %v1350 = vunpack.c.l.b16 %v633
      %v1351 = vunpack.c.l.b16 %v634
      %v1352 = vunpack.c.l.b16 %v635
      %v1353 = vunpack.c.l.b16 %v636
      %v1354 = vunpack.c.l.b16 %v637
      %v1355 = vunpack.c.l.b16 %v638
      %v1356 = vunpack.c.l.b16 %v639
      %v1357 = vunpack.c.l.b16 %v640
      %v1358 = vunpack.c.l.b16 %v641
      %v1359 = vunpack.c.l.b16 %v642
      %v1360 = vunpack.c.l.b16 %v643
      %v1361 = vunpack.c.l.b16 %v644
      %v1362 = vunpack.c.l.b16 %v645
      %v1363 = vunpack.c.l.b16 %v646
      %v1364 = vunpack.c.l.b16 %v647
      %v1365 = vunpack.c.l.b16 %v648
      %v1366 = vunpack.c.l.b16 %v649
      %v1367 = vunpack.c.l.b16 %v650
      %v1368 = vunpack.c.l.b16 %v651
      %v1369 = vunpack.c.l.b16 %v652
      %v1370 = vunpack.c.l.b16 %v653
      %v1371 = vunpack.c.l.b16 %v654
      %v1372 = vunpack.c.l.b16 %v655
      %v1373 = vunpack.c.l.b16 %v656
      %v1374 = vunpack.c.l.b16 %v657
      %v1375 = vunpack.c.l.b16 %v658
      %v1376 = vunpack.c.l.b16 %v659
      %v1377 = vunpack.c.l.b16 %v660
      %v1378 = vunpack.c.l.b16 %v661
      %v1379 = vunpack.c.l.b16 %v662
      %v1380 = vunpack.c.l.b16 %v663
      %v1381 = vunpack.c.l.b16 %v664
      %v1382 = vunpack.c.l.b16 %v665
      %v1383 = vunpack.c.l.b16 %v666
      %v1384 = vunpack.c.l.b16 %v667
      %v1385 = vunpack.c.l.b16 %v668
      %v1386 = vunpack.c.l.b16 %v669
      %v1387 = vunpack.c.l.b16 %v670
      %v1388 = vunpack.c.l.b16 %v671
      %v1389 = vunpack.c.l.b16 %v672
      %v1390 = vunpack.c.l.b16 %v673
      %v1391 = vunpack.c.l.b16 %v674
      %v1392 = vunpack.c.l.b16 %v675
      %v1393 = vunpack.c.l.b16 %v676
      %v1394 = vunpack.c.l.b16 %v677
      %v1395 = vunpack.c.l.b16 %v678
      %v1396 = vunpack.c.l.b16 %v679
      %v1397 = vunpack.c.l.b16 %v680
      %v1398 = vunpack.c.l.b16 %v681
      %v1399 = vunpack.c.l.b16 %v682
      %v1400 = vunpack.c.l.b16 %v683
      %v1401 = vunpack.c.l.b16 %v684
      %v1402 = vunpack.c.l.b16 %v685
      %v1403 = vunpack.c.l.b16 %v686
      %v1404 = vunpack.c.l.b16 %v687
      %v1405 = vunpack.c.l.b16 %v688
      %v1406 = vunpack.c.l.b16 %v689
      %v1407 = vunpack.c.l.b16 %v690
      %v1408 = vunpack.c.l.b16 %v691
      %v1409 = vunpack.c.l.b16 %v692
      %v1410 = vunpack.c.l.b16 %v693
      %v1411 = vunpack.c.l.b16 %v694
      %v1412 = vunpack.c.l.b16 %v695
      %v1413 = vunpack.c.l.b16 %v696
      %v1414 = vunpack.c.l.b16 %v697
      %v1415 = vunpack.c.l.b16 %v698
      %v1416 = vunpack.c.l.b16 %v699
      %v1417 = vunpack.c.l.b16 %v700
      %v1418 = vunpack.c.l.b16 %v701
      %v1419 = vunpack.c.l.b16 %v702
      %v1420 = vunpack.c.l.b16 %v703
      %v1421 = vpack.c.b16 %v1134, %v1133
      %v1422 = vpack.c.b16 %v1136, %v1135
      %v1423 = vpack.c.b16 %v1138, %v1137
      %v1424 = vpack.c.b16 %v1140, %v1139
      %v1425 = vpack.c.b16 %v1142, %v1141
      %v1426 = vpack.c.b16 %v1144, %v1143
      %v1427 = vpack.c.b16 %v1146, %v1145
      %v1428 = vpack.c.b16 %v1148, %v1147
      %v1429 = vpack.c.b16 %v1150, %v1149
      %v1430 = vpack.c.b16 %v1152, %v1151
      %v1431 = vpack.c.b16 %v1154, %v1153
      %v1432 = vpack.c.b16 %v1156, %v1155
      %v1433 = vpack.c.b16 %v1158, %v1157
      %v1434 = vpack.c.b16 %v1160, %v1159
      %v1435 = vpack.c.b16 %v1162, %v1161
      %v1436 = vpack.c.b16 %v1164, %v1163
      %v1437 = vpack.c.b16 %v1166, %v1165
      %v1438 = vpack.c.b16 %v1168, %v1167
      %v1439 = vpack.c.b16 %v1170, %v1169
      %v1440 = vpack.c.b16 %v1172, %v1171
      %v1441 = vpack.c.b16 %v1174, %v1173
      %v1442 = vpack.c.b16 %v1176, %v1175
      %v1443 = vpack.c.b16 %v1178, %v1177
      %v1444 = vpack.c.b16 %v1180, %v1179
      %v1445 = vpack.c.b16 %v1182, %v1181
      %v1446 = vpack.c.b16 %v1184, %v1183
      %v1447 = vpack.c.b16 %v1186, %v1185
      %v1448 = vpack.c.b16 %v1188, %v1187
      %v1449 = vpack.c.b16 %v1190, %v1189
      %v1450 = vpack.c.b16 %v1192, %v1191
      %v1451 = vpack.c.b16 %v1194, %v1193
      %v1452 = vpack.c.b16 %v1196, %v1195
      %v1453 = vpack.c.b16 %v1198, %v1197
      %v1454 = vpack.c.b16 %v1200, %v1199
      %v1455 = vpack.c.b16 %v1202, %v1201
      %v1456 = vpack.c.b16 %v1204, %v1203
      %v1457 = vpack.c.b16 %v1206, %v1205
      %v1458 = vpack.c.b16 %v1208, %v1207
      %v1459 = vpack.c.b16 %v1210, %v1209
      %v1460 = vpack.c.b16 %v1212, %v1211
      %v1461 = vpack.c.b16 %v1214, %v1213
      %v1462 = vpack.c.b16 %v1216, %v1215
      %v1463 = vpack.c.b16 %v1218, %v1217
      %v1464 = vpack.c.b16 %v1220, %v1219
      %v1465 = vpack.c.b16 %v1222, %v1221
      %v1466 = vpack.c.b16 %v1224, %v1223
      %v1467 = vpack.c.b16 %v1226, %v1225
      %v1468 = vpack.c.b16 %v1228, %v1227
      %v1469 = vpack.c.b16 %v1230, %v1229
      %v1470 = vpack.c.b16 %v1232, %v1231
      %v1471 = vpack.c.b16 %v1234, %v1233
      %v1472 = vpack.c.b16 %v1236, %v1235
      %v1473 = vpack.c.b16 %v1238, %v1237
      %v1474 = vpack.c.b16 %v1240, %v1239
      %v1475 = vpack.c.b16 %v1242, %v1241
      %v1476 = vpack.c.b16 %v1244, %v1243
      %v1477 = vpack.c.b16 %v1246, %v1245
      %v1478 = vpack.c.b16 %v1248, %v1247
      %v1479 = vpack.c.b16 %v1250, %v1249
      %v1480 = vpack.c.b16 %v1252, %v1251
      %v1481 = vpack.c.b16 %v1254, %v1253
      %v1482 = vpack.c.b16 %v1256, %v1255
      %v1483 = vpack.c.b16 %v1258, %v1257
      %v1484 = vpack.c.b16 %v1260, %v1259
      %v1485 = vpack.c.b16 %v1262, %v1261
      %v1486 = vpack.c.b16 %v1264, %v1263
      %v1487 = vpack.c.b16 %v1266, %v1265
      %v1488 = vpack.c.b16 %v1268, %v1267
      %v1489 = vpack.c.b16 %v1270, %v1269
      %v1490 = vpack.c.b16 %v1272, %v1271
      %v1491 = vpack.c.b16 %v1274, %v1273
      %v1492 = vpack.c.b16 %v1276, %v1275
      %v1493 = vpack.c.b16 %v1278, %v1277
      %v1494 = vpack.c.b16 %v1280, %v1279
      %v1495 = vpack.c.b16 %v1282, %v1281
      %v1496 = vpack.c.b16 %v1284, %v1283
      %v1497 = vpack.c.b16 %v1286, %v1285
      %v1498 = vpack.c.b16 %v1288, %v1287
      %v1499 = vpack.c.b16 %v1290, %v1289
      %v1500 = vpack.c.b16 %v1292, %v1291
      %v1501 = vpack.c.b16 %v1294, %v1293
      %v1502 = vpack.c.b16 %v1296, %v1295
      %v1503 = vpack.c.b16 %v1298, %v1297
      %v1504 = vpack.c.b16 %v1300, %v1299
      %v1505 = vpack.c.b16 %v1302, %v1301
      %v1506 = vpack.c.b16 %v1304, %v1303
      %v1507 = vpack.c.b16 %v1306, %v1305
      %v1508 = vpack.c.b16 %v1308, %v1307
      %v1509 = vpack.c.b16 %v1310, %v1309
      %v1510 = vpack.c.b16 %v1312, %v1311
      %v1511 = vpack.c.b16 %v1314, %v1313
      %v1512 = vpack.c.b16 %v1316, %v1315
      %v1513 = vpack.c.b16 %v1318, %v1317
      %v1514 = vpack.c.b16 %v1320, %v1319
      %v1515 = vpack.c.b16 %v1322, %v1321
      %v1516 = vpack.c.b16 %v1324, %v1323
      %v1517 = vpack.c.b16 %v1326, %v1325
      %v1518 = vpack.c.b16 %v1328, %v1327
      %v1519 = vpack.c.b16 %v1330, %v1329
      %v1520 = vpack.c.b16 %v1332, %v1331
      %v1521 = vpack.c.b16 %v1334, %v1333
      %v1522 = vpack.c.b16 %v1336, %v1335
      %v1523 = vpack.c.b16 %v1338, %v1337
      %v1524 = vpack.c.b16 %v1340, %v1339
      %v1525 = vpack.c.b16 %v1342, %v1341
      %v1526 = vpack.c.b16 %v1344, %v1343
      %v1527 = vpack.c.b16 %v1346, %v1345
      %v1528 = vpack.c.b16 %v1348, %v1347
      %v1529 = vpack.c.b16 %v1350, %v1349
      %v1530 = vpack.c.b16 %v1352, %v1351
      %v1531 = vpack.c.b16 %v1354, %v1353
      %v1532 = vpack.c.b16 %v1356, %v1355
      %v1533 = vpack.c.b16 %v1358, %v1357
      %v1534 = vpack.c.b16 %v1360, %v1359
      %v1535 = vpack.c.b16 %v1362, %v1361
      %v1536 = vpack.c.b16 %v1364, %v1363
      %v1537 = vpack.c.b16 %v1366, %v1365
      %v1538 = vpack.c.b16 %v1368, %v1367
      %v1539 = vpack.c.b16 %v1370, %v1369
      %v1540 = vpack.c.b16 %v1372, %v1371
      %v1541 = vpack.c.b16 %v1374, %v1373
      %v1542 = vpack.c.b16 %v1376, %v1375
      %v1543 = vpack.c.b16 %v1378, %v1377
      %v1544 = vpack.c.b16 %v1380, %v1379
      %v1545 = vpack.c.b16 %v1382, %v1381
      %v1546 = vpack.c.b16 %v1384, %v1383
      %v1547 = vpack.c.b16 %v1386, %v1385
      %v1548 = vpack.c.b16 %v1388, %v1387
      %v1549 = vpack.c.b16 %v1390, %v1389
      %v1550 = vpack.c.b16 %v1392, %v1391
      %v1551 = vpack.c.b16 %v1394, %v1393
      %v1552 = vpack.c.b16 %v1396, %v1395
      %v1553 = vpack.c.b16 %v1398, %v1397
      %v1554 = vpack.c.b16 %v1400, %v1399
      %v1555 = vpack.c.b16 %v1402, %v1401
      %v1556 = vpack.c.b16 %v1404, %v1403
      %v1557 = vpack.c.b16 %v1406, %v1405
      %v1558 = vpack.c.b16 %v1408, %v1407
      %v1559 = vpack.c.b16 %v1410, %v1409
      %v1560 = vpack.c.b16 %v1412, %v1411
      %v1561 = vpack.c.b16 %v1414, %v1413
      %v1562 = vpack.c.b16 %v1416, %v1415
      %v1563 = vpack.c.b16 %v1418, %v1417
      %v1564 = vpack.c.b16 %v1420, %v1419
      %1709 = vmatprep.subr.bf16.mxu0 0
      %1710 = vmatpush1.bf16.msra.mxu0 %v1421
      %1711 = vmatprep.subr.bf16.mxu0 0
      %1712 = vmatpush1.bf16.msra.mxu0 %v1422
      %1713 = vmatprep.subr.bf16.mxu0 0
      %1714 = vmatpush1.bf16.msra.mxu0 %v1423
      %1715 = vmatprep.subr.bf16.mxu0 0
      %1716 = vmatpush1.bf16.msra.mxu0 %v1424
      %1717 = vmatprep.subr.bf16.mxu0 0
      %1718 = vmatpush1.bf16.msra.mxu0 %v1425
      %1719 = vmatprep.subr.bf16.mxu0 0
      %1720 = vmatpush1.bf16.msra.mxu0 %v1426
      %1721 = vmatprep.subr.bf16.mxu0 0
      %1722 = vmatpush1.bf16.msra.mxu0 %v1427
      %1723 = vmatprep.subr.bf16.mxu0 0
      %1724 = vmatpush1.bf16.msra.mxu0 %v1428
      %1725 = vmatprep.subr.bf16.mxu0 0
      %1726 = vmatpush1.bf16.msra.mxu0 %v1429
      %1727 = vmatprep.subr.bf16.mxu0 0
      %1728 = vmatpush1.bf16.msra.mxu0 %v1430
      %1729 = vmatprep.subr.bf16.mxu0 0
      %1730 = vmatpush1.bf16.msra.mxu0 %v1431
      %1731 = vmatprep.subr.bf16.mxu0 0
      %1732 = vmatpush1.bf16.msra.mxu0 %v1432
      %1733 = vmatprep.subr.bf16.mxu0 0
      %1734 = vmatpush1.bf16.msra.mxu0 %v1433
      %1735 = vmatprep.subr.bf16.mxu0 0
      %1736 = vmatpush1.bf16.msra.mxu0 %v1434
      %1737 = vmatprep.subr.bf16.mxu0 0
      %1738 = vmatpush1.bf16.msra.mxu0 %v1435
      %1739 = vmatprep.subr.bf16.mxu0 0
      %1740 = vmatpush1.bf16.msra.mxu0 %v1436
      %1741 = vmatprep.mubr.bf16.mxu0 %v744
      %1742 = vmatmul.mubr.bf16.gmra.mrb[0].mxu0 %v730
      %v1743 = vpop.f32.mrb[0].mxu0
      %v1744 = vadd.f32 0.0, %v1743
      %v1745 = vpop.f32.mrb[0].mxu0
      %v1746 = vpop.f32.mrb[0].mxu0
      %v1747 = vpop.f32.mrb[0].mxu0
      %1748 = vdwg.mxu0
      %1749 = vmatprep.subr.bf16.mxu0 0
      %1750 = vmatpush1.bf16.msra.mxu0 %v1437
      %1751 = vmatprep.subr.bf16.mxu0 0
      %1752 = vmatpush1.bf16.msra.mxu0 %v1438
      %1753 = vmatprep.subr.bf16.mxu0 0
      %1754 = vmatpush1.bf16.msra.mxu0 %v1439
      %1755 = vmatprep.subr.bf16.mxu0 0
      %1756 = vmatpush1.bf16.msra.mxu0 %v1440
      %1757 = vmatprep.subr.bf16.mxu0 0
      %1758 = vmatpush1.bf16.msra.mxu0 %v1441
      %1759 = vmatprep.subr.bf16.mxu0 0
      %1760 = vmatpush1.bf16.msra.mxu0 %v1442
      %1761 = vmatprep.subr.bf16.mxu0 0
      %1762 = vmatpush1.bf16.msra.mxu0 %v1443
      %1763 = vmatprep.subr.bf16.mxu0 0
      %1764 = vmatpush1.bf16.msra.mxu0 %v1444
      %1765 = vmatprep.subr.bf16.mxu0 0
      %1766 = vmatpush1.bf16.msra.mxu0 %v1445
      %1767 = vmatprep.subr.bf16.mxu0 0
      %1768 = vmatpush1.bf16.msra.mxu0 %v1446
      %1769 = vmatprep.subr.bf16.mxu0 0
      %1770 = vmatpush1.bf16.msra.mxu0 %v1447
      %1771 = vmatprep.subr.bf16.mxu0 0
      %1772 = vmatpush1.bf16.msra.mxu0 %v1448
      %1773 = vmatprep.subr.bf16.mxu0 0
      %1774 = vmatpush1.bf16.msra.mxu0 %v1449
      %1775 = vmatprep.subr.bf16.mxu0 0
      %1776 = vmatpush1.bf16.msra.mxu0 %v1450
      %1777 = vmatprep.subr.bf16.mxu0 0
      %1778 = vmatpush1.bf16.msra.mxu0 %v1451
      %1779 = vmatprep.subr.bf16.mxu0 0
      %1780 = vmatpush1.bf16.msra.mxu0 %v1452
      %1781 = vmatprep.mubr.bf16.mxu0 %v754
      %1782 = vmatmul.mubr.bf16.gmra.mrb[0].mxu0 %v752
      %v1783 = vpop.f32.mrb[0].mxu0
      %v1784 = vadd.f32 %v1744, %v1783
      %v1785 = vpop.f32.mrb[0].mxu0
      %v1786 = vpop.f32.mrb[0].mxu0
      %v1787 = vpop.f32.mrb[0].mxu0
      %1788 = vdwg.mxu0
      %1789 = vmatprep.subr.bf16.mxu0 0
      %1790 = vmatpush1.bf16.msra.mxu0 %v1453
      %1791 = vmatprep.subr.bf16.mxu0 0
      %1792 = vmatpush1.bf16.msra.mxu0 %v1454
      %1793 = vmatprep.subr.bf16.mxu0 0
      %1794 = vmatpush1.bf16.msra.mxu0 %v1455
      %1795 = vmatprep.subr.bf16.mxu0 0
      %1796 = vmatpush1.bf16.msra.mxu0 %v1456
      %1797 = vmatprep.subr.bf16.mxu0 0
      %1798 = vmatpush1.bf16.msra.mxu0 %v1457
      %1799 = vmatprep.subr.bf16.mxu0 0
      %1800 = vmatpush1.bf16.msra.mxu0 %v1458
      %1801 = vmatprep.subr.bf16.mxu0 0
      %1802 = vmatpush1.bf16.msra.mxu0 %v1459
      %1803 = vmatprep.subr.bf16.mxu0 0
      %1804 = vmatpush1.bf16.msra.mxu0 %v1460
      %1805 = vmatprep.subr.bf16.mxu0 0
      %1806 = vmatpush1.bf16.msra.mxu0 %v1461
      %1807 = vmatprep.subr.bf16.mxu0 0
      %1808 = vmatpush1.bf16.msra.mxu0 %v1462
      %1809 = vmatprep.subr.bf16.mxu0 0
      %1810 = vmatpush1.bf16.msra.mxu0 %v1463
      %1811 = vmatprep.subr.bf16.mxu0 0
      %1812 = vmatpush1.bf16.msra.mxu0 %v1464
      %1813 = vmatprep.subr.bf16.mxu0 0
      %1814 = vmatpush1.bf16.msra.mxu0 %v1465
      %1815 = vmatprep.subr.bf16.mxu0 0
      %1816 = vmatpush1.bf16.msra.mxu0 %v1466
      %1817 = vmatprep.subr.bf16.mxu0 0
      %1818 = vmatpush1.bf16.msra.mxu0 %v1467
      %1819 = vmatprep.subr.bf16.mxu0 0
      %1820 = vmatpush1.bf16.msra.mxu0 %v1468
      %1821 = vmatprep.mubr.bf16.mxu0 %v751
      %1822 = vmatmul.mubr.bf16.gmra.mrb[0].mxu0 %v737
      %v1823 = vpop.f32.mrb[0].mxu0
      %v1824 = vadd.f32 %v1784, %v1823
      %v1825 = vpop.f32.mrb[0].mxu0
      %v1826 = vpop.f32.mrb[0].mxu0
      %v1827 = vpop.f32.mrb[0].mxu0
      %1828 = vdwg.mxu0
      %1829 = vmatprep.subr.bf16.mxu0 0
      %1830 = vmatpush1.bf16.msra.mxu0 %v1469
      %1831 = vmatprep.subr.bf16.mxu0 0
      %1832 = vmatpush1.bf16.msra.mxu0 %v1470
      %1833 = vmatprep.subr.bf16.mxu0 0
      %1834 = vmatpush1.bf16.msra.mxu0 %v1471
      %1835 = vmatprep.subr.bf16.mxu0 0
      %1836 = vmatpush1.bf16.msra.mxu0 %v1472
      %1837 = vmatprep.subr.bf16.mxu0 0
      %1838 = vmatpush1.bf16.msra.mxu0 %v1473
      %1839 = vmatprep.subr.bf16.mxu0 0
      %1840 = vmatpush1.bf16.msra.mxu0 %v1474
      %1841 = vmatprep.subr.bf16.mxu0 0
      %1842 = vmatpush1.bf16.msra.mxu0 %v1475
      %1843 = vmatprep.subr.bf16.mxu0 0
      %1844 = vmatpush1.bf16.msra.mxu0 %v1476
      %1845 = vmatprep.subr.bf16.mxu0 0
      %1846 = vmatpush1.bf16.msra.mxu0 %v1477
      %1847 = vmatprep.subr.bf16.mxu0 0
      %1848 = vmatpush1.bf16.msra.mxu0 %v1478
      %1849 = vmatprep.subr.bf16.mxu0 0
      %1850 = vmatpush1.bf16.msra.mxu0 %v1479
      %1851 = vmatprep.subr.bf16.mxu0 0
      %1852 = vmatpush1.bf16.msra.mxu0 %v1480
      %1853 = vmatprep.subr.bf16.mxu0 0
      %1854 = vmatpush1.bf16.msra.mxu0 %v1481
      %1855 = vmatprep.subr.bf16.mxu0 0
      %1856 = vmatpush1.bf16.msra.mxu0 %v1482
      %1857 = vmatprep.subr.bf16.mxu0 0
      %1858 = vmatpush1.bf16.msra.mxu0 %v1483
      %1859 = vmatprep.subr.bf16.mxu0 0
      %1860 = vmatpush1.bf16.msra.mxu0 %v1484
      %1861 = vmatprep.mubr.bf16.mxu0 %v755
      %1862 = vmatmul.mubr.bf16.gmra.mrb[0].mxu0 %v753
      %v1863 = vpop.f32.mrb[0].mxu0
      %v1864 = vadd.f32 %v1824, %v1863
      %v1865 = vpop.f32.mrb[0].mxu0
      %v1866 = vpop.f32.mrb[0].mxu0
      %v1867 = vpop.f32.mrb[0].mxu0
      %1868 = vdwg.mxu0
      %1869 = vmatprep.subr.bf16.mxu0 0
      %1870 = vmatpush1.bf16.msra.mxu0 %v1485
      %1871 = vmatprep.subr.bf16.mxu0 0
      %1872 = vmatpush1.bf16.msra.mxu0 %v1486
      %1873 = vmatprep.subr.bf16.mxu0 0
      %1874 = vmatpush1.bf16.msra.mxu0 %v1487
      %1875 = vmatprep.subr.bf16.mxu0 0
      %1876 = vmatpush1.bf16.msra.mxu0 %v1488
      %1877 = vmatprep.subr.bf16.mxu0 0
      %1878 = vmatpush1.bf16.msra.mxu0 %v1489
      %1879 = vmatprep.subr.bf16.mxu0 0
      %1880 = vmatpush1.bf16.msra.mxu0 %v1490
      %1881 = vmatprep.subr.bf16.mxu0 0
      %1882 = vmatpush1.bf16.msra.mxu0 %v1491
      %1883 = vmatprep.subr.bf16.mxu0 0
      %1884 = vmatpush1.bf16.msra.mxu0 %v1492
      %1885 = vmatprep.subr.bf16.mxu0 0
      %1886 = vmatpush1.bf16.msra.mxu0 %v1493
      %1887 = vmatprep.subr.bf16.mxu0 0
      %1888 = vmatpush1.bf16.msra.mxu0 %v1494
      %1889 = vmatprep.subr.bf16.mxu0 0
      %1890 = vmatpush1.bf16.msra.mxu0 %v1495
      %1891 = vmatprep.subr.bf16.mxu0 0
      %1892 = vmatpush1.bf16.msra.mxu0 %v1496
      %1893 = vmatprep.subr.bf16.mxu0 0
      %1894 = vmatpush1.bf16.msra.mxu0 %v1497
      %1895 = vmatprep.subr.bf16.mxu0 0
      %1896 = vmatpush1.bf16.msra.mxu0 %v1498
      %1897 = vmatprep.subr.bf16.mxu0 0
      %1898 = vmatpush1.bf16.msra.mxu0 %v1499
      %1899 = vmatprep.subr.bf16.mxu0 0
      %1900 = vmatpush1.bf16.msra.mxu0 %v1500
      %1901 = vmatprep.mubr.bf16.mxu0 %v793
      %1902 = vmatmul.mubr.bf16.gmra.mrb[0].mxu0 %v779
      %v1903 = vpop.f32.mrb[0].mxu0
      %v1904 = vadd.f32 %v1864, %v1903
      %v1905 = vpop.f32.mrb[0].mxu0
      %v1906 = vpop.f32.mrb[0].mxu0
      %v1907 = vpop.f32.mrb[0].mxu0
      %1908 = vdwg.mxu0
      %1909 = vmatprep.subr.bf16.mxu0 0
      %1910 = vmatpush1.bf16.msra.mxu0 %v1501
      %1911 = vmatprep.subr.bf16.mxu0 0
      %1912 = vmatpush1.bf16.msra.mxu0 %v1502
      %1913 = vmatprep.subr.bf16.mxu0 0
      %1914 = vmatpush1.bf16.msra.mxu0 %v1503
      %1915 = vmatprep.subr.bf16.mxu0 0
      %1916 = vmatpush1.bf16.msra.mxu0 %v1504
      %1917 = vmatprep.subr.bf16.mxu0 0
      %1918 = vmatpush1.bf16.msra.mxu0 %v1505
      %1919 = vmatprep.subr.bf16.mxu0 0
      %1920 = vmatpush1.bf16.msra.mxu0 %v1506
      %1921 = vmatprep.subr.bf16.mxu0 0
      %1922 = vmatpush1.bf16.msra.mxu0 %v1507
      %1923 = vmatprep.subr.bf16.mxu0 0
      %1924 = vmatpush1.bf16.msra.mxu0 %v1508
      %1925 = vmatprep.subr.bf16.mxu0 0
      %1926 = vmatpush1.bf16.msra.mxu0 %v1509
      %1927 = vmatprep.subr.bf16.mxu0 0
      %1928 = vmatpush1.bf16.msra.mxu0 %v1510
      %1929 = vmatprep.subr.bf16.mxu0 0
      %1930 = vmatpush1.bf16.msra.mxu0 %v1511
      %1931 = vmatprep.subr.bf16.mxu0 0
      %1932 = vmatpush1.bf16.msra.mxu0 %v1512
      %1933 = vmatprep.subr.bf16.mxu0 0
      %1934 = vmatpush1.bf16.msra.mxu0 %v1513
      %1935 = vmatprep.subr.bf16.mxu0 0
      %1936 = vmatpush1.bf16.msra.mxu0 %v1514
      %1937 = vmatprep.subr.bf16.mxu0 0
      %1938 = vmatpush1.bf16.msra.mxu0 %v1515
      %1939 = vmatprep.subr.bf16.mxu0 0
      %1940 = vmatpush1.bf16.msra.mxu0 %v1516
      %1941 = vmatprep.mubr.bf16.mxu0 %v803
      %1942 = vmatmul.mubr.bf16.gmra.mrb[0].mxu0 %v801
      %v1943 = vpop.f32.mrb[0].mxu0
      %v1944 = vadd.f32 %v1904, %v1943
      %v1945 = vpop.f32.mrb[0].mxu0
      %v1946 = vpop.f32.mrb[0].mxu0
      %v1947 = vpop.f32.mrb[0].mxu0
      %1948 = vdwg.mxu0
      %1949 = vmatprep.subr.bf16.mxu0 0
      %1950 = vmatpush1.bf16.msra.mxu0 %v1517
      %1951 = vmatprep.subr.bf16.mxu0 0
      %1952 = vmatpush1.bf16.msra.mxu0 %v1518
      %1953 = vmatprep.subr.bf16.mxu0 0
      %1954 = vmatpush1.bf16.msra.mxu0 %v1519
      %1955 = vmatprep.subr.bf16.mxu0 0
      %1956 = vmatpush1.bf16.msra.mxu0 %v1520
      %1957 = vmatprep.subr.bf16.mxu0 0
      %1958 = vmatpush1.bf16.msra.mxu0 %v1521
      %1959 = vmatprep.subr.bf16.mxu0 0
      %1960 = vmatpush1.bf16.msra.mxu0 %v1522
      %1961 = vmatprep.subr.bf16.mxu0 0
      %1962 = vmatpush1.bf16.msra.mxu0 %v1523
      %1963 = vmatprep.subr.bf16.mxu0 0
      %1964 = vmatpush1.bf16.msra.mxu0 %v1524
      %1965 = vmatprep.subr.bf16.mxu0 0
      %1966 = vmatpush1.bf16.msra.mxu0 %v1525
      %1967 = vmatprep.subr.bf16.mxu0 0
      %1968 = vmatpush1.bf16.msra.mxu0 %v1526
      %1969 = vmatprep.subr.bf16.mxu0 0
      %1970 = vmatpush1.bf16.msra.mxu0 %v1527
      %1971 = vmatprep.subr.bf16.mxu0 0
      %1972 = vmatpush1.bf16.msra.mxu0 %v1528
      %1973 = vmatprep.subr.bf16.mxu0 0
      %1974 = vmatpush1.bf16.msra.mxu0 %v1529
      %1975 = vmatprep.subr.bf16.mxu0 0
      %1976 = vmatpush1.bf16.msra.mxu0 %v1530
      %1977 = vmatprep.subr.bf16.mxu0 0
      %1978 = vmatpush1.bf16.msra.mxu0 %v1531
      %1979 = vmatprep.subr.bf16.mxu0 0
      %1980 = vmatpush1.bf16.msra.mxu0 %v1532
      %1981 = vmatprep.mubr.bf16.mxu0 %v800
      %1982 = vmatmul.mubr.bf16.gmra.mrb[0].mxu0 %v786
      %v1983 = vpop.f32.mrb[0].mxu0
      %v1984 = vadd.f32 %v1944, %v1983
      %v1985 = vpop.f32.mrb[0].mxu0
      %v1986 = vpop.f32.mrb[0].mxu0
      %v1987 = vpop.f32.mrb[0].mxu0
      %1988 = vdwg.mxu0
      %1989 = vmatprep.subr.bf16.mxu0 0
      %1990 = vmatpush1.bf16.msra.mxu0 %v1533
      %1991 = vmatprep.subr.bf16.mxu0 0
      %1992 = vmatpush1.bf16.msra.mxu0 %v1534
      %1993 = vmatprep.subr.bf16.mxu0 0
      %1994 = vmatpush1.bf16.msra.mxu0 %v1535
      %1995 = vmatprep.subr.bf16.mxu0 0
      %1996 = vmatpush1.bf16.msra.mxu0 %v1536
      %1997 = vmatprep.subr.bf16.mxu0 0
      %1998 = vmatpush1.bf16.msra.mxu0 %v1537
      %1999 = vmatprep.subr.bf16.mxu0 0
      %2000 = vmatpush1.bf16.msra.mxu0 %v1538
      %2001 = vmatprep.subr.bf16.mxu0 0
      %2002 = vmatpush1.bf16.msra.mxu0 %v1539
      %2003 = vmatprep.subr.bf16.mxu0 0
      %2004 = vmatpush1.bf16.msra.mxu0 %v1540
      %2005 = vmatprep.subr.bf16.mxu0 0
      %2006 = vmatpush1.bf16.msra.mxu0 %v1541
      %2007 = vmatprep.subr.bf16.mxu0 0
      %2008 = vmatpush1.bf16.msra.mxu0 %v1542
      %2009 = vmatprep.subr.bf16.mxu0 0
      %2010 = vmatpush1.bf16.msra.mxu0 %v1543
      %2011 = vmatprep.subr.bf16.mxu0 0
      %2012 = vmatpush1.bf16.msra.mxu0 %v1544
      %2013 = vmatprep.subr.bf16.mxu0 0
      %2014 = vmatpush1.bf16.msra.mxu0 %v1545
      %2015 = vmatprep.subr.bf16.mxu0 0
      %2016 = vmatpush1.bf16.msra.mxu0 %v1546
      %2017 = vmatprep.subr.bf16.mxu0 0
      %2018 = vmatpush1.bf16.msra.mxu0 %v1547
      %2019 = vmatprep.subr.bf16.mxu0 0
      %2020 = vmatpush1.bf16.msra.mxu0 %v1548
      %2021 = vmatprep.mubr.bf16.mxu0 %v804
      %2022 = vmatmul.mubr.bf16.gmra.mrb[0].mxu0 %v802
      %v2023 = vpop.f32.mrb[0].mxu0
      %v2024 = vadd.f32 %v1984, %v2023
      %v2025 = vpop.f32.mrb[0].mxu0
      %v2026 = vpop.f32.mrb[0].mxu0
      %v2027 = vpop.f32.mrb[0].mxu0
      %2028 = vdwg.mxu0
      %2029 = vmatprep.subr.bf16.mxu0 0
      %2030 = vmatpush1.bf16.msra.mxu0 %v1549
      %2031 = vmatprep.subr.bf16.mxu0 0
      %2032 = vmatpush1.bf16.msra.mxu0 %v1550
      %2033 = vmatprep.subr.bf16.mxu0 0
      %2034 = vmatpush1.bf16.msra.mxu0 %v1551
      %2035 = vmatprep.subr.bf16.mxu0 0
      %2036 = vmatpush1.bf16.msra.mxu0 %v1552
      %2037 = vmatprep.subr.bf16.mxu0 0
      %2038 = vmatpush1.bf16.msra.mxu0 %v1553
      %2039 = vmatprep.subr.bf16.mxu0 0
      %2040 = vmatpush1.bf16.msra.mxu0 %v1554
      %2041 = vmatprep.subr.bf16.mxu0 0
      %2042 = vmatpush1.bf16.msra.mxu0 %v1555
      %2043 = vmatprep.subr.bf16.mxu0 0
      %2044 = vmatpush1.bf16.msra.mxu0 %v1556
      %2045 = vmatprep.subr.bf16.mxu0 0
      %2046 = vmatpush1.bf16.msra.mxu0 %v1557
      %2047 = vmatprep.subr.bf16.mxu0 0
      %2048 = vmatpush1.bf16.msra.mxu0 %v1558
      %2049 = vmatprep.subr.bf16.mxu0 0
      %2050 = vmatpush1.bf16.msra.mxu0 %v1559
      %2051 = vmatprep.subr.bf16.mxu0 0
      %2052 = vmatpush1.bf16.msra.mxu0 %v1560
      %2053 = vmatprep.subr.bf16.mxu0 0
      %2054 = vmatpush1.bf16.msra.mxu0 %v1561
      %2055 = vmatprep.subr.bf16.mxu0 0
      %2056 = vmatpush1.bf16.msra.mxu0 %v1562
      %2057 = vmatprep.subr.bf16.mxu0 0
      %2058 = vmatpush1.bf16.msra.mxu0 %v1563
      %2059 = vmatprep.subr.bf16.mxu0 0
      %2060 = vmatpush1.bf16.msra.mxu0 %v1564
      %2061 = vmatprep.mubr.bf16.mxu0 %v826
      %2062 = vmatmul.mubr.bf16.gmra.mrb[0].mxu0 %v819
      %v2063 = vpop.f32.mrb[0].mxu0
      %v2064 = vadd.f32 %v2024, %v2063
      %v2065 = vpop.f32.mrb[0].mxu0
      %v2066 = vpop.f32.mrb[0].mxu0
      %v2067 = vpop.f32.mrb[0].mxu0
      %2068 = vdwg.mxu0
      %v2069 = vadd.f32 %v412, %v2064
      %2070 = vst [vmem:[#allocation2] sm:$0x3] %v2069
      %p2071 = scmp.eq.s32.totalorder %s23, 3
      // Predicated region
      $region53: #{qnet_forward.11} parent=47 // pred_check
        %p2072 = pneg %p2071
      $region54: #{qnet_forward.11} parent=47 // pred_check_branch
        %2074 = sbr.rel (%p2072) target = $region56
      $region55: #{qnet_forward.11} parent=47 // pred_region
        %v2075 = vld [vmem:[#allocation2] sm:$0x3]
        %v2076 = vld [vmem:[%s385] sm:$0x1]
        %v2078 = vlaneseq
        %v2079 = vshrl.u32 %v2078, 7
        %v2080 = vsub.s32 0, %v2079
        %v2081 = vrot.slane %v2076, %v2080
        %v2083 = vadd.f32 %v2075, %v2081
        %v2084 = vmax.f32 %v2083, 0.0
        %v2085 = vld [vmem:[%s390] sm:$0xff]
        %v2086 = vld [vmem:[%s390 + $0x8] sm:$0xff]
        %v2087 = vld [vmem:[%s390 + $0x10] sm:$0xff]
        %v2088 = vld [vmem:[%s390 + $0x18] sm:$0xff]
        %v2089 = vld [vmem:[%s390 + $0x20] sm:$0xff]
        %v2090 = vld [vmem:[%s390 + $0x28] sm:$0xff]
        %v2091 = vld [vmem:[%s390 + $0x30] sm:$0xff]
        %v2092 = vld [vmem:[%s390 + $0x38] sm:$0xff]
        %v2093 = vld [vmem:[%s390 + $0x40] sm:$0xff]
        %v2094 = vld [vmem:[%s390 + $0x48] sm:$0xff]
        %v2095 = vld [vmem:[%s390 + $0x50] sm:$0xff]
        %v2096 = vld [vmem:[%s390 + $0x58] sm:$0xff]
        %v2097 = vld [vmem:[%s390 + $0x60] sm:$0xff]
        %v2098 = vld [vmem:[%s390 + $0x68] sm:$0xff]
        %v2099 = vld [vmem:[%s390 + $0x70] sm:$0xff]
        %v2100 = vld [vmem:[%s390 + $0x78] sm:$0xff]
        %v2101 = vld [vmem:[%s393] sm:$0x1]
        %v2103 = vlaneseq
        %v2104 = vshrl.u32 %v2103, 7
        %v2105 = vsub.s32 0, %v2104
        %v2106 = vrot.slane %v2101, %v2105
        %2108 = vmatprep.subr.mxu0 0.0
        %2109 = vmatpush1.msra.mxu0 %v2085
        %2110 = vmatprep.subr.mxu0 0.0
        %2111 = vmatpush1.msra.mxu0 %v2086
        %2112 = vmatprep.subr.mxu0 0.0
        %2113 = vmatpush1.msra.mxu0 %v2087
        %2114 = vmatprep.subr.mxu0 0.0
        %2115 = vmatpush1.msra.mxu0 %v2088
        %2116 = vmatprep.subr.mxu0 0.0
        %2117 = vmatpush1.msra.mxu0 %v2089
        %2118 = vmatprep.subr.mxu0 0.0
        %2119 = vmatpush1.msra.mxu0 %v2090
        %2120 = vmatprep.subr.mxu0 0.0
        %2121 = vmatpush1.msra.mxu0 %v2091
        %2122 = vmatprep.subr.mxu0 0.0
        %2123 = vmatpush1.msra.mxu0 %v2092
        %2124 = vmatprep.subr.mxu0 0.0
        %2125 = vmatpush1.msra.mxu0 %v2093
        %2126 = vmatprep.subr.mxu0 0.0
        %2127 = vmatpush1.msra.mxu0 %v2094
        %2128 = vmatprep.subr.mxu0 0.0
        %2129 = vmatpush1.msra.mxu0 %v2095
        %2130 = vmatprep.subr.mxu0 0.0
        %2131 = vmatpush1.msra.mxu0 %v2096
        %2132 = vmatprep.subr.mxu0 0.0
        %2133 = vmatpush1.msra.mxu0 %v2097
        %2134 = vmatprep.subr.mxu0 0.0
        %2135 = vmatpush1.msra.mxu0 %v2098
        %2136 = vmatprep.subr.mxu0 0.0
        %2137 = vmatpush1.msra.mxu0 %v2099
        %2138 = vmatprep.subr.mxu0 0.0
        %2139 = vmatpush1.msra.mxu0 %v2100
        %2140 = vmatprep.subr.mxu0 0.0
        %2141 = vmatpush1.msra.mxu0 0.0
        %2142 = vmatprep.subr.mxu0 0.0
        %2143 = vmatpush1.msra.mxu0 0.0
        %2144 = vmatprep.subr.mxu0 0.0
        %2145 = vmatpush1.msra.mxu0 0.0
        %2146 = vmatprep.subr.mxu0 0.0
        %2147 = vmatpush1.msra.mxu0 0.0
        %2148 = vmatprep.subr.mxu0 0.0
        %2149 = vmatpush1.msra.mxu0 0.0
        %2150 = vmatprep.subr.mxu0 0.0
        %2151 = vmatpush1.msra.mxu0 0.0
        %2152 = vmatprep.subr.mxu0 0.0
        %2153 = vmatpush1.msra.mxu0 0.0
        %2154 = vmatprep.subr.mxu0 0.0
        %2155 = vmatpush1.msra.mxu0 0.0
        %2156 = vmatprep.subr.mxu0 0.0
        %2157 = vmatpush1.msra.mxu0 0.0
        %2158 = vmatprep.subr.mxu0 0.0
        %2159 = vmatpush1.msra.mxu0 0.0
        %2160 = vmatprep.subr.mxu0 0.0
        %2161 = vmatpush1.msra.mxu0 0.0
        %2162 = vmatprep.subr.mxu0 0.0
        %2163 = vmatpush1.msra.mxu0 0.0
        %2164 = vmatprep.subr.mxu0 0.0
        %2165 = vmatpush1.msra.mxu0 0.0
        %2166 = vmatprep.subr.mxu0 0.0
        %2167 = vmatpush1.msra.mxu0 0.0
        %2168 = vmatprep.subr.mxu0 0.0
        %2169 = vmatpush1.msra.mxu0 0.0
        %2170 = vmatprep.subr.mxu0 0.0
        %2171 = vmatpush1.msra.mxu0 0.0
        %2172 = vmatprep.mubr.f32.mxu0 0.0
        %2173 = vmatmul.mubr.f32.gmra.mrb[0].mxu0 %v2084
        %v2174 = vpop.f32.mrb[0].mxu0
        %v2175 = vadd.f32 %v2106, %v2174
        %v2176 = vpop.f32.mrb[0].mxu0
        %2177 = vdwg.mxu0
        %v2178 = vmax.f32 %v2175, 0.0
        %v2179 = vld [vmem:[%s398] sm:$0xff]
        %v2180 = vld [vmem:[%s398 + $0x8] sm:$0xff]
        %v2181 = vld [vmem:[%s398 + $0x10] sm:$0xff]
        %v2182 = vld [vmem:[%s398 + $0x18] sm:$0xff]
        %v2183 = vld [vmem:[%s398 + $0x20] sm:$0xff]
        %v2184 = vld [vmem:[%s398 + $0x28] sm:$0xff]
        %v2185 = vld [vmem:[%s398 + $0x30] sm:$0xff]
        %v2186 = vld [vmem:[%s398 + $0x38] sm:$0xff]
        %v2187 = vld [vmem:[%s398 + $0x40] sm:$0xff]
        %v2188 = vld [vmem:[%s398 + $0x48] sm:$0xff]
        %v2189 = vld [vmem:[%s398 + $0x50] sm:$0xff]
        %v2190 = vld [vmem:[%s398 + $0x58] sm:$0xff]
        %v2191 = vld [vmem:[%s398 + $0x60] sm:$0xff]
        %v2192 = vld [vmem:[%s398 + $0x68] sm:$0xff]
        %v2193 = vld [vmem:[%s398 + $0x70] sm:$0xff]
        %v2194 = vld [vmem:[%s398 + $0x78] sm:$0xff]
        %v2195 = vld [vmem:[%s401] sm:$0x1]
        %v2197 = vlaneseq
        %v2198 = vshrl.u32 %v2197, 7
        %v2199 = vsub.s32 0, %v2198
        %v2200 = vrot.slane %v2195, %v2199
        %2202 = vmatprep.subr.mxu0 0.0
        %2203 = vmatpush1.msra.mxu0 %v2179
        %2204 = vmatprep.subr.mxu0 0.0
        %2205 = vmatpush1.msra.mxu0 %v2180
        %2206 = vmatprep.subr.mxu0 0.0
        %2207 = vmatpush1.msra.mxu0 %v2181
        %2208 = vmatprep.subr.mxu0 0.0
        %2209 = vmatpush1.msra.mxu0 %v2182
        %2210 = vmatprep.subr.mxu0 0.0
        %2211 = vmatpush1.msra.mxu0 %v2183
        %2212 = vmatprep.subr.mxu0 0.0
        %2213 = vmatpush1.msra.mxu0 %v2184
        %2214 = vmatprep.subr.mxu0 0.0
        %2215 = vmatpush1.msra.mxu0 %v2185
        %2216 = vmatprep.subr.mxu0 0.0
        %2217 = vmatpush1.msra.mxu0 %v2186
        %2218 = vmatprep.subr.mxu0 0.0
        %2219 = vmatpush1.msra.mxu0 %v2187
        %2220 = vmatprep.subr.mxu0 0.0
        %2221 = vmatpush1.msra.mxu0 %v2188
        %2222 = vmatprep.subr.mxu0 0.0
        %2223 = vmatpush1.msra.mxu0 %v2189
        %2224 = vmatprep.subr.mxu0 0.0
        %2225 = vmatpush1.msra.mxu0 %v2190
        %2226 = vmatprep.subr.mxu0 0.0
        %2227 = vmatpush1.msra.mxu0 %v2191
        %2228 = vmatprep.subr.mxu0 0.0
        %2229 = vmatpush1.msra.mxu0 %v2192
        %2230 = vmatprep.subr.mxu0 0.0
        %2231 = vmatpush1.msra.mxu0 %v2193
        %2232 = vmatprep.subr.mxu0 0.0
        %2233 = vmatpush1.msra.mxu0 %v2194
        %2234 = vmatprep.subr.mxu0 0.0
        %2235 = vmatpush1.msra.mxu0 0.0
        %2236 = vmatprep.subr.mxu0 0.0
        %2237 = vmatpush1.msra.mxu0 0.0
        %2238 = vmatprep.subr.mxu0 0.0
        %2239 = vmatpush1.msra.mxu0 0.0
        %2240 = vmatprep.subr.mxu0 0.0
        %2241 = vmatpush1.msra.mxu0 0.0
        %2242 = vmatprep.subr.mxu0 0.0
        %2243 = vmatpush1.msra.mxu0 0.0
        %2244 = vmatprep.subr.mxu0 0.0
        %2245 = vmatpush1.msra.mxu0 0.0
        %2246 = vmatprep.subr.mxu0 0.0
        %2247 = vmatpush1.msra.mxu0 0.0
        %2248 = vmatprep.subr.mxu0 0.0
        %2249 = vmatpush1.msra.mxu0 0.0
        %2250 = vmatprep.subr.mxu0 0.0
        %2251 = vmatpush1.msra.mxu0 0.0
        %2252 = vmatprep.subr.mxu0 0.0
        %2253 = vmatpush1.msra.mxu0 0.0
        %2254 = vmatprep.subr.mxu0 0.0
        %2255 = vmatpush1.msra.mxu0 0.0
        %2256 = vmatprep.subr.mxu0 0.0
        %2257 = vmatpush1.msra.mxu0 0.0
        %2258 = vmatprep.subr.mxu0 0.0
        %2259 = vmatpush1.msra.mxu0 0.0
        %2260 = vmatprep.subr.mxu0 0.0
        %2261 = vmatpush1.msra.mxu0 0.0
        %2262 = vmatprep.subr.mxu0 0.0
        %2263 = vmatpush1.msra.mxu0 0.0
        %2264 = vmatprep.subr.mxu0 0.0
        %2265 = vmatpush1.msra.mxu0 0.0
        %2266 = vmatprep.mubr.f32.mxu0 0.0
        %2267 = vmatmul.mubr.f32.gmra.mrb[0].mxu0 %v2178
        %v2268 = vpop.f32.mrb[0].mxu0
        %v2269 = vadd.f32 %v2200, %v2268
        %v2270 = vpop.f32.mrb[0].mxu0
        %2271 = vdwg.mxu0
        %vm2272 = vcmask 1024
        %2273 = vst.msk [vmem:[%s405] sm:$0x3] %vm2272, %v2269
      $region56: #{qnet_forward.11} parent=47 // pred_fallthru
        _
      %p2274 = scmp.lt.s32.totalorder %s22, 1
      %s2275 = scalar_select %p2274, %s22, 1
      %s2276 = smul.addr %s2275, 2
      %s2277 = scalar_lea.vmem %s7, %s2276
      // Predicated region
      $region57: #{qnet_forward.11} parent=47 // pred_check
        %p2278 = pneg %p232
      $region58: #{qnet_forward.11} parent=47 // pred_check_branch
        %2280 = sbr.rel (%p2278) target = $region60
      $region59: #{qnet_forward.11} parent=47 // pred_region
        _
      $region60: #{qnet_forward.11} parent=47 // pred_fallthru
        _
    $region48: #{qnet_forward.11} parent=5 // pred_fallthru
      _
    %p2281 = scmp.le.s32.totalorder 2, %s13
    // Predicated region
    $region61: #{qnet_forward.11} parent=5 // pred_check
      %p2282 = pneg %p2281
    $region62: #{qnet_forward.11} parent=5 // pred_check_branch
      %2284 = sbr.rel (%p2282) target = $region64
    $region63: #{qnet_forward.11} parent=5 // pred_region
      %s2285 = ssub.s32 %s13, 2
      // Predicated region
      $region65: #{qnet_forward.11} parent=63 // pred_check
        %p2286 = pneg %p238
      $region66: #{qnet_forward.11} parent=63 // pred_check_branch
        %2288 = sbr.rel (%p2286) target = $region68
      $region67: #{qnet_forward.11} parent=63 // pred_region
        %p2289 = scmp.lt.s32.totalorder %s24, 1
        %s2290 = scalar_select %p2289, %s24, 1
        %s2291 = smul.addr %s2290, 2
        %s2292 = scalar_lea.vmem %s7, %s2291
      $region68: #{qnet_forward.11} parent=63 // pred_fallthru
        _
    $region64: #{qnet_forward.11} parent=5 // pred_fallthru
      _
  $region6: #{qnet_forward.11} parent=0 // loop_footer
    %s17 = sadd.s32 1, %s13
  $region7: #{qnet_forward.11} parent=0 // loop_footer_branch
    %12 = sbr.rel target = $region3
  $region8: #{qnet_forward.11} parent=0 // loop_exit
    _

</llo_original>
